<compile_context>
chip_gen: v6e
topology: v6e:2x2x1
jax: 0.10.0
libtpu: 0.0.40
codegen_flags: <defaults>
</compile_context>

<pallas_src>
import functools
import math

import jax
import jax.numpy as jnp
import numpy as np
from jax.experimental import pallas as pl
from jax.experimental.pallas import tpu as pltpu


def _mhdsa_kernel(x_ref, w_ref, wo_ref, out_ref,
                  xpad_ref, q_ref, k_ref, v_ref, *, heads, W, pad):
    """Grid = (batch, q_block).  One query block of attention per step.

    x_ref  : (1, N, F)       tokens (channels-last), N = H*W
    w_ref  : (31, F)         [wq*scale(9) | wk(9) | wv(9) | bq*scale | bk | bv | bo]
    wo_ref : (F, F) bf16     output projection, (in, out) so y = o @ wo
    out_ref: (1, Tq, F)      lane-dense output tile for this query block
    xpad_ref: (N + 2*pad, F) zero-halo padded token scratch (f32)
    q/k/v_ref: (N, F) bf16   conv results, filled once per batch element
    """
    N = x_ref.shape[1]
    F = x_ref.shape[2]
    Tq = out_ref.shape[1]
    hd = F // heads
    qb = pl.program_id(1)

    # ---- once per batch element: pad + fused depthwise 3x3 conv -> scratch --
    @pl.when(qb == 0)
    def _():
        zeros_halo = jnp.zeros((pad, F), xpad_ref.dtype)
        xpad_ref[pl.ds(0, pad), :] = zeros_halo            # top halo
        xpad_ref[pl.ds(pad + N, pad), :] = zeros_halo      # bottom halo
        xpad_ref[pl.ds(pad, N), :] = x_ref[0]              # tokens

        w = w_ref[...]                                     # (31, F)

        # Only the x +/- 1 taps need an edge mask (vertical out-of-range token
        # reads land in the zero halo rows of xpad).
        tok = jax.lax.broadcasted_iota(jnp.int32, (N, 1), 0)
        if (W & (W - 1)) == 0:
            col = jnp.bitwise_and(tok, W - 1)
        else:
            col = jax.lax.rem(tok, W)
        m_left = col >= 1            # reading x-1 is valid
        m_right = col <= W - 2       # reading x+1 is valid

        accq = jnp.zeros((N, F), jnp.float32)
        acck = jnp.zeros((N, F), jnp.float32)
        accv = jnp.zeros((N, F), jnp.float32)
        for ky in (-1, 0, 1):
            for kx in (-1, 0, 1):
                off = pad + ky * W + kx                    # static shift
                tap = xpad_ref[pl.ds(off, N), :].astype(jnp.float32)
                if kx == -1:
                    tap = jnp.where(m_left, tap, 0.0)
                elif kx == 1:
                    tap = jnp.where(m_right, tap, 0.0)
                t = (ky + 1) * 3 + (kx + 1)
                accq = accq + tap * w[t:t + 1, :]
                acck = acck + tap * w[9 + t:10 + t, :]
                accv = accv + tap * w[18 + t:19 + t, :]
        # 1/sqrt(feats) already folded into the q weights/bias.
        q_ref[...] = (accq + w[27:28, :]).astype(jnp.bfloat16)
        k_ref[...] = (acck + w[28:29, :]).astype(jnp.bfloat16)
        v_ref[...] = (accv + w[29:30, :]).astype(jnp.bfloat16)

    # ---- every step: attention + output projection for one query block -----
    q0 = pl.multiple_of(qb * Tq, 8)
    qv = q_ref[pl.ds(q0, Tq), :]             # (Tq, F) bf16
    kv = k_ref[...]                          # (N, F)  bf16
    vv = v_ref[...]                          # (N, F)  bf16
    bo = w_ref[30:31, :]                     # (1, F)  f32

    y = jnp.broadcast_to(bo, (Tq, F)).astype(jnp.float32)
    for h in range(heads):
        s0 = h * hd
        qh = qv[:, s0:s0 + hd]
        kh = kv[:, s0:s0 + hd]
        vh = vv[:, s0:s0 + hd]
        # scores = qh @ kh^T on the MXU (bf16 operands, f32 accumulation);
        # M = Tq = 128 and the lane dim N is a multiple of 128 (dense tiles).
        s = jax.lax.dot_general(qh, kh, (((1,), (1,)), ((), ())),
                                preferred_element_type=jnp.float32)   # (Tq, N)
        s = s - jnp.max(s, axis=-1, keepdims=True)
        p = jnp.exp(s)
        inv = pl.reciprocal(jnp.sum(p, axis=-1, keepdims=True), approx=True)
        p = (p * inv).astype(jnp.bfloat16)
        oh = jnp.dot(p, vh, preferred_element_type=jnp.float32)       # (Tq, hd)
        # Fold each head straight into the output projection; wo slice is an
        # aligned sublane slice of the bf16 ref (no concat, no full-wo value).
        y = y + jnp.dot(oh.astype(jnp.bfloat16), wo_ref[s0:s0 + hd, :],
                        preferred_element_type=jnp.float32)
    # TODO(synk): nn.Dropout(p=0) is an identity at default init -> omitted.
    out_ref[0] = y.astype(out_ref.dtype)


def multi_head_depthwise_self_attention(x, params, heads=8, q_block=128):
    """x: (B, feats, H, W) NCHW.  Returns (B, N, feats) tokens."""
    B, F, H, W = x.shape
    N = H * W
    assert F % heads == 0
    assert W >= 3, "edge masking assumes spatial width >= 3"
    assert N % 8 == 0

    Tq = q_block if (N % q_block == 0) else N      # query-block tile
    n_qb = N // Tq
    pad = ((W + 1 + 7) // 8) * 8                   # 8-aligned halo, >= W+1

    # Layout glue only: NCHW -> token-major (B, N, F).
    xt = jnp.transpose(x.reshape(B, F, N), (0, 2, 1))

    w_slab = params["w_slab"]                      # (31, F) f32
    wo_bf16 = params["wo_bf16"]                    # (F, F)  bf16

    # Explicit VMEM budget (review: v7x has 64 MiB/TC, v5e default scoped
    # limit is only 16 MiB).  Generous estimate, clamped to [32, 64] MiB.
    vmem_est = (
        2 * N * F * 4            # x double-buffer
        + 2 * Tq * F * 4         # out double-buffer
        + 2 * 32 * F * 4         # weight slab
        + 2 * F * F * 2          # wo (bf16)
        + (N + 2 * pad) * F * 4  # xpad scratch
        + 3 * N * F * 2          # q/k/v bf16 scratch
        + 8 * Tq * N * 4         # per-head score/prob transients + headroom
        + (4 << 20)              # slack for spills / compiler temporaries
    )
    vmem_limit = int(min(max(vmem_est, 32 * 1024 * 1024), 64 * 1024 * 1024))

    grid_spec = pltpu.PrefetchScalarGridSpec(
        num_scalar_prefetch=0,
        grid=(B, n_qb),
        in_specs=[
            pl.BlockSpec((1, N, F), lambda b, qb: (b, 0, 0)),   # fetched once / b
            pl.BlockSpec((31, F), lambda b, qb: (0, 0)),        # weight slab
            pl.BlockSpec((F, F), lambda b, qb: (0, 0)),         # wo (bf16)
        ],
        out_specs=pl.BlockSpec((1, Tq, F), lambda b, qb: (b, qb, 0)),
        scratch_shapes=[
            pltpu.VMEM((N + 2 * pad, F), xt.dtype),             # xpad
            pltpu.VMEM((N, F), jnp.bfloat16),                   # q
            pltpu.VMEM((N, F), jnp.bfloat16),                   # k
            pltpu.VMEM((N, F), jnp.bfloat16),                   # v
        ],
    )

    kernel = functools.partial(_mhdsa_kernel, heads=heads, W=W, pad=pad)
    return pl.pallas_call(
        kernel,
        out_shape=jax.ShapeDtypeStruct((B, N, F), x.dtype),
        grid_spec=grid_spec,
        compiler_params=pltpu.CompilerParams(
            dimension_semantics=("parallel", "arbitrary"),
            vmem_limit_bytes=vmem_limit),
    )(xt, w_slab, wo_bf16)


def init_params(key, feats):
    """Deterministic synthetic parameters matching the PyTorch module shapes."""
    ks = jax.random.split(key, 8)
    std_dw = 1.0 / 3.0                  # fan_in = 1*3*3 for depthwise conv
    std_o = 1.0 / math.sqrt(feats)
    wq = jax.random.normal(ks[0], (feats, 1, 3, 3), jnp.float32) * std_dw
    wk = jax.random.normal(ks[1], (feats, 1, 3, 3), jnp.float32) * std_dw
    wv = jax.random.normal(ks[2], (feats, 1, 3, 3), jnp.float32) * std_dw
    bq = jax.random.normal(ks[3], (feats,), jnp.float32) * 0.02
    bk = jax.random.normal(ks[4], (feats,), jnp.float32) * 0.02
    bv = jax.random.normal(ks[5], (feats,), jnp.float32) * 0.02
    wo = jax.random.normal(ks[6], (feats, feats), jnp.float32) * std_o  # (out, in)
    bo = jax.random.normal(ks[7], (feats,), jnp.float32) * 0.02

    scale = 1.0 / math.sqrt(feats)      # score scaling, folded into q conv
    wq_s = wq.reshape(feats, 9).T * scale          # (9, F), tap-major
    wk_t = wk.reshape(feats, 9).T
    wv_t = wv.reshape(feats, 9).T
    wo_t = wo.T                                    # (in, out) so y = o @ wo_t
    w_slab = jnp.concatenate(
        [wq_s, wk_t, wv_t,
         (bq * scale)[None, :], bk[None, :], bv[None, :], bo[None, :]],
        axis=0)                                    # (31, F)
    return dict(
        wq=wq, wk=wk, wv=wv, bq=bq, bk=bk, bv=bv, wo=wo, bo=bo,
        wo_t=wo_t,
        w_slab=w_slab,                             # kernel-friendly f32 slab
        wo_bf16=wo_t.astype(jnp.bfloat16),         # host-side bf16 cast
    )


def reference(x, params, heads):
    """Pure-JAX reference of the same forward pass."""
    B, F, H, W = x.shape
    N = H * W
    hi = jax.lax.Precision.HIGHEST

    def dwconv(w, b):
        y = jax.lax.conv_general_dilated(
            x, w, window_strides=(1, 1), padding=((1, 1), (1, 1)),
            dimension_numbers=("NCHW", "OIHW", "NCHW"), feature_group_count=F)
        return y + b[None, :, None, None]

    def to_heads(t):  # (B,F,H,W) -> (B,heads,N,F//heads)
        t = t.reshape(B, F, N).transpose(0, 2, 1)
        return t.reshape(B, N, heads, F // heads).transpose(0, 2, 1, 3)

    q = to_heads(dwconv(params["wq"], params["bq"]))
    k = to_heads(dwconv(params["wk"], params["bk"]))
    v = to_heads(dwconv(params["wv"], params["bv"]))

    s = jnp.einsum("bhif,bhjf->bhij", q, k, precision=hi) / math.sqrt(float(F))
    p = jax.nn.softmax(s, axis=-1)
    o = jnp.einsum("bhij,bhjf->bhif", p, v, precision=hi)
    o = o.transpose(0, 2, 1, 3).reshape(B, N, F)
    return (jnp.einsum("bnf,fg->bng", o, params["wo_t"], precision=hi)
            + params["bo"][None, None, :])


if __name__ == "__main__":
    # Small demo shapes: F=128 keeps the lane dim dense; N = H*W = 256 tokens
    # -> 2 query blocks of 128, so the grid has >= 2 steps per batch element.
    B, feats, H, W, head = 2, 128, 16, 16, 8
    key = jax.random.PRNGKey(0)
    kx, kp = jax.random.split(key)
    x = jax.random.normal(kx, (B, feats, H, W), jnp.float32)
    params = init_params(kp, feats)

    out = multi_head_depthwise_self_attention(x, params, heads=head)
    out = jax.block_until_ready(out)

    ref = reference(x, params, head)
    np.testing.assert_allclose(np.asarray(out), np.asarray(ref),
                               rtol=2e-2, atol=2e-2)
    print("KERNEL_OK")
</pallas_src>

<mosaic_0001>
module attributes {stable_mosaic.version = 11 : i64} {
  func.func @_mhdsa_kernel(%arg0: i32, %arg1: i32, %arg2: memref<1x256x128xf32, #tpu.memory_space<vmem>>, %arg3: memref<31x128xf32, #tpu.memory_space<vmem>>, %arg4: memref<128x128xbf16, #tpu.memory_space<vmem>>, %arg5: memref<1x128x128xf32, #tpu.memory_space<vmem>>, %arg6: memref<304x128xf32, #tpu.memory_space<vmem>>, %arg7: memref<256x128xbf16, #tpu.memory_space<vmem>>, %arg8: memref<256x128xbf16, #tpu.memory_space<vmem>>, %arg9: memref<256x128xbf16, #tpu.memory_space<vmem>>) attributes {dimension_semantics = [#tpu.dimension_semantics<parallel>, #tpu.dimension_semantics<arbitrary>], iteration_bounds = array<i64: 2, 2>, scalar_prefetch = 0 : i64, scratch_operands = 4 : i64, tpu.core_type = #tpu.core_type<tc>, window_params = [{transform_indices = @transform_0, window_bounds = array<i64: 1, 256, 128>}, {pipeline_mode = #tpu.pipeline_mode<synchronous>, transform_indices = @transform_1, window_bounds = array<i64: 31, 128>}, {pipeline_mode = #tpu.pipeline_mode<synchronous>, transform_indices = @transform_2, window_bounds = array<i64: 128, 128>}, {transform_indices = @transform_3, window_bounds = array<i64: 1, 128, 128>}]} {
    %c0_i32 = arith.constant 0 : i32
    %0 = arith.cmpi eq, %arg1, %c0_i32 : i32
    %1 = arith.extui %0 : i1 to i32
    %c0_i32_0 = arith.constant 0 : i32
    %2 = arith.cmpi ne, %1, %c0_i32_0 : i32
    scf.if %2 {
      %cst_57 = arith.constant 0.000000e+00 : f32
      %175 = vector.broadcast %cst_57 : f32 to vector<24x128xf32>
      %c0_58 = arith.constant 0 : index
      %c0_59 = arith.constant 0 : index
      %176 = vector.load %arg6[%c0_58, %c0_59] : memref<304x128xf32, #tpu.memory_space<vmem>>, vector<24x128xf32>
      tpu.vector_store %arg6[%c0_58, %c0_59], %175 {strides = array<i32>} : memref<304x128xf32, #tpu.memory_space<vmem>>, vector<24x128xf32>,
      %c280 = arith.constant 280 : index
      %c0_60 = arith.constant 0 : index
      %177 = vector.load %arg6[%c280, %c0_60] : memref<304x128xf32, #tpu.memory_space<vmem>>, vector<24x128xf32>
      tpu.vector_store %arg6[%c280, %c0_60], %175 {strides = array<i32>} : memref<304x128xf32, #tpu.memory_space<vmem>>, vector<24x128xf32>,
      %c0_61 = arith.constant 0 : index
      %c0_62 = arith.constant 0 : index
      %c0_63 = arith.constant 0 : index
      %178 = vector.load %arg2[%c0_61, %c0_62, %c0_63] : memref<1x256x128xf32, #tpu.memory_space<vmem>>, vector<1x256x128xf32>
      %179 = vector.shape_cast %178 : vector<1x256x128xf32> to vector<256x128xf32>
      %c24 = arith.constant 24 : index
      %c0_64 = arith.constant 0 : index
      %180 = vector.load %arg6[%c24, %c0_64] : memref<304x128xf32, #tpu.memory_space<vmem>>, vector<256x128xf32>
      tpu.vector_store %arg6[%c24, %c0_64], %179 {strides = array<i32>} : memref<304x128xf32, #tpu.memory_space<vmem>>, vector<256x128xf32>,
      %c0_65 = arith.constant 0 : index
      %c0_66 = arith.constant 0 : index
      %181 = vector.load %arg3[%c0_65, %c0_66] : memref<31x128xf32, #tpu.memory_space<vmem>>, vector<31x128xf32>
      %182 = tpu.iota {dimensions = array<i32: 0>} : vector<256x1xi32>
      %c15_i32 = arith.constant 15 : i32
      %183 = vector.broadcast %c15_i32 : i32 to vector<256x1xi32>
      %184 = arith.andi %182, %183 : vector<256x1xi32>
      %c1_i32 = arith.constant 1 : i32
      %185 = vector.broadcast %c1_i32 : i32 to vector<256x1xi32>
      %186 = arith.cmpi sge, %184, %185 : vector<256x1xi32>
      %c14_i32 = arith.constant 14 : i32
      %187 = vector.broadcast %c14_i32 : i32 to vector<256x1xi32>
      %188 = arith.cmpi sle, %184, %187 : vector<256x1xi32>
      %cst_67 = arith.constant 0.000000e+00 : f32
      %189 = vector.broadcast %cst_67 : f32 to vector<256x128xf32>
      %cst_68 = arith.constant 0.000000e+00 : f32
      %190 = vector.broadcast %cst_68 : f32 to vector<256x128xf32>
      %cst_69 = arith.constant 0.000000e+00 : f32
      %191 = vector.broadcast %cst_69 : f32 to vector<256x128xf32>
      %c7 = arith.constant 7 : index
      %c0_70 = arith.constant 0 : index
      %192 = vector.load %arg6[%c7, %c0_70] : memref<304x128xf32, #tpu.memory_space<vmem>>, vector<256x128xf32>
      %cst_71 = arith.constant 0.000000e+00 : f32
      %193 = vector.shape_cast %186 : vector<256x1xi1> to vector<256x1xi1>
      %194 = vector.broadcast %193 : vector<256x1xi1> to vector<256x128xi1>
      %195 = vector.broadcast %cst_71 : f32 to vector<256x128xf32>
      %196 = arith.select %194, %192, %195 : vector<256x128xi1>, vector<256x128xf32>
      %197 = vector.extract_strided_slice %181 {offsets = [0, 0], sizes = [1, 128], strides = [1, 1]} : vector<31x128xf32> to vector<1x128xf32>
      %198 = vector.broadcast %197 : vector<1x128xf32> to vector<256x128xf32>
      %199 = arith.mulf %196, %198 : vector<256x128xf32>
      %200 = arith.addf %189, %199 : vector<256x128xf32>
      %201 = vector.extract_strided_slice %181 {offsets = [9, 0], sizes = [1, 128], strides = [1, 1]} : vector<31x128xf32> to vector<1x128xf32>
      %202 = vector.broadcast %201 : vector<1x128xf32> to vector<256x128xf32>
      %203 = arith.mulf %196, %202 : vector<256x128xf32>
      %204 = arith.addf %190, %203 : vector<256x128xf32>
      %205 = vector.extract_strided_slice %181 {offsets = [18, 0], sizes = [1, 128], strides = [1, 1]} : vector<31x128xf32> to vector<1x128xf32>
      %206 = vector.broadcast %205 : vector<1x128xf32> to vector<256x128xf32>
      %207 = arith.mulf %196, %206 : vector<256x128xf32>
      %208 = arith.addf %191, %207 : vector<256x128xf32>
      %c8 = arith.constant 8 : index
      %c0_72 = arith.constant 0 : index
      %209 = vector.load %arg6[%c8, %c0_72] : memref<304x128xf32, #tpu.memory_space<vmem>>, vector<256x128xf32>
      %210 = vector.extract_strided_slice %181 {offsets = [1, 0], sizes = [1, 128], strides = [1, 1]} : vector<31x128xf32> to vector<1x128xf32>
      %211 = vector.broadcast %210 : vector<1x128xf32> to vector<256x128xf32>
      %212 = arith.mulf %209, %211 : vector<256x128xf32>
      %213 = arith.addf %200, %212 : vector<256x128xf32>
      %214 = vector.extract_strided_slice %181 {offsets = [10, 0], sizes = [1, 128], strides = [1, 1]} : vector<31x128xf32> to vector<1x128xf32>
      %215 = vector.broadcast %214 : vector<1x128xf32> to vector<256x128xf32>
      %216 = arith.mulf %209, %215 : vector<256x128xf32>
      %217 = arith.addf %204, %216 : vector<256x128xf32>
      %218 = vector.extract_strided_slice %181 {offsets = [19, 0], sizes = [1, 128], strides = [1, 1]} : vector<31x128xf32> to vector<1x128xf32>
      %219 = vector.broadcast %218 : vector<1x128xf32> to vector<256x128xf32>
      %220 = arith.mulf %209, %219 : vector<256x128xf32>
      %221 = arith.addf %208, %220 : vector<256x128xf32>
      %c9 = arith.constant 9 : index
      %c0_73 = arith.constant 0 : index
      %222 = vector.load %arg6[%c9, %c0_73] : memref<304x128xf32, #tpu.memory_space<vmem>>, vector<256x128xf32>
      %cst_74 = arith.constant 0.000000e+00 : f32
      %223 = vector.shape_cast %188 : vector<256x1xi1> to vector<256x1xi1>
      %224 = vector.broadcast %223 : vector<256x1xi1> to vector<256x128xi1>
      %225 = vector.broadcast %cst_74 : f32 to vector<256x128xf32>
      %226 = arith.select %224, %222, %225 : vector<256x128xi1>, vector<256x128xf32>
      %227 = vector.extract_strided_slice %181 {offsets = [2, 0], sizes = [1, 128], strides = [1, 1]} : vector<31x128xf32> to vector<1x128xf32>
      %228 = vector.broadcast %227 : vector<1x128xf32> to vector<256x128xf32>
      %229 = arith.mulf %226, %228 : vector<256x128xf32>
      %230 = arith.addf %213, %229 : vector<256x128xf32>
      %231 = vector.extract_strided_slice %181 {offsets = [11, 0], sizes = [1, 128], strides = [1, 1]} : vector<31x128xf32> to vector<1x128xf32>
      %232 = vector.broadcast %231 : vector<1x128xf32> to vector<256x128xf32>
      %233 = arith.mulf %226, %232 : vector<256x128xf32>
      %234 = arith.addf %217, %233 : vector<256x128xf32>
      %235 = vector.extract_strided_slice %181 {offsets = [20, 0], sizes = [1, 128], strides = [1, 1]} : vector<31x128xf32> to vector<1x128xf32>
      %236 = vector.broadcast %235 : vector<1x128xf32> to vector<256x128xf32>
      %237 = arith.mulf %226, %236 : vector<256x128xf32>
      %238 = arith.addf %221, %237 : vector<256x128xf32>
      %c23 = arith.constant 23 : index
      %c0_75 = arith.constant 0 : index
      %239 = vector.load %arg6[%c23, %c0_75] : memref<304x128xf32, #tpu.memory_space<vmem>>, vector<256x128xf32>
      %cst_76 = arith.constant 0.000000e+00 : f32
      %240 = vector.shape_cast %186 : vector<256x1xi1> to vector<256x1xi1>
      %241 = vector.broadcast %240 : vector<256x1xi1> to vector<256x128xi1>
      %242 = vector.broadcast %cst_76 : f32 to vector<256x128xf32>
      %243 = arith.select %241, %239, %242 : vector<256x128xi1>, vector<256x128xf32>
      %244 = vector.extract_strided_slice %181 {offsets = [3, 0], sizes = [1, 128], strides = [1, 1]} : vector<31x128xf32> to vector<1x128xf32>
      %245 = vector.broadcast %244 : vector<1x128xf32> to vector<256x128xf32>
      %246 = arith.mulf %243, %245 : vector<256x128xf32>
      %247 = arith.addf %230, %246 : vector<256x128xf32>
      %248 = vector.extract_strided_slice %181 {offsets = [12, 0], sizes = [1, 128], strides = [1, 1]} : vector<31x128xf32> to vector<1x128xf32>
      %249 = vector.broadcast %248 : vector<1x128xf32> to vector<256x128xf32>
      %250 = arith.mulf %243, %249 : vector<256x128xf32>
      %251 = arith.addf %234, %250 : vector<256x128xf32>
      %252 = vector.extract_strided_slice %181 {offsets = [21, 0], sizes = [1, 128], strides = [1, 1]} : vector<31x128xf32> to vector<1x128xf32>
      %253 = vector.broadcast %252 : vector<1x128xf32> to vector<256x128xf32>
      %254 = arith.mulf %243, %253 : vector<256x128xf32>
      %255 = arith.addf %238, %254 : vector<256x128xf32>
      %c24_77 = arith.constant 24 : index
      %c0_78 = arith.constant 0 : index
      %256 = vector.load %arg6[%c24_77, %c0_78] : memref<304x128xf32, #tpu.memory_space<vmem>>, vector<256x128xf32>
      %257 = vector.extract_strided_slice %181 {offsets = [4, 0], sizes = [1, 128], strides = [1, 1]} : vector<31x128xf32> to vector<1x128xf32>
      %258 = vector.broadcast %257 : vector<1x128xf32> to vector<256x128xf32>
      %259 = arith.mulf %256, %258 : vector<256x128xf32>
      %260 = arith.addf %247, %259 : vector<256x128xf32>
      %261 = vector.extract_strided_slice %181 {offsets = [13, 0], sizes = [1, 128], strides = [1, 1]} : vector<31x128xf32> to vector<1x128xf32>
      %262 = vector.broadcast %261 : vector<1x128xf32> to vector<256x128xf32>
      %263 = arith.mulf %256, %262 : vector<256x128xf32>
      %264 = arith.addf %251, %263 : vector<256x128xf32>
      %265 = vector.extract_strided_slice %181 {offsets = [22, 0], sizes = [1, 128], strides = [1, 1]} : vector<31x128xf32> to vector<1x128xf32>
      %266 = vector.broadcast %265 : vector<1x128xf32> to vector<256x128xf32>
      %267 = arith.mulf %256, %266 : vector<256x128xf32>
      %268 = arith.addf %255, %267 : vector<256x128xf32>
      %c25 = arith.constant 25 : index
      %c0_79 = arith.constant 0 : index
      %269 = vector.load %arg6[%c25, %c0_79] : memref<304x128xf32, #tpu.memory_space<vmem>>, vector<256x128xf32>
      %cst_80 = arith.constant 0.000000e+00 : f32
      %270 = vector.shape_cast %188 : vector<256x1xi1> to vector<256x1xi1>
      %271 = vector.broadcast %270 : vector<256x1xi1> to vector<256x128xi1>
      %272 = vector.broadcast %cst_80 : f32 to vector<256x128xf32>
      %273 = arith.select %271, %269, %272 : vector<256x128xi1>, vector<256x128xf32>
      %274 = vector.extract_strided_slice %181 {offsets = [5, 0], sizes = [1, 128], strides = [1, 1]} : vector<31x128xf32> to vector<1x128xf32>
      %275 = vector.broadcast %274 : vector<1x128xf32> to vector<256x128xf32>
      %276 = arith.mulf %273, %275 : vector<256x128xf32>
      %277 = arith.addf %260, %276 : vector<256x128xf32>
      %278 = vector.extract_strided_slice %181 {offsets = [14, 0], sizes = [1, 128], strides = [1, 1]} : vector<31x128xf32> to vector<1x128xf32>
      %279 = vector.broadcast %278 : vector<1x128xf32> to vector<256x128xf32>
      %280 = arith.mulf %273, %279 : vector<256x128xf32>
      %281 = arith.addf %264, %280 : vector<256x128xf32>
      %282 = vector.extract_strided_slice %181 {offsets = [23, 0], sizes = [1, 128], strides = [1, 1]} : vector<31x128xf32> to vector<1x128xf32>
      %283 = vector.broadcast %282 : vector<1x128xf32> to vector<256x128xf32>
      %284 = arith.mulf %273, %283 : vector<256x128xf32>
      %285 = arith.addf %268, %284 : vector<256x128xf32>
      %c39 = arith.constant 39 : index
      %c0_81 = arith.constant 0 : index
      %286 = vector.load %arg6[%c39, %c0_81] : memref<304x128xf32, #tpu.memory_space<vmem>>, vector<256x128xf32>
      %cst_82 = arith.constant 0.000000e+00 : f32
      %287 = vector.shape_cast %186 : vector<256x1xi1> to vector<256x1xi1>
      %288 = vector.broadcast %287 : vector<256x1xi1> to vector<256x128xi1>
      %289 = vector.broadcast %cst_82 : f32 to vector<256x128xf32>
      %290 = arith.select %288, %286, %289 : vector<256x128xi1>, vector<256x128xf32>
      %291 = vector.extract_strided_slice %181 {offsets = [6, 0], sizes = [1, 128], strides = [1, 1]} : vector<31x128xf32> to vector<1x128xf32>
      %292 = vector.broadcast %291 : vector<1x128xf32> to vector<256x128xf32>
      %293 = arith.mulf %290, %292 : vector<256x128xf32>
      %294 = arith.addf %277, %293 : vector<256x128xf32>
      %295 = vector.extract_strided_slice %181 {offsets = [15, 0], sizes = [1, 128], strides = [1, 1]} : vector<31x128xf32> to vector<1x128xf32>
      %296 = vector.broadcast %295 : vector<1x128xf32> to vector<256x128xf32>
      %297 = arith.mulf %290, %296 : vector<256x128xf32>
      %298 = arith.addf %281, %297 : vector<256x128xf32>
      %299 = vector.extract_strided_slice %181 {offsets = [24, 0], sizes = [1, 128], strides = [1, 1]} : vector<31x128xf32> to vector<1x128xf32>
      %300 = vector.broadcast %299 : vector<1x128xf32> to vector<256x128xf32>
      %301 = arith.mulf %290, %300 : vector<256x128xf32>
      %302 = arith.addf %285, %301 : vector<256x128xf32>
      %c40 = arith.constant 40 : index
      %c0_83 = arith.constant 0 : index
      %303 = vector.load %arg6[%c40, %c0_83] : memref<304x128xf32, #tpu.memory_space<vmem>>, vector<256x128xf32>
      %304 = vector.extract_strided_slice %181 {offsets = [7, 0], sizes = [1, 128], strides = [1, 1]} : vector<31x128xf32> to vector<1x128xf32>
      %305 = vector.broadcast %304 : vector<1x128xf32> to vector<256x128xf32>
      %306 = arith.mulf %303, %305 : vector<256x128xf32>
      %307 = arith.addf %294, %306 : vector<256x128xf32>
      %308 = vector.extract_strided_slice %181 {offsets = [16, 0], sizes = [1, 128], strides = [1, 1]} : vector<31x128xf32> to vector<1x128xf32>
      %309 = vector.broadcast %308 : vector<1x128xf32> to vector<256x128xf32>
      %310 = arith.mulf %303, %309 : vector<256x128xf32>
      %311 = arith.addf %298, %310 : vector<256x128xf32>
      %312 = vector.extract_strided_slice %181 {offsets = [25, 0], sizes = [1, 128], strides = [1, 1]} : vector<31x128xf32> to vector<1x128xf32>
      %313 = vector.broadcast %312 : vector<1x128xf32> to vector<256x128xf32>
      %314 = arith.mulf %303, %313 : vector<256x128xf32>
      %315 = arith.addf %302, %314 : vector<256x128xf32>
      %c41 = arith.constant 41 : index
      %c0_84 = arith.constant 0 : index
      %316 = vector.load %arg6[%c41, %c0_84] : memref<304x128xf32, #tpu.memory_space<vmem>>, vector<256x128xf32>
      %cst_85 = arith.constant 0.000000e+00 : f32
      %317 = vector.shape_cast %188 : vector<256x1xi1> to vector<256x1xi1>
      %318 = vector.broadcast %317 : vector<256x1xi1> to vector<256x128xi1>
      %319 = vector.broadcast %cst_85 : f32 to vector<256x128xf32>
      %320 = arith.select %318, %316, %319 : vector<256x128xi1>, vector<256x128xf32>
      %321 = vector.extract_strided_slice %181 {offsets = [8, 0], sizes = [1, 128], strides = [1, 1]} : vector<31x128xf32> to vector<1x128xf32>
      %322 = vector.broadcast %321 : vector<1x128xf32> to vector<256x128xf32>
      %323 = arith.mulf %320, %322 : vector<256x128xf32>
      %324 = arith.addf %307, %323 : vector<256x128xf32>
      %325 = vector.extract_strided_slice %181 {offsets = [17, 0], sizes = [1, 128], strides = [1, 1]} : vector<31x128xf32> to vector<1x128xf32>
      %326 = vector.broadcast %325 : vector<1x128xf32> to vector<256x128xf32>
      %327 = arith.mulf %320, %326 : vector<256x128xf32>
      %328 = arith.addf %311, %327 : vector<256x128xf32>
      %329 = vector.extract_strided_slice %181 {offsets = [26, 0], sizes = [1, 128], strides = [1, 1]} : vector<31x128xf32> to vector<1x128xf32>
      %330 = vector.broadcast %329 : vector<1x128xf32> to vector<256x128xf32>
      %331 = arith.mulf %320, %330 : vector<256x128xf32>
      %332 = arith.addf %315, %331 : vector<256x128xf32>
      %333 = vector.extract_strided_slice %181 {offsets = [27, 0], sizes = [1, 128], strides = [1, 1]} : vector<31x128xf32> to vector<1x128xf32>
      %334 = vector.broadcast %333 : vector<1x128xf32> to vector<256x128xf32>
      %335 = arith.addf %324, %334 : vector<256x128xf32>
      %336 = arith.truncf %335 : vector<256x128xf32> to vector<256x128xbf16>
      %c0_86 = arith.constant 0 : index
      %c0_87 = arith.constant 0 : index
      %337 = vector.load %arg7[%c0_86, %c0_87] : memref<256x128xbf16, #tpu.memory_space<vmem>>, vector<256x128xbf16>
      tpu.vector_store %arg7[%c0_86, %c0_87], %336 {strides = array<i32>} : memref<256x128xbf16, #tpu.memory_space<vmem>>, vector<256x128xbf16>,
      %338 = vector.extract_strided_slice %181 {offsets = [28, 0], sizes = [1, 128], strides = [1, 1]} : vector<31x128xf32> to vector<1x128xf32>
      %339 = vector.broadcast %338 : vector<1x128xf32> to vector<256x128xf32>
      %340 = arith.addf %328, %339 : vector<256x128xf32>
      %341 = arith.truncf %340 : vector<256x128xf32> to vector<256x128xbf16>
      %c0_88 = arith.constant 0 : index
      %c0_89 = arith.constant 0 : index
      %342 = vector.load %arg8[%c0_88, %c0_89] : memref<256x128xbf16, #tpu.memory_space<vmem>>, vector<256x128xbf16>
      tpu.vector_store %arg8[%c0_88, %c0_89], %341 {strides = array<i32>} : memref<256x128xbf16, #tpu.memory_space<vmem>>, vector<256x128xbf16>,
      %343 = vector.extract_strided_slice %181 {offsets = [29, 0], sizes = [1, 128], strides = [1, 1]} : vector<31x128xf32> to vector<1x128xf32>
      %344 = vector.broadcast %343 : vector<1x128xf32> to vector<256x128xf32>
      %345 = arith.addf %332, %344 : vector<256x128xf32>
      %346 = arith.truncf %345 : vector<256x128xf32> to vector<256x128xbf16>
      %c0_90 = arith.constant 0 : index
      %c0_91 = arith.constant 0 : index
      %347 = vector.load %arg9[%c0_90, %c0_91] : memref<256x128xbf16, #tpu.memory_space<vmem>>, vector<256x128xbf16>
      tpu.vector_store %arg9[%c0_90, %c0_91], %346 {strides = array<i32>} : memref<256x128xbf16, #tpu.memory_space<vmem>>, vector<256x128xbf16>,
    } else {
    }
    %c128_i32 = arith.constant 128 : i32
    %3 = arith.muli %arg1, %c128_i32 : i32
    %4 = tpu.assume_multiple %3, 8 : i32
    %5 = arith.index_cast %4 : i32 to index
    %c0 = arith.constant 0 : index
    %6 = vector.load %arg7[%5, %c0] : memref<256x128xbf16, #tpu.memory_space<vmem>>, vector<128x128xbf16>
    %c0_1 = arith.constant 0 : index
    %c0_2 = arith.constant 0 : index
    %7 = vector.load %arg8[%c0_1, %c0_2] : memref<256x128xbf16, #tpu.memory_space<vmem>>, vector<256x128xbf16>
    %c0_3 = arith.constant 0 : index
    %c0_4 = arith.constant 0 : index
    %8 = vector.load %arg9[%c0_3, %c0_4] : memref<256x128xbf16, #tpu.memory_space<vmem>>, vector<256x128xbf16>
    %c30 = arith.constant 30 : index
    %c0_5 = arith.constant 0 : index
    %9 = vector.load %arg3[%c30, %c0_5] : memref<31x128xf32, #tpu.memory_space<vmem>>, vector<1x128xf32>
    %10 = vector.shape_cast %9 : vector<1x128xf32> to vector<1x128xf32>
    %11 = vector.broadcast %10 : vector<1x128xf32> to vector<128x128xf32>
    %12 = vector.extract_strided_slice %6 {offsets = [0, 0], sizes = [128, 16], strides = [1, 1]} : vector<128x128xbf16> to vector<128x16xbf16>
    %13 = vector.extract_strided_slice %7 {offsets = [0, 0], sizes = [256, 16], strides = [1, 1]} : vector<256x128xbf16> to vector<256x16xbf16>
    %14 = vector.extract_strided_slice %8 {offsets = [0, 0], sizes = [256, 16], strides = [1, 1]} : vector<256x128xbf16> to vector<256x16xbf16>
    %cst = arith.constant dense<0.000000e+00> : vector<128x256xf32>
    %15 = tpu.matmul %12, %13, %cst {dimension_numbers = #tpu.dot_dimension_numbers<[1], [1], [0], [0], [0, 0, 1, 0], [], []>} : vector<128x16xbf16>, vector<256x16xbf16>, vector<128x256xf32> -> vector<128x256xf32>
    %cst_6 = arith.constant dense<0xFF800000> : vector<128xf32>
    %16 = vector.multi_reduction <maximumf>, %15, %cst_6 [1] : vector<128x256xf32> to vector<128xf32>
    %17 = vector.shape_cast %16 : vector<128xf32> to vector<128x1xf32>
    %18 = vector.broadcast %17 : vector<128x1xf32> to vector<128x256xf32>
    %19 = arith.subf %15, %18 : vector<128x256xf32>
    %20 = math.exp %19 : vector<128x256xf32>
    %cst_7 = arith.constant dense<0.000000e+00> : vector<128xf32>
    %21 = vector.multi_reduction <add>, %20, %cst_7 [1] : vector<128x256xf32> to vector<128xf32>
    %22 = vector.shape_cast %21 : vector<128xf32> to vector<128x1xf32>
    %23 = tpu.reciprocal %22 {approx = true} : vector<128x1xf32> -> vector<128x1xf32>
    %24 = vector.broadcast %23 : vector<128x1xf32> to vector<128x256xf32>
    %25 = arith.mulf %20, %24 : vector<128x256xf32>
    %26 = arith.truncf %25 : vector<128x256xf32> to vector<128x256xbf16>
    %cst_8 = arith.constant dense<0.000000e+00> : vector<128x16xf32>
    %27 = tpu.matmul %26, %14, %cst_8 {dimension_numbers = #tpu.dot_dimension_numbers<[1], [0], [0], [1], [0, 0, 1, 1], [], []>} : vector<128x256xbf16>, vector<256x16xbf16>, vector<128x16xf32> -> vector<128x16xf32>
    %28 = arith.truncf %27 : vector<128x16xf32> to vector<128x16xbf16>
    %c0_9 = arith.constant 0 : index
    %c0_10 = arith.constant 0 : index
    %29 = vector.load %arg4[%c0_9, %c0_10] : memref<128x128xbf16, #tpu.memory_space<vmem>>, vector<16x128xbf16>
    %cst_11 = arith.constant dense<0.000000e+00> : vector<128x128xf32>
    %30 = tpu.matmul %28, %29, %cst_11 {dimension_numbers = #tpu.dot_dimension_numbers<[1], [0], [0], [1], [0, 0, 1, 1], [], []>} : vector<128x16xbf16>, vector<16x128xbf16>, vector<128x128xf32> -> vector<128x128xf32>
    %31 = arith.addf %11, %30 : vector<128x128xf32>
    %32 = vector.extract_strided_slice %6 {offsets = [0, 16], sizes = [128, 16], strides = [1, 1]} : vector<128x128xbf16> to vector<128x16xbf16>
    %33 = vector.extract_strided_slice %7 {offsets = [0, 16], sizes = [256, 16], strides = [1, 1]} : vector<256x128xbf16> to vector<256x16xbf16>
    %34 = vector.extract_strided_slice %8 {offsets = [0, 16], sizes = [256, 16], strides = [1, 1]} : vector<256x128xbf16> to vector<256x16xbf16>
    %cst_12 = arith.constant dense<0.000000e+00> : vector<128x256xf32>
    %35 = tpu.matmul %32, %33, %cst_12 {dimension_numbers = #tpu.dot_dimension_numbers<[1], [1], [0], [0], [0, 0, 1, 0], [], []>} : vector<128x16xbf16>, vector<256x16xbf16>, vector<128x256xf32> -> vector<128x256xf32>
    %cst_13 = arith.constant dense<0xFF800000> : vector<128xf32>
    %36 = vector.multi_reduction <maximumf>, %35, %cst_13 [1] : vector<128x256xf32> to vector<128xf32>
    %37 = vector.shape_cast %36 : vector<128xf32> to vector<128x1xf32>
    %38 = vector.broadcast %37 : vector<128x1xf32> to vector<128x256xf32>
    %39 = arith.subf %35, %38 : vector<128x256xf32>
    %40 = math.exp %39 : vector<128x256xf32>
    %cst_14 = arith.constant dense<0.000000e+00> : vector<128xf32>
    %41 = vector.multi_reduction <add>, %40, %cst_14 [1] : vector<128x256xf32> to vector<128xf32>
    %42 = vector.shape_cast %41 : vector<128xf32> to vector<128x1xf32>
    %43 = tpu.reciprocal %42 {approx = true} : vector<128x1xf32> -> vector<128x1xf32>
    %44 = vector.broadcast %43 : vector<128x1xf32> to vector<128x256xf32>
    %45 = arith.mulf %40, %44 : vector<128x256xf32>
    %46 = arith.truncf %45 : vector<128x256xf32> to vector<128x256xbf16>
    %cst_15 = arith.constant dense<0.000000e+00> : vector<128x16xf32>
    %47 = tpu.matmul %46, %34, %cst_15 {dimension_numbers = #tpu.dot_dimension_numbers<[1], [0], [0], [1], [0, 0, 1, 1], [], []>} : vector<128x256xbf16>, vector<256x16xbf16>, vector<128x16xf32> -> vector<128x16xf32>
    %48 = arith.truncf %47 : vector<128x16xf32> to vector<128x16xbf16>
    %c16 = arith.constant 16 : index
    %c0_16 = arith.constant 0 : index
    %49 = vector.load %arg4[%c16, %c0_16] : memref<128x128xbf16, #tpu.memory_space<vmem>>, vector<16x128xbf16>
    %cst_17 = arith.constant dense<0.000000e+00> : vector<128x128xf32>
    %50 = tpu.matmul %48, %49, %cst_17 {dimension_numbers = #tpu.dot_dimension_numbers<[1], [0], [0], [1], [0, 0, 1, 1], [], []>} : vector<128x16xbf16>, vector<16x128xbf16>, vector<128x128xf32> -> vector<128x128xf32>
    %51 = arith.addf %31, %50 : vector<128x128xf32>
    %52 = vector.extract_strided_slice %6 {offsets = [0, 32], sizes = [128, 16], strides = [1, 1]} : vector<128x128xbf16> to vector<128x16xbf16>
    %53 = vector.extract_strided_slice %7 {offsets = [0, 32], sizes = [256, 16], strides = [1, 1]} : vector<256x128xbf16> to vector<256x16xbf16>
    %54 = vector.extract_strided_slice %8 {offsets = [0, 32], sizes = [256, 16], strides = [1, 1]} : vector<256x128xbf16> to vector<256x16xbf16>
    %cst_18 = arith.constant dense<0.000000e+00> : vector<128x256xf32>
    %55 = tpu.matmul %52, %53, %cst_18 {dimension_numbers = #tpu.dot_dimension_numbers<[1], [1], [0], [0], [0, 0, 1, 0], [], []>} : vector<128x16xbf16>, vector<256x16xbf16>, vector<128x256xf32> -> vector<128x256xf32>
    %cst_19 = arith.constant dense<0xFF800000> : vector<128xf32>
    %56 = vector.multi_reduction <maximumf>, %55, %cst_19 [1] : vector<128x256xf32> to vector<128xf32>
    %57 = vector.shape_cast %56 : vector<128xf32> to vector<128x1xf32>
    %58 = vector.broadcast %57 : vector<128x1xf32> to vector<128x256xf32>
    %59 = arith.subf %55, %58 : vector<128x256xf32>
    %60 = math.exp %59 : vector<128x256xf32>
    %cst_20 = arith.constant dense<0.000000e+00> : vector<128xf32>
    %61 = vector.multi_reduction <add>, %60, %cst_20 [1] : vector<128x256xf32> to vector<128xf32>
    %62 = vector.shape_cast %61 : vector<128xf32> to vector<128x1xf32>
    %63 = tpu.reciprocal %62 {approx = true} : vector<128x1xf32> -> vector<128x1xf32>
    %64 = vector.broadcast %63 : vector<128x1xf32> to vector<128x256xf32>
    %65 = arith.mulf %60, %64 : vector<128x256xf32>
    %66 = arith.truncf %65 : vector<128x256xf32> to vector<128x256xbf16>
    %cst_21 = arith.constant dense<0.000000e+00> : vector<128x16xf32>
    %67 = tpu.matmul %66, %54, %cst_21 {dimension_numbers = #tpu.dot_dimension_numbers<[1], [0], [0], [1], [0, 0, 1, 1], [], []>} : vector<128x256xbf16>, vector<256x16xbf16>, vector<128x16xf32> -> vector<128x16xf32>
    %68 = arith.truncf %67 : vector<128x16xf32> to vector<128x16xbf16>
    %c32 = arith.constant 32 : index
    %c0_22 = arith.constant 0 : index
    %69 = vector.load %arg4[%c32, %c0_22] : memref<128x128xbf16, #tpu.memory_space<vmem>>, vector<16x128xbf16>
    %cst_23 = arith.constant dense<0.000000e+00> : vector<128x128xf32>
    %70 = tpu.matmul %68, %69, %cst_23 {dimension_numbers = #tpu.dot_dimension_numbers<[1], [0], [0], [1], [0, 0, 1, 1], [], []>} : vector<128x16xbf16>, vector<16x128xbf16>, vector<128x128xf32> -> vector<128x128xf32>
    %71 = arith.addf %51, %70 : vector<128x128xf32>
    %72 = vector.extract_strided_slice %6 {offsets = [0, 48], sizes = [128, 16], strides = [1, 1]} : vector<128x128xbf16> to vector<128x16xbf16>
    %73 = vector.extract_strided_slice %7 {offsets = [0, 48], sizes = [256, 16], strides = [1, 1]} : vector<256x128xbf16> to vector<256x16xbf16>
    %74 = vector.extract_strided_slice %8 {offsets = [0, 48], sizes = [256, 16], strides = [1, 1]} : vector<256x128xbf16> to vector<256x16xbf16>
    %cst_24 = arith.constant dense<0.000000e+00> : vector<128x256xf32>
    %75 = tpu.matmul %72, %73, %cst_24 {dimension_numbers = #tpu.dot_dimension_numbers<[1], [1], [0], [0], [0, 0, 1, 0], [], []>} : vector<128x16xbf16>, vector<256x16xbf16>, vector<128x256xf32> -> vector<128x256xf32>
    %cst_25 = arith.constant dense<0xFF800000> : vector<128xf32>
    %76 = vector.multi_reduction <maximumf>, %75, %cst_25 [1] : vector<128x256xf32> to vector<128xf32>
    %77 = vector.shape_cast %76 : vector<128xf32> to vector<128x1xf32>
    %78 = vector.broadcast %77 : vector<128x1xf32> to vector<128x256xf32>
    %79 = arith.subf %75, %78 : vector<128x256xf32>
    %80 = math.exp %79 : vector<128x256xf32>
    %cst_26 = arith.constant dense<0.000000e+00> : vector<128xf32>
    %81 = vector.multi_reduction <add>, %80, %cst_26 [1] : vector<128x256xf32> to vector<128xf32>
    %82 = vector.shape_cast %81 : vector<128xf32> to vector<128x1xf32>
    %83 = tpu.reciprocal %82 {approx = true} : vector<128x1xf32> -> vector<128x1xf32>
    %84 = vector.broadcast %83 : vector<128x1xf32> to vector<128x256xf32>
    %85 = arith.mulf %80, %84 : vector<128x256xf32>
    %86 = arith.truncf %85 : vector<128x256xf32> to vector<128x256xbf16>
    %cst_27 = arith.constant dense<0.000000e+00> : vector<128x16xf32>
    %87 = tpu.matmul %86, %74, %cst_27 {dimension_numbers = #tpu.dot_dimension_numbers<[1], [0], [0], [1], [0, 0, 1, 1], [], []>} : vector<128x256xbf16>, vector<256x16xbf16>, vector<128x16xf32> -> vector<128x16xf32>
    %88 = arith.truncf %87 : vector<128x16xf32> to vector<128x16xbf16>
    %c48 = arith.constant 48 : index
    %c0_28 = arith.constant 0 : index
    %89 = vector.load %arg4[%c48, %c0_28] : memref<128x128xbf16, #tpu.memory_space<vmem>>, vector<16x128xbf16>
    %cst_29 = arith.constant dense<0.000000e+00> : vector<128x128xf32>
    %90 = tpu.matmul %88, %89, %cst_29 {dimension_numbers = #tpu.dot_dimension_numbers<[1], [0], [0], [1], [0, 0, 1, 1], [], []>} : vector<128x16xbf16>, vector<16x128xbf16>, vector<128x128xf32> -> vector<128x128xf32>
    %91 = arith.addf %71, %90 : vector<128x128xf32>
    %92 = vector.extract_strided_slice %6 {offsets = [0, 64], sizes = [128, 16], strides = [1, 1]} : vector<128x128xbf16> to vector<128x16xbf16>
    %93 = vector.extract_strided_slice %7 {offsets = [0, 64], sizes = [256, 16], strides = [1, 1]} : vector<256x128xbf16> to vector<256x16xbf16>
    %94 = vector.extract_strided_slice %8 {offsets = [0, 64], sizes = [256, 16], strides = [1, 1]} : vector<256x128xbf16> to vector<256x16xbf16>
    %cst_30 = arith.constant dense<0.000000e+00> : vector<128x256xf32>
    %95 = tpu.matmul %92, %93, %cst_30 {dimension_numbers = #tpu.dot_dimension_numbers<[1], [1], [0], [0], [0, 0, 1, 0], [], []>} : vector<128x16xbf16>, vector<256x16xbf16>, vector<128x256xf32> -> vector<128x256xf32>
    %cst_31 = arith.constant dense<0xFF800000> : vector<128xf32>
    %96 = vector.multi_reduction <maximumf>, %95, %cst_31 [1] : vector<128x256xf32> to vector<128xf32>
    %97 = vector.shape_cast %96 : vector<128xf32> to vector<128x1xf32>
    %98 = vector.broadcast %97 : vector<128x1xf32> to vector<128x256xf32>
    %99 = arith.subf %95, %98 : vector<128x256xf32>
    %100 = math.exp %99 : vector<128x256xf32>
    %cst_32 = arith.constant dense<0.000000e+00> : vector<128xf32>
    %101 = vector.multi_reduction <add>, %100, %cst_32 [1] : vector<128x256xf32> to vector<128xf32>
    %102 = vector.shape_cast %101 : vector<128xf32> to vector<128x1xf32>
    %103 = tpu.reciprocal %102 {approx = true} : vector<128x1xf32> -> vector<128x1xf32>
    %104 = vector.broadcast %103 : vector<128x1xf32> to vector<128x256xf32>
    %105 = arith.mulf %100, %104 : vector<128x256xf32>
    %106 = arith.truncf %105 : vector<128x256xf32> to vector<128x256xbf16>
    %cst_33 = arith.constant dense<0.000000e+00> : vector<128x16xf32>
    %107 = tpu.matmul %106, %94, %cst_33 {dimension_numbers = #tpu.dot_dimension_numbers<[1], [0], [0], [1], [0, 0, 1, 1], [], []>} : vector<128x256xbf16>, vector<256x16xbf16>, vector<128x16xf32> -> vector<128x16xf32>
    %108 = arith.truncf %107 : vector<128x16xf32> to vector<128x16xbf16>
    %c64 = arith.constant 64 : index
    %c0_34 = arith.constant 0 : index
    %109 = vector.load %arg4[%c64, %c0_34] : memref<128x128xbf16, #tpu.memory_space<vmem>>, vector<16x128xbf16>
    %cst_35 = arith.constant dense<0.000000e+00> : vector<128x128xf32>
    %110 = tpu.matmul %108, %109, %cst_35 {dimension_numbers = #tpu.dot_dimension_numbers<[1], [0], [0], [1], [0, 0, 1, 1], [], []>} : vector<128x16xbf16>, vector<16x128xbf16>, vector<128x128xf32> -> vector<128x128xf32>
    %111 = arith.addf %91, %110 : vector<128x128xf32>
    %112 = vector.extract_strided_slice %6 {offsets = [0, 80], sizes = [128, 16], strides = [1, 1]} : vector<128x128xbf16> to vector<128x16xbf16>
    %113 = vector.extract_strided_slice %7 {offsets = [0, 80], sizes = [256, 16], strides = [1, 1]} : vector<256x128xbf16> to vector<256x16xbf16>
    %114 = vector.extract_strided_slice %8 {offsets = [0, 80], sizes = [256, 16], strides = [1, 1]} : vector<256x128xbf16> to vector<256x16xbf16>
    %cst_36 = arith.constant dense<0.000000e+00> : vector<128x256xf32>
    %115 = tpu.matmul %112, %113, %cst_36 {dimension_numbers = #tpu.dot_dimension_numbers<[1], [1], [0], [0], [0, 0, 1, 0], [], []>} : vector<128x16xbf16>, vector<256x16xbf16>, vector<128x256xf32> -> vector<128x256xf32>
    %cst_37 = arith.constant dense<0xFF800000> : vector<128xf32>
    %116 = vector.multi_reduction <maximumf>, %115, %cst_37 [1] : vector<128x256xf32> to vector<128xf32>
    %117 = vector.shape_cast %116 : vector<128xf32> to vector<128x1xf32>
    %118 = vector.broadcast %117 : vector<128x1xf32> to vector<128x256xf32>
    %119 = arith.subf %115, %118 : vector<128x256xf32>
    %120 = math.exp %119 : vector<128x256xf32>
    %cst_38 = arith.constant dense<0.000000e+00> : vector<128xf32>
    %121 = vector.multi_reduction <add>, %120, %cst_38 [1] : vector<128x256xf32> to vector<128xf32>
    %122 = vector.shape_cast %121 : vector<128xf32> to vector<128x1xf32>
    %123 = tpu.reciprocal %122 {approx = true} : vector<128x1xf32> -> vector<128x1xf32>
    %124 = vector.broadcast %123 : vector<128x1xf32> to vector<128x256xf32>
    %125 = arith.mulf %120, %124 : vector<128x256xf32>
    %126 = arith.truncf %125 : vector<128x256xf32> to vector<128x256xbf16>
    %cst_39 = arith.constant dense<0.000000e+00> : vector<128x16xf32>
    %127 = tpu.matmul %126, %114, %cst_39 {dimension_numbers = #tpu.dot_dimension_numbers<[1], [0], [0], [1], [0, 0, 1, 1], [], []>} : vector<128x256xbf16>, vector<256x16xbf16>, vector<128x16xf32> -> vector<128x16xf32>
    %128 = arith.truncf %127 : vector<128x16xf32> to vector<128x16xbf16>
    %c80 = arith.constant 80 : index
    %c0_40 = arith.constant 0 : index
    %129 = vector.load %arg4[%c80, %c0_40] : memref<128x128xbf16, #tpu.memory_space<vmem>>, vector<16x128xbf16>
    %cst_41 = arith.constant dense<0.000000e+00> : vector<128x128xf32>
    %130 = tpu.matmul %128, %129, %cst_41 {dimension_numbers = #tpu.dot_dimension_numbers<[1], [0], [0], [1], [0, 0, 1, 1], [], []>} : vector<128x16xbf16>, vector<16x128xbf16>, vector<128x128xf32> -> vector<128x128xf32>
    %131 = arith.addf %111, %130 : vector<128x128xf32>
    %132 = vector.extract_strided_slice %6 {offsets = [0, 96], sizes = [128, 16], strides = [1, 1]} : vector<128x128xbf16> to vector<128x16xbf16>
    %133 = vector.extract_strided_slice %7 {offsets = [0, 96], sizes = [256, 16], strides = [1, 1]} : vector<256x128xbf16> to vector<256x16xbf16>
    %134 = vector.extract_strided_slice %8 {offsets = [0, 96], sizes = [256, 16], strides = [1, 1]} : vector<256x128xbf16> to vector<256x16xbf16>
    %cst_42 = arith.constant dense<0.000000e+00> : vector<128x256xf32>
    %135 = tpu.matmul %132, %133, %cst_42 {dimension_numbers = #tpu.dot_dimension_numbers<[1], [1], [0], [0], [0, 0, 1, 0], [], []>} : vector<128x16xbf16>, vector<256x16xbf16>, vector<128x256xf32> -> vector<128x256xf32>
    %cst_43 = arith.constant dense<0xFF800000> : vector<128xf32>
    %136 = vector.multi_reduction <maximumf>, %135, %cst_43 [1] : vector<128x256xf32> to vector<128xf32>
    %137 = vector.shape_cast %136 : vector<128xf32> to vector<128x1xf32>
    %138 = vector.broadcast %137 : vector<128x1xf32> to vector<128x256xf32>
    %139 = arith.subf %135, %138 : vector<128x256xf32>
    %140 = math.exp %139 : vector<128x256xf32>
    %cst_44 = arith.constant dense<0.000000e+00> : vector<128xf32>
    %141 = vector.multi_reduction <add>, %140, %cst_44 [1] : vector<128x256xf32> to vector<128xf32>
    %142 = vector.shape_cast %141 : vector<128xf32> to vector<128x1xf32>
    %143 = tpu.reciprocal %142 {approx = true} : vector<128x1xf32> -> vector<128x1xf32>
    %144 = vector.broadcast %143 : vector<128x1xf32> to vector<128x256xf32>
    %145 = arith.mulf %140, %144 : vector<128x256xf32>
    %146 = arith.truncf %145 : vector<128x256xf32> to vector<128x256xbf16>
    %cst_45 = arith.constant dense<0.000000e+00> : vector<128x16xf32>
    %147 = tpu.matmul %146, %134, %cst_45 {dimension_numbers = #tpu.dot_dimension_numbers<[1], [0], [0], [1], [0, 0, 1, 1], [], []>} : vector<128x256xbf16>, vector<256x16xbf16>, vector<128x16xf32> -> vector<128x16xf32>
    %148 = arith.truncf %147 : vector<128x16xf32> to vector<128x16xbf16>
    %c96 = arith.constant 96 : index
    %c0_46 = arith.constant 0 : index
    %149 = vector.load %arg4[%c96, %c0_46] : memref<128x128xbf16, #tpu.memory_space<vmem>>, vector<16x128xbf16>
    %cst_47 = arith.constant dense<0.000000e+00> : vector<128x128xf32>
    %150 = tpu.matmul %148, %149, %cst_47 {dimension_numbers = #tpu.dot_dimension_numbers<[1], [0], [0], [1], [0, 0, 1, 1], [], []>} : vector<128x16xbf16>, vector<16x128xbf16>, vector<128x128xf32> -> vector<128x128xf32>
    %151 = arith.addf %131, %150 : vector<128x128xf32>
    %152 = vector.extract_strided_slice %6 {offsets = [0, 112], sizes = [128, 16], strides = [1, 1]} : vector<128x128xbf16> to vector<128x16xbf16>
    %153 = vector.extract_strided_slice %7 {offsets = [0, 112], sizes = [256, 16], strides = [1, 1]} : vector<256x128xbf16> to vector<256x16xbf16>
    %154 = vector.extract_strided_slice %8 {offsets = [0, 112], sizes = [256, 16], strides = [1, 1]} : vector<256x128xbf16> to vector<256x16xbf16>
    %cst_48 = arith.constant dense<0.000000e+00> : vector<128x256xf32>
    %155 = tpu.matmul %152, %153, %cst_48 {dimension_numbers = #tpu.dot_dimension_numbers<[1], [1], [0], [0], [0, 0, 1, 0], [], []>} : vector<128x16xbf16>, vector<256x16xbf16>, vector<128x256xf32> -> vector<128x256xf32>
    %cst_49 = arith.constant dense<0xFF800000> : vector<128xf32>
    %156 = vector.multi_reduction <maximumf>, %155, %cst_49 [1] : vector<128x256xf32> to vector<128xf32>
    %157 = vector.shape_cast %156 : vector<128xf32> to vector<128x1xf32>
    %158 = vector.broadcast %157 : vector<128x1xf32> to vector<128x256xf32>
    %159 = arith.subf %155, %158 : vector<128x256xf32>
    %160 = math.exp %159 : vector<128x256xf32>
    %cst_50 = arith.constant dense<0.000000e+00> : vector<128xf32>
    %161 = vector.multi_reduction <add>, %160, %cst_50 [1] : vector<128x256xf32> to vector<128xf32>
    %162 = vector.shape_cast %161 : vector<128xf32> to vector<128x1xf32>
    %163 = tpu.reciprocal %162 {approx = true} : vector<128x1xf32> -> vector<128x1xf32>
    %164 = vector.broadcast %163 : vector<128x1xf32> to vector<128x256xf32>
    %165 = arith.mulf %160, %164 : vector<128x256xf32>
    %166 = arith.truncf %165 : vector<128x256xf32> to vector<128x256xbf16>
    %cst_51 = arith.constant dense<0.000000e+00> : vector<128x16xf32>
    %167 = tpu.matmul %166, %154, %cst_51 {dimension_numbers = #tpu.dot_dimension_numbers<[1], [0], [0], [1], [0, 0, 1, 1], [], []>} : vector<128x256xbf16>, vector<256x16xbf16>, vector<128x16xf32> -> vector<128x16xf32>
    %168 = arith.truncf %167 : vector<128x16xf32> to vector<128x16xbf16>
    %c112 = arith.constant 112 : index
    %c0_52 = arith.constant 0 : index
    %169 = vector.load %arg4[%c112, %c0_52] : memref<128x128xbf16, #tpu.memory_space<vmem>>, vector<16x128xbf16>
    %cst_53 = arith.constant dense<0.000000e+00> : vector<128x128xf32>
    %170 = tpu.matmul %168, %169, %cst_53 {dimension_numbers = #tpu.dot_dimension_numbers<[1], [0], [0], [1], [0, 0, 1, 1], [], []>} : vector<128x16xbf16>, vector<16x128xbf16>, vector<128x128xf32> -> vector<128x128xf32>
    %171 = arith.addf %151, %170 : vector<128x128xf32>
    %c0_54 = arith.constant 0 : index
    %c0_55 = arith.constant 0 : index
    %c0_56 = arith.constant 0 : index
    %172 = vector.load %arg5[%c0_54, %c0_55, %c0_56] : memref<1x128x128xf32, #tpu.memory_space<vmem>>, vector<1x128x128xf32>
    %173 = vector.shape_cast %172 : vector<1x128x128xf32> to vector<128x128xf32>
    %174 = vector.shape_cast %171 : vector<128x128xf32> to vector<1x128x128xf32>
    tpu.vector_store %arg5[%c0_54, %c0_55, %c0_56], %174 {strides = array<i32>} : memref<1x128x128xf32, #tpu.memory_space<vmem>>, vector<1x128x128xf32>,
    return
  }
  func.func @transform_0(%arg0: i32, %arg1: i32) -> (i32, i32, i32) {
    %c0_i32 = arith.constant 0 : i32
    %c0_i32_0 = arith.constant 0 : i32
    %c0_i32_1 = arith.constant 0 : i32
    return %arg0, %c0_i32, %c0_i32_0 : i32, i32, i32
  }
  func.func @transform_1(%arg0: i32, %arg1: i32) -> (i32, i32) {
    %c0_i32 = arith.constant 0 : i32
    %c0_i32_0 = arith.constant 0 : i32
    %c0_i32_1 = arith.constant 0 : i32
    return %c0_i32, %c0_i32_0 : i32, i32
  }
  func.func @transform_2(%arg0: i32, %arg1: i32) -> (i32, i32) {
    %c0_i32 = arith.constant 0 : i32
    %c0_i32_0 = arith.constant 0 : i32
    %c0_i32_1 = arith.constant 0 : i32
    return %c0_i32, %c0_i32_0 : i32, i32
  }
  func.func @transform_3(%arg0: i32, %arg1: i32) -> (i32, i32, i32) {
    %c0_i32 = arith.constant 0 : i32
    %c0_i32_0 = arith.constant 0 : i32
    return %arg0, %arg1, %c0_i32 : i32, i32, i32
  }
}

</mosaic_0001>

<llo_original>
// kernel: tpu_custom_call.1
$region0: #{tpu_custom_call.1}
  #allocation0 [shape = 'u32[]', space=smem, size = 0x4, offset = 0x4, fixed_abs, tag = 'smem constant byte address 0x4 - core index']
  #allocation1 [shape = 'u32[144,128]{1,0:T(1,128)}', space=vmem, size = 0x12000, scoped, tag = 'internal scratch']
  #allocation2 [shape = 'f32[304,128]{1,0:T(8,128)}', space=vmem, size = 0x26000, scoped, tag = 'scratch operand']
  #allocation3 [shape = 'bf16[256,128]{1,0:T(8,128)(2,1)}', space=vmem, size = 0x10000, scoped, tag = 'scratch operand']
  #allocation4 [shape = 'bf16[256,128]{1,0:T(8,128)(2,1)}', space=vmem, size = 0x10000, scoped, tag = 'scratch operand']
  #allocation5 [shape = 'bf16[256,128]{1,0:T(8,128)(2,1)}', space=vmem, size = 0x10000, scoped, tag = 'scratch operand']
  %s0 = inlined_call_operand.hbm [shape: f32[2,256,128], index: 0, kind: input, shape index: {}]
  %s1 = inlined_call_operand.hbm [shape: f32[31,128], index: 1, kind: input, shape index: {}]
  %s2 = inlined_call_operand.hbm [shape: bf16[128,128], index: 2, kind: input, shape index: {}]
  %s3 = inlined_call_operand.hbm [shape: f32[2,256,128], index: 3, kind: output, shape index: {}]
  %s4 = sld [smem:[#allocation0]]
  $region61: #{tpu_custom_call.1} parent=0
    _
  %s6 = ssub.s32 1, %s4
  %s7 = scalar_select 0, %s6, %s4
  $region1: #{tpu_custom_call.1} parent=0
    #allocation6 [shape = 'u8[262144]{0}', space=vmem, size = 0x40000, scoped, tag = 'input window, operand 0']
    #allocation7 [shape = 's32[2]{0}', space=sflag, size = 0x8, scoped, tag = 'scoped memory for tpu_custom_call.1']
    #allocation8 [shape = 's32[2]{0}', space=sflag, size = 0x8, scoped, tag = 'scoped memory for tpu_custom_call.1']
    #allocation9 [shape = 'u8[16384]{0}', space=vmem, size = 0x4000, scoped, tag = 'input window, operand 1, single buffered']
    #allocation10 [shape = 's32[1]{0}', space=sflag, size = 0x4, scoped, tag = 'scoped memory for tpu_custom_call.1']
    #allocation11 [shape = 'u8[32768]{0}', space=vmem, size = 0x8000, scoped, tag = 'input window, operand 2, single buffered']
    #allocation12 [shape = 'u8[131072]{0}', space=vmem, size = 0x20000, scoped, tag = 'output window, operand 0']
    %8 = vsyncpa [#allocation7], 0
    %s9 = scalar_lea.sflag [#allocation7], 1
    %10 = vsyncpa %s9, 0
    %11 = vsyncpa [#allocation10], 0
    %12 = vsyncpa [#allocation8], 0
    %s13 = scalar_lea.sflag [#allocation8], 1
    %14 = vsyncpa %s13, 0
    loop: start=0, step=1, limit=6
    $region2: #{tpu_custom_call.1} parent=1 // loop_pre_header
      _
    $region3: #{tpu_custom_call.1} parent=1 // loop_header
      %s16 = sphi 0, %s20
      %p17 = scmp.ge.s32.totalorder %s16, 6
      %s23 = sphi 0, %s35
      %s24 = sphi 0, %s31
      %s25 = sphi 0, %s23
      %s26 = sphi 0, %s24
      %s27 = sphi 0, %s25
      %s28 = sphi 0, %s26
      %s38 = sphi 0, %s40
      %s41 = sphi 0, %s38
      %s42 = sphi 0, %s41
      %s58 = sphi 0, %s42
      %s62 = sphi 0, %s62
      %s64 = sphi 0, %s62
      %s65 = sphi 0, %s64
      %s79 = sphi 0, %s65
      %s83 = sphi 0, %s83
      %s85 = sphi 0, %s83
      %s86 = sphi 0, %s85
      %s100 = sphi 0, %s86
      %s108 = sphi 0, %s110
      %s111 = sphi 0, %s108
      %s112 = sphi 0, %s111
      %s128 = sphi 0, %s112
    $region4: #{tpu_custom_call.1} parent=1 // loop_header_branch
      %19 = sbr.rel (%p17) target = $region8
    $region5: #{tpu_custom_call.1} parent=1 // loop_body
      %s21 = ssub.s32 %s16, 1
      %s22 = ssub.s32 %s16, 2
      %s29 = sadd.s32 1, %s24
      %p30 = scmp.ge.s32.totalorder %s29, 2
      %s31 = scalar_select %p30, 0, %s29
      %s32 = sadd.s32 1, %s23
      %s33 = scalar_select %p30, %s32, %s23
      %p34 = scmp.ge.s32.totalorder %s33, 2
      %s35 = scalar_select %p34, 0, %s33
      %s36 = ssub.s32 %s23, %s35
      %p37 = scmp.eq.s32.totalorder %s36, 0
      %s39 = sadd.s32 %s38, 1
      %s40 = scalar_select %p37, %s38, %s39
      %p43 = pneg %p37
      %p44 = scmp.eq.s32.totalorder %s16, 3
      %p45 = por %p43, %p44
      %p46 = scmp.ne.s32.totalorder %s38, %s41
      %p47 = scmp.eq.s32.totalorder %s16, 0
      %p48 = por %p46, %p47
      %p49 = scmp.ne.s32.totalorder %s38, %s41
      %p50 = scmp.eq.s32.totalorder %s21, 3
      %p51 = por %p49, %p50
      %p52 = scmp.ne.s32.totalorder %s41, %s42
      %p53 = scmp.eq.s32.totalorder %s21, 0
      %p54 = por %p52, %p53
      %p55 = scmp.ne.s32.totalorder %s41, %s42
      %p56 = scmp.eq.s32.totalorder %s22, 3
      %p57 = por %p55, %p56
      %p59 = scmp.ne.s32.totalorder %s42, %s58
      %p60 = scmp.eq.s32.totalorder %s22, 0
      %p61 = por %p59, %p60
      %s63 = sadd.s32 %s62, 1
      %p66 = scmp.eq.s32.totalorder %s16, 3
      %p67 = scmp.ne.s32.totalorder %s62, %s64
      %p68 = scmp.eq.s32.totalorder %s16, 0
      %p69 = por %p67, %p68
      %p70 = scmp.ne.s32.totalorder %s62, %s64
      %p71 = scmp.eq.s32.totalorder %s21, 3
      %p72 = por %p70, %p71
      %p73 = scmp.ne.s32.totalorder %s64, %s65
      %p74 = scmp.eq.s32.totalorder %s21, 0
      %p75 = por %p73, %p74
      %p76 = scmp.ne.s32.totalorder %s64, %s65
      %p77 = scmp.eq.s32.totalorder %s22, 3
      %p78 = por %p76, %p77
      %p80 = scmp.ne.s32.totalorder %s65, %s79
      %p81 = scmp.eq.s32.totalorder %s22, 0
      %p82 = por %p80, %p81
      %s84 = sadd.s32 %s83, 1
      %p87 = scmp.eq.s32.totalorder %s16, 3
      %p88 = scmp.ne.s32.totalorder %s83, %s85
      %p89 = scmp.eq.s32.totalorder %s16, 0
      %p90 = por %p88, %p89
      %p91 = scmp.ne.s32.totalorder %s83, %s85
      %p92 = scmp.eq.s32.totalorder %s21, 3
      %p93 = por %p91, %p92
      %p94 = scmp.ne.s32.totalorder %s85, %s86
      %p95 = scmp.eq.s32.totalorder %s21, 0
      %p96 = por %p94, %p95
      %p97 = scmp.ne.s32.totalorder %s85, %s86
      %p98 = scmp.eq.s32.totalorder %s22, 3
      %p99 = por %p97, %p98
      %p101 = scmp.ne.s32.totalorder %s86, %s100
      %p102 = scmp.eq.s32.totalorder %s22, 0
      %p103 = por %p101, %p102
      %s104 = ssub.s32 %s23, %s35
      %s105 = ssub.s32 %s24, %s31
      %s106 = sor.u32 %s104, %s105
      %p107 = scmp.eq.s32.totalorder %s106, 0
      %s109 = sadd.s32 %s108, 1
      %s110 = scalar_select %p107, %s108, %s109
      %p113 = pneg %p107
      %p114 = scmp.eq.s32.totalorder %s16, 3
      %p115 = por %p113, %p114
      %p116 = scmp.ne.s32.totalorder %s108, %s111
      %p117 = scmp.eq.s32.totalorder %s16, 0
      %p118 = por %p116, %p117
      %p119 = scmp.ne.s32.totalorder %s108, %s111
      %p120 = scmp.eq.s32.totalorder %s21, 3
      %p121 = por %p119, %p120
      %p122 = scmp.ne.s32.totalorder %s111, %s112
      %p123 = scmp.eq.s32.totalorder %s21, 0
      %p124 = por %p122, %p123
      %p125 = scmp.ne.s32.totalorder %s111, %s112
      %p126 = scmp.eq.s32.totalorder %s22, 3
      %p127 = por %p125, %p126
      %p129 = scmp.ne.s32.totalorder %s112, %s128
      %p130 = scmp.eq.s32.totalorder %s22, 0
      %p131 = por %p129, %p130
      %p132 = scmp.le.s32.totalorder 1, %s16
      %p133 = scmp.lt.s32.totalorder %s16, 5
      %p134 = pnand %p132, %p133
      %p135 = pneg %p134
      // Predicated region
      $region9: #{tpu_custom_call.1} parent=5 // pred_check
        _
      $region10: #{tpu_custom_call.1} parent=5 // pred_check_branch
        %137 = sbr.rel (%p134) target = $region12
      $region11: #{tpu_custom_call.1} parent=5 // pred_region
        %s138 = ssub.s32 %s16, 1
        // Predicated region
        $region13: #{tpu_custom_call.1} parent=11 // pred_check
          %p139 = pneg %p75
        $region14: #{tpu_custom_call.1} parent=11 // pred_check_branch
          %141 = sbr.rel (%p139) target = $region16
        $region15: #{tpu_custom_call.1} parent=11 // pred_region
          %s143 = ssub.s32 512, 512
          %144 = vsyncadd [#allocation10], %s143
          %s145 = sshll.u32 [#allocation9], 4
          %s146 = int_to_ptr.vmem [resolvable:$true] %s145
          %151 = dma.hbm_to_vmem [thread:$0]  %s1, 512, %s146, [#allocation10], 128, 128, 8
        $region16: #{tpu_custom_call.1} parent=11 // pred_fallthru
          _
        // Predicated region
        $region17: #{tpu_custom_call.1} parent=11 // pred_check
          %p152 = pneg %p96
        $region18: #{tpu_custom_call.1} parent=11 // pred_check_branch
          %154 = sbr.rel (%p152) target = $region20
        $region19: #{tpu_custom_call.1} parent=11 // pred_region
          %s156 = ssub.s32 1024, 1024
          %157 = vsyncadd [#allocation10], %s156
          %s158 = sshll.u32 [#allocation11], 4
          %s159 = int_to_ptr.vmem [resolvable:$true] %s158
          %164 = dma.hbm_to_vmem [thread:$0]  %s2, 1024, %s159, [#allocation10], 64, 64, 4
        $region20: #{tpu_custom_call.1} parent=11 // pred_fallthru
          _
      $region12: #{tpu_custom_call.1} parent=5 // pred_fallthru
        _
      %p165 = scmp.lt.s32.totalorder %s16, 4
      // Predicated region
      $region21: #{tpu_custom_call.1} parent=5 // pred_check
        %p166 = pneg %p165
      $region22: #{tpu_custom_call.1} parent=5 // pred_check_branch
        %168 = sbr.rel (%p166) target = $region24
      $region23: #{tpu_custom_call.1} parent=5 // pred_region
        // Predicated region
        $region25: #{tpu_custom_call.1} parent=23 // pred_check
          %p169 = pneg %p48
        $region26: #{tpu_custom_call.1} parent=23 // pred_check_branch
          %171 = sbr.rel (%p169) target = $region28
        $region27: #{tpu_custom_call.1} parent=23 // pred_region
          %s172 = sand.u32 %s38, 1
          %s173 = scalar_lea.sflag [#allocation7], %s172
          %s174 = sand.u32 %s38, 1
          %s175 = smul.addr %s174, 256
          %s176 = scalar_lea.vmem [#allocation6], %s175
          %s178 = ssub.s32 4096, 4096
          %179 = vsyncadd %s173, %s178
          %s180 = smul.addr %s23, 32
          %s181 = smul.addr %s180, 128
          %s182 = scalar_lea.hbm %s0, %s181
          %s183 = sshll.u32 %s176, 4
          %s184 = int_to_ptr.vmem [resolvable:$true] %s183
          %189 = dma.hbm_to_vmem [thread:$0]  %s182, 4096, %s184, %s173, 128, 128, 8
        $region28: #{tpu_custom_call.1} parent=23 // pred_fallthru
          _
      $region24: #{tpu_custom_call.1} parent=5 // pred_fallthru
        _
      %p190 = scmp.le.s32.totalorder 1, %s16
      %p191 = scmp.lt.s32.totalorder %s16, 5
      %p192 = pnand %p190, %p191
      %p193 = pneg %p192
      // Predicated region
      $region29: #{tpu_custom_call.1} parent=5 // pred_check
        _
      $region30: #{tpu_custom_call.1} parent=5 // pred_check_branch
        %195 = sbr.rel (%p192) target = $region32
      $region31: #{tpu_custom_call.1} parent=5 // pred_region
        %s196 = ssub.s32 %s16, 1
        %s197 = sand.u32 %s41, 1
        %s198 = scalar_lea.sflag [#allocation7], %s197
        %s199 = sand.u32 %s41, 1
        %s200 = smul.addr %s199, 256
        %s201 = scalar_lea.vmem [#allocation6], %s200
        // Predicated region
        $region33: #{tpu_custom_call.1} parent=31 // pred_check
          %p202 = pneg %p54
        $region34: #{tpu_custom_call.1} parent=31 // pred_check_branch
          %204 = sbr.rel (%p202) target = $region36
        $region35: #{tpu_custom_call.1} parent=31 // pred_region
          %205 = dma.done %s198, 4096
        $region36: #{tpu_custom_call.1} parent=31 // pred_fallthru
          _
        // Predicated region
        $region37: #{tpu_custom_call.1} parent=31 // pred_check
          %p206 = pneg %p75
        $region38: #{tpu_custom_call.1} parent=31 // pred_check_branch
          %208 = sbr.rel (%p206) target = $region40
        $region39: #{tpu_custom_call.1} parent=31 // pred_region
          %209 = dma.done [#allocation10], 512
        $region40: #{tpu_custom_call.1} parent=31 // pred_fallthru
          _
        // Predicated region
        $region41: #{tpu_custom_call.1} parent=31 // pred_check
          %p210 = pneg %p96
        $region42: #{tpu_custom_call.1} parent=31 // pred_check_branch
          %212 = sbr.rel (%p210) target = $region44
        $region43: #{tpu_custom_call.1} parent=31 // pred_region
          %213 = dma.done [#allocation10], 1024
        $region44: #{tpu_custom_call.1} parent=31 // pred_fallthru
          _
        %s214 = sand.u32 %s41, 1
        %s215 = scalar_lea.sflag [#allocation7], %s214
        %s216 = sand.u32 %s41, 1
        %s217 = smul.addr %s216, 256
        %s218 = scalar_lea.vmem [#allocation6], %s217
        %p219 = pneg %p54
        %p220 = pneg %p51
        %p221 = pneg %p75
        %p222 = pneg %p72
        %p223 = pneg %p96
        %p224 = pneg %p93
        %p225 = pneg %p124
        %p226 = pneg %p121
        %s227 = sand.u32 %s111, 1
        %s228 = scalar_lea.sflag [#allocation8], %s227
        %s229 = sand.u32 %s111, 1
        %s230 = smul.addr %s229, 128
        %s231 = scalar_lea.vmem [#allocation12], %s230
        %s232 = smul.u32 16, %s26
        %p234 = scmp.eq.s32.totalorder %s26, 0
        // Predicated region
        $region45: #{tpu_custom_call.1} parent=31 // pred_check
          %p235 = pneg %p234
        $region46: #{tpu_custom_call.1} parent=31 // pred_check_branch
          %237 = sbr.rel (%p235) target = $region48
        $region47: #{tpu_custom_call.1} parent=31 // pred_region
          %238 = vst [vmem:[#allocation2] sm:$0xff] 0.0
          %239 = vst [vmem:[#allocation2 + $0x8] sm:$0xff] 0.0
          %240 = vst [vmem:[#allocation2 + $0x10] sm:$0xff] 0.0
          %241 = vst [vmem:[#allocation2 + $0x118] sm:$0xff] 0.0
          %242 = vst [vmem:[#allocation2 + $0x120] sm:$0xff] 0.0
          %243 = vst [vmem:[#allocation2 + $0x128] sm:$0xff] 0.0
          %v244 = vld [vmem:[%s201] sm:$0xff]
          %v245 = vld [vmem:[%s201 + $0x8] sm:$0xff]
          %v246 = vld [vmem:[%s201 + $0x10] sm:$0xff]
          %v247 = vld [vmem:[%s201 + $0x18] sm:$0xff]
          %v248 = vld [vmem:[%s201 + $0x20] sm:$0xff]
          %v249 = vld [vmem:[%s201 + $0x28] sm:$0xff]
          %v250 = vld [vmem:[%s201 + $0x30] sm:$0xff]
          %v251 = vld [vmem:[%s201 + $0x38] sm:$0xff]
          %v252 = vld [vmem:[%s201 + $0x40] sm:$0xff]
          %v253 = vld [vmem:[%s201 + $0x48] sm:$0xff]
          %v254 = vld [vmem:[%s201 + $0x50] sm:$0xff]
          %v255 = vld [vmem:[%s201 + $0x58] sm:$0xff]
          %v256 = vld [vmem:[%s201 + $0x60] sm:$0xff]
          %v257 = vld [vmem:[%s201 + $0x68] sm:$0xff]
          %v258 = vld [vmem:[%s201 + $0x70] sm:$0xff]
          %v259 = vld [vmem:[%s201 + $0x78] sm:$0xff]
          %v260 = vld [vmem:[%s201 + $0x80] sm:$0xff]
          %v261 = vld [vmem:[%s201 + $0x88] sm:$0xff]
          %v262 = vld [vmem:[%s201 + $0x90] sm:$0xff]
          %v263 = vld [vmem:[%s201 + $0x98] sm:$0xff]
          %v264 = vld [vmem:[%s201 + $0xa0] sm:$0xff]
          %v265 = vld [vmem:[%s201 + $0xa8] sm:$0xff]
          %v266 = vld [vmem:[%s201 + $0xb0] sm:$0xff]
          %v267 = vld [vmem:[%s201 + $0xb8] sm:$0xff]
          %v268 = vld [vmem:[%s201 + $0xc0] sm:$0xff]
          %v269 = vld [vmem:[%s201 + $0xc8] sm:$0xff]
          %v270 = vld [vmem:[%s201 + $0xd0] sm:$0xff]
          %v271 = vld [vmem:[%s201 + $0xd8] sm:$0xff]
          %v272 = vld [vmem:[%s201 + $0xe0] sm:$0xff]
          %v273 = vld [vmem:[%s201 + $0xe8] sm:$0xff]
          %v274 = vld [vmem:[%s201 + $0xf0] sm:$0xff]
          %v275 = vld [vmem:[%s201 + $0xf8] sm:$0xff]
          %276 = vst [vmem:[#allocation2 + $0x18] sm:$0xff] %v244
          %277 = vst [vmem:[#allocation2 + $0x20] sm:$0xff] %v245
          %278 = vst [vmem:[#allocation2 + $0x28] sm:$0xff] %v246
          %279 = vst [vmem:[#allocation2 + $0x30] sm:$0xff] %v247
          %280 = vst [vmem:[#allocation2 + $0x38] sm:$0xff] %v248
          %281 = vst [vmem:[#allocation2 + $0x40] sm:$0xff] %v249
          %282 = vst [vmem:[#allocation2 + $0x48] sm:$0xff] %v250
          %283 = vst [vmem:[#allocation2 + $0x50] sm:$0xff] %v251
          %284 = vst [vmem:[#allocation2 + $0x58] sm:$0xff] %v252
          %285 = vst [vmem:[#allocation2 + $0x60] sm:$0xff] %v253
          %286 = vst [vmem:[#allocation2 + $0x68] sm:$0xff] %v254
          %287 = vst [vmem:[#allocation2 + $0x70] sm:$0xff] %v255
          %288 = vst [vmem:[#allocation2 + $0x78] sm:$0xff] %v256
          %289 = vst [vmem:[#allocation2 + $0x80] sm:$0xff] %v257
          %290 = vst [vmem:[#allocation2 + $0x88] sm:$0xff] %v258
          %291 = vst [vmem:[#allocation2 + $0x90] sm:$0xff] %v259
          %292 = vst [vmem:[#allocation2 + $0x98] sm:$0xff] %v260
          %293 = vst [vmem:[#allocation2 + $0xa0] sm:$0xff] %v261
          %294 = vst [vmem:[#allocation2 + $0xa8] sm:$0xff] %v262
          %295 = vst [vmem:[#allocation2 + $0xb0] sm:$0xff] %v263
          %296 = vst [vmem:[#allocation2 + $0xb8] sm:$0xff] %v264
          %297 = vst [vmem:[#allocation2 + $0xc0] sm:$0xff] %v265
          %298 = vst [vmem:[#allocation2 + $0xc8] sm:$0xff] %v266
          %299 = vst [vmem:[#allocation2 + $0xd0] sm:$0xff] %v267
          %300 = vst [vmem:[#allocation2 + $0xd8] sm:$0xff] %v268
          %301 = vst [vmem:[#allocation2 + $0xe0] sm:$0xff] %v269
          %302 = vst [vmem:[#allocation2 + $0xe8] sm:$0xff] %v270
          %303 = vst [vmem:[#allocation2 + $0xf0] sm:$0xff] %v271
          %304 = vst [vmem:[#allocation2 + $0xf8] sm:$0xff] %v272
          %305 = vst [vmem:[#allocation2 + $0x100] sm:$0xff] %v273
          %306 = vst [vmem:[#allocation2 + $0x108] sm:$0xff] %v274
          %307 = vst [vmem:[#allocation2 + $0x110] sm:$0xff] %v275
          %v308 = vld [vmem:[#allocation9] sm:$0xff]
          %v309 = vld [vmem:[#allocation9 + $0x8] sm:$0xff]
          %v310 = vld [vmem:[#allocation9 + $0x10] sm:$0xff]
          %v311 = vld [vmem:[#allocation9 + $0x18] sm:$0x7f]
          %v312 = vlaneseq
          %v313 = vshrl.u32 %v312, 7
          %v314 = vadd.s32 %v313, 8
          %v315 = vadd.s32 %v313, 16
          %v316 = vadd.s32 %v313, 24
          %v317 = vadd.s32 %v313, 32
          %v318 = vadd.s32 %v313, 40
          %v319 = vadd.s32 %v313, 48
          %v320 = vadd.s32 %v313, 56
          %v321 = vadd.s32 %v313, 64
          %v322 = vadd.s32 %v313, 72
          %v323 = vadd.s32 %v313, 80
          %v324 = vadd.s32 %v313, 88
          %v325 = vadd.s32 %v313, 96
          %v326 = vadd.s32 %v313, 104
          %v327 = vadd.s32 %v313, 112
          %v328 = vadd.s32 %v313, 120
          %v329 = vadd.s32 %v313, 128
          %v330 = vadd.s32 %v313, 136
          %v331 = vadd.s32 %v313, 144
          %v332 = vadd.s32 %v313, 152
          %v333 = vadd.s32 %v313, 160
          %v334 = vadd.s32 %v313, 168
          %v335 = vadd.s32 %v313, 176
          %v336 = vadd.s32 %v313, 184
          %v337 = vadd.s32 %v313, 192
          %v338 = vadd.s32 %v313, 200
          %v339 = vadd.s32 %v313, 208
          %v340 = vadd.s32 %v313, 216
          %v341 = vadd.s32 %v313, 224
          %v342 = vadd.s32 %v313, 232
          %v343 = vadd.s32 %v313, 240
          %v344 = vadd.s32 %v313, 248
          %v345 = vand.u32 %v313, 15
          %v346 = vand.u32 %v314, 15
          %v347 = vand.u32 %v315, 15
          %v348 = vand.u32 %v316, 15
          %v349 = vand.u32 %v317, 15
          %v350 = vand.u32 %v318, 15
          %v351 = vand.u32 %v319, 15
          %v352 = vand.u32 %v320, 15
          %v353 = vand.u32 %v321, 15
          %v354 = vand.u32 %v322, 15
          %v355 = vand.u32 %v323, 15
          %v356 = vand.u32 %v324, 15
          %v357 = vand.u32 %v325, 15
          %v358 = vand.u32 %v326, 15
          %v359 = vand.u32 %v327, 15
          %v360 = vand.u32 %v328, 15
          %v361 = vand.u32 %v329, 15
          %v362 = vand.u32 %v330, 15
          %v363 = vand.u32 %v331, 15
          %v364 = vand.u32 %v332, 15
          %v365 = vand.u32 %v333, 15
          %v366 = vand.u32 %v334, 15
          %v367 = vand.u32 %v335, 15
          %v368 = vand.u32 %v336, 15
          %v369 = vand.u32 %v337, 15
          %v370 = vand.u32 %v338, 15
          %v371 = vand.u32 %v339, 15
          %v372 = vand.u32 %v340, 15
          %v373 = vand.u32 %v341, 15
          %v374 = vand.u32 %v342, 15
          %v375 = vand.u32 %v343, 15
          %v376 = vand.u32 %v344, 15
          %vm377 = vcmp.ge.s32.totalorder %v345, 1
          %vm378 = vcmp.ge.s32.totalorder %v346, 1
          %vm379 = vcmp.ge.s32.totalorder %v347, 1
          %vm380 = vcmp.ge.s32.totalorder %v348, 1
          %vm381 = vcmp.ge.s32.totalorder %v349, 1
          %vm382 = vcmp.ge.s32.totalorder %v350, 1
          %vm383 = vcmp.ge.s32.totalorder %v351, 1
          %vm384 = vcmp.ge.s32.totalorder %v352, 1
          %vm385 = vcmp.ge.s32.totalorder %v353, 1
          %vm386 = vcmp.ge.s32.totalorder %v354, 1
          %vm387 = vcmp.ge.s32.totalorder %v355, 1
          %vm388 = vcmp.ge.s32.totalorder %v356, 1
          %vm389 = vcmp.ge.s32.totalorder %v357, 1
          %vm390 = vcmp.ge.s32.totalorder %v358, 1
          %vm391 = vcmp.ge.s32.totalorder %v359, 1
          %vm392 = vcmp.ge.s32.totalorder %v360, 1
          %vm393 = vcmp.ge.s32.totalorder %v361, 1
          %vm394 = vcmp.ge.s32.totalorder %v362, 1
          %vm395 = vcmp.ge.s32.totalorder %v363, 1
          %vm396 = vcmp.ge.s32.totalorder %v364, 1
          %vm397 = vcmp.ge.s32.totalorder %v365, 1
          %vm398 = vcmp.ge.s32.totalorder %v366, 1
          %vm399 = vcmp.ge.s32.totalorder %v367, 1
          %vm400 = vcmp.ge.s32.totalorder %v368, 1
          %vm401 = vcmp.ge.s32.totalorder %v369, 1
          %vm402 = vcmp.ge.s32.totalorder %v370, 1
          %vm403 = vcmp.ge.s32.totalorder %v371, 1
          %vm404 = vcmp.ge.s32.totalorder %v372, 1
          %vm405 = vcmp.ge.s32.totalorder %v373, 1
          %vm406 = vcmp.ge.s32.totalorder %v374, 1
          %vm407 = vcmp.ge.s32.totalorder %v375, 1
          %vm408 = vcmp.ge.s32.totalorder %v376, 1
          %vm409 = vcmp.le.s32.totalorder %v345, 14
          %vm410 = vcmp.le.s32.totalorder %v346, 14
          %vm411 = vcmp.le.s32.totalorder %v347, 14
          %vm412 = vcmp.le.s32.totalorder %v348, 14
          %vm413 = vcmp.le.s32.totalorder %v349, 14
          %vm414 = vcmp.le.s32.totalorder %v350, 14
          %vm415 = vcmp.le.s32.totalorder %v351, 14
          %vm416 = vcmp.le.s32.totalorder %v352, 14
          %vm417 = vcmp.le.s32.totalorder %v353, 14
          %vm418 = vcmp.le.s32.totalorder %v354, 14
          %vm419 = vcmp.le.s32.totalorder %v355, 14
          %vm420 = vcmp.le.s32.totalorder %v356, 14
          %vm421 = vcmp.le.s32.totalorder %v357, 14
          %vm422 = vcmp.le.s32.totalorder %v358, 14
          %vm423 = vcmp.le.s32.totalorder %v359, 14
          %vm424 = vcmp.le.s32.totalorder %v360, 14
          %vm425 = vcmp.le.s32.totalorder %v361, 14
          %vm426 = vcmp.le.s32.totalorder %v362, 14
          %vm427 = vcmp.le.s32.totalorder %v363, 14
          %vm428 = vcmp.le.s32.totalorder %v364, 14
          %vm429 = vcmp.le.s32.totalorder %v365, 14
          %vm430 = vcmp.le.s32.totalorder %v366, 14
          %vm431 = vcmp.le.s32.totalorder %v367, 14
          %vm432 = vcmp.le.s32.totalorder %v368, 14
          %vm433 = vcmp.le.s32.totalorder %v369, 14
          %vm434 = vcmp.le.s32.totalorder %v370, 14
          %vm435 = vcmp.le.s32.totalorder %v371, 14
          %vm436 = vcmp.le.s32.totalorder %v372, 14
          %vm437 = vcmp.le.s32.totalorder %v373, 14
          %vm438 = vcmp.le.s32.totalorder %v374, 14
          %vm439 = vcmp.le.s32.totalorder %v375, 14
          %vm440 = vcmp.le.s32.totalorder %v376, 14
          %v441 = vld [vmem:[#allocation2 + $0x7] sm:$0xff]
          %v442 = vld [vmem:[#allocation2 + $0xf] sm:$0xff]
          %v443 = vld [vmem:[#allocation2 + $0x17] sm:$0xff]
          %v444 = vld [vmem:[#allocation2 + $0x1f] sm:$0xff]
          %v445 = vld [vmem:[#allocation2 + $0x27] sm:$0xff]
          %v446 = vld [vmem:[#allocation2 + $0x2f] sm:$0xff]
          %v447 = vld [vmem:[#allocation2 + $0x37] sm:$0xff]
          %v448 = vld [vmem:[#allocation2 + $0x3f] sm:$0xff]
          %v449 = vld [vmem:[#allocation2 + $0x47] sm:$0xff]
          %v450 = vld [vmem:[#allocation2 + $0x4f] sm:$0xff]
          %v451 = vld [vmem:[#allocation2 + $0x57] sm:$0xff]
          %v452 = vld [vmem:[#allocation2 + $0x5f] sm:$0xff]
          %v453 = vld [vmem:[#allocation2 + $0x67] sm:$0xff]
          %v454 = vld [vmem:[#allocation2 + $0x6f] sm:$0xff]
          %v455 = vld [vmem:[#allocation2 + $0x77] sm:$0xff]
          %v456 = vld [vmem:[#allocation2 + $0x7f] sm:$0xff]
          %v457 = vld [vmem:[#allocation2 + $0x87] sm:$0xff]
          %v458 = vld [vmem:[#allocation2 + $0x8f] sm:$0xff]
          %v459 = vld [vmem:[#allocation2 + $0x97] sm:$0xff]
          %v460 = vld [vmem:[#allocation2 + $0x9f] sm:$0xff]
          %v461 = vld [vmem:[#allocation2 + $0xa7] sm:$0xff]
          %v462 = vld [vmem:[#allocation2 + $0xaf] sm:$0xff]
          %v463 = vld [vmem:[#allocation2 + $0xb7] sm:$0xff]
          %v464 = vld [vmem:[#allocation2 + $0xbf] sm:$0xff]
          %v465 = vld [vmem:[#allocation2 + $0xc7] sm:$0xff]
          %v466 = vld [vmem:[#allocation2 + $0xcf] sm:$0xff]
          %v467 = vld [vmem:[#allocation2 + $0xd7] sm:$0xff]
          %v468 = vld [vmem:[#allocation2 + $0xdf] sm:$0xff]
          %v469 = vld [vmem:[#allocation2 + $0xe7] sm:$0xff]
          %v470 = vld [vmem:[#allocation2 + $0xef] sm:$0xff]
          %v471 = vld [vmem:[#allocation2 + $0xf7] sm:$0xff]
          %v472 = vld [vmem:[#allocation2 + $0xff] sm:$0xff]
          %v473 = vsel %vm377, 1, 0
          %v474 = vsel %vm378, 1, 0
          %v475 = vsel %vm379, 1, 0
          %v476 = vsel %vm380, 1, 0
          %v477 = vsel %vm381, 1, 0
          %v478 = vsel %vm382, 1, 0
          %v479 = vsel %vm383, 1, 0
          %v480 = vsel %vm384, 1, 0
          %v481 = vsel %vm385, 1, 0
          %v482 = vsel %vm386, 1, 0
          %v483 = vsel %vm387, 1, 0
          %v484 = vsel %vm388, 1, 0
          %v485 = vsel %vm389, 1, 0
          %v486 = vsel %vm390, 1, 0
          %v487 = vsel %vm391, 1, 0
          %v488 = vsel %vm392, 1, 0
          %v489 = vsel %vm393, 1, 0
          %v490 = vsel %vm394, 1, 0
          %v491 = vsel %vm395, 1, 0
          %v492 = vsel %vm396, 1, 0
          %v493 = vsel %vm397, 1, 0
          %v494 = vsel %vm398, 1, 0
          %v495 = vsel %vm399, 1, 0
          %v496 = vsel %vm400, 1, 0
          %v497 = vsel %vm401, 1, 0
          %v498 = vsel %vm402, 1, 0
          %v499 = vsel %vm403, 1, 0
          %v500 = vsel %vm404, 1, 0
          %v501 = vsel %vm405, 1, 0
          %v502 = vsel %vm406, 1, 0
          %v503 = vsel %vm407, 1, 0
          %v504 = vsel %vm408, 1, 0
          %vm505 = vcmp.eq.s32.totalorder %v473, 1
          %vm506 = vcmp.eq.s32.totalorder %v474, 1
          %vm507 = vcmp.eq.s32.totalorder %v475, 1
          %vm508 = vcmp.eq.s32.totalorder %v476, 1
          %vm509 = vcmp.eq.s32.totalorder %v477, 1
          %vm510 = vcmp.eq.s32.totalorder %v478, 1
          %vm511 = vcmp.eq.s32.totalorder %v479, 1
          %vm512 = vcmp.eq.s32.totalorder %v480, 1
          %vm513 = vcmp.eq.s32.totalorder %v481, 1
          %vm514 = vcmp.eq.s32.totalorder %v482, 1
          %vm515 = vcmp.eq.s32.totalorder %v483, 1
          %vm516 = vcmp.eq.s32.totalorder %v484, 1
          %vm517 = vcmp.eq.s32.totalorder %v485, 1
          %vm518 = vcmp.eq.s32.totalorder %v486, 1
          %vm519 = vcmp.eq.s32.totalorder %v487, 1
          %vm520 = vcmp.eq.s32.totalorder %v488, 1
          %vm521 = vcmp.eq.s32.totalorder %v489, 1
          %vm522 = vcmp.eq.s32.totalorder %v490, 1
          %vm523 = vcmp.eq.s32.totalorder %v491, 1
          %vm524 = vcmp.eq.s32.totalorder %v492, 1
          %vm525 = vcmp.eq.s32.totalorder %v493, 1
          %vm526 = vcmp.eq.s32.totalorder %v494, 1
          %vm527 = vcmp.eq.s32.totalorder %v495, 1
          %vm528 = vcmp.eq.s32.totalorder %v496, 1
          %vm529 = vcmp.eq.s32.totalorder %v497, 1
          %vm530 = vcmp.eq.s32.totalorder %v498, 1
          %vm531 = vcmp.eq.s32.totalorder %v499, 1
          %vm532 = vcmp.eq.s32.totalorder %v500, 1
          %vm533 = vcmp.eq.s32.totalorder %v501, 1
          %vm534 = vcmp.eq.s32.totalorder %v502, 1
          %vm535 = vcmp.eq.s32.totalorder %v503, 1
          %vm536 = vcmp.eq.s32.totalorder %v504, 1
          %v537 = vsel %vm505, %v441, 0.0
          %v538 = vsel %vm506, %v442, 0.0
          %v539 = vsel %vm507, %v443, 0.0
          %v540 = vsel %vm508, %v444, 0.0
          %v541 = vsel %vm509, %v445, 0.0
          %v542 = vsel %vm510, %v446, 0.0
          %v543 = vsel %vm511, %v447, 0.0
          %v544 = vsel %vm512, %v448, 0.0
          %v545 = vsel %vm513, %v449, 0.0
          %v546 = vsel %vm514, %v450, 0.0
          %v547 = vsel %vm515, %v451, 0.0
          %v548 = vsel %vm516, %v452, 0.0
          %v549 = vsel %vm517, %v453, 0.0
          %v550 = vsel %vm518, %v454, 0.0
          %v551 = vsel %vm519, %v455, 0.0
          %v552 = vsel %vm520, %v456, 0.0
          %v553 = vsel %vm521, %v457, 0.0
          %v554 = vsel %vm522, %v458, 0.0
          %v555 = vsel %vm523, %v459, 0.0
          %v556 = vsel %vm524, %v460, 0.0
          %v557 = vsel %vm525, %v461, 0.0
          %v558 = vsel %vm526, %v462, 0.0
          %v559 = vsel %vm527, %v463, 0.0
          %v560 = vsel %vm528, %v464, 0.0
          %v561 = vsel %vm529, %v465, 0.0
          %v562 = vsel %vm530, %v466, 0.0
          %v563 = vsel %vm531, %v467, 0.0
          %v564 = vsel %vm532, %v468, 0.0
          %v565 = vsel %vm533, %v469, 0.0
          %v566 = vsel %vm534, %v470, 0.0
          %v567 = vsel %vm535, %v471, 0.0
          %v568 = vsel %vm536, %v472, 0.0
          %v569 = vlaneseq
          %v570 = vshrl.u32 %v569, 7
          %v571 = vsub.s32 0, %v570
          %v572 = vrot.slane %v308, %v571
          %v573 = vmul.f32 %v537, %v572
          %v574 = vmul.f32 %v538, %v572
          %v575 = vmul.f32 %v539, %v572
          %v576 = vmul.f32 %v540, %v572
          %v577 = vmul.f32 %v541, %v572
          %v578 = vmul.f32 %v542, %v572
          %v579 = vmul.f32 %v543, %v572
          %v580 = vmul.f32 %v544, %v572
          %v581 = vmul.f32 %v545, %v572
          %v582 = vmul.f32 %v546, %v572
          %v583 = vmul.f32 %v547, %v572
          %v584 = vmul.f32 %v548, %v572
          %v585 = vmul.f32 %v549, %v572
          %v586 = vmul.f32 %v550, %v572
          %v587 = vmul.f32 %v551, %v572
          %v588 = vmul.f32 %v552, %v572
          %v589 = vmul.f32 %v553, %v572
          %v590 = vmul.f32 %v554, %v572
          %v591 = vmul.f32 %v555, %v572
          %v592 = vmul.f32 %v556, %v572
          %v593 = vmul.f32 %v557, %v572
          %v594 = vmul.f32 %v558, %v572
          %v595 = vmul.f32 %v559, %v572
          %v596 = vmul.f32 %v560, %v572
          %v597 = vmul.f32 %v561, %v572
          %v598 = vmul.f32 %v562, %v572
          %v599 = vmul.f32 %v563, %v572
          %v600 = vmul.f32 %v564, %v572
          %v601 = vmul.f32 %v565, %v572
          %v602 = vmul.f32 %v566, %v572
          %v603 = vmul.f32 %v567, %v572
          %v604 = vmul.f32 %v568, %v572
          %v605 = vadd.f32 %v573, 0.0
          %v606 = vadd.f32 %v574, 0.0
          %v607 = vadd.f32 %v575, 0.0
          %v608 = vadd.f32 %v576, 0.0
          %v609 = vadd.f32 %v577, 0.0
          %v610 = vadd.f32 %v578, 0.0
          %v611 = vadd.f32 %v579, 0.0
          %v612 = vadd.f32 %v580, 0.0
          %v613 = vadd.f32 %v581, 0.0
          %v614 = vadd.f32 %v582, 0.0
          %v615 = vadd.f32 %v583, 0.0
          %v616 = vadd.f32 %v584, 0.0
          %v617 = vadd.f32 %v585, 0.0
          %v618 = vadd.f32 %v586, 0.0
          %v619 = vadd.f32 %v587, 0.0
          %v620 = vadd.f32 %v588, 0.0
          %v621 = vadd.f32 %v589, 0.0
          %v622 = vadd.f32 %v590, 0.0
          %v623 = vadd.f32 %v591, 0.0
          %v624 = vadd.f32 %v592, 0.0
          %v625 = vadd.f32 %v593, 0.0
          %v626 = vadd.f32 %v594, 0.0
          %v627 = vadd.f32 %v595, 0.0
          %v628 = vadd.f32 %v596, 0.0
          %v629 = vadd.f32 %v597, 0.0
          %v630 = vadd.f32 %v598, 0.0
          %v631 = vadd.f32 %v599, 0.0
          %v632 = vadd.f32 %v600, 0.0
          %v633 = vadd.f32 %v601, 0.0
          %v634 = vadd.f32 %v602, 0.0
          %v635 = vadd.f32 %v603, 0.0
          %v636 = vadd.f32 %v604, 0.0
          %v637 = vlaneseq
          %v638 = vshrl.u32 %v637, 7
          %v639 = vsub.s32 1, %v638
          %v640 = vrot.slane %v309, %v639
          %v641 = vmul.f32 %v537, %v640
          %v642 = vmul.f32 %v538, %v640
          %v643 = vmul.f32 %v539, %v640
          %v644 = vmul.f32 %v540, %v640
          %v645 = vmul.f32 %v541, %v640
          %v646 = vmul.f32 %v542, %v640
          %v647 = vmul.f32 %v543, %v640
          %v648 = vmul.f32 %v544, %v640
          %v649 = vmul.f32 %v545, %v640
          %v650 = vmul.f32 %v546, %v640
          %v651 = vmul.f32 %v547, %v640
          %v652 = vmul.f32 %v548, %v640
          %v653 = vmul.f32 %v549, %v640
          %v654 = vmul.f32 %v550, %v640
          %v655 = vmul.f32 %v551, %v640
          %v656 = vmul.f32 %v552, %v640
          %v657 = vmul.f32 %v553, %v640
          %v658 = vmul.f32 %v554, %v640
          %v659 = vmul.f32 %v555, %v640
          %v660 = vmul.f32 %v556, %v640
          %v661 = vmul.f32 %v557, %v640
          %v662 = vmul.f32 %v558, %v640
          %v663 = vmul.f32 %v559, %v640
          %v664 = vmul.f32 %v560, %v640
          %v665 = vmul.f32 %v561, %v640
          %v666 = vmul.f32 %v562, %v640
          %v667 = vmul.f32 %v563, %v640
          %v668 = vmul.f32 %v564, %v640
          %v669 = vmul.f32 %v565, %v640
          %v670 = vmul.f32 %v566, %v640
          %v671 = vmul.f32 %v567, %v640
          %v672 = vmul.f32 %v568, %v640
          %v673 = vadd.f32 %v641, 0.0
          %v674 = vadd.f32 %v642, 0.0
          %v675 = vadd.f32 %v643, 0.0
          %v676 = vadd.f32 %v644, 0.0
          %v677 = vadd.f32 %v645, 0.0
          %v678 = vadd.f32 %v646, 0.0
          %v679 = vadd.f32 %v647, 0.0
          %v680 = vadd.f32 %v648, 0.0
          %v681 = vadd.f32 %v649, 0.0
          %v682 = vadd.f32 %v650, 0.0
          %v683 = vadd.f32 %v651, 0.0
          %v684 = vadd.f32 %v652, 0.0
          %v685 = vadd.f32 %v653, 0.0
          %v686 = vadd.f32 %v654, 0.0
          %v687 = vadd.f32 %v655, 0.0
          %v688 = vadd.f32 %v656, 0.0
          %v689 = vadd.f32 %v657, 0.0
          %v690 = vadd.f32 %v658, 0.0
          %v691 = vadd.f32 %v659, 0.0
          %v692 = vadd.f32 %v660, 0.0
          %v693 = vadd.f32 %v661, 0.0
          %v694 = vadd.f32 %v662, 0.0
          %v695 = vadd.f32 %v663, 0.0
          %v696 = vadd.f32 %v664, 0.0
          %v697 = vadd.f32 %v665, 0.0
          %v698 = vadd.f32 %v666, 0.0
          %v699 = vadd.f32 %v667, 0.0
          %v700 = vadd.f32 %v668, 0.0
          %v701 = vadd.f32 %v669, 0.0
          %v702 = vadd.f32 %v670, 0.0
          %v703 = vadd.f32 %v671, 0.0
          %v704 = vadd.f32 %v672, 0.0
          %v705 = vlaneseq
          %v706 = vshrl.u32 %v705, 7
          %v707 = vsub.s32 2, %v706
          %v708 = vrot.slane %v310, %v707
          %v709 = vmul.f32 %v537, %v708
          %v710 = vmul.f32 %v538, %v708
          %v711 = vmul.f32 %v539, %v708
          %v712 = vmul.f32 %v540, %v708
          %v713 = vmul.f32 %v541, %v708
          %v714 = vmul.f32 %v542, %v708
          %v715 = vmul.f32 %v543, %v708
          %v716 = vmul.f32 %v544, %v708
          %v717 = vmul.f32 %v545, %v708
          %v718 = vmul.f32 %v546, %v708
          %v719 = vmul.f32 %v547, %v708
          %v720 = vmul.f32 %v548, %v708
          %v721 = vmul.f32 %v549, %v708
          %v722 = vmul.f32 %v550, %v708
          %v723 = vmul.f32 %v551, %v708
          %v724 = vmul.f32 %v552, %v708
          %v725 = vmul.f32 %v553, %v708
          %v726 = vmul.f32 %v554, %v708
          %v727 = vmul.f32 %v555, %v708
          %v728 = vmul.f32 %v556, %v708
          %v729 = vmul.f32 %v557, %v708
          %v730 = vmul.f32 %v558, %v708
          %v731 = vmul.f32 %v559, %v708
          %v732 = vmul.f32 %v560, %v708
          %v733 = vmul.f32 %v561, %v708
          %v734 = vmul.f32 %v562, %v708
          %v735 = vmul.f32 %v563, %v708
          %v736 = vmul.f32 %v564, %v708
          %v737 = vmul.f32 %v565, %v708
          %v738 = vmul.f32 %v566, %v708
          %v739 = vmul.f32 %v567, %v708
          %v740 = vmul.f32 %v568, %v708
          %v741 = vadd.f32 %v709, 0.0
          %v742 = vadd.f32 %v710, 0.0
          %v743 = vadd.f32 %v711, 0.0
          %v744 = vadd.f32 %v712, 0.0
          %v745 = vadd.f32 %v713, 0.0
          %v746 = vadd.f32 %v714, 0.0
          %v747 = vadd.f32 %v715, 0.0
          %v748 = vadd.f32 %v716, 0.0
          %v749 = vadd.f32 %v717, 0.0
          %v750 = vadd.f32 %v718, 0.0
          %v751 = vadd.f32 %v719, 0.0
          %v752 = vadd.f32 %v720, 0.0
          %v753 = vadd.f32 %v721, 0.0
          %v754 = vadd.f32 %v722, 0.0
          %v755 = vadd.f32 %v723, 0.0
          %v756 = vadd.f32 %v724, 0.0
          %v757 = vadd.f32 %v725, 0.0
          %v758 = vadd.f32 %v726, 0.0
          %v759 = vadd.f32 %v727, 0.0
          %v760 = vadd.f32 %v728, 0.0
          %v761 = vadd.f32 %v729, 0.0
          %v762 = vadd.f32 %v730, 0.0
          %v763 = vadd.f32 %v731, 0.0
          %v764 = vadd.f32 %v732, 0.0
          %v765 = vadd.f32 %v733, 0.0
          %v766 = vadd.f32 %v734, 0.0
          %v767 = vadd.f32 %v735, 0.0
          %v768 = vadd.f32 %v736, 0.0
          %v769 = vadd.f32 %v737, 0.0
          %v770 = vadd.f32 %v738, 0.0
          %v771 = vadd.f32 %v739, 0.0
          %v772 = vadd.f32 %v740, 0.0
          %v773 = vld [vmem:[#allocation2 + $0x8] sm:$0xff]
          %v774 = vld [vmem:[#allocation2 + $0x10] sm:$0xff]
          %v775 = vld [vmem:[#allocation2 + $0x18] sm:$0xff]
          %v776 = vld [vmem:[#allocation2 + $0x20] sm:$0xff]
          %v777 = vld [vmem:[#allocation2 + $0x28] sm:$0xff]
          %v778 = vld [vmem:[#allocation2 + $0x30] sm:$0xff]
          %v779 = vld [vmem:[#allocation2 + $0x38] sm:$0xff]
          %v780 = vld [vmem:[#allocation2 + $0x40] sm:$0xff]
          %v781 = vld [vmem:[#allocation2 + $0x48] sm:$0xff]
          %v782 = vld [vmem:[#allocation2 + $0x50] sm:$0xff]
          %v783 = vld [vmem:[#allocation2 + $0x58] sm:$0xff]
          %v784 = vld [vmem:[#allocation2 + $0x60] sm:$0xff]
          %v785 = vld [vmem:[#allocation2 + $0x68] sm:$0xff]
          %v786 = vld [vmem:[#allocation2 + $0x70] sm:$0xff]
          %v787 = vld [vmem:[#allocation2 + $0x78] sm:$0xff]
          %v788 = vld [vmem:[#allocation2 + $0x80] sm:$0xff]
          %v789 = vld [vmem:[#allocation2 + $0x88] sm:$0xff]
          %v790 = vld [vmem:[#allocation2 + $0x90] sm:$0xff]
          %v791 = vld [vmem:[#allocation2 + $0x98] sm:$0xff]
          %v792 = vld [vmem:[#allocation2 + $0xa0] sm:$0xff]
          %v793 = vld [vmem:[#allocation2 + $0xa8] sm:$0xff]
          %v794 = vld [vmem:[#allocation2 + $0xb0] sm:$0xff]
          %v795 = vld [vmem:[#allocation2 + $0xb8] sm:$0xff]
          %v796 = vld [vmem:[#allocation2 + $0xc0] sm:$0xff]
          %v797 = vld [vmem:[#allocation2 + $0xc8] sm:$0xff]
          %v798 = vld [vmem:[#allocation2 + $0xd0] sm:$0xff]
          %v799 = vld [vmem:[#allocation2 + $0xd8] sm:$0xff]
          %v800 = vld [vmem:[#allocation2 + $0xe0] sm:$0xff]
          %v801 = vld [vmem:[#allocation2 + $0xe8] sm:$0xff]
          %v802 = vld [vmem:[#allocation2 + $0xf0] sm:$0xff]
          %v803 = vld [vmem:[#allocation2 + $0xf8] sm:$0xff]
          %v804 = vld [vmem:[#allocation2 + $0x100] sm:$0xff]
          %v805 = vlaneseq
          %v806 = vshrl.u32 %v805, 7
          %v807 = vsub.s32 1, %v806
          %v808 = vrot.slane %v308, %v807
          %v809 = vmul.f32 %v773, %v808
          %v810 = vmul.f32 %v774, %v808
          %v811 = vmul.f32 %v775, %v808
          %v812 = vmul.f32 %v776, %v808
          %v813 = vmul.f32 %v777, %v808
          %v814 = vmul.f32 %v778, %v808
          %v815 = vmul.f32 %v779, %v808
          %v816 = vmul.f32 %v780, %v808
          %v817 = vmul.f32 %v781, %v808
          %v818 = vmul.f32 %v782, %v808
          %v819 = vmul.f32 %v783, %v808
          %v820 = vmul.f32 %v784, %v808
          %v821 = vmul.f32 %v785, %v808
          %v822 = vmul.f32 %v786, %v808
          %v823 = vmul.f32 %v787, %v808
          %v824 = vmul.f32 %v788, %v808
          %v825 = vmul.f32 %v789, %v808
          %v826 = vmul.f32 %v790, %v808
          %v827 = vmul.f32 %v791, %v808
          %v828 = vmul.f32 %v792, %v808
          %v829 = vmul.f32 %v793, %v808
          %v830 = vmul.f32 %v794, %v808
          %v831 = vmul.f32 %v795, %v808
          %v832 = vmul.f32 %v796, %v808
          %v833 = vmul.f32 %v797, %v808
          %v834 = vmul.f32 %v798, %v808
          %v835 = vmul.f32 %v799, %v808
          %v836 = vmul.f32 %v800, %v808
          %v837 = vmul.f32 %v801, %v808
          %v838 = vmul.f32 %v802, %v808
          %v839 = vmul.f32 %v803, %v808
          %v840 = vmul.f32 %v804, %v808
          %v841 = vadd.f32 %v605, %v809
          %v842 = vadd.f32 %v606, %v810
          %v843 = vadd.f32 %v607, %v811
          %v844 = vadd.f32 %v608, %v812
          %v845 = vadd.f32 %v609, %v813
          %v846 = vadd.f32 %v610, %v814
          %v847 = vadd.f32 %v611, %v815
          %v848 = vadd.f32 %v612, %v816
          %v849 = vadd.f32 %v613, %v817
          %v850 = vadd.f32 %v614, %v818
          %v851 = vadd.f32 %v615, %v819
          %v852 = vadd.f32 %v616, %v820
          %v853 = vadd.f32 %v617, %v821
          %v854 = vadd.f32 %v618, %v822
          %v855 = vadd.f32 %v619, %v823
          %v856 = vadd.f32 %v620, %v824
          %v857 = vadd.f32 %v621, %v825
          %v858 = vadd.f32 %v622, %v826
          %v859 = vadd.f32 %v623, %v827
          %v860 = vadd.f32 %v624, %v828
          %v861 = vadd.f32 %v625, %v829
          %v862 = vadd.f32 %v626, %v830
          %v863 = vadd.f32 %v627, %v831
          %v864 = vadd.f32 %v628, %v832
          %v865 = vadd.f32 %v629, %v833
          %v866 = vadd.f32 %v630, %v834
          %v867 = vadd.f32 %v631, %v835
          %v868 = vadd.f32 %v632, %v836
          %v869 = vadd.f32 %v633, %v837
          %v870 = vadd.f32 %v634, %v838
          %v871 = vadd.f32 %v635, %v839
          %v872 = vadd.f32 %v636, %v840
          %v873 = vlaneseq
          %v874 = vshrl.u32 %v873, 7
          %v875 = vsub.s32 2, %v874
          %v876 = vrot.slane %v309, %v875
          %v877 = vmul.f32 %v773, %v876
          %v878 = vmul.f32 %v774, %v876
          %v879 = vmul.f32 %v775, %v876
          %v880 = vmul.f32 %v776, %v876
          %v881 = vmul.f32 %v777, %v876
          %v882 = vmul.f32 %v778, %v876
          %v883 = vmul.f32 %v779, %v876
          %v884 = vmul.f32 %v780, %v876
          %v885 = vmul.f32 %v781, %v876
          %v886 = vmul.f32 %v782, %v876
          %v887 = vmul.f32 %v783, %v876
          %v888 = vmul.f32 %v784, %v876
          %v889 = vmul.f32 %v785, %v876
          %v890 = vmul.f32 %v786, %v876
          %v891 = vmul.f32 %v787, %v876
          %v892 = vmul.f32 %v788, %v876
          %v893 = vmul.f32 %v789, %v876
          %v894 = vmul.f32 %v790, %v876
          %v895 = vmul.f32 %v791, %v876
          %v896 = vmul.f32 %v792, %v876
          %v897 = vmul.f32 %v793, %v876
          %v898 = vmul.f32 %v794, %v876
          %v899 = vmul.f32 %v795, %v876
          %v900 = vmul.f32 %v796, %v876
          %v901 = vmul.f32 %v797, %v876
          %v902 = vmul.f32 %v798, %v876
          %v903 = vmul.f32 %v799, %v876
          %v904 = vmul.f32 %v800, %v876
          %v905 = vmul.f32 %v801, %v876
          %v906 = vmul.f32 %v802, %v876
          %v907 = vmul.f32 %v803, %v876
          %v908 = vmul.f32 %v804, %v876
          %v909 = vadd.f32 %v673, %v877
          %v910 = vadd.f32 %v674, %v878
          %v911 = vadd.f32 %v675, %v879
          %v912 = vadd.f32 %v676, %v880
          %v913 = vadd.f32 %v677, %v881
          %v914 = vadd.f32 %v678, %v882
          %v915 = vadd.f32 %v679, %v883
          %v916 = vadd.f32 %v680, %v884
          %v917 = vadd.f32 %v681, %v885
          %v918 = vadd.f32 %v682, %v886
          %v919 = vadd.f32 %v683, %v887
          %v920 = vadd.f32 %v684, %v888
          %v921 = vadd.f32 %v685, %v889
          %v922 = vadd.f32 %v686, %v890
          %v923 = vadd.f32 %v687, %v891
          %v924 = vadd.f32 %v688, %v892
          %v925 = vadd.f32 %v689, %v893
          %v926 = vadd.f32 %v690, %v894
          %v927 = vadd.f32 %v691, %v895
          %v928 = vadd.f32 %v692, %v896
          %v929 = vadd.f32 %v693, %v897
          %v930 = vadd.f32 %v694, %v898
          %v931 = vadd.f32 %v695, %v899
          %v932 = vadd.f32 %v696, %v900
          %v933 = vadd.f32 %v697, %v901
          %v934 = vadd.f32 %v698, %v902
          %v935 = vadd.f32 %v699, %v903
          %v936 = vadd.f32 %v700, %v904
          %v937 = vadd.f32 %v701, %v905
          %v938 = vadd.f32 %v702, %v906
          %v939 = vadd.f32 %v703, %v907
          %v940 = vadd.f32 %v704, %v908
          %v941 = vlaneseq
          %v942 = vshrl.u32 %v941, 7
          %v943 = vsub.s32 3, %v942
          %v944 = vrot.slane %v310, %v943
          %v945 = vmul.f32 %v773, %v944
          %v946 = vmul.f32 %v774, %v944
          %v947 = vmul.f32 %v775, %v944
          %v948 = vmul.f32 %v776, %v944
          %v949 = vmul.f32 %v777, %v944
          %v950 = vmul.f32 %v778, %v944
          %v951 = vmul.f32 %v779, %v944
          %v952 = vmul.f32 %v780, %v944
          %v953 = vmul.f32 %v781, %v944
          %v954 = vmul.f32 %v782, %v944
          %v955 = vmul.f32 %v783, %v944
          %v956 = vmul.f32 %v784, %v944
          %v957 = vmul.f32 %v785, %v944
          %v958 = vmul.f32 %v786, %v944
          %v959 = vmul.f32 %v787, %v944
          %v960 = vmul.f32 %v788, %v944
          %v961 = vmul.f32 %v789, %v944
          %v962 = vmul.f32 %v790, %v944
          %v963 = vmul.f32 %v791, %v944
          %v964 = vmul.f32 %v792, %v944
          %v965 = vmul.f32 %v793, %v944
          %v966 = vmul.f32 %v794, %v944
          %v967 = vmul.f32 %v795, %v944
          %v968 = vmul.f32 %v796, %v944
          %v969 = vmul.f32 %v797, %v944
          %v970 = vmul.f32 %v798, %v944
          %v971 = vmul.f32 %v799, %v944
          %v972 = vmul.f32 %v800, %v944
          %v973 = vmul.f32 %v801, %v944
          %v974 = vmul.f32 %v802, %v944
          %v975 = vmul.f32 %v803, %v944
          %v976 = vmul.f32 %v804, %v944
          %v977 = vadd.f32 %v741, %v945
          %v978 = vadd.f32 %v742, %v946
          %v979 = vadd.f32 %v743, %v947
          %v980 = vadd.f32 %v744, %v948
          %v981 = vadd.f32 %v745, %v949
          %v982 = vadd.f32 %v746, %v950
          %v983 = vadd.f32 %v747, %v951
          %v984 = vadd.f32 %v748, %v952
          %v985 = vadd.f32 %v749, %v953
          %v986 = vadd.f32 %v750, %v954
          %v987 = vadd.f32 %v751, %v955
          %v988 = vadd.f32 %v752, %v956
          %v989 = vadd.f32 %v753, %v957
          %v990 = vadd.f32 %v754, %v958
          %v991 = vadd.f32 %v755, %v959
          %v992 = vadd.f32 %v756, %v960
          %v993 = vadd.f32 %v757, %v961
          %v994 = vadd.f32 %v758, %v962
          %v995 = vadd.f32 %v759, %v963
          %v996 = vadd.f32 %v760, %v964
          %v997 = vadd.f32 %v761, %v965
          %v998 = vadd.f32 %v762, %v966
          %v999 = vadd.f32 %v763, %v967
          %v1000 = vadd.f32 %v764, %v968
          %v1001 = vadd.f32 %v765, %v969
          %v1002 = vadd.f32 %v766, %v970
          %v1003 = vadd.f32 %v767, %v971
          %v1004 = vadd.f32 %v768, %v972
          %v1005 = vadd.f32 %v769, %v973
          %v1006 = vadd.f32 %v770, %v974
          %v1007 = vadd.f32 %v771, %v975
          %v1008 = vadd.f32 %v772, %v976
          %v1009 = vld [vmem:[#allocation2 + $0x9] sm:$0xff]
          %v1010 = vld [vmem:[#allocation2 + $0x11] sm:$0xff]
          %v1011 = vld [vmem:[#allocation2 + $0x19] sm:$0xff]
          %v1012 = vld [vmem:[#allocation2 + $0x21] sm:$0xff]
          %v1013 = vld [vmem:[#allocation2 + $0x29] sm:$0xff]
          %v1014 = vld [vmem:[#allocation2 + $0x31] sm:$0xff]
          %v1015 = vld [vmem:[#allocation2 + $0x39] sm:$0xff]
          %v1016 = vld [vmem:[#allocation2 + $0x41] sm:$0xff]
          %v1017 = vld [vmem:[#allocation2 + $0x49] sm:$0xff]
          %v1018 = vld [vmem:[#allocation2 + $0x51] sm:$0xff]
          %v1019 = vld [vmem:[#allocation2 + $0x59] sm:$0xff]
          %v1020 = vld [vmem:[#allocation2 + $0x61] sm:$0xff]
          %v1021 = vld [vmem:[#allocation2 + $0x69] sm:$0xff]
          %v1022 = vld [vmem:[#allocation2 + $0x71] sm:$0xff]
          %v1023 = vld [vmem:[#allocation2 + $0x79] sm:$0xff]
          %v1024 = vld [vmem:[#allocation2 + $0x81] sm:$0xff]
          %v1025 = vld [vmem:[#allocation2 + $0x89] sm:$0xff]
          %v1026 = vld [vmem:[#allocation2 + $0x91] sm:$0xff]
          %v1027 = vld [vmem:[#allocation2 + $0x99] sm:$0xff]
          %v1028 = vld [vmem:[#allocation2 + $0xa1] sm:$0xff]
          %v1029 = vld [vmem:[#allocation2 + $0xa9] sm:$0xff]
          %v1030 = vld [vmem:[#allocation2 + $0xb1] sm:$0xff]
          %v1031 = vld [vmem:[#allocation2 + $0xb9] sm:$0xff]
          %v1032 = vld [vmem:[#allocation2 + $0xc1] sm:$0xff]
          %v1033 = vld [vmem:[#allocation2 + $0xc9] sm:$0xff]
          %v1034 = vld [vmem:[#allocation2 + $0xd1] sm:$0xff]
          %v1035 = vld [vmem:[#allocation2 + $0xd9] sm:$0xff]
          %v1036 = vld [vmem:[#allocation2 + $0xe1] sm:$0xff]
          %v1037 = vld [vmem:[#allocation2 + $0xe9] sm:$0xff]
          %v1038 = vld [vmem:[#allocation2 + $0xf1] sm:$0xff]
          %v1039 = vld [vmem:[#allocation2 + $0xf9] sm:$0xff]
          %v1040 = vld [vmem:[#allocation2 + $0x101] sm:$0xff]
          %v1041 = vsel %vm409, 1, 0
          %v1042 = vsel %vm410, 1, 0
          %v1043 = vsel %vm411, 1, 0
          %v1044 = vsel %vm412, 1, 0
          %v1045 = vsel %vm413, 1, 0
          %v1046 = vsel %vm414, 1, 0
          %v1047 = vsel %vm415, 1, 0
          %v1048 = vsel %vm416, 1, 0
          %v1049 = vsel %vm417, 1, 0
          %v1050 = vsel %vm418, 1, 0
          %v1051 = vsel %vm419, 1, 0
          %v1052 = vsel %vm420, 1, 0
          %v1053 = vsel %vm421, 1, 0
          %v1054 = vsel %vm422, 1, 0
          %v1055 = vsel %vm423, 1, 0
          %v1056 = vsel %vm424, 1, 0
          %v1057 = vsel %vm425, 1, 0
          %v1058 = vsel %vm426, 1, 0
          %v1059 = vsel %vm427, 1, 0
          %v1060 = vsel %vm428, 1, 0
          %v1061 = vsel %vm429, 1, 0
          %v1062 = vsel %vm430, 1, 0
          %v1063 = vsel %vm431, 1, 0
          %v1064 = vsel %vm432, 1, 0
          %v1065 = vsel %vm433, 1, 0
          %v1066 = vsel %vm434, 1, 0
          %v1067 = vsel %vm435, 1, 0
          %v1068 = vsel %vm436, 1, 0
          %v1069 = vsel %vm437, 1, 0
          %v1070 = vsel %vm438, 1, 0
          %v1071 = vsel %vm439, 1, 0
          %v1072 = vsel %vm440, 1, 0
          %vm1073 = vcmp.eq.s32.totalorder %v1041, 1
          %vm1074 = vcmp.eq.s32.totalorder %v1042, 1
          %vm1075 = vcmp.eq.s32.totalorder %v1043, 1
          %vm1076 = vcmp.eq.s32.totalorder %v1044, 1
          %vm1077 = vcmp.eq.s32.totalorder %v1045, 1
          %vm1078 = vcmp.eq.s32.totalorder %v1046, 1
          %vm1079 = vcmp.eq.s32.totalorder %v1047, 1
          %vm1080 = vcmp.eq.s32.totalorder %v1048, 1
          %vm1081 = vcmp.eq.s32.totalorder %v1049, 1
          %vm1082 = vcmp.eq.s32.totalorder %v1050, 1
          %vm1083 = vcmp.eq.s32.totalorder %v1051, 1
          %vm1084 = vcmp.eq.s32.totalorder %v1052, 1
          %vm1085 = vcmp.eq.s32.totalorder %v1053, 1
          %vm1086 = vcmp.eq.s32.totalorder %v1054, 1
          %vm1087 = vcmp.eq.s32.totalorder %v1055, 1
          %vm1088 = vcmp.eq.s32.totalorder %v1056, 1
          %vm1089 = vcmp.eq.s32.totalorder %v1057, 1
          %vm1090 = vcmp.eq.s32.totalorder %v1058, 1
          %vm1091 = vcmp.eq.s32.totalorder %v1059, 1
          %vm1092 = vcmp.eq.s32.totalorder %v1060, 1
          %vm1093 = vcmp.eq.s32.totalorder %v1061, 1
          %vm1094 = vcmp.eq.s32.totalorder %v1062, 1
          %vm1095 = vcmp.eq.s32.totalorder %v1063, 1
          %vm1096 = vcmp.eq.s32.totalorder %v1064, 1
          %vm1097 = vcmp.eq.s32.totalorder %v1065, 1
          %vm1098 = vcmp.eq.s32.totalorder %v1066, 1
          %vm1099 = vcmp.eq.s32.totalorder %v1067, 1
          %vm1100 = vcmp.eq.s32.totalorder %v1068, 1
          %vm1101 = vcmp.eq.s32.totalorder %v1069, 1
          %vm1102 = vcmp.eq.s32.totalorder %v1070, 1
          %vm1103 = vcmp.eq.s32.totalorder %v1071, 1
          %vm1104 = vcmp.eq.s32.totalorder %v1072, 1
          %v1105 = vsel %vm1073, %v1009, 0.0
          %v1106 = vsel %vm1074, %v1010, 0.0
          %v1107 = vsel %vm1075, %v1011, 0.0
          %v1108 = vsel %vm1076, %v1012, 0.0
          %v1109 = vsel %vm1077, %v1013, 0.0
          %v1110 = vsel %vm1078, %v1014, 0.0
          %v1111 = vsel %vm1079, %v1015, 0.0
          %v1112 = vsel %vm1080, %v1016, 0.0
          %v1113 = vsel %vm1081, %v1017, 0.0
          %v1114 = vsel %vm1082, %v1018, 0.0
          %v1115 = vsel %vm1083, %v1019, 0.0
          %v1116 = vsel %vm1084, %v1020, 0.0
          %v1117 = vsel %vm1085, %v1021, 0.0
          %v1118 = vsel %vm1086, %v1022, 0.0
          %v1119 = vsel %vm1087, %v1023, 0.0
          %v1120 = vsel %vm1088, %v1024, 0.0
          %v1121 = vsel %vm1089, %v1025, 0.0
          %v1122 = vsel %vm1090, %v1026, 0.0
          %v1123 = vsel %vm1091, %v1027, 0.0
          %v1124 = vsel %vm1092, %v1028, 0.0
          %v1125 = vsel %vm1093, %v1029, 0.0
          %v1126 = vsel %vm1094, %v1030, 0.0
          %v1127 = vsel %vm1095, %v1031, 0.0
          %v1128 = vsel %vm1096, %v1032, 0.0
          %v1129 = vsel %vm1097, %v1033, 0.0
          %v1130 = vsel %vm1098, %v1034, 0.0
          %v1131 = vsel %vm1099, %v1035, 0.0
          %v1132 = vsel %vm1100, %v1036, 0.0
          %v1133 = vsel %vm1101, %v1037, 0.0
          %v1134 = vsel %vm1102, %v1038, 0.0
          %v1135 = vsel %vm1103, %v1039, 0.0
          %v1136 = vsel %vm1104, %v1040, 0.0
          %v1137 = vlaneseq
          %v1138 = vshrl.u32 %v1137, 7
          %v1139 = vsub.s32 2, %v1138
          %v1140 = vrot.slane %v308, %v1139
          %v1141 = vmul.f32 %v1105, %v1140
          %v1142 = vmul.f32 %v1106, %v1140
          %v1143 = vmul.f32 %v1107, %v1140
          %v1144 = vmul.f32 %v1108, %v1140
          %v1145 = vmul.f32 %v1109, %v1140
          %v1146 = vmul.f32 %v1110, %v1140
          %v1147 = vmul.f32 %v1111, %v1140
          %v1148 = vmul.f32 %v1112, %v1140
          %v1149 = vmul.f32 %v1113, %v1140
          %v1150 = vmul.f32 %v1114, %v1140
          %v1151 = vmul.f32 %v1115, %v1140
          %v1152 = vmul.f32 %v1116, %v1140
          %v1153 = vmul.f32 %v1117, %v1140
          %v1154 = vmul.f32 %v1118, %v1140
          %v1155 = vmul.f32 %v1119, %v1140
          %v1156 = vmul.f32 %v1120, %v1140
          %v1157 = vmul.f32 %v1121, %v1140
          %v1158 = vmul.f32 %v1122, %v1140
          %v1159 = vmul.f32 %v1123, %v1140
          %v1160 = vmul.f32 %v1124, %v1140
          %v1161 = vmul.f32 %v1125, %v1140
          %v1162 = vmul.f32 %v1126, %v1140
          %v1163 = vmul.f32 %v1127, %v1140
          %v1164 = vmul.f32 %v1128, %v1140
          %v1165 = vmul.f32 %v1129, %v1140
          %v1166 = vmul.f32 %v1130, %v1140
          %v1167 = vmul.f32 %v1131, %v1140
          %v1168 = vmul.f32 %v1132, %v1140
          %v1169 = vmul.f32 %v1133, %v1140
          %v1170 = vmul.f32 %v1134, %v1140
          %v1171 = vmul.f32 %v1135, %v1140
          %v1172 = vmul.f32 %v1136, %v1140
          %v1173 = vadd.f32 %v841, %v1141
          %v1174 = vadd.f32 %v842, %v1142
          %v1175 = vadd.f32 %v843, %v1143
          %v1176 = vadd.f32 %v844, %v1144
          %v1177 = vadd.f32 %v845, %v1145
          %v1178 = vadd.f32 %v846, %v1146
          %v1179 = vadd.f32 %v847, %v1147
          %v1180 = vadd.f32 %v848, %v1148
          %v1181 = vadd.f32 %v849, %v1149
          %v1182 = vadd.f32 %v850, %v1150
          %v1183 = vadd.f32 %v851, %v1151
          %v1184 = vadd.f32 %v852, %v1152
          %v1185 = vadd.f32 %v853, %v1153
          %v1186 = vadd.f32 %v854, %v1154
          %v1187 = vadd.f32 %v855, %v1155
          %v1188 = vadd.f32 %v856, %v1156
          %v1189 = vadd.f32 %v857, %v1157
          %v1190 = vadd.f32 %v858, %v1158
          %v1191 = vadd.f32 %v859, %v1159
          %v1192 = vadd.f32 %v860, %v1160
          %v1193 = vadd.f32 %v861, %v1161
          %v1194 = vadd.f32 %v862, %v1162
          %v1195 = vadd.f32 %v863, %v1163
          %v1196 = vadd.f32 %v864, %v1164
          %v1197 = vadd.f32 %v865, %v1165
          %v1198 = vadd.f32 %v866, %v1166
          %v1199 = vadd.f32 %v867, %v1167
          %v1200 = vadd.f32 %v868, %v1168
          %v1201 = vadd.f32 %v869, %v1169
          %v1202 = vadd.f32 %v870, %v1170
          %v1203 = vadd.f32 %v871, %v1171
          %v1204 = vadd.f32 %v872, %v1172
          %v1205 = vlaneseq
          %v1206 = vshrl.u32 %v1205, 7
          %v1207 = vsub.s32 3, %v1206
          %v1208 = vrot.slane %v309, %v1207
          %v1209 = vmul.f32 %v1105, %v1208
          %v1210 = vmul.f32 %v1106, %v1208
          %v1211 = vmul.f32 %v1107, %v1208
          %v1212 = vmul.f32 %v1108, %v1208
          %v1213 = vmul.f32 %v1109, %v1208
          %v1214 = vmul.f32 %v1110, %v1208
          %v1215 = vmul.f32 %v1111, %v1208
          %v1216 = vmul.f32 %v1112, %v1208
          %v1217 = vmul.f32 %v1113, %v1208
          %v1218 = vmul.f32 %v1114, %v1208
          %v1219 = vmul.f32 %v1115, %v1208
          %v1220 = vmul.f32 %v1116, %v1208
          %v1221 = vmul.f32 %v1117, %v1208
          %v1222 = vmul.f32 %v1118, %v1208
          %v1223 = vmul.f32 %v1119, %v1208
          %v1224 = vmul.f32 %v1120, %v1208
          %v1225 = vmul.f32 %v1121, %v1208
          %v1226 = vmul.f32 %v1122, %v1208
          %v1227 = vmul.f32 %v1123, %v1208
          %v1228 = vmul.f32 %v1124, %v1208
          %v1229 = vmul.f32 %v1125, %v1208
          %v1230 = vmul.f32 %v1126, %v1208
          %v1231 = vmul.f32 %v1127, %v1208
          %v1232 = vmul.f32 %v1128, %v1208
          %v1233 = vmul.f32 %v1129, %v1208
          %v1234 = vmul.f32 %v1130, %v1208
          %v1235 = vmul.f32 %v1131, %v1208
          %v1236 = vmul.f32 %v1132, %v1208
          %v1237 = vmul.f32 %v1133, %v1208
          %v1238 = vmul.f32 %v1134, %v1208
          %v1239 = vmul.f32 %v1135, %v1208
          %v1240 = vmul.f32 %v1136, %v1208
          %v1241 = vadd.f32 %v909, %v1209
          %v1242 = vadd.f32 %v910, %v1210
          %v1243 = vadd.f32 %v911, %v1211
          %v1244 = vadd.f32 %v912, %v1212
          %v1245 = vadd.f32 %v913, %v1213
          %v1246 = vadd.f32 %v914, %v1214
          %v1247 = vadd.f32 %v915, %v1215
          %v1248 = vadd.f32 %v916, %v1216
          %v1249 = vadd.f32 %v917, %v1217
          %v1250 = vadd.f32 %v918, %v1218
          %v1251 = vadd.f32 %v919, %v1219
          %v1252 = vadd.f32 %v920, %v1220
          %v1253 = vadd.f32 %v921, %v1221
          %v1254 = vadd.f32 %v922, %v1222
          %v1255 = vadd.f32 %v923, %v1223
          %v1256 = vadd.f32 %v924, %v1224
          %v1257 = vadd.f32 %v925, %v1225
          %v1258 = vadd.f32 %v926, %v1226
          %v1259 = vadd.f32 %v927, %v1227
          %v1260 = vadd.f32 %v928, %v1228
          %v1261 = vadd.f32 %v929, %v1229
          %v1262 = vadd.f32 %v930, %v1230
          %v1263 = vadd.f32 %v931, %v1231
          %v1264 = vadd.f32 %v932, %v1232
          %v1265 = vadd.f32 %v933, %v1233
          %v1266 = vadd.f32 %v934, %v1234
          %v1267 = vadd.f32 %v935, %v1235
          %v1268 = vadd.f32 %v936, %v1236
          %v1269 = vadd.f32 %v937, %v1237
          %v1270 = vadd.f32 %v938, %v1238
          %v1271 = vadd.f32 %v939, %v1239
          %v1272 = vadd.f32 %v940, %v1240
          %v1273 = vlaneseq
          %v1274 = vshrl.u32 %v1273, 7
          %v1275 = vsub.s32 4, %v1274
          %v1276 = vrot.slane %v310, %v1275
          %v1277 = vmul.f32 %v1105, %v1276
          %v1278 = vmul.f32 %v1106, %v1276
          %v1279 = vmul.f32 %v1107, %v1276
          %v1280 = vmul.f32 %v1108, %v1276
          %v1281 = vmul.f32 %v1109, %v1276
          %v1282 = vmul.f32 %v1110, %v1276
          %v1283 = vmul.f32 %v1111, %v1276
          %v1284 = vmul.f32 %v1112, %v1276
          %v1285 = vmul.f32 %v1113, %v1276
          %v1286 = vmul.f32 %v1114, %v1276
          %v1287 = vmul.f32 %v1115, %v1276
          %v1288 = vmul.f32 %v1116, %v1276
          %v1289 = vmul.f32 %v1117, %v1276
          %v1290 = vmul.f32 %v1118, %v1276
          %v1291 = vmul.f32 %v1119, %v1276
          %v1292 = vmul.f32 %v1120, %v1276
          %v1293 = vmul.f32 %v1121, %v1276
          %v1294 = vmul.f32 %v1122, %v1276
          %v1295 = vmul.f32 %v1123, %v1276
          %v1296 = vmul.f32 %v1124, %v1276
          %v1297 = vmul.f32 %v1125, %v1276
          %v1298 = vmul.f32 %v1126, %v1276
          %v1299 = vmul.f32 %v1127, %v1276
          %v1300 = vmul.f32 %v1128, %v1276
          %v1301 = vmul.f32 %v1129, %v1276
          %v1302 = vmul.f32 %v1130, %v1276
          %v1303 = vmul.f32 %v1131, %v1276
          %v1304 = vmul.f32 %v1132, %v1276
          %v1305 = vmul.f32 %v1133, %v1276
          %v1306 = vmul.f32 %v1134, %v1276
          %v1307 = vmul.f32 %v1135, %v1276
          %v1308 = vmul.f32 %v1136, %v1276
          %v1309 = vadd.f32 %v977, %v1277
          %v1310 = vadd.f32 %v978, %v1278
          %v1311 = vadd.f32 %v979, %v1279
          %v1312 = vadd.f32 %v980, %v1280
          %v1313 = vadd.f32 %v981, %v1281
          %v1314 = vadd.f32 %v982, %v1282
          %v1315 = vadd.f32 %v983, %v1283
          %v1316 = vadd.f32 %v984, %v1284
          %v1317 = vadd.f32 %v985, %v1285
          %v1318 = vadd.f32 %v986, %v1286
          %v1319 = vadd.f32 %v987, %v1287
          %v1320 = vadd.f32 %v988, %v1288
          %v1321 = vadd.f32 %v989, %v1289
          %v1322 = vadd.f32 %v990, %v1290
          %v1323 = vadd.f32 %v991, %v1291
          %v1324 = vadd.f32 %v992, %v1292
          %v1325 = vadd.f32 %v993, %v1293
          %v1326 = vadd.f32 %v994, %v1294
          %v1327 = vadd.f32 %v995, %v1295
          %v1328 = vadd.f32 %v996, %v1296
          %v1329 = vadd.f32 %v997, %v1297
          %v1330 = vadd.f32 %v998, %v1298
          %v1331 = vadd.f32 %v999, %v1299
          %v1332 = vadd.f32 %v1000, %v1300
          %v1333 = vadd.f32 %v1001, %v1301
          %v1334 = vadd.f32 %v1002, %v1302
          %v1335 = vadd.f32 %v1003, %v1303
          %v1336 = vadd.f32 %v1004, %v1304
          %v1337 = vadd.f32 %v1005, %v1305
          %v1338 = vadd.f32 %v1006, %v1306
          %v1339 = vadd.f32 %v1007, %v1307
          %v1340 = vadd.f32 %v1008, %v1308
          %v1341 = vld [vmem:[#allocation2 + $0x107] sm:$0xff]
          %v1342 = vld [vmem:[#allocation2 + $0x10f] sm:$0xff]
          %v1343 = vsel %vm505, %v443, 0.0
          %v1344 = vsel %vm506, %v444, 0.0
          %v1345 = vsel %vm507, %v445, 0.0
          %v1346 = vsel %vm508, %v446, 0.0
          %v1347 = vsel %vm509, %v447, 0.0
          %v1348 = vsel %vm510, %v448, 0.0
          %v1349 = vsel %vm511, %v449, 0.0
          %v1350 = vsel %vm512, %v450, 0.0
          %v1351 = vsel %vm513, %v451, 0.0
          %v1352 = vsel %vm514, %v452, 0.0
          %v1353 = vsel %vm515, %v453, 0.0
          %v1354 = vsel %vm516, %v454, 0.0
          %v1355 = vsel %vm517, %v455, 0.0
          %v1356 = vsel %vm518, %v456, 0.0
          %v1357 = vsel %vm519, %v457, 0.0
          %v1358 = vsel %vm520, %v458, 0.0
          %v1359 = vsel %vm521, %v459, 0.0
          %v1360 = vsel %vm522, %v460, 0.0
          %v1361 = vsel %vm523, %v461, 0.0
          %v1362 = vsel %vm524, %v462, 0.0
          %v1363 = vsel %vm525, %v463, 0.0
          %v1364 = vsel %vm526, %v464, 0.0
          %v1365 = vsel %vm527, %v465, 0.0
          %v1366 = vsel %vm528, %v466, 0.0
          %v1367 = vsel %vm529, %v467, 0.0
          %v1368 = vsel %vm530, %v468, 0.0
          %v1369 = vsel %vm531, %v469, 0.0
          %v1370 = vsel %vm532, %v470, 0.0
          %v1371 = vsel %vm533, %v471, 0.0
          %v1372 = vsel %vm534, %v472, 0.0
          %v1373 = vsel %vm535, %v1341, 0.0
          %v1374 = vsel %vm536, %v1342, 0.0
          %v1375 = vlaneseq
          %v1376 = vshrl.u32 %v1375, 7
          %v1377 = vsub.s32 3, %v1376
          %v1378 = vrot.slane %v308, %v1377
          %v1379 = vmul.f32 %v1343, %v1378
          %v1380 = vmul.f32 %v1344, %v1378
          %v1381 = vmul.f32 %v1345, %v1378
          %v1382 = vmul.f32 %v1346, %v1378
          %v1383 = vmul.f32 %v1347, %v1378
          %v1384 = vmul.f32 %v1348, %v1378
          %v1385 = vmul.f32 %v1349, %v1378
          %v1386 = vmul.f32 %v1350, %v1378
          %v1387 = vmul.f32 %v1351, %v1378
          %v1388 = vmul.f32 %v1352, %v1378
          %v1389 = vmul.f32 %v1353, %v1378
          %v1390 = vmul.f32 %v1354, %v1378
          %v1391 = vmul.f32 %v1355, %v1378
          %v1392 = vmul.f32 %v1356, %v1378
          %v1393 = vmul.f32 %v1357, %v1378
          %v1394 = vmul.f32 %v1358, %v1378
          %v1395 = vmul.f32 %v1359, %v1378
          %v1396 = vmul.f32 %v1360, %v1378
          %v1397 = vmul.f32 %v1361, %v1378
          %v1398 = vmul.f32 %v1362, %v1378
          %v1399 = vmul.f32 %v1363, %v1378
          %v1400 = vmul.f32 %v1364, %v1378
          %v1401 = vmul.f32 %v1365, %v1378
          %v1402 = vmul.f32 %v1366, %v1378
          %v1403 = vmul.f32 %v1367, %v1378
          %v1404 = vmul.f32 %v1368, %v1378
          %v1405 = vmul.f32 %v1369, %v1378
          %v1406 = vmul.f32 %v1370, %v1378
          %v1407 = vmul.f32 %v1371, %v1378
          %v1408 = vmul.f32 %v1372, %v1378
          %v1409 = vmul.f32 %v1373, %v1378
          %v1410 = vmul.f32 %v1374, %v1378
          %v1411 = vadd.f32 %v1173, %v1379
          %v1412 = vadd.f32 %v1174, %v1380
          %v1413 = vadd.f32 %v1175, %v1381
          %v1414 = vadd.f32 %v1176, %v1382
          %v1415 = vadd.f32 %v1177, %v1383
          %v1416 = vadd.f32 %v1178, %v1384
          %v1417 = vadd.f32 %v1179, %v1385
          %v1418 = vadd.f32 %v1180, %v1386
          %v1419 = vadd.f32 %v1181, %v1387
          %v1420 = vadd.f32 %v1182, %v1388
          %v1421 = vadd.f32 %v1183, %v1389
          %v1422 = vadd.f32 %v1184, %v1390
          %v1423 = vadd.f32 %v1185, %v1391
          %v1424 = vadd.f32 %v1186, %v1392
          %v1425 = vadd.f32 %v1187, %v1393
          %v1426 = vadd.f32 %v1188, %v1394
          %v1427 = vadd.f32 %v1189, %v1395
          %v1428 = vadd.f32 %v1190, %v1396
          %v1429 = vadd.f32 %v1191, %v1397
          %v1430 = vadd.f32 %v1192, %v1398
          %v1431 = vadd.f32 %v1193, %v1399
          %v1432 = vadd.f32 %v1194, %v1400
          %v1433 = vadd.f32 %v1195, %v1401
          %v1434 = vadd.f32 %v1196, %v1402
          %v1435 = vadd.f32 %v1197, %v1403
          %v1436 = vadd.f32 %v1198, %v1404
          %v1437 = vadd.f32 %v1199, %v1405
          %v1438 = vadd.f32 %v1200, %v1406
          %v1439 = vadd.f32 %v1201, %v1407
          %v1440 = vadd.f32 %v1202, %v1408
          %v1441 = vadd.f32 %v1203, %v1409
          %v1442 = vadd.f32 %v1204, %v1410
          %v1443 = vlaneseq
          %v1444 = vshrl.u32 %v1443, 7
          %v1445 = vsub.s32 4, %v1444
          %v1446 = vrot.slane %v309, %v1445
          %v1447 = vmul.f32 %v1343, %v1446
          %v1448 = vmul.f32 %v1344, %v1446
          %v1449 = vmul.f32 %v1345, %v1446
          %v1450 = vmul.f32 %v1346, %v1446
          %v1451 = vmul.f32 %v1347, %v1446
          %v1452 = vmul.f32 %v1348, %v1446
          %v1453 = vmul.f32 %v1349, %v1446
          %v1454 = vmul.f32 %v1350, %v1446
          %v1455 = vmul.f32 %v1351, %v1446
          %v1456 = vmul.f32 %v1352, %v1446
          %v1457 = vmul.f32 %v1353, %v1446
          %v1458 = vmul.f32 %v1354, %v1446
          %v1459 = vmul.f32 %v1355, %v1446
          %v1460 = vmul.f32 %v1356, %v1446
          %v1461 = vmul.f32 %v1357, %v1446
          %v1462 = vmul.f32 %v1358, %v1446
          %v1463 = vmul.f32 %v1359, %v1446
          %v1464 = vmul.f32 %v1360, %v1446
          %v1465 = vmul.f32 %v1361, %v1446
          %v1466 = vmul.f32 %v1362, %v1446
          %v1467 = vmul.f32 %v1363, %v1446
          %v1468 = vmul.f32 %v1364, %v1446
          %v1469 = vmul.f32 %v1365, %v1446
          %v1470 = vmul.f32 %v1366, %v1446
          %v1471 = vmul.f32 %v1367, %v1446
          %v1472 = vmul.f32 %v1368, %v1446
          %v1473 = vmul.f32 %v1369, %v1446
          %v1474 = vmul.f32 %v1370, %v1446
          %v1475 = vmul.f32 %v1371, %v1446
          %v1476 = vmul.f32 %v1372, %v1446
          %v1477 = vmul.f32 %v1373, %v1446
          %v1478 = vmul.f32 %v1374, %v1446
          %v1479 = vadd.f32 %v1241, %v1447
          %v1480 = vadd.f32 %v1242, %v1448
          %v1481 = vadd.f32 %v1243, %v1449
          %v1482 = vadd.f32 %v1244, %v1450
          %v1483 = vadd.f32 %v1245, %v1451
          %v1484 = vadd.f32 %v1246, %v1452
          %v1485 = vadd.f32 %v1247, %v1453
          %v1486 = vadd.f32 %v1248, %v1454
          %v1487 = vadd.f32 %v1249, %v1455
          %v1488 = vadd.f32 %v1250, %v1456
          %v1489 = vadd.f32 %v1251, %v1457
          %v1490 = vadd.f32 %v1252, %v1458
          %v1491 = vadd.f32 %v1253, %v1459
          %v1492 = vadd.f32 %v1254, %v1460
          %v1493 = vadd.f32 %v1255, %v1461
          %v1494 = vadd.f32 %v1256, %v1462
          %v1495 = vadd.f32 %v1257, %v1463
          %v1496 = vadd.f32 %v1258, %v1464
          %v1497 = vadd.f32 %v1259, %v1465
          %v1498 = vadd.f32 %v1260, %v1466
          %v1499 = vadd.f32 %v1261, %v1467
          %v1500 = vadd.f32 %v1262, %v1468
          %v1501 = vadd.f32 %v1263, %v1469
          %v1502 = vadd.f32 %v1264, %v1470
          %v1503 = vadd.f32 %v1265, %v1471
          %v1504 = vadd.f32 %v1266, %v1472
          %v1505 = vadd.f32 %v1267, %v1473
          %v1506 = vadd.f32 %v1268, %v1474
          %v1507 = vadd.f32 %v1269, %v1475
          %v1508 = vadd.f32 %v1270, %v1476
          %v1509 = vadd.f32 %v1271, %v1477
          %v1510 = vadd.f32 %v1272, %v1478
          %v1511 = vlaneseq
          %v1512 = vshrl.u32 %v1511, 7
          %v1513 = vsub.s32 5, %v1512
          %v1514 = vrot.slane %v310, %v1513
          %v1515 = vmul.f32 %v1343, %v1514
          %v1516 = vmul.f32 %v1344, %v1514
          %v1517 = vmul.f32 %v1345, %v1514
          %v1518 = vmul.f32 %v1346, %v1514
          %v1519 = vmul.f32 %v1347, %v1514
          %v1520 = vmul.f32 %v1348, %v1514
          %v1521 = vmul.f32 %v1349, %v1514
          %v1522 = vmul.f32 %v1350, %v1514
          %v1523 = vmul.f32 %v1351, %v1514
          %v1524 = vmul.f32 %v1352, %v1514
          %v1525 = vmul.f32 %v1353, %v1514
          %v1526 = vmul.f32 %v1354, %v1514
          %v1527 = vmul.f32 %v1355, %v1514
          %v1528 = vmul.f32 %v1356, %v1514
          %v1529 = vmul.f32 %v1357, %v1514
          %v1530 = vmul.f32 %v1358, %v1514
          %v1531 = vmul.f32 %v1359, %v1514
          %v1532 = vmul.f32 %v1360, %v1514
          %v1533 = vmul.f32 %v1361, %v1514
          %v1534 = vmul.f32 %v1362, %v1514
          %v1535 = vmul.f32 %v1363, %v1514
          %v1536 = vmul.f32 %v1364, %v1514
          %v1537 = vmul.f32 %v1365, %v1514
          %v1538 = vmul.f32 %v1366, %v1514
          %v1539 = vmul.f32 %v1367, %v1514
          %v1540 = vmul.f32 %v1368, %v1514
          %v1541 = vmul.f32 %v1369, %v1514
          %v1542 = vmul.f32 %v1370, %v1514
          %v1543 = vmul.f32 %v1371, %v1514
          %v1544 = vmul.f32 %v1372, %v1514
          %v1545 = vmul.f32 %v1373, %v1514
          %v1546 = vmul.f32 %v1374, %v1514
          %v1547 = vadd.f32 %v1309, %v1515
          %v1548 = vadd.f32 %v1310, %v1516
          %v1549 = vadd.f32 %v1311, %v1517
          %v1550 = vadd.f32 %v1312, %v1518
          %v1551 = vadd.f32 %v1313, %v1519
          %v1552 = vadd.f32 %v1314, %v1520
          %v1553 = vadd.f32 %v1315, %v1521
          %v1554 = vadd.f32 %v1316, %v1522
          %v1555 = vadd.f32 %v1317, %v1523
          %v1556 = vadd.f32 %v1318, %v1524
          %v1557 = vadd.f32 %v1319, %v1525
          %v1558 = vadd.f32 %v1320, %v1526
          %v1559 = vadd.f32 %v1321, %v1527
          %v1560 = vadd.f32 %v1322, %v1528
          %v1561 = vadd.f32 %v1323, %v1529
          %v1562 = vadd.f32 %v1324, %v1530
          %v1563 = vadd.f32 %v1325, %v1531
          %v1564 = vadd.f32 %v1326, %v1532
          %v1565 = vadd.f32 %v1327, %v1533
          %v1566 = vadd.f32 %v1328, %v1534
          %v1567 = vadd.f32 %v1329, %v1535
          %v1568 = vadd.f32 %v1330, %v1536
          %v1569 = vadd.f32 %v1331, %v1537
          %v1570 = vadd.f32 %v1332, %v1538
          %v1571 = vadd.f32 %v1333, %v1539
          %v1572 = vadd.f32 %v1334, %v1540
          %v1573 = vadd.f32 %v1335, %v1541
          %v1574 = vadd.f32 %v1336, %v1542
          %v1575 = vadd.f32 %v1337, %v1543
          %v1576 = vadd.f32 %v1338, %v1544
          %v1577 = vadd.f32 %v1339, %v1545
          %v1578 = vadd.f32 %v1340, %v1546
          %v1579 = vld [vmem:[#allocation2 + $0x108] sm:$0xff]
          %v1580 = vld [vmem:[#allocation2 + $0x110] sm:$0xff]
          %v1581 = vlaneseq
          %v1582 = vshrl.u32 %v1581, 7
          %v1583 = vsub.s32 4, %v1582
          %v1584 = vrot.slane %v308, %v1583
          %v1585 = vmul.f32 %v775, %v1584
          %v1586 = vmul.f32 %v776, %v1584
          %v1587 = vmul.f32 %v777, %v1584
          %v1588 = vmul.f32 %v778, %v1584
          %v1589 = vmul.f32 %v779, %v1584
          %v1590 = vmul.f32 %v780, %v1584
          %v1591 = vmul.f32 %v781, %v1584
          %v1592 = vmul.f32 %v782, %v1584
          %v1593 = vmul.f32 %v783, %v1584
          %v1594 = vmul.f32 %v784, %v1584
          %v1595 = vmul.f32 %v785, %v1584
          %v1596 = vmul.f32 %v786, %v1584
          %v1597 = vmul.f32 %v787, %v1584
          %v1598 = vmul.f32 %v788, %v1584
          %v1599 = vmul.f32 %v789, %v1584
          %v1600 = vmul.f32 %v790, %v1584
          %v1601 = vmul.f32 %v791, %v1584
          %v1602 = vmul.f32 %v792, %v1584
          %v1603 = vmul.f32 %v793, %v1584
          %v1604 = vmul.f32 %v794, %v1584
          %v1605 = vmul.f32 %v795, %v1584
          %v1606 = vmul.f32 %v796, %v1584
          %v1607 = vmul.f32 %v797, %v1584
          %v1608 = vmul.f32 %v798, %v1584
          %v1609 = vmul.f32 %v799, %v1584
          %v1610 = vmul.f32 %v800, %v1584
          %v1611 = vmul.f32 %v801, %v1584
          %v1612 = vmul.f32 %v802, %v1584
          %v1613 = vmul.f32 %v803, %v1584
          %v1614 = vmul.f32 %v804, %v1584
          %v1615 = vmul.f32 %v1579, %v1584
          %v1616 = vmul.f32 %v1580, %v1584
          %v1617 = vadd.f32 %v1411, %v1585
          %v1618 = vadd.f32 %v1412, %v1586
          %v1619 = vadd.f32 %v1413, %v1587
          %v1620 = vadd.f32 %v1414, %v1588
          %v1621 = vadd.f32 %v1415, %v1589
          %v1622 = vadd.f32 %v1416, %v1590
          %v1623 = vadd.f32 %v1417, %v1591
          %v1624 = vadd.f32 %v1418, %v1592
          %v1625 = vadd.f32 %v1419, %v1593
          %v1626 = vadd.f32 %v1420, %v1594
          %v1627 = vadd.f32 %v1421, %v1595
          %v1628 = vadd.f32 %v1422, %v1596
          %v1629 = vadd.f32 %v1423, %v1597
          %v1630 = vadd.f32 %v1424, %v1598
          %v1631 = vadd.f32 %v1425, %v1599
          %v1632 = vadd.f32 %v1426, %v1600
          %v1633 = vadd.f32 %v1427, %v1601
          %v1634 = vadd.f32 %v1428, %v1602
          %v1635 = vadd.f32 %v1429, %v1603
          %v1636 = vadd.f32 %v1430, %v1604
          %v1637 = vadd.f32 %v1431, %v1605
          %v1638 = vadd.f32 %v1432, %v1606
          %v1639 = vadd.f32 %v1433, %v1607
          %v1640 = vadd.f32 %v1434, %v1608
          %v1641 = vadd.f32 %v1435, %v1609
          %v1642 = vadd.f32 %v1436, %v1610
          %v1643 = vadd.f32 %v1437, %v1611
          %v1644 = vadd.f32 %v1438, %v1612
          %v1645 = vadd.f32 %v1439, %v1613
          %v1646 = vadd.f32 %v1440, %v1614
          %v1647 = vadd.f32 %v1441, %v1615
          %v1648 = vadd.f32 %v1442, %v1616
          %v1649 = vlaneseq
          %v1650 = vshrl.u32 %v1649, 7
          %v1651 = vsub.s32 5, %v1650
          %v1652 = vrot.slane %v309, %v1651
          %v1653 = vmul.f32 %v775, %v1652
          %v1654 = vmul.f32 %v776, %v1652
          %v1655 = vmul.f32 %v777, %v1652
          %v1656 = vmul.f32 %v778, %v1652
          %v1657 = vmul.f32 %v779, %v1652
          %v1658 = vmul.f32 %v780, %v1652
          %v1659 = vmul.f32 %v781, %v1652
          %v1660 = vmul.f32 %v782, %v1652
          %v1661 = vmul.f32 %v783, %v1652
          %v1662 = vmul.f32 %v784, %v1652
          %v1663 = vmul.f32 %v785, %v1652
          %v1664 = vmul.f32 %v786, %v1652
          %v1665 = vmul.f32 %v787, %v1652
          %v1666 = vmul.f32 %v788, %v1652
          %v1667 = vmul.f32 %v789, %v1652
          %v1668 = vmul.f32 %v790, %v1652
          %v1669 = vmul.f32 %v791, %v1652
          %v1670 = vmul.f32 %v792, %v1652
          %v1671 = vmul.f32 %v793, %v1652
          %v1672 = vmul.f32 %v794, %v1652
          %v1673 = vmul.f32 %v795, %v1652
          %v1674 = vmul.f32 %v796, %v1652
          %v1675 = vmul.f32 %v797, %v1652
          %v1676 = vmul.f32 %v798, %v1652
          %v1677 = vmul.f32 %v799, %v1652
          %v1678 = vmul.f32 %v800, %v1652
          %v1679 = vmul.f32 %v801, %v1652
          %v1680 = vmul.f32 %v802, %v1652
          %v1681 = vmul.f32 %v803, %v1652
          %v1682 = vmul.f32 %v804, %v1652
          %v1683 = vmul.f32 %v1579, %v1652
          %v1684 = vmul.f32 %v1580, %v1652
          %v1685 = vadd.f32 %v1479, %v1653
          %v1686 = vadd.f32 %v1480, %v1654
          %v1687 = vadd.f32 %v1481, %v1655
          %v1688 = vadd.f32 %v1482, %v1656
          %v1689 = vadd.f32 %v1483, %v1657
          %v1690 = vadd.f32 %v1484, %v1658
          %v1691 = vadd.f32 %v1485, %v1659
          %v1692 = vadd.f32 %v1486, %v1660
          %v1693 = vadd.f32 %v1487, %v1661
          %v1694 = vadd.f32 %v1488, %v1662
          %v1695 = vadd.f32 %v1489, %v1663
          %v1696 = vadd.f32 %v1490, %v1664
          %v1697 = vadd.f32 %v1491, %v1665
          %v1698 = vadd.f32 %v1492, %v1666
          %v1699 = vadd.f32 %v1493, %v1667
          %v1700 = vadd.f32 %v1494, %v1668
          %v1701 = vadd.f32 %v1495, %v1669
          %v1702 = vadd.f32 %v1496, %v1670
          %v1703 = vadd.f32 %v1497, %v1671
          %v1704 = vadd.f32 %v1498, %v1672
          %v1705 = vadd.f32 %v1499, %v1673
          %v1706 = vadd.f32 %v1500, %v1674
          %v1707 = vadd.f32 %v1501, %v1675
          %v1708 = vadd.f32 %v1502, %v1676
          %v1709 = vadd.f32 %v1503, %v1677
          %v1710 = vadd.f32 %v1504, %v1678
          %v1711 = vadd.f32 %v1505, %v1679
          %v1712 = vadd.f32 %v1506, %v1680
          %v1713 = vadd.f32 %v1507, %v1681
          %v1714 = vadd.f32 %v1508, %v1682
          %v1715 = vadd.f32 %v1509, %v1683
          %v1716 = vadd.f32 %v1510, %v1684
          %v1717 = vlaneseq
          %v1718 = vshrl.u32 %v1717, 7
          %v1719 = vsub.s32 6, %v1718
          %v1720 = vrot.slane %v310, %v1719
          %v1721 = vmul.f32 %v775, %v1720
          %v1722 = vmul.f32 %v776, %v1720
          %v1723 = vmul.f32 %v777, %v1720
          %v1724 = vmul.f32 %v778, %v1720
          %v1725 = vmul.f32 %v779, %v1720
          %v1726 = vmul.f32 %v780, %v1720
          %v1727 = vmul.f32 %v781, %v1720
          %v1728 = vmul.f32 %v782, %v1720
          %v1729 = vmul.f32 %v783, %v1720
          %v1730 = vmul.f32 %v784, %v1720
          %v1731 = vmul.f32 %v785, %v1720
          %v1732 = vmul.f32 %v786, %v1720
          %v1733 = vmul.f32 %v787, %v1720
          %v1734 = vmul.f32 %v788, %v1720
          %v1735 = vmul.f32 %v789, %v1720
          %v1736 = vmul.f32 %v790, %v1720
          %v1737 = vmul.f32 %v791, %v1720
          %v1738 = vmul.f32 %v792, %v1720
          %v1739 = vmul.f32 %v793, %v1720
          %v1740 = vmul.f32 %v794, %v1720
          %v1741 = vmul.f32 %v795, %v1720
          %v1742 = vmul.f32 %v796, %v1720
          %v1743 = vmul.f32 %v797, %v1720
          %v1744 = vmul.f32 %v798, %v1720
          %v1745 = vmul.f32 %v799, %v1720
          %v1746 = vmul.f32 %v800, %v1720
          %v1747 = vmul.f32 %v801, %v1720
          %v1748 = vmul.f32 %v802, %v1720
          %v1749 = vmul.f32 %v803, %v1720
          %v1750 = vmul.f32 %v804, %v1720
          %v1751 = vmul.f32 %v1579, %v1720
          %v1752 = vmul.f32 %v1580, %v1720
          %v1753 = vadd.f32 %v1547, %v1721
          %v1754 = vadd.f32 %v1548, %v1722
          %v1755 = vadd.f32 %v1549, %v1723
          %v1756 = vadd.f32 %v1550, %v1724
          %v1757 = vadd.f32 %v1551, %v1725
          %v1758 = vadd.f32 %v1552, %v1726
          %v1759 = vadd.f32 %v1553, %v1727
          %v1760 = vadd.f32 %v1554, %v1728
          %v1761 = vadd.f32 %v1555, %v1729
          %v1762 = vadd.f32 %v1556, %v1730
          %v1763 = vadd.f32 %v1557, %v1731
          %v1764 = vadd.f32 %v1558, %v1732
          %v1765 = vadd.f32 %v1559, %v1733
          %v1766 = vadd.f32 %v1560, %v1734
          %v1767 = vadd.f32 %v1561, %v1735
          %v1768 = vadd.f32 %v1562, %v1736
          %v1769 = vadd.f32 %v1563, %v1737
          %v1770 = vadd.f32 %v1564, %v1738
          %v1771 = vadd.f32 %v1565, %v1739
          %v1772 = vadd.f32 %v1566, %v1740
          %v1773 = vadd.f32 %v1567, %v1741
          %v1774 = vadd.f32 %v1568, %v1742
          %v1775 = vadd.f32 %v1569, %v1743
          %v1776 = vadd.f32 %v1570, %v1744
          %v1777 = vadd.f32 %v1571, %v1745
          %v1778 = vadd.f32 %v1572, %v1746
          %v1779 = vadd.f32 %v1573, %v1747
          %v1780 = vadd.f32 %v1574, %v1748
          %v1781 = vadd.f32 %v1575, %v1749
          %v1782 = vadd.f32 %v1576, %v1750
          %v1783 = vadd.f32 %v1577, %v1751
          %v1784 = vadd.f32 %v1578, %v1752
          %v1785 = vld [vmem:[#allocation2 + $0x109] sm:$0xff]
          %v1786 = vld [vmem:[#allocation2 + $0x111] sm:$0xff]
          %v1787 = vsel %vm1073, %v1011, 0.0
          %v1788 = vsel %vm1074, %v1012, 0.0
          %v1789 = vsel %vm1075, %v1013, 0.0
          %v1790 = vsel %vm1076, %v1014, 0.0
          %v1791 = vsel %vm1077, %v1015, 0.0
          %v1792 = vsel %vm1078, %v1016, 0.0
          %v1793 = vsel %vm1079, %v1017, 0.0
          %v1794 = vsel %vm1080, %v1018, 0.0
          %v1795 = vsel %vm1081, %v1019, 0.0
          %v1796 = vsel %vm1082, %v1020, 0.0
          %v1797 = vsel %vm1083, %v1021, 0.0
          %v1798 = vsel %vm1084, %v1022, 0.0
          %v1799 = vsel %vm1085, %v1023, 0.0
          %v1800 = vsel %vm1086, %v1024, 0.0
          %v1801 = vsel %vm1087, %v1025, 0.0
          %v1802 = vsel %vm1088, %v1026, 0.0
          %v1803 = vsel %vm1089, %v1027, 0.0
          %v1804 = vsel %vm1090, %v1028, 0.0
          %v1805 = vsel %vm1091, %v1029, 0.0
          %v1806 = vsel %vm1092, %v1030, 0.0
          %v1807 = vsel %vm1093, %v1031, 0.0
          %v1808 = vsel %vm1094, %v1032, 0.0
          %v1809 = vsel %vm1095, %v1033, 0.0
          %v1810 = vsel %vm1096, %v1034, 0.0
          %v1811 = vsel %vm1097, %v1035, 0.0
          %v1812 = vsel %vm1098, %v1036, 0.0
          %v1813 = vsel %vm1099, %v1037, 0.0
          %v1814 = vsel %vm1100, %v1038, 0.0
          %v1815 = vsel %vm1101, %v1039, 0.0
          %v1816 = vsel %vm1102, %v1040, 0.0
          %v1817 = vsel %vm1103, %v1785, 0.0
          %v1818 = vsel %vm1104, %v1786, 0.0
          %v1819 = vlaneseq
          %v1820 = vshrl.u32 %v1819, 7
          %v1821 = vsub.s32 5, %v1820
          %v1822 = vrot.slane %v308, %v1821
          %v1823 = vmul.f32 %v1787, %v1822
          %v1824 = vmul.f32 %v1788, %v1822
          %v1825 = vmul.f32 %v1789, %v1822
          %v1826 = vmul.f32 %v1790, %v1822
          %v1827 = vmul.f32 %v1791, %v1822
          %v1828 = vmul.f32 %v1792, %v1822
          %v1829 = vmul.f32 %v1793, %v1822
          %v1830 = vmul.f32 %v1794, %v1822
          %v1831 = vmul.f32 %v1795, %v1822
          %v1832 = vmul.f32 %v1796, %v1822
          %v1833 = vmul.f32 %v1797, %v1822
          %v1834 = vmul.f32 %v1798, %v1822
          %v1835 = vmul.f32 %v1799, %v1822
          %v1836 = vmul.f32 %v1800, %v1822
          %v1837 = vmul.f32 %v1801, %v1822
          %v1838 = vmul.f32 %v1802, %v1822
          %v1839 = vmul.f32 %v1803, %v1822
          %v1840 = vmul.f32 %v1804, %v1822
          %v1841 = vmul.f32 %v1805, %v1822
          %v1842 = vmul.f32 %v1806, %v1822
          %v1843 = vmul.f32 %v1807, %v1822
          %v1844 = vmul.f32 %v1808, %v1822
          %v1845 = vmul.f32 %v1809, %v1822
          %v1846 = vmul.f32 %v1810, %v1822
          %v1847 = vmul.f32 %v1811, %v1822
          %v1848 = vmul.f32 %v1812, %v1822
          %v1849 = vmul.f32 %v1813, %v1822
          %v1850 = vmul.f32 %v1814, %v1822
          %v1851 = vmul.f32 %v1815, %v1822
          %v1852 = vmul.f32 %v1816, %v1822
          %v1853 = vmul.f32 %v1817, %v1822
          %v1854 = vmul.f32 %v1818, %v1822
          %v1855 = vadd.f32 %v1617, %v1823
          %v1856 = vadd.f32 %v1618, %v1824
          %v1857 = vadd.f32 %v1619, %v1825
          %v1858 = vadd.f32 %v1620, %v1826
          %v1859 = vadd.f32 %v1621, %v1827
          %v1860 = vadd.f32 %v1622, %v1828
          %v1861 = vadd.f32 %v1623, %v1829
          %v1862 = vadd.f32 %v1624, %v1830
          %v1863 = vadd.f32 %v1625, %v1831
          %v1864 = vadd.f32 %v1626, %v1832
          %v1865 = vadd.f32 %v1627, %v1833
          %v1866 = vadd.f32 %v1628, %v1834
          %v1867 = vadd.f32 %v1629, %v1835
          %v1868 = vadd.f32 %v1630, %v1836
          %v1869 = vadd.f32 %v1631, %v1837
          %v1870 = vadd.f32 %v1632, %v1838
          %v1871 = vadd.f32 %v1633, %v1839
          %v1872 = vadd.f32 %v1634, %v1840
          %v1873 = vadd.f32 %v1635, %v1841
          %v1874 = vadd.f32 %v1636, %v1842
          %v1875 = vadd.f32 %v1637, %v1843
          %v1876 = vadd.f32 %v1638, %v1844
          %v1877 = vadd.f32 %v1639, %v1845
          %v1878 = vadd.f32 %v1640, %v1846
          %v1879 = vadd.f32 %v1641, %v1847
          %v1880 = vadd.f32 %v1642, %v1848
          %v1881 = vadd.f32 %v1643, %v1849
          %v1882 = vadd.f32 %v1644, %v1850
          %v1883 = vadd.f32 %v1645, %v1851
          %v1884 = vadd.f32 %v1646, %v1852
          %v1885 = vadd.f32 %v1647, %v1853
          %v1886 = vadd.f32 %v1648, %v1854
          %v1887 = vlaneseq
          %v1888 = vshrl.u32 %v1887, 7
          %v1889 = vsub.s32 6, %v1888
          %v1890 = vrot.slane %v309, %v1889
          %v1891 = vmul.f32 %v1787, %v1890
          %v1892 = vmul.f32 %v1788, %v1890
          %v1893 = vmul.f32 %v1789, %v1890
          %v1894 = vmul.f32 %v1790, %v1890
          %v1895 = vmul.f32 %v1791, %v1890
          %v1896 = vmul.f32 %v1792, %v1890
          %v1897 = vmul.f32 %v1793, %v1890
          %v1898 = vmul.f32 %v1794, %v1890
          %v1899 = vmul.f32 %v1795, %v1890
          %v1900 = vmul.f32 %v1796, %v1890
          %v1901 = vmul.f32 %v1797, %v1890
          %v1902 = vmul.f32 %v1798, %v1890
          %v1903 = vmul.f32 %v1799, %v1890
          %v1904 = vmul.f32 %v1800, %v1890
          %v1905 = vmul.f32 %v1801, %v1890
          %v1906 = vmul.f32 %v1802, %v1890
          %v1907 = vmul.f32 %v1803, %v1890
          %v1908 = vmul.f32 %v1804, %v1890
          %v1909 = vmul.f32 %v1805, %v1890
          %v1910 = vmul.f32 %v1806, %v1890
          %v1911 = vmul.f32 %v1807, %v1890
          %v1912 = vmul.f32 %v1808, %v1890
          %v1913 = vmul.f32 %v1809, %v1890
          %v1914 = vmul.f32 %v1810, %v1890
          %v1915 = vmul.f32 %v1811, %v1890
          %v1916 = vmul.f32 %v1812, %v1890
          %v1917 = vmul.f32 %v1813, %v1890
          %v1918 = vmul.f32 %v1814, %v1890
          %v1919 = vmul.f32 %v1815, %v1890
          %v1920 = vmul.f32 %v1816, %v1890
          %v1921 = vmul.f32 %v1817, %v1890
          %v1922 = vmul.f32 %v1818, %v1890
          %v1923 = vadd.f32 %v1685, %v1891
          %v1924 = vadd.f32 %v1686, %v1892
          %v1925 = vadd.f32 %v1687, %v1893
          %v1926 = vadd.f32 %v1688, %v1894
          %v1927 = vadd.f32 %v1689, %v1895
          %v1928 = vadd.f32 %v1690, %v1896
          %v1929 = vadd.f32 %v1691, %v1897
          %v1930 = vadd.f32 %v1692, %v1898
          %v1931 = vadd.f32 %v1693, %v1899
          %v1932 = vadd.f32 %v1694, %v1900
          %v1933 = vadd.f32 %v1695, %v1901
          %v1934 = vadd.f32 %v1696, %v1902
          %v1935 = vadd.f32 %v1697, %v1903
          %v1936 = vadd.f32 %v1698, %v1904
          %v1937 = vadd.f32 %v1699, %v1905
          %v1938 = vadd.f32 %v1700, %v1906
          %v1939 = vadd.f32 %v1701, %v1907
          %v1940 = vadd.f32 %v1702, %v1908
          %v1941 = vadd.f32 %v1703, %v1909
          %v1942 = vadd.f32 %v1704, %v1910
          %v1943 = vadd.f32 %v1705, %v1911
          %v1944 = vadd.f32 %v1706, %v1912
          %v1945 = vadd.f32 %v1707, %v1913
          %v1946 = vadd.f32 %v1708, %v1914
          %v1947 = vadd.f32 %v1709, %v1915
          %v1948 = vadd.f32 %v1710, %v1916
          %v1949 = vadd.f32 %v1711, %v1917
          %v1950 = vadd.f32 %v1712, %v1918
          %v1951 = vadd.f32 %v1713, %v1919
          %v1952 = vadd.f32 %v1714, %v1920
          %v1953 = vadd.f32 %v1715, %v1921
          %v1954 = vadd.f32 %v1716, %v1922
          %v1955 = vlaneseq
          %v1956 = vshrl.u32 %v1955, 7
          %v1957 = vsub.s32 7, %v1956
          %v1958 = vrot.slane %v310, %v1957
          %v1959 = vmul.f32 %v1787, %v1958
          %v1960 = vmul.f32 %v1788, %v1958
          %v1961 = vmul.f32 %v1789, %v1958
          %v1962 = vmul.f32 %v1790, %v1958
          %v1963 = vmul.f32 %v1791, %v1958
          %v1964 = vmul.f32 %v1792, %v1958
          %v1965 = vmul.f32 %v1793, %v1958
          %v1966 = vmul.f32 %v1794, %v1958
          %v1967 = vmul.f32 %v1795, %v1958
          %v1968 = vmul.f32 %v1796, %v1958
          %v1969 = vmul.f32 %v1797, %v1958
          %v1970 = vmul.f32 %v1798, %v1958
          %v1971 = vmul.f32 %v1799, %v1958
          %v1972 = vmul.f32 %v1800, %v1958
          %v1973 = vmul.f32 %v1801, %v1958
          %v1974 = vmul.f32 %v1802, %v1958
          %v1975 = vmul.f32 %v1803, %v1958
          %v1976 = vmul.f32 %v1804, %v1958
          %v1977 = vmul.f32 %v1805, %v1958
          %v1978 = vmul.f32 %v1806, %v1958
          %v1979 = vmul.f32 %v1807, %v1958
          %v1980 = vmul.f32 %v1808, %v1958
          %v1981 = vmul.f32 %v1809, %v1958
          %v1982 = vmul.f32 %v1810, %v1958
          %v1983 = vmul.f32 %v1811, %v1958
          %v1984 = vmul.f32 %v1812, %v1958
          %v1985 = vmul.f32 %v1813, %v1958
          %v1986 = vmul.f32 %v1814, %v1958
          %v1987 = vmul.f32 %v1815, %v1958
          %v1988 = vmul.f32 %v1816, %v1958
          %v1989 = vmul.f32 %v1817, %v1958
          %v1990 = vmul.f32 %v1818, %v1958
          %v1991 = vadd.f32 %v1753, %v1959
          %v1992 = vadd.f32 %v1754, %v1960
          %v1993 = vadd.f32 %v1755, %v1961
          %v1994 = vadd.f32 %v1756, %v1962
          %v1995 = vadd.f32 %v1757, %v1963
          %v1996 = vadd.f32 %v1758, %v1964
          %v1997 = vadd.f32 %v1759, %v1965
          %v1998 = vadd.f32 %v1760, %v1966
          %v1999 = vadd.f32 %v1761, %v1967
          %v2000 = vadd.f32 %v1762, %v1968
          %v2001 = vadd.f32 %v1763, %v1969
          %v2002 = vadd.f32 %v1764, %v1970
          %v2003 = vadd.f32 %v1765, %v1971
          %v2004 = vadd.f32 %v1766, %v1972
          %v2005 = vadd.f32 %v1767, %v1973
          %v2006 = vadd.f32 %v1768, %v1974
          %v2007 = vadd.f32 %v1769, %v1975
          %v2008 = vadd.f32 %v1770, %v1976
          %v2009 = vadd.f32 %v1771, %v1977
          %v2010 = vadd.f32 %v1772, %v1978
          %v2011 = vadd.f32 %v1773, %v1979
          %v2012 = vadd.f32 %v1774, %v1980
          %v2013 = vadd.f32 %v1775, %v1981
          %v2014 = vadd.f32 %v1776, %v1982
          %v2015 = vadd.f32 %v1777, %v1983
          %v2016 = vadd.f32 %v1778, %v1984
          %v2017 = vadd.f32 %v1779, %v1985
          %v2018 = vadd.f32 %v1780, %v1986
          %v2019 = vadd.f32 %v1781, %v1987
          %v2020 = vadd.f32 %v1782, %v1988
          %v2021 = vadd.f32 %v1783, %v1989
          %v2022 = vadd.f32 %v1784, %v1990
          %v2023 = vld [vmem:[#allocation2 + $0x117] sm:$0xff]
          %v2024 = vld [vmem:[#allocation2 + $0x11f] sm:$0xff]
          %v2025 = vsel %vm505, %v445, 0.0
          %v2026 = vsel %vm506, %v446, 0.0
          %v2027 = vsel %vm507, %v447, 0.0
          %v2028 = vsel %vm508, %v448, 0.0
          %v2029 = vsel %vm509, %v449, 0.0
          %v2030 = vsel %vm510, %v450, 0.0
          %v2031 = vsel %vm511, %v451, 0.0
          %v2032 = vsel %vm512, %v452, 0.0
          %v2033 = vsel %vm513, %v453, 0.0
          %v2034 = vsel %vm514, %v454, 0.0
          %v2035 = vsel %vm515, %v455, 0.0
          %v2036 = vsel %vm516, %v456, 0.0
          %v2037 = vsel %vm517, %v457, 0.0
          %v2038 = vsel %vm518, %v458, 0.0
          %v2039 = vsel %vm519, %v459, 0.0
          %v2040 = vsel %vm520, %v460, 0.0
          %v2041 = vsel %vm521, %v461, 0.0
          %v2042 = vsel %vm522, %v462, 0.0
          %v2043 = vsel %vm523, %v463, 0.0
          %v2044 = vsel %vm524, %v464, 0.0
          %v2045 = vsel %vm525, %v465, 0.0
          %v2046 = vsel %vm526, %v466, 0.0
          %v2047 = vsel %vm527, %v467, 0.0
          %v2048 = vsel %vm528, %v468, 0.0
          %v2049 = vsel %vm529, %v469, 0.0
          %v2050 = vsel %vm530, %v470, 0.0
          %v2051 = vsel %vm531, %v471, 0.0
          %v2052 = vsel %vm532, %v472, 0.0
          %v2053 = vsel %vm533, %v1341, 0.0
          %v2054 = vsel %vm534, %v1342, 0.0
          %v2055 = vsel %vm535, %v2023, 0.0
          %v2056 = vsel %vm536, %v2024, 0.0
          %v2057 = vlaneseq
          %v2058 = vshrl.u32 %v2057, 7
          %v2059 = vsub.s32 6, %v2058
          %v2060 = vrot.slane %v308, %v2059
          %v2061 = vmul.f32 %v2025, %v2060
          %v2062 = vmul.f32 %v2026, %v2060
          %v2063 = vmul.f32 %v2027, %v2060
          %v2064 = vmul.f32 %v2028, %v2060
          %v2065 = vmul.f32 %v2029, %v2060
          %v2066 = vmul.f32 %v2030, %v2060
          %v2067 = vmul.f32 %v2031, %v2060
          %v2068 = vmul.f32 %v2032, %v2060
          %v2069 = vmul.f32 %v2033, %v2060
          %v2070 = vmul.f32 %v2034, %v2060
          %v2071 = vmul.f32 %v2035, %v2060
          %v2072 = vmul.f32 %v2036, %v2060
          %v2073 = vmul.f32 %v2037, %v2060
          %v2074 = vmul.f32 %v2038, %v2060
          %v2075 = vmul.f32 %v2039, %v2060
          %v2076 = vmul.f32 %v2040, %v2060
          %v2077 = vmul.f32 %v2041, %v2060
          %v2078 = vmul.f32 %v2042, %v2060
          %v2079 = vmul.f32 %v2043, %v2060
          %v2080 = vmul.f32 %v2044, %v2060
          %v2081 = vmul.f32 %v2045, %v2060
          %v2082 = vmul.f32 %v2046, %v2060
          %v2083 = vmul.f32 %v2047, %v2060
          %v2084 = vmul.f32 %v2048, %v2060
          %v2085 = vmul.f32 %v2049, %v2060
          %v2086 = vmul.f32 %v2050, %v2060
          %v2087 = vmul.f32 %v2051, %v2060
          %v2088 = vmul.f32 %v2052, %v2060
          %v2089 = vmul.f32 %v2053, %v2060
          %v2090 = vmul.f32 %v2054, %v2060
          %v2091 = vmul.f32 %v2055, %v2060
          %v2092 = vmul.f32 %v2056, %v2060
          %v2093 = vadd.f32 %v1855, %v2061
          %v2094 = vadd.f32 %v1856, %v2062
          %v2095 = vadd.f32 %v1857, %v2063
          %v2096 = vadd.f32 %v1858, %v2064
          %v2097 = vadd.f32 %v1859, %v2065
          %v2098 = vadd.f32 %v1860, %v2066
          %v2099 = vadd.f32 %v1861, %v2067
          %v2100 = vadd.f32 %v1862, %v2068
          %v2101 = vadd.f32 %v1863, %v2069
          %v2102 = vadd.f32 %v1864, %v2070
          %v2103 = vadd.f32 %v1865, %v2071
          %v2104 = vadd.f32 %v1866, %v2072
          %v2105 = vadd.f32 %v1867, %v2073
          %v2106 = vadd.f32 %v1868, %v2074
          %v2107 = vadd.f32 %v1869, %v2075
          %v2108 = vadd.f32 %v1870, %v2076
          %v2109 = vadd.f32 %v1871, %v2077
          %v2110 = vadd.f32 %v1872, %v2078
          %v2111 = vadd.f32 %v1873, %v2079
          %v2112 = vadd.f32 %v1874, %v2080
          %v2113 = vadd.f32 %v1875, %v2081
          %v2114 = vadd.f32 %v1876, %v2082
          %v2115 = vadd.f32 %v1877, %v2083
          %v2116 = vadd.f32 %v1878, %v2084
          %v2117 = vadd.f32 %v1879, %v2085
          %v2118 = vadd.f32 %v1880, %v2086
          %v2119 = vadd.f32 %v1881, %v2087
          %v2120 = vadd.f32 %v1882, %v2088
          %v2121 = vadd.f32 %v1883, %v2089
          %v2122 = vadd.f32 %v1884, %v2090
          %v2123 = vadd.f32 %v1885, %v2091
          %v2124 = vadd.f32 %v1886, %v2092
          %v2125 = vlaneseq
          %v2126 = vshrl.u32 %v2125, 7
          %v2127 = vsub.s32 7, %v2126
          %v2128 = vrot.slane %v309, %v2127
          %v2129 = vmul.f32 %v2025, %v2128
          %v2130 = vmul.f32 %v2026, %v2128
          %v2131 = vmul.f32 %v2027, %v2128
          %v2132 = vmul.f32 %v2028, %v2128
          %v2133 = vmul.f32 %v2029, %v2128
          %v2134 = vmul.f32 %v2030, %v2128
          %v2135 = vmul.f32 %v2031, %v2128
          %v2136 = vmul.f32 %v2032, %v2128
          %v2137 = vmul.f32 %v2033, %v2128
          %v2138 = vmul.f32 %v2034, %v2128
          %v2139 = vmul.f32 %v2035, %v2128
          %v2140 = vmul.f32 %v2036, %v2128
          %v2141 = vmul.f32 %v2037, %v2128
          %v2142 = vmul.f32 %v2038, %v2128
          %v2143 = vmul.f32 %v2039, %v2128
          %v2144 = vmul.f32 %v2040, %v2128
          %v2145 = vmul.f32 %v2041, %v2128
          %v2146 = vmul.f32 %v2042, %v2128
          %v2147 = vmul.f32 %v2043, %v2128
          %v2148 = vmul.f32 %v2044, %v2128
          %v2149 = vmul.f32 %v2045, %v2128
          %v2150 = vmul.f32 %v2046, %v2128
          %v2151 = vmul.f32 %v2047, %v2128
          %v2152 = vmul.f32 %v2048, %v2128
          %v2153 = vmul.f32 %v2049, %v2128
          %v2154 = vmul.f32 %v2050, %v2128
          %v2155 = vmul.f32 %v2051, %v2128
          %v2156 = vmul.f32 %v2052, %v2128
          %v2157 = vmul.f32 %v2053, %v2128
          %v2158 = vmul.f32 %v2054, %v2128
          %v2159 = vmul.f32 %v2055, %v2128
          %v2160 = vmul.f32 %v2056, %v2128
          %v2161 = vadd.f32 %v1923, %v2129
          %v2162 = vadd.f32 %v1924, %v2130
          %v2163 = vadd.f32 %v1925, %v2131
          %v2164 = vadd.f32 %v1926, %v2132
          %v2165 = vadd.f32 %v1927, %v2133
          %v2166 = vadd.f32 %v1928, %v2134
          %v2167 = vadd.f32 %v1929, %v2135
          %v2168 = vadd.f32 %v1930, %v2136
          %v2169 = vadd.f32 %v1931, %v2137
          %v2170 = vadd.f32 %v1932, %v2138
          %v2171 = vadd.f32 %v1933, %v2139
          %v2172 = vadd.f32 %v1934, %v2140
          %v2173 = vadd.f32 %v1935, %v2141
          %v2174 = vadd.f32 %v1936, %v2142
          %v2175 = vadd.f32 %v1937, %v2143
          %v2176 = vadd.f32 %v1938, %v2144
          %v2177 = vadd.f32 %v1939, %v2145
          %v2178 = vadd.f32 %v1940, %v2146
          %v2179 = vadd.f32 %v1941, %v2147
          %v2180 = vadd.f32 %v1942, %v2148
          %v2181 = vadd.f32 %v1943, %v2149
          %v2182 = vadd.f32 %v1944, %v2150
          %v2183 = vadd.f32 %v1945, %v2151
          %v2184 = vadd.f32 %v1946, %v2152
          %v2185 = vadd.f32 %v1947, %v2153
          %v2186 = vadd.f32 %v1948, %v2154
          %v2187 = vadd.f32 %v1949, %v2155
          %v2188 = vadd.f32 %v1950, %v2156
          %v2189 = vadd.f32 %v1951, %v2157
          %v2190 = vadd.f32 %v1952, %v2158
          %v2191 = vadd.f32 %v1953, %v2159
          %v2192 = vadd.f32 %v1954, %v2160
          %v2193 = vlaneseq
          %v2194 = vshrl.u32 %v2193, 7
          %v2195 = vsub.s32 0, %v2194
          %v2196 = vrot.slane %v311, %v2195
          %v2197 = vmul.f32 %v2025, %v2196
          %v2198 = vmul.f32 %v2026, %v2196
          %v2199 = vmul.f32 %v2027, %v2196
          %v2200 = vmul.f32 %v2028, %v2196
          %v2201 = vmul.f32 %v2029, %v2196
          %v2202 = vmul.f32 %v2030, %v2196
          %v2203 = vmul.f32 %v2031, %v2196
          %v2204 = vmul.f32 %v2032, %v2196
          %v2205 = vmul.f32 %v2033, %v2196
          %v2206 = vmul.f32 %v2034, %v2196
          %v2207 = vmul.f32 %v2035, %v2196
          %v2208 = vmul.f32 %v2036, %v2196
          %v2209 = vmul.f32 %v2037, %v2196
          %v2210 = vmul.f32 %v2038, %v2196
          %v2211 = vmul.f32 %v2039, %v2196
          %v2212 = vmul.f32 %v2040, %v2196
          %v2213 = vmul.f32 %v2041, %v2196
          %v2214 = vmul.f32 %v2042, %v2196
          %v2215 = vmul.f32 %v2043, %v2196
          %v2216 = vmul.f32 %v2044, %v2196
          %v2217 = vmul.f32 %v2045, %v2196
          %v2218 = vmul.f32 %v2046, %v2196
          %v2219 = vmul.f32 %v2047, %v2196
          %v2220 = vmul.f32 %v2048, %v2196
          %v2221 = vmul.f32 %v2049, %v2196
          %v2222 = vmul.f32 %v2050, %v2196
          %v2223 = vmul.f32 %v2051, %v2196
          %v2224 = vmul.f32 %v2052, %v2196
          %v2225 = vmul.f32 %v2053, %v2196
          %v2226 = vmul.f32 %v2054, %v2196
          %v2227 = vmul.f32 %v2055, %v2196
          %v2228 = vmul.f32 %v2056, %v2196
          %v2229 = vadd.f32 %v1991, %v2197
          %v2230 = vadd.f32 %v1992, %v2198
          %v2231 = vadd.f32 %v1993, %v2199
          %v2232 = vadd.f32 %v1994, %v2200
          %v2233 = vadd.f32 %v1995, %v2201
          %v2234 = vadd.f32 %v1996, %v2202
          %v2235 = vadd.f32 %v1997, %v2203
          %v2236 = vadd.f32 %v1998, %v2204
          %v2237 = vadd.f32 %v1999, %v2205
          %v2238 = vadd.f32 %v2000, %v2206
          %v2239 = vadd.f32 %v2001, %v2207
          %v2240 = vadd.f32 %v2002, %v2208
          %v2241 = vadd.f32 %v2003, %v2209
          %v2242 = vadd.f32 %v2004, %v2210
          %v2243 = vadd.f32 %v2005, %v2211
          %v2244 = vadd.f32 %v2006, %v2212
          %v2245 = vadd.f32 %v2007, %v2213
          %v2246 = vadd.f32 %v2008, %v2214
          %v2247 = vadd.f32 %v2009, %v2215
          %v2248 = vadd.f32 %v2010, %v2216
          %v2249 = vadd.f32 %v2011, %v2217
          %v2250 = vadd.f32 %v2012, %v2218
          %v2251 = vadd.f32 %v2013, %v2219
          %v2252 = vadd.f32 %v2014, %v2220
          %v2253 = vadd.f32 %v2015, %v2221
          %v2254 = vadd.f32 %v2016, %v2222
          %v2255 = vadd.f32 %v2017, %v2223
          %v2256 = vadd.f32 %v2018, %v2224
          %v2257 = vadd.f32 %v2019, %v2225
          %v2258 = vadd.f32 %v2020, %v2226
          %v2259 = vadd.f32 %v2021, %v2227
          %v2260 = vadd.f32 %v2022, %v2228
          %v2261 = vld [vmem:[#allocation2 + $0x118] sm:$0xff]
          %v2262 = vld [vmem:[#allocation2 + $0x120] sm:$0xff]
          %v2263 = vlaneseq
          %v2264 = vshrl.u32 %v2263, 7
          %v2265 = vsub.s32 7, %v2264
          %v2266 = vrot.slane %v308, %v2265
          %v2267 = vmul.f32 %v777, %v2266
          %v2268 = vmul.f32 %v778, %v2266
          %v2269 = vmul.f32 %v779, %v2266
          %v2270 = vmul.f32 %v780, %v2266
          %v2271 = vmul.f32 %v781, %v2266
          %v2272 = vmul.f32 %v782, %v2266
          %v2273 = vmul.f32 %v783, %v2266
          %v2274 = vmul.f32 %v784, %v2266
          %v2275 = vmul.f32 %v785, %v2266
          %v2276 = vmul.f32 %v786, %v2266
          %v2277 = vmul.f32 %v787, %v2266
          %v2278 = vmul.f32 %v788, %v2266
          %v2279 = vmul.f32 %v789, %v2266
          %v2280 = vmul.f32 %v790, %v2266
          %v2281 = vmul.f32 %v791, %v2266
          %v2282 = vmul.f32 %v792, %v2266
          %v2283 = vmul.f32 %v793, %v2266
          %v2284 = vmul.f32 %v794, %v2266
          %v2285 = vmul.f32 %v795, %v2266
          %v2286 = vmul.f32 %v796, %v2266
          %v2287 = vmul.f32 %v797, %v2266
          %v2288 = vmul.f32 %v798, %v2266
          %v2289 = vmul.f32 %v799, %v2266
          %v2290 = vmul.f32 %v800, %v2266
          %v2291 = vmul.f32 %v801, %v2266
          %v2292 = vmul.f32 %v802, %v2266
          %v2293 = vmul.f32 %v803, %v2266
          %v2294 = vmul.f32 %v804, %v2266
          %v2295 = vmul.f32 %v1579, %v2266
          %v2296 = vmul.f32 %v1580, %v2266
          %v2297 = vmul.f32 %v2261, %v2266
          %v2298 = vmul.f32 %v2262, %v2266
          %v2299 = vadd.f32 %v2093, %v2267
          %v2300 = vadd.f32 %v2094, %v2268
          %v2301 = vadd.f32 %v2095, %v2269
          %v2302 = vadd.f32 %v2096, %v2270
          %v2303 = vadd.f32 %v2097, %v2271
          %v2304 = vadd.f32 %v2098, %v2272
          %v2305 = vadd.f32 %v2099, %v2273
          %v2306 = vadd.f32 %v2100, %v2274
          %v2307 = vadd.f32 %v2101, %v2275
          %v2308 = vadd.f32 %v2102, %v2276
          %v2309 = vadd.f32 %v2103, %v2277
          %v2310 = vadd.f32 %v2104, %v2278
          %v2311 = vadd.f32 %v2105, %v2279
          %v2312 = vadd.f32 %v2106, %v2280
          %v2313 = vadd.f32 %v2107, %v2281
          %v2314 = vadd.f32 %v2108, %v2282
          %v2315 = vadd.f32 %v2109, %v2283
          %v2316 = vadd.f32 %v2110, %v2284
          %v2317 = vadd.f32 %v2111, %v2285
          %v2318 = vadd.f32 %v2112, %v2286
          %v2319 = vadd.f32 %v2113, %v2287
          %v2320 = vadd.f32 %v2114, %v2288
          %v2321 = vadd.f32 %v2115, %v2289
          %v2322 = vadd.f32 %v2116, %v2290
          %v2323 = vadd.f32 %v2117, %v2291
          %v2324 = vadd.f32 %v2118, %v2292
          %v2325 = vadd.f32 %v2119, %v2293
          %v2326 = vadd.f32 %v2120, %v2294
          %v2327 = vadd.f32 %v2121, %v2295
          %v2328 = vadd.f32 %v2122, %v2296
          %v2329 = vadd.f32 %v2123, %v2297
          %v2330 = vadd.f32 %v2124, %v2298
          %v2331 = vlaneseq
          %v2332 = vshrl.u32 %v2331, 7
          %v2333 = vsub.s32 0, %v2332
          %v2334 = vrot.slane %v310, %v2333
          %v2335 = vmul.f32 %v777, %v2334
          %v2336 = vmul.f32 %v778, %v2334
          %v2337 = vmul.f32 %v779, %v2334
          %v2338 = vmul.f32 %v780, %v2334
          %v2339 = vmul.f32 %v781, %v2334
          %v2340 = vmul.f32 %v782, %v2334
          %v2341 = vmul.f32 %v783, %v2334
          %v2342 = vmul.f32 %v784, %v2334
          %v2343 = vmul.f32 %v785, %v2334
          %v2344 = vmul.f32 %v786, %v2334
          %v2345 = vmul.f32 %v787, %v2334
          %v2346 = vmul.f32 %v788, %v2334
          %v2347 = vmul.f32 %v789, %v2334
          %v2348 = vmul.f32 %v790, %v2334
          %v2349 = vmul.f32 %v791, %v2334
          %v2350 = vmul.f32 %v792, %v2334
          %v2351 = vmul.f32 %v793, %v2334
          %v2352 = vmul.f32 %v794, %v2334
          %v2353 = vmul.f32 %v795, %v2334
          %v2354 = vmul.f32 %v796, %v2334
          %v2355 = vmul.f32 %v797, %v2334
          %v2356 = vmul.f32 %v798, %v2334
          %v2357 = vmul.f32 %v799, %v2334
          %v2358 = vmul.f32 %v800, %v2334
          %v2359 = vmul.f32 %v801, %v2334
          %v2360 = vmul.f32 %v802, %v2334
          %v2361 = vmul.f32 %v803, %v2334
          %v2362 = vmul.f32 %v804, %v2334
          %v2363 = vmul.f32 %v1579, %v2334
          %v2364 = vmul.f32 %v1580, %v2334
          %v2365 = vmul.f32 %v2261, %v2334
          %v2366 = vmul.f32 %v2262, %v2334
          %v2367 = vadd.f32 %v2161, %v2335
          %v2368 = vadd.f32 %v2162, %v2336
          %v2369 = vadd.f32 %v2163, %v2337
          %v2370 = vadd.f32 %v2164, %v2338
          %v2371 = vadd.f32 %v2165, %v2339
          %v2372 = vadd.f32 %v2166, %v2340
          %v2373 = vadd.f32 %v2167, %v2341
          %v2374 = vadd.f32 %v2168, %v2342
          %v2375 = vadd.f32 %v2169, %v2343
          %v2376 = vadd.f32 %v2170, %v2344
          %v2377 = vadd.f32 %v2171, %v2345
          %v2378 = vadd.f32 %v2172, %v2346
          %v2379 = vadd.f32 %v2173, %v2347
          %v2380 = vadd.f32 %v2174, %v2348
          %v2381 = vadd.f32 %v2175, %v2349
          %v2382 = vadd.f32 %v2176, %v2350
          %v2383 = vadd.f32 %v2177, %v2351
          %v2384 = vadd.f32 %v2178, %v2352
          %v2385 = vadd.f32 %v2179, %v2353
          %v2386 = vadd.f32 %v2180, %v2354
          %v2387 = vadd.f32 %v2181, %v2355
          %v2388 = vadd.f32 %v2182, %v2356
          %v2389 = vadd.f32 %v2183, %v2357
          %v2390 = vadd.f32 %v2184, %v2358
          %v2391 = vadd.f32 %v2185, %v2359
          %v2392 = vadd.f32 %v2186, %v2360
          %v2393 = vadd.f32 %v2187, %v2361
          %v2394 = vadd.f32 %v2188, %v2362
          %v2395 = vadd.f32 %v2189, %v2363
          %v2396 = vadd.f32 %v2190, %v2364
          %v2397 = vadd.f32 %v2191, %v2365
          %v2398 = vadd.f32 %v2192, %v2366
          %v2399 = vlaneseq
          %v2400 = vshrl.u32 %v2399, 7
          %v2401 = vsub.s32 1, %v2400
          %v2402 = vrot.slane %v311, %v2401
          %v2403 = vmul.f32 %v777, %v2402
          %v2404 = vmul.f32 %v778, %v2402
          %v2405 = vmul.f32 %v779, %v2402
          %v2406 = vmul.f32 %v780, %v2402
          %v2407 = vmul.f32 %v781, %v2402
          %v2408 = vmul.f32 %v782, %v2402
          %v2409 = vmul.f32 %v783, %v2402
          %v2410 = vmul.f32 %v784, %v2402
          %v2411 = vmul.f32 %v785, %v2402
          %v2412 = vmul.f32 %v786, %v2402
          %v2413 = vmul.f32 %v787, %v2402
          %v2414 = vmul.f32 %v788, %v2402
          %v2415 = vmul.f32 %v789, %v2402
          %v2416 = vmul.f32 %v790, %v2402
          %v2417 = vmul.f32 %v791, %v2402
          %v2418 = vmul.f32 %v792, %v2402
          %v2419 = vmul.f32 %v793, %v2402
          %v2420 = vmul.f32 %v794, %v2402
          %v2421 = vmul.f32 %v795, %v2402
          %v2422 = vmul.f32 %v796, %v2402
          %v2423 = vmul.f32 %v797, %v2402
          %v2424 = vmul.f32 %v798, %v2402
          %v2425 = vmul.f32 %v799, %v2402
          %v2426 = vmul.f32 %v800, %v2402
          %v2427 = vmul.f32 %v801, %v2402
          %v2428 = vmul.f32 %v802, %v2402
          %v2429 = vmul.f32 %v803, %v2402
          %v2430 = vmul.f32 %v804, %v2402
          %v2431 = vmul.f32 %v1579, %v2402
          %v2432 = vmul.f32 %v1580, %v2402
          %v2433 = vmul.f32 %v2261, %v2402
          %v2434 = vmul.f32 %v2262, %v2402
          %v2435 = vadd.f32 %v2229, %v2403
          %v2436 = vadd.f32 %v2230, %v2404
          %v2437 = vadd.f32 %v2231, %v2405
          %v2438 = vadd.f32 %v2232, %v2406
          %v2439 = vadd.f32 %v2233, %v2407
          %v2440 = vadd.f32 %v2234, %v2408
          %v2441 = vadd.f32 %v2235, %v2409
          %v2442 = vadd.f32 %v2236, %v2410
          %v2443 = vadd.f32 %v2237, %v2411
          %v2444 = vadd.f32 %v2238, %v2412
          %v2445 = vadd.f32 %v2239, %v2413
          %v2446 = vadd.f32 %v2240, %v2414
          %v2447 = vadd.f32 %v2241, %v2415
          %v2448 = vadd.f32 %v2242, %v2416
          %v2449 = vadd.f32 %v2243, %v2417
          %v2450 = vadd.f32 %v2244, %v2418
          %v2451 = vadd.f32 %v2245, %v2419
          %v2452 = vadd.f32 %v2246, %v2420
          %v2453 = vadd.f32 %v2247, %v2421
          %v2454 = vadd.f32 %v2248, %v2422
          %v2455 = vadd.f32 %v2249, %v2423
          %v2456 = vadd.f32 %v2250, %v2424
          %v2457 = vadd.f32 %v2251, %v2425
          %v2458 = vadd.f32 %v2252, %v2426
          %v2459 = vadd.f32 %v2253, %v2427
          %v2460 = vadd.f32 %v2254, %v2428
          %v2461 = vadd.f32 %v2255, %v2429
          %v2462 = vadd.f32 %v2256, %v2430
          %v2463 = vadd.f32 %v2257, %v2431
          %v2464 = vadd.f32 %v2258, %v2432
          %v2465 = vadd.f32 %v2259, %v2433
          %v2466 = vadd.f32 %v2260, %v2434
          %v2467 = vld [vmem:[#allocation2 + $0x119] sm:$0xff]
          %v2468 = vld [vmem:[#allocation2 + $0x121] sm:$0xff]
          %v2469 = vsel %vm1073, %v1013, 0.0
          %v2470 = vsel %vm1074, %v1014, 0.0
          %v2471 = vsel %vm1075, %v1015, 0.0
          %v2472 = vsel %vm1076, %v1016, 0.0
          %v2473 = vsel %vm1077, %v1017, 0.0
          %v2474 = vsel %vm1078, %v1018, 0.0
          %v2475 = vsel %vm1079, %v1019, 0.0
          %v2476 = vsel %vm1080, %v1020, 0.0
          %v2477 = vsel %vm1081, %v1021, 0.0
          %v2478 = vsel %vm1082, %v1022, 0.0
          %v2479 = vsel %vm1083, %v1023, 0.0
          %v2480 = vsel %vm1084, %v1024, 0.0
          %v2481 = vsel %vm1085, %v1025, 0.0
          %v2482 = vsel %vm1086, %v1026, 0.0
          %v2483 = vsel %vm1087, %v1027, 0.0
          %v2484 = vsel %vm1088, %v1028, 0.0
          %v2485 = vsel %vm1089, %v1029, 0.0
          %v2486 = vsel %vm1090, %v1030, 0.0
          %v2487 = vsel %vm1091, %v1031, 0.0
          %v2488 = vsel %vm1092, %v1032, 0.0
          %v2489 = vsel %vm1093, %v1033, 0.0
          %v2490 = vsel %vm1094, %v1034, 0.0
          %v2491 = vsel %vm1095, %v1035, 0.0
          %v2492 = vsel %vm1096, %v1036, 0.0
          %v2493 = vsel %vm1097, %v1037, 0.0
          %v2494 = vsel %vm1098, %v1038, 0.0
          %v2495 = vsel %vm1099, %v1039, 0.0
          %v2496 = vsel %vm1100, %v1040, 0.0
          %v2497 = vsel %vm1101, %v1785, 0.0
          %v2498 = vsel %vm1102, %v1786, 0.0
          %v2499 = vsel %vm1103, %v2467, 0.0
          %v2500 = vsel %vm1104, %v2468, 0.0
          %v2501 = vlaneseq
          %v2502 = vshrl.u32 %v2501, 7
          %v2503 = vsub.s32 0, %v2502
          %v2504 = vrot.slane %v309, %v2503
          %v2505 = vmul.f32 %v2469, %v2504
          %v2506 = vmul.f32 %v2470, %v2504
          %v2507 = vmul.f32 %v2471, %v2504
          %v2508 = vmul.f32 %v2472, %v2504
          %v2509 = vmul.f32 %v2473, %v2504
          %v2510 = vmul.f32 %v2474, %v2504
          %v2511 = vmul.f32 %v2475, %v2504
          %v2512 = vmul.f32 %v2476, %v2504
          %v2513 = vmul.f32 %v2477, %v2504
          %v2514 = vmul.f32 %v2478, %v2504
          %v2515 = vmul.f32 %v2479, %v2504
          %v2516 = vmul.f32 %v2480, %v2504
          %v2517 = vmul.f32 %v2481, %v2504
          %v2518 = vmul.f32 %v2482, %v2504
          %v2519 = vmul.f32 %v2483, %v2504
          %v2520 = vmul.f32 %v2484, %v2504
          %v2521 = vmul.f32 %v2485, %v2504
          %v2522 = vmul.f32 %v2486, %v2504
          %v2523 = vmul.f32 %v2487, %v2504
          %v2524 = vmul.f32 %v2488, %v2504
          %v2525 = vmul.f32 %v2489, %v2504
          %v2526 = vmul.f32 %v2490, %v2504
          %v2527 = vmul.f32 %v2491, %v2504
          %v2528 = vmul.f32 %v2492, %v2504
          %v2529 = vmul.f32 %v2493, %v2504
          %v2530 = vmul.f32 %v2494, %v2504
          %v2531 = vmul.f32 %v2495, %v2504
          %v2532 = vmul.f32 %v2496, %v2504
          %v2533 = vmul.f32 %v2497, %v2504
          %v2534 = vmul.f32 %v2498, %v2504
          %v2535 = vmul.f32 %v2499, %v2504
          %v2536 = vmul.f32 %v2500, %v2504
          %v2537 = vadd.f32 %v2299, %v2505
          %v2538 = vadd.f32 %v2300, %v2506
          %v2539 = vadd.f32 %v2301, %v2507
          %v2540 = vadd.f32 %v2302, %v2508
          %v2541 = vadd.f32 %v2303, %v2509
          %v2542 = vadd.f32 %v2304, %v2510
          %v2543 = vadd.f32 %v2305, %v2511
          %v2544 = vadd.f32 %v2306, %v2512
          %v2545 = vadd.f32 %v2307, %v2513
          %v2546 = vadd.f32 %v2308, %v2514
          %v2547 = vadd.f32 %v2309, %v2515
          %v2548 = vadd.f32 %v2310, %v2516
          %v2549 = vadd.f32 %v2311, %v2517
          %v2550 = vadd.f32 %v2312, %v2518
          %v2551 = vadd.f32 %v2313, %v2519
          %v2552 = vadd.f32 %v2314, %v2520
          %v2553 = vadd.f32 %v2315, %v2521
          %v2554 = vadd.f32 %v2316, %v2522
          %v2555 = vadd.f32 %v2317, %v2523
          %v2556 = vadd.f32 %v2318, %v2524
          %v2557 = vadd.f32 %v2319, %v2525
          %v2558 = vadd.f32 %v2320, %v2526
          %v2559 = vadd.f32 %v2321, %v2527
          %v2560 = vadd.f32 %v2322, %v2528
          %v2561 = vadd.f32 %v2323, %v2529
          %v2562 = vadd.f32 %v2324, %v2530
          %v2563 = vadd.f32 %v2325, %v2531
          %v2564 = vadd.f32 %v2326, %v2532
          %v2565 = vadd.f32 %v2327, %v2533
          %v2566 = vadd.f32 %v2328, %v2534
          %v2567 = vadd.f32 %v2329, %v2535
          %v2568 = vadd.f32 %v2330, %v2536
          %v2569 = vlaneseq
          %v2570 = vshrl.u32 %v2569, 7
          %v2571 = vsub.s32 1, %v2570
          %v2572 = vrot.slane %v310, %v2571
          %v2573 = vmul.f32 %v2469, %v2572
          %v2574 = vmul.f32 %v2470, %v2572
          %v2575 = vmul.f32 %v2471, %v2572
          %v2576 = vmul.f32 %v2472, %v2572
          %v2577 = vmul.f32 %v2473, %v2572
          %v2578 = vmul.f32 %v2474, %v2572
          %v2579 = vmul.f32 %v2475, %v2572
          %v2580 = vmul.f32 %v2476, %v2572
          %v2581 = vmul.f32 %v2477, %v2572
          %v2582 = vmul.f32 %v2478, %v2572
          %v2583 = vmul.f32 %v2479, %v2572
          %v2584 = vmul.f32 %v2480, %v2572
          %v2585 = vmul.f32 %v2481, %v2572
          %v2586 = vmul.f32 %v2482, %v2572
          %v2587 = vmul.f32 %v2483, %v2572
          %v2588 = vmul.f32 %v2484, %v2572
          %v2589 = vmul.f32 %v2485, %v2572
          %v2590 = vmul.f32 %v2486, %v2572
          %v2591 = vmul.f32 %v2487, %v2572
          %v2592 = vmul.f32 %v2488, %v2572
          %v2593 = vmul.f32 %v2489, %v2572
          %v2594 = vmul.f32 %v2490, %v2572
          %v2595 = vmul.f32 %v2491, %v2572
          %v2596 = vmul.f32 %v2492, %v2572
          %v2597 = vmul.f32 %v2493, %v2572
          %v2598 = vmul.f32 %v2494, %v2572
          %v2599 = vmul.f32 %v2495, %v2572
          %v2600 = vmul.f32 %v2496, %v2572
          %v2601 = vmul.f32 %v2497, %v2572
          %v2602 = vmul.f32 %v2498, %v2572
          %v2603 = vmul.f32 %v2499, %v2572
          %v2604 = vmul.f32 %v2500, %v2572
          %v2605 = vadd.f32 %v2367, %v2573
          %v2606 = vadd.f32 %v2368, %v2574
          %v2607 = vadd.f32 %v2369, %v2575
          %v2608 = vadd.f32 %v2370, %v2576
          %v2609 = vadd.f32 %v2371, %v2577
          %v2610 = vadd.f32 %v2372, %v2578
          %v2611 = vadd.f32 %v2373, %v2579
          %v2612 = vadd.f32 %v2374, %v2580
          %v2613 = vadd.f32 %v2375, %v2581
          %v2614 = vadd.f32 %v2376, %v2582
          %v2615 = vadd.f32 %v2377, %v2583
          %v2616 = vadd.f32 %v2378, %v2584
          %v2617 = vadd.f32 %v2379, %v2585
          %v2618 = vadd.f32 %v2380, %v2586
          %v2619 = vadd.f32 %v2381, %v2587
          %v2620 = vadd.f32 %v2382, %v2588
          %v2621 = vadd.f32 %v2383, %v2589
          %v2622 = vadd.f32 %v2384, %v2590
          %v2623 = vadd.f32 %v2385, %v2591
          %v2624 = vadd.f32 %v2386, %v2592
          %v2625 = vadd.f32 %v2387, %v2593
          %v2626 = vadd.f32 %v2388, %v2594
          %v2627 = vadd.f32 %v2389, %v2595
          %v2628 = vadd.f32 %v2390, %v2596
          %v2629 = vadd.f32 %v2391, %v2597
          %v2630 = vadd.f32 %v2392, %v2598
          %v2631 = vadd.f32 %v2393, %v2599
          %v2632 = vadd.f32 %v2394, %v2600
          %v2633 = vadd.f32 %v2395, %v2601
          %v2634 = vadd.f32 %v2396, %v2602
          %v2635 = vadd.f32 %v2397, %v2603
          %v2636 = vadd.f32 %v2398, %v2604
          %v2637 = vlaneseq
          %v2638 = vshrl.u32 %v2637, 7
          %v2639 = vsub.s32 2, %v2638
          %v2640 = vrot.slane %v311, %v2639
          %v2641 = vmul.f32 %v2469, %v2640
          %v2642 = vmul.f32 %v2470, %v2640
          %v2643 = vmul.f32 %v2471, %v2640
          %v2644 = vmul.f32 %v2472, %v2640
          %v2645 = vmul.f32 %v2473, %v2640
          %v2646 = vmul.f32 %v2474, %v2640
          %v2647 = vmul.f32 %v2475, %v2640
          %v2648 = vmul.f32 %v2476, %v2640
          %v2649 = vmul.f32 %v2477, %v2640
          %v2650 = vmul.f32 %v2478, %v2640
          %v2651 = vmul.f32 %v2479, %v2640
          %v2652 = vmul.f32 %v2480, %v2640
          %v2653 = vmul.f32 %v2481, %v2640
          %v2654 = vmul.f32 %v2482, %v2640
          %v2655 = vmul.f32 %v2483, %v2640
          %v2656 = vmul.f32 %v2484, %v2640
          %v2657 = vmul.f32 %v2485, %v2640
          %v2658 = vmul.f32 %v2486, %v2640
          %v2659 = vmul.f32 %v2487, %v2640
          %v2660 = vmul.f32 %v2488, %v2640
          %v2661 = vmul.f32 %v2489, %v2640
          %v2662 = vmul.f32 %v2490, %v2640
          %v2663 = vmul.f32 %v2491, %v2640
          %v2664 = vmul.f32 %v2492, %v2640
          %v2665 = vmul.f32 %v2493, %v2640
          %v2666 = vmul.f32 %v2494, %v2640
          %v2667 = vmul.f32 %v2495, %v2640
          %v2668 = vmul.f32 %v2496, %v2640
          %v2669 = vmul.f32 %v2497, %v2640
          %v2670 = vmul.f32 %v2498, %v2640
          %v2671 = vmul.f32 %v2499, %v2640
          %v2672 = vmul.f32 %v2500, %v2640
          %v2673 = vadd.f32 %v2435, %v2641
          %v2674 = vadd.f32 %v2436, %v2642
          %v2675 = vadd.f32 %v2437, %v2643
          %v2676 = vadd.f32 %v2438, %v2644
          %v2677 = vadd.f32 %v2439, %v2645
          %v2678 = vadd.f32 %v2440, %v2646
          %v2679 = vadd.f32 %v2441, %v2647
          %v2680 = vadd.f32 %v2442, %v2648
          %v2681 = vadd.f32 %v2443, %v2649
          %v2682 = vadd.f32 %v2444, %v2650
          %v2683 = vadd.f32 %v2445, %v2651
          %v2684 = vadd.f32 %v2446, %v2652
          %v2685 = vadd.f32 %v2447, %v2653
          %v2686 = vadd.f32 %v2448, %v2654
          %v2687 = vadd.f32 %v2449, %v2655
          %v2688 = vadd.f32 %v2450, %v2656
          %v2689 = vadd.f32 %v2451, %v2657
          %v2690 = vadd.f32 %v2452, %v2658
          %v2691 = vadd.f32 %v2453, %v2659
          %v2692 = vadd.f32 %v2454, %v2660
          %v2693 = vadd.f32 %v2455, %v2661
          %v2694 = vadd.f32 %v2456, %v2662
          %v2695 = vadd.f32 %v2457, %v2663
          %v2696 = vadd.f32 %v2458, %v2664
          %v2697 = vadd.f32 %v2459, %v2665
          %v2698 = vadd.f32 %v2460, %v2666
          %v2699 = vadd.f32 %v2461, %v2667
          %v2700 = vadd.f32 %v2462, %v2668
          %v2701 = vadd.f32 %v2463, %v2669
          %v2702 = vadd.f32 %v2464, %v2670
          %v2703 = vadd.f32 %v2465, %v2671
          %v2704 = vadd.f32 %v2466, %v2672
          %v2705 = vlaneseq
          %v2706 = vshrl.u32 %v2705, 7
          %v2707 = vsub.s32 3, %v2706
          %v2708 = vrot.slane %v311, %v2707
          %v2709 = vadd.f32 %v2537, %v2708
          %v2710 = vadd.f32 %v2538, %v2708
          %v2711 = vadd.f32 %v2539, %v2708
          %v2712 = vadd.f32 %v2540, %v2708
          %v2713 = vadd.f32 %v2541, %v2708
          %v2714 = vadd.f32 %v2542, %v2708
          %v2715 = vadd.f32 %v2543, %v2708
          %v2716 = vadd.f32 %v2544, %v2708
          %v2717 = vadd.f32 %v2545, %v2708
          %v2718 = vadd.f32 %v2546, %v2708
          %v2719 = vadd.f32 %v2547, %v2708
          %v2720 = vadd.f32 %v2548, %v2708
          %v2721 = vadd.f32 %v2549, %v2708
          %v2722 = vadd.f32 %v2550, %v2708
          %v2723 = vadd.f32 %v2551, %v2708
          %v2724 = vadd.f32 %v2552, %v2708
          %v2725 = vadd.f32 %v2553, %v2708
          %v2726 = vadd.f32 %v2554, %v2708
          %v2727 = vadd.f32 %v2555, %v2708
          %v2728 = vadd.f32 %v2556, %v2708
          %v2729 = vadd.f32 %v2557, %v2708
          %v2730 = vadd.f32 %v2558, %v2708
          %v2731 = vadd.f32 %v2559, %v2708
          %v2732 = vadd.f32 %v2560, %v2708
          %v2733 = vadd.f32 %v2561, %v2708
          %v2734 = vadd.f32 %v2562, %v2708
          %v2735 = vadd.f32 %v2563, %v2708
          %v2736 = vadd.f32 %v2564, %v2708
          %v2737 = vadd.f32 %v2565, %v2708
          %v2738 = vadd.f32 %v2566, %v2708
          %v2739 = vadd.f32 %v2567, %v2708
          %v2740 = vadd.f32 %v2568, %v2708
          %v2741 = vpack.c.bf16 %v2710, %v2709
          %v2742 = vpack.c.bf16 %v2712, %v2711
          %v2743 = vpack.c.bf16 %v2714, %v2713
          %v2744 = vpack.c.bf16 %v2716, %v2715
          %v2745 = vpack.c.bf16 %v2718, %v2717
          %v2746 = vpack.c.bf16 %v2720, %v2719
          %v2747 = vpack.c.bf16 %v2722, %v2721
          %v2748 = vpack.c.bf16 %v2724, %v2723
          %v2749 = vpack.c.bf16 %v2726, %v2725
          %v2750 = vpack.c.bf16 %v2728, %v2727
          %v2751 = vpack.c.bf16 %v2730, %v2729
          %v2752 = vpack.c.bf16 %v2732, %v2731
          %v2753 = vpack.c.bf16 %v2734, %v2733
          %v2754 = vpack.c.bf16 %v2736, %v2735
          %v2755 = vpack.c.bf16 %v2738, %v2737
          %v2756 = vpack.c.bf16 %v2740, %v2739
          %v2773 = vunpack.c.l.b16 %v2741
          %v2774 = vunpack.c.h.b16 %v2741
          %v2775 = vunpack.c.l.b16 %v2742
          %v2776 = vunpack.c.h.b16 %v2742
          %v2777 = vunpack.c.l.b16 %v2743
          %v2778 = vunpack.c.h.b16 %v2743
          %v2779 = vunpack.c.l.b16 %v2744
          %v2780 = vunpack.c.h.b16 %v2744
          %v2781 = vunpack.c.l.b16 %v2745
          %v2782 = vunpack.c.h.b16 %v2745
          %v2783 = vunpack.c.l.b16 %v2746
          %v2784 = vunpack.c.h.b16 %v2746
          %v2785 = vunpack.c.l.b16 %v2747
          %v2786 = vunpack.c.h.b16 %v2747
          %v2787 = vunpack.c.l.b16 %v2748
          %v2788 = vunpack.c.h.b16 %v2748
          %v2789 = vunpack.c.l.b16 %v2749
          %v2790 = vunpack.c.h.b16 %v2749
          %v2791 = vunpack.c.l.b16 %v2750
          %v2792 = vunpack.c.h.b16 %v2750
          %v2793 = vunpack.c.l.b16 %v2751
          %v2794 = vunpack.c.h.b16 %v2751
          %v2795 = vunpack.c.l.b16 %v2752
          %v2796 = vunpack.c.h.b16 %v2752
          %v2797 = vunpack.c.l.b16 %v2753
          %v2798 = vunpack.c.h.b16 %v2753
          %v2799 = vunpack.c.l.b16 %v2754
          %v2800 = vunpack.c.h.b16 %v2754
          %v2801 = vunpack.c.l.b16 %v2755
          %v2802 = vunpack.c.h.b16 %v2755
          %v2803 = vunpack.c.l.b16 %v2756
          %v2804 = vunpack.c.h.b16 %v2756
          %v2805 = vpack.c.b16 %v2773, %v2773
          %v2806 = vpack.c.b16 %v2774, %v2774
          %v2807 = vpack.c.b16 %v2775, %v2775
          %v2808 = vpack.c.b16 %v2776, %v2776
          %v2809 = vpack.c.b16 %v2777, %v2777
          %v2810 = vpack.c.b16 %v2778, %v2778
          %v2811 = vpack.c.b16 %v2779, %v2779
          %v2812 = vpack.c.b16 %v2780, %v2780
          %v2813 = vpack.c.b16 %v2781, %v2781
          %v2814 = vpack.c.b16 %v2782, %v2782
          %v2815 = vpack.c.b16 %v2783, %v2783
          %v2816 = vpack.c.b16 %v2784, %v2784
          %v2817 = vpack.c.b16 %v2785, %v2785
          %v2818 = vpack.c.b16 %v2786, %v2786
          %v2819 = vpack.c.b16 %v2787, %v2787
          %v2820 = vpack.c.b16 %v2788, %v2788
          %v2821 = vpack.c.b16 %v2789, %v2789
          %v2822 = vpack.c.b16 %v2790, %v2790
          %v2823 = vpack.c.b16 %v2791, %v2791
          %v2824 = vpack.c.b16 %v2792, %v2792
          %v2825 = vpack.c.b16 %v2793, %v2793
          %v2826 = vpack.c.b16 %v2794, %v2794
          %v2827 = vpack.c.b16 %v2795, %v2795
          %v2828 = vpack.c.b16 %v2796, %v2796
          %v2829 = vpack.c.b16 %v2797, %v2797
          %v2830 = vpack.c.b16 %v2798, %v2798
          %v2831 = vpack.c.b16 %v2799, %v2799
          %v2832 = vpack.c.b16 %v2800, %v2800
          %v2833 = vpack.c.b16 %v2801, %v2801
          %v2834 = vpack.c.b16 %v2802, %v2802
          %v2835 = vpack.c.b16 %v2803, %v2803
          %v2836 = vpack.c.b16 %v2804, %v2804
          %2869 = vst [vmem:[#allocation3] sm:$0xf] %v2805
          %2870 = vst [vmem:[#allocation3 + $0x4] sm:$0xf] %v2806
          %2871 = vst [vmem:[#allocation3 + $0x8] sm:$0xf] %v2807
          %2872 = vst [vmem:[#allocation3 + $0xc] sm:$0xf] %v2808
          %2873 = vst [vmem:[#allocation3 + $0x10] sm:$0xf] %v2809
          %2874 = vst [vmem:[#allocation3 + $0x14] sm:$0xf] %v2810
          %2875 = vst [vmem:[#allocation3 + $0x18] sm:$0xf] %v2811
          %2876 = vst [vmem:[#allocation3 + $0x1c] sm:$0xf] %v2812
          %2877 = vst [vmem:[#allocation3 + $0x20] sm:$0xf] %v2813
          %2878 = vst [vmem:[#allocation3 + $0x24] sm:$0xf] %v2814
          %2879 = vst [vmem:[#allocation3 + $0x28] sm:$0xf] %v2815
          %2880 = vst [vmem:[#allocation3 + $0x2c] sm:$0xf] %v2816
          %2881 = vst [vmem:[#allocation3 + $0x30] sm:$0xf] %v2817
          %2882 = vst [vmem:[#allocation3 + $0x34] sm:$0xf] %v2818
          %2883 = vst [vmem:[#allocation3 + $0x38] sm:$0xf] %v2819
          %2884 = vst [vmem:[#allocation3 + $0x3c] sm:$0xf] %v2820
          %2885 = vst [vmem:[#allocation3 + $0x40] sm:$0xf] %v2821
          %2886 = vst [vmem:[#allocation3 + $0x44] sm:$0xf] %v2822
          %2887 = vst [vmem:[#allocation3 + $0x48] sm:$0xf] %v2823
          %2888 = vst [vmem:[#allocation3 + $0x4c] sm:$0xf] %v2824
          %2889 = vst [vmem:[#allocation3 + $0x50] sm:$0xf] %v2825
          %2890 = vst [vmem:[#allocation3 + $0x54] sm:$0xf] %v2826
          %2891 = vst [vmem:[#allocation3 + $0x58] sm:$0xf] %v2827
          %2892 = vst [vmem:[#allocation3 + $0x5c] sm:$0xf] %v2828
          %2893 = vst [vmem:[#allocation3 + $0x60] sm:$0xf] %v2829
          %2894 = vst [vmem:[#allocation3 + $0x64] sm:$0xf] %v2830
          %2895 = vst [vmem:[#allocation3 + $0x68] sm:$0xf] %v2831
          %2896 = vst [vmem:[#allocation3 + $0x6c] sm:$0xf] %v2832
          %2897 = vst [vmem:[#allocation3 + $0x70] sm:$0xf] %v2833
          %2898 = vst [vmem:[#allocation3 + $0x74] sm:$0xf] %v2834
          %2899 = vst [vmem:[#allocation3 + $0x78] sm:$0xf] %v2835
          %2900 = vst [vmem:[#allocation3 + $0x7c] sm:$0xf] %v2836
          %v2901 = vlaneseq
          %v2902 = vshrl.u32 %v2901, 7
          %v2903 = vsub.s32 4, %v2902
          %v2904 = vrot.slane %v311, %v2903
          %v2905 = vadd.f32 %v2605, %v2904
          %v2906 = vadd.f32 %v2606, %v2904
          %v2907 = vadd.f32 %v2607, %v2904
          %v2908 = vadd.f32 %v2608, %v2904
          %v2909 = vadd.f32 %v2609, %v2904
          %v2910 = vadd.f32 %v2610, %v2904
          %v2911 = vadd.f32 %v2611, %v2904
          %v2912 = vadd.f32 %v2612, %v2904
          %v2913 = vadd.f32 %v2613, %v2904
          %v2914 = vadd.f32 %v2614, %v2904
          %v2915 = vadd.f32 %v2615, %v2904
          %v2916 = vadd.f32 %v2616, %v2904
          %v2917 = vadd.f32 %v2617, %v2904
          %v2918 = vadd.f32 %v2618, %v2904
          %v2919 = vadd.f32 %v2619, %v2904
          %v2920 = vadd.f32 %v2620, %v2904
          %v2921 = vadd.f32 %v2621, %v2904
          %v2922 = vadd.f32 %v2622, %v2904
          %v2923 = vadd.f32 %v2623, %v2904
          %v2924 = vadd.f32 %v2624, %v2904
          %v2925 = vadd.f32 %v2625, %v2904
          %v2926 = vadd.f32 %v2626, %v2904
          %v2927 = vadd.f32 %v2627, %v2904
          %v2928 = vadd.f32 %v2628, %v2904
          %v2929 = vadd.f32 %v2629, %v2904
          %v2930 = vadd.f32 %v2630, %v2904
          %v2931 = vadd.f32 %v2631, %v2904
          %v2932 = vadd.f32 %v2632, %v2904
          %v2933 = vadd.f32 %v2633, %v2904
          %v2934 = vadd.f32 %v2634, %v2904
          %v2935 = vadd.f32 %v2635, %v2904
          %v2936 = vadd.f32 %v2636, %v2904
          %v2937 = vpack.c.bf16 %v2906, %v2905
          %v2938 = vpack.c.bf16 %v2908, %v2907
          %v2939 = vpack.c.bf16 %v2910, %v2909
          %v2940 = vpack.c.bf16 %v2912, %v2911
          %v2941 = vpack.c.bf16 %v2914, %v2913
          %v2942 = vpack.c.bf16 %v2916, %v2915
          %v2943 = vpack.c.bf16 %v2918, %v2917
          %v2944 = vpack.c.bf16 %v2920, %v2919
          %v2945 = vpack.c.bf16 %v2922, %v2921
          %v2946 = vpack.c.bf16 %v2924, %v2923
          %v2947 = vpack.c.bf16 %v2926, %v2925
          %v2948 = vpack.c.bf16 %v2928, %v2927
          %v2949 = vpack.c.bf16 %v2930, %v2929
          %v2950 = vpack.c.bf16 %v2932, %v2931
          %v2951 = vpack.c.bf16 %v2934, %v2933
          %v2952 = vpack.c.bf16 %v2936, %v2935
          %v2969 = vunpack.c.l.b16 %v2937
          %v2970 = vunpack.c.h.b16 %v2937
          %v2971 = vunpack.c.l.b16 %v2938
          %v2972 = vunpack.c.h.b16 %v2938
          %v2973 = vunpack.c.l.b16 %v2939
          %v2974 = vunpack.c.h.b16 %v2939
          %v2975 = vunpack.c.l.b16 %v2940
          %v2976 = vunpack.c.h.b16 %v2940
          %v2977 = vunpack.c.l.b16 %v2941
          %v2978 = vunpack.c.h.b16 %v2941
          %v2979 = vunpack.c.l.b16 %v2942
          %v2980 = vunpack.c.h.b16 %v2942
          %v2981 = vunpack.c.l.b16 %v2943
          %v2982 = vunpack.c.h.b16 %v2943
          %v2983 = vunpack.c.l.b16 %v2944
          %v2984 = vunpack.c.h.b16 %v2944
          %v2985 = vunpack.c.l.b16 %v2945
          %v2986 = vunpack.c.h.b16 %v2945
          %v2987 = vunpack.c.l.b16 %v2946
          %v2988 = vunpack.c.h.b16 %v2946
          %v2989 = vunpack.c.l.b16 %v2947
          %v2990 = vunpack.c.h.b16 %v2947
          %v2991 = vunpack.c.l.b16 %v2948
          %v2992 = vunpack.c.h.b16 %v2948
          %v2993 = vunpack.c.l.b16 %v2949
          %v2994 = vunpack.c.h.b16 %v2949
          %v2995 = vunpack.c.l.b16 %v2950
          %v2996 = vunpack.c.h.b16 %v2950
          %v2997 = vunpack.c.l.b16 %v2951
          %v2998 = vunpack.c.h.b16 %v2951
          %v2999 = vunpack.c.l.b16 %v2952
          %v3000 = vunpack.c.h.b16 %v2952
          %v3001 = vpack.c.b16 %v2969, %v2969
          %v3002 = vpack.c.b16 %v2970, %v2970
          %v3003 = vpack.c.b16 %v2971, %v2971
          %v3004 = vpack.c.b16 %v2972, %v2972
          %v3005 = vpack.c.b16 %v2973, %v2973
          %v3006 = vpack.c.b16 %v2974, %v2974
          %v3007 = vpack.c.b16 %v2975, %v2975
          %v3008 = vpack.c.b16 %v2976, %v2976
          %v3009 = vpack.c.b16 %v2977, %v2977
          %v3010 = vpack.c.b16 %v2978, %v2978
          %v3011 = vpack.c.b16 %v2979, %v2979
          %v3012 = vpack.c.b16 %v2980, %v2980
          %v3013 = vpack.c.b16 %v2981, %v2981
          %v3014 = vpack.c.b16 %v2982, %v2982
          %v3015 = vpack.c.b16 %v2983, %v2983
          %v3016 = vpack.c.b16 %v2984, %v2984
          %v3017 = vpack.c.b16 %v2985, %v2985
          %v3018 = vpack.c.b16 %v2986, %v2986
          %v3019 = vpack.c.b16 %v2987, %v2987
          %v3020 = vpack.c.b16 %v2988, %v2988
          %v3021 = vpack.c.b16 %v2989, %v2989
          %v3022 = vpack.c.b16 %v2990, %v2990
          %v3023 = vpack.c.b16 %v2991, %v2991
          %v3024 = vpack.c.b16 %v2992, %v2992
          %v3025 = vpack.c.b16 %v2993, %v2993
          %v3026 = vpack.c.b16 %v2994, %v2994
          %v3027 = vpack.c.b16 %v2995, %v2995
          %v3028 = vpack.c.b16 %v2996, %v2996
          %v3029 = vpack.c.b16 %v2997, %v2997
          %v3030 = vpack.c.b16 %v2998, %v2998
          %v3031 = vpack.c.b16 %v2999, %v2999
          %v3032 = vpack.c.b16 %v3000, %v3000
          %3065 = vst [vmem:[#allocation4] sm:$0xf] %v3001
          %3066 = vst [vmem:[#allocation4 + $0x4] sm:$0xf] %v3002
          %3067 = vst [vmem:[#allocation4 + $0x8] sm:$0xf] %v3003
          %3068 = vst [vmem:[#allocation4 + $0xc] sm:$0xf] %v3004
          %3069 = vst [vmem:[#allocation4 + $0x10] sm:$0xf] %v3005
          %3070 = vst [vmem:[#allocation4 + $0x14] sm:$0xf] %v3006
          %3071 = vst [vmem:[#allocation4 + $0x18] sm:$0xf] %v3007
          %3072 = vst [vmem:[#allocation4 + $0x1c] sm:$0xf] %v3008
          %3073 = vst [vmem:[#allocation4 + $0x20] sm:$0xf] %v3009
          %3074 = vst [vmem:[#allocation4 + $0x24] sm:$0xf] %v3010
          %3075 = vst [vmem:[#allocation4 + $0x28] sm:$0xf] %v3011
          %3076 = vst [vmem:[#allocation4 + $0x2c] sm:$0xf] %v3012
          %3077 = vst [vmem:[#allocation4 + $0x30] sm:$0xf] %v3013
          %3078 = vst [vmem:[#allocation4 + $0x34] sm:$0xf] %v3014
          %3079 = vst [vmem:[#allocation4 + $0x38] sm:$0xf] %v3015
          %3080 = vst [vmem:[#allocation4 + $0x3c] sm:$0xf] %v3016
          %3081 = vst [vmem:[#allocation4 + $0x40] sm:$0xf] %v3017
          %3082 = vst [vmem:[#allocation4 + $0x44] sm:$0xf] %v3018
          %3083 = vst [vmem:[#allocation4 + $0x48] sm:$0xf] %v3019
          %3084 = vst [vmem:[#allocation4 + $0x4c] sm:$0xf] %v3020
          %3085 = vst [vmem:[#allocation4 + $0x50] sm:$0xf] %v3021
          %3086 = vst [vmem:[#allocation4 + $0x54] sm:$0xf] %v3022
          %3087 = vst [vmem:[#allocation4 + $0x58] sm:$0xf] %v3023
          %3088 = vst [vmem:[#allocation4 + $0x5c] sm:$0xf] %v3024
          %3089 = vst [vmem:[#allocation4 + $0x60] sm:$0xf] %v3025
          %3090 = vst [vmem:[#allocation4 + $0x64] sm:$0xf] %v3026
          %3091 = vst [vmem:[#allocation4 + $0x68] sm:$0xf] %v3027
          %3092 = vst [vmem:[#allocation4 + $0x6c] sm:$0xf] %v3028
          %3093 = vst [vmem:[#allocation4 + $0x70] sm:$0xf] %v3029
          %3094 = vst [vmem:[#allocation4 + $0x74] sm:$0xf] %v3030
          %3095 = vst [vmem:[#allocation4 + $0x78] sm:$0xf] %v3031
          %3096 = vst [vmem:[#allocation4 + $0x7c] sm:$0xf] %v3032
          %v3097 = vlaneseq
          %v3098 = vshrl.u32 %v3097, 7
          %v3099 = vsub.s32 5, %v3098
          %v3100 = vrot.slane %v311, %v3099
          %v3101 = vadd.f32 %v2673, %v3100
          %v3102 = vadd.f32 %v2674, %v3100
          %v3103 = vadd.f32 %v2675, %v3100
          %v3104 = vadd.f32 %v2676, %v3100
          %v3105 = vadd.f32 %v2677, %v3100
          %v3106 = vadd.f32 %v2678, %v3100
          %v3107 = vadd.f32 %v2679, %v3100
          %v3108 = vadd.f32 %v2680, %v3100
          %v3109 = vadd.f32 %v2681, %v3100
          %v3110 = vadd.f32 %v2682, %v3100
          %v3111 = vadd.f32 %v2683, %v3100
          %v3112 = vadd.f32 %v2684, %v3100
          %v3113 = vadd.f32 %v2685, %v3100
          %v3114 = vadd.f32 %v2686, %v3100
          %v3115 = vadd.f32 %v2687, %v3100
          %v3116 = vadd.f32 %v2688, %v3100
          %v3117 = vadd.f32 %v2689, %v3100
          %v3118 = vadd.f32 %v2690, %v3100
          %v3119 = vadd.f32 %v2691, %v3100
          %v3120 = vadd.f32 %v2692, %v3100
          %v3121 = vadd.f32 %v2693, %v3100
          %v3122 = vadd.f32 %v2694, %v3100
          %v3123 = vadd.f32 %v2695, %v3100
          %v3124 = vadd.f32 %v2696, %v3100
          %v3125 = vadd.f32 %v2697, %v3100
          %v3126 = vadd.f32 %v2698, %v3100
          %v3127 = vadd.f32 %v2699, %v3100
          %v3128 = vadd.f32 %v2700, %v3100
          %v3129 = vadd.f32 %v2701, %v3100
          %v3130 = vadd.f32 %v2702, %v3100
          %v3131 = vadd.f32 %v2703, %v3100
          %v3132 = vadd.f32 %v2704, %v3100
          %v3133 = vpack.c.bf16 %v3102, %v3101
          %v3134 = vpack.c.bf16 %v3104, %v3103
          %v3135 = vpack.c.bf16 %v3106, %v3105
          %v3136 = vpack.c.bf16 %v3108, %v3107
          %v3137 = vpack.c.bf16 %v3110, %v3109
          %v3138 = vpack.c.bf16 %v3112, %v3111
          %v3139 = vpack.c.bf16 %v3114, %v3113
          %v3140 = vpack.c.bf16 %v3116, %v3115
          %v3141 = vpack.c.bf16 %v3118, %v3117
          %v3142 = vpack.c.bf16 %v3120, %v3119
          %v3143 = vpack.c.bf16 %v3122, %v3121
          %v3144 = vpack.c.bf16 %v3124, %v3123
          %v3145 = vpack.c.bf16 %v3126, %v3125
          %v3146 = vpack.c.bf16 %v3128, %v3127
          %v3147 = vpack.c.bf16 %v3130, %v3129
          %v3148 = vpack.c.bf16 %v3132, %v3131
          %v3165 = vunpack.c.l.b16 %v3133
          %v3166 = vunpack.c.h.b16 %v3133
          %v3167 = vunpack.c.l.b16 %v3134
          %v3168 = vunpack.c.h.b16 %v3134
          %v3169 = vunpack.c.l.b16 %v3135
          %v3170 = vunpack.c.h.b16 %v3135
          %v3171 = vunpack.c.l.b16 %v3136
          %v3172 = vunpack.c.h.b16 %v3136
          %v3173 = vunpack.c.l.b16 %v3137
          %v3174 = vunpack.c.h.b16 %v3137
          %v3175 = vunpack.c.l.b16 %v3138
          %v3176 = vunpack.c.h.b16 %v3138
          %v3177 = vunpack.c.l.b16 %v3139
          %v3178 = vunpack.c.h.b16 %v3139
          %v3179 = vunpack.c.l.b16 %v3140
          %v3180 = vunpack.c.h.b16 %v3140
          %v3181 = vunpack.c.l.b16 %v3141
          %v3182 = vunpack.c.h.b16 %v3141
          %v3183 = vunpack.c.l.b16 %v3142
          %v3184 = vunpack.c.h.b16 %v3142
          %v3185 = vunpack.c.l.b16 %v3143
          %v3186 = vunpack.c.h.b16 %v3143
          %v3187 = vunpack.c.l.b16 %v3144
          %v3188 = vunpack.c.h.b16 %v3144
          %v3189 = vunpack.c.l.b16 %v3145
          %v3190 = vunpack.c.h.b16 %v3145
          %v3191 = vunpack.c.l.b16 %v3146
          %v3192 = vunpack.c.h.b16 %v3146
          %v3193 = vunpack.c.l.b16 %v3147
          %v3194 = vunpack.c.h.b16 %v3147
          %v3195 = vunpack.c.l.b16 %v3148
          %v3196 = vunpack.c.h.b16 %v3148
          %v3197 = vpack.c.b16 %v3165, %v3165
          %v3198 = vpack.c.b16 %v3166, %v3166
          %v3199 = vpack.c.b16 %v3167, %v3167
          %v3200 = vpack.c.b16 %v3168, %v3168
          %v3201 = vpack.c.b16 %v3169, %v3169
          %v3202 = vpack.c.b16 %v3170, %v3170
          %v3203 = vpack.c.b16 %v3171, %v3171
          %v3204 = vpack.c.b16 %v3172, %v3172
          %v3205 = vpack.c.b16 %v3173, %v3173
          %v3206 = vpack.c.b16 %v3174, %v3174
          %v3207 = vpack.c.b16 %v3175, %v3175
          %v3208 = vpack.c.b16 %v3176, %v3176
          %v3209 = vpack.c.b16 %v3177, %v3177
          %v3210 = vpack.c.b16 %v3178, %v3178
          %v3211 = vpack.c.b16 %v3179, %v3179
          %v3212 = vpack.c.b16 %v3180, %v3180
          %v3213 = vpack.c.b16 %v3181, %v3181
          %v3214 = vpack.c.b16 %v3182, %v3182
          %v3215 = vpack.c.b16 %v3183, %v3183
          %v3216 = vpack.c.b16 %v3184, %v3184
          %v3217 = vpack.c.b16 %v3185, %v3185
          %v3218 = vpack.c.b16 %v3186, %v3186
          %v3219 = vpack.c.b16 %v3187, %v3187
          %v3220 = vpack.c.b16 %v3188, %v3188
          %v3221 = vpack.c.b16 %v3189, %v3189
          %v3222 = vpack.c.b16 %v3190, %v3190
          %v3223 = vpack.c.b16 %v3191, %v3191
          %v3224 = vpack.c.b16 %v3192, %v3192
          %v3225 = vpack.c.b16 %v3193, %v3193
          %v3226 = vpack.c.b16 %v3194, %v3194
          %v3227 = vpack.c.b16 %v3195, %v3195
          %v3228 = vpack.c.b16 %v3196, %v3196
          %3261 = vst [vmem:[#allocation5] sm:$0xf] %v3197
          %3262 = vst [vmem:[#allocation5 + $0x4] sm:$0xf] %v3198
          %3263 = vst [vmem:[#allocation5 + $0x8] sm:$0xf] %v3199
          %3264 = vst [vmem:[#allocation5 + $0xc] sm:$0xf] %v3200
          %3265 = vst [vmem:[#allocation5 + $0x10] sm:$0xf] %v3201
          %3266 = vst [vmem:[#allocation5 + $0x14] sm:$0xf] %v3202
          %3267 = vst [vmem:[#allocation5 + $0x18] sm:$0xf] %v3203
          %3268 = vst [vmem:[#allocation5 + $0x1c] sm:$0xf] %v3204
          %3269 = vst [vmem:[#allocation5 + $0x20] sm:$0xf] %v3205
          %3270 = vst [vmem:[#allocation5 + $0x24] sm:$0xf] %v3206
          %3271 = vst [vmem:[#allocation5 + $0x28] sm:$0xf] %v3207
          %3272 = vst [vmem:[#allocation5 + $0x2c] sm:$0xf] %v3208
          %3273 = vst [vmem:[#allocation5 + $0x30] sm:$0xf] %v3209
          %3274 = vst [vmem:[#allocation5 + $0x34] sm:$0xf] %v3210
          %3275 = vst [vmem:[#allocation5 + $0x38] sm:$0xf] %v3211
          %3276 = vst [vmem:[#allocation5 + $0x3c] sm:$0xf] %v3212
          %3277 = vst [vmem:[#allocation5 + $0x40] sm:$0xf] %v3213
          %3278 = vst [vmem:[#allocation5 + $0x44] sm:$0xf] %v3214
          %3279 = vst [vmem:[#allocation5 + $0x48] sm:$0xf] %v3215
          %3280 = vst [vmem:[#allocation5 + $0x4c] sm:$0xf] %v3216
          %3281 = vst [vmem:[#allocation5 + $0x50] sm:$0xf] %v3217
          %3282 = vst [vmem:[#allocation5 + $0x54] sm:$0xf] %v3218
          %3283 = vst [vmem:[#allocation5 + $0x58] sm:$0xf] %v3219
          %3284 = vst [vmem:[#allocation5 + $0x5c] sm:$0xf] %v3220
          %3285 = vst [vmem:[#allocation5 + $0x60] sm:$0xf] %v3221
          %3286 = vst [vmem:[#allocation5 + $0x64] sm:$0xf] %v3222
          %3287 = vst [vmem:[#allocation5 + $0x68] sm:$0xf] %v3223
          %3288 = vst [vmem:[#allocation5 + $0x6c] sm:$0xf] %v3224
          %3289 = vst [vmem:[#allocation5 + $0x70] sm:$0xf] %v3225
          %3290 = vst [vmem:[#allocation5 + $0x74] sm:$0xf] %v3226
          %3291 = vst [vmem:[#allocation5 + $0x78] sm:$0xf] %v3227
          %3292 = vst [vmem:[#allocation5 + $0x7c] sm:$0xf] %v3228
        $region48: #{tpu_custom_call.1} parent=31 // pred_fallthru
          _
        %s3293 = smul.u32 %s26, 128
        %s3294 = sshra.s32 %s3293, 3
        %s3295 = sand.u32 %s3293, 7
        %s3296 = smul.addr %s3294, 4
        %s3297 = scalar_lea.vmem [#allocation3], %s3296
        %v3298 = vld [vmem:[%s3297] sm:$0xf]
        %v3299 = vld [vmem:[%s3297 + $0x4] sm:$0xf]
        %v3300 = vld [vmem:[%s3297 + $0x8] sm:$0xf]
        %v3301 = vld [vmem:[%s3297 + $0xc] sm:$0xf]
        %v3302 = vld [vmem:[%s3297 + $0x10] sm:$0xf]
        %v3303 = vld [vmem:[%s3297 + $0x14] sm:$0xf]
        %v3304 = vld [vmem:[%s3297 + $0x18] sm:$0xf]
        %v3305 = vld [vmem:[%s3297 + $0x1c] sm:$0xf]
        %v3306 = vld [vmem:[%s3297 + $0x20] sm:$0xf]
        %v3307 = vld [vmem:[%s3297 + $0x24] sm:$0xf]
        %v3308 = vld [vmem:[%s3297 + $0x28] sm:$0xf]
        %v3309 = vld [vmem:[%s3297 + $0x2c] sm:$0xf]
        %v3310 = vld [vmem:[%s3297 + $0x30] sm:$0xf]
        %v3311 = vld [vmem:[%s3297 + $0x34] sm:$0xf]
        %v3312 = vld [vmem:[%s3297 + $0x38] sm:$0xf]
        %v3313 = vld [vmem:[%s3297 + $0x3c] sm:$0xf]
        %v3314 = vld [vmem:[#allocation4] sm:$0xf]
        %v3315 = vld [vmem:[#allocation4 + $0x4] sm:$0xf]
        %v3316 = vld [vmem:[#allocation4 + $0x8] sm:$0xf]
        %v3317 = vld [vmem:[#allocation4 + $0xc] sm:$0xf]
        %v3318 = vld [vmem:[#allocation4 + $0x10] sm:$0xf]
        %v3319 = vld [vmem:[#allocation4 + $0x14] sm:$0xf]
        %v3320 = vld [vmem:[#allocation4 + $0x18] sm:$0xf]
        %v3321 = vld [vmem:[#allocation4 + $0x1c] sm:$0xf]
        %v3322 = vld [vmem:[#allocation4 + $0x20] sm:$0xf]
        %v3323 = vld [vmem:[#allocation4 + $0x24] sm:$0xf]
        %v3324 = vld [vmem:[#allocation4 + $0x28] sm:$0xf]
        %v3325 = vld [vmem:[#allocation4 + $0x2c] sm:$0xf]
        %v3326 = vld [vmem:[#allocation4 + $0x30] sm:$0xf]
        %v3327 = vld [vmem:[#allocation4 + $0x34] sm:$0xf]
        %v3328 = vld [vmem:[#allocation4 + $0x38] sm:$0xf]
        %v3329 = vld [vmem:[#allocation4 + $0x3c] sm:$0xf]
        %v3330 = vld [vmem:[#allocation4 + $0x40] sm:$0xf]
        %v3331 = vld [vmem:[#allocation4 + $0x44] sm:$0xf]
        %v3332 = vld [vmem:[#allocation4 + $0x48] sm:$0xf]
        %v3333 = vld [vmem:[#allocation4 + $0x4c] sm:$0xf]
        %v3334 = vld [vmem:[#allocation4 + $0x50] sm:$0xf]
        %v3335 = vld [vmem:[#allocation4 + $0x54] sm:$0xf]
        %v3336 = vld [vmem:[#allocation4 + $0x58] sm:$0xf]
        %v3337 = vld [vmem:[#allocation4 + $0x5c] sm:$0xf]
        %v3338 = vld [vmem:[#allocation4 + $0x60] sm:$0xf]
        %v3339 = vld [vmem:[#allocation4 + $0x64] sm:$0xf]
        %v3340 = vld [vmem:[#allocation4 + $0x68] sm:$0xf]
        %v3341 = vld [vmem:[#allocation4 + $0x6c] sm:$0xf]
        %v3342 = vld [vmem:[#allocation4 + $0x70] sm:$0xf]
        %v3343 = vld [vmem:[#allocation4 + $0x74] sm:$0xf]
        %v3344 = vld [vmem:[#allocation4 + $0x78] sm:$0xf]
        %v3345 = vld [vmem:[#allocation4 + $0x7c] sm:$0xf]
        %v3346 = vld [vmem:[#allocation5] sm:$0xf]
        %v3347 = vld [vmem:[#allocation5 + $0x4] sm:$0xf]
        %v3348 = vld [vmem:[#allocation5 + $0x8] sm:$0xf]
        %v3349 = vld [vmem:[#allocation5 + $0xc] sm:$0xf]
        %v3350 = vld [vmem:[#allocation5 + $0x10] sm:$0xf]
        %v3351 = vld [vmem:[#allocation5 + $0x14] sm:$0xf]
        %v3352 = vld [vmem:[#allocation5 + $0x18] sm:$0xf]
        %v3353 = vld [vmem:[#allocation5 + $0x1c] sm:$0xf]
        %v3354 = vld [vmem:[#allocation5 + $0x20] sm:$0xf]
        %v3355 = vld [vmem:[#allocation5 + $0x24] sm:$0xf]
        %v3356 = vld [vmem:[#allocation5 + $0x28] sm:$0xf]
        %v3357 = vld [vmem:[#allocation5 + $0x2c] sm:$0xf]
        %v3358 = vld [vmem:[#allocation5 + $0x30] sm:$0xf]
        %v3359 = vld [vmem:[#allocation5 + $0x34] sm:$0xf]
        %v3360 = vld [vmem:[#allocation5 + $0x38] sm:$0xf]
        %v3361 = vld [vmem:[#allocation5 + $0x3c] sm:$0xf]
        %v3362 = vld [vmem:[#allocation5 + $0x40] sm:$0xf]
        %v3363 = vld [vmem:[#allocation5 + $0x44] sm:$0xf]
        %v3364 = vld [vmem:[#allocation5 + $0x48] sm:$0xf]
        %v3365 = vld [vmem:[#allocation5 + $0x4c] sm:$0xf]
        %v3366 = vld [vmem:[#allocation5 + $0x50] sm:$0xf]
        %v3367 = vld [vmem:[#allocation5 + $0x54] sm:$0xf]
        %v3368 = vld [vmem:[#allocation5 + $0x58] sm:$0xf]
        %v3369 = vld [vmem:[#allocation5 + $0x5c] sm:$0xf]
        %v3370 = vld [vmem:[#allocation5 + $0x60] sm:$0xf]
        %v3371 = vld [vmem:[#allocation5 + $0x64] sm:$0xf]
        %v3372 = vld [vmem:[#allocation5 + $0x68] sm:$0xf]
        %v3373 = vld [vmem:[#allocation5 + $0x6c] sm:$0xf]
        %v3374 = vld [vmem:[#allocation5 + $0x70] sm:$0xf]
        %v3375 = vld [vmem:[#allocation5 + $0x74] sm:$0xf]
        %v3376 = vld [vmem:[#allocation5 + $0x78] sm:$0xf]
        %v3377 = vld [vmem:[#allocation5 + $0x7c] sm:$0xf]
        %v3378 = vld [vmem:[#allocation9 + $0x1e] sm:$0x1]
        %v3379 = vlaneseq
        %v3380 = vshrl.u32 %v3379, 7
        %v3381 = vsub.s32 0, %v3380
        %v3382 = vrot.slane %v3378, %v3381
        %v3399 = vunpack.c.l.b16 %v3298
        %v3400 = vunpack.c.l.b16 %v3299
        %v3401 = vunpack.c.l.b16 %v3300
        %v3402 = vunpack.c.l.b16 %v3301
        %v3403 = vunpack.c.l.b16 %v3302
        %v3404 = vunpack.c.l.b16 %v3303
        %v3405 = vunpack.c.l.b16 %v3304
        %v3406 = vunpack.c.l.b16 %v3305
        %v3407 = vunpack.c.l.b16 %v3306
        %v3408 = vunpack.c.l.b16 %v3307
        %v3409 = vunpack.c.l.b16 %v3308
        %v3410 = vunpack.c.l.b16 %v3309
        %v3411 = vunpack.c.l.b16 %v3310
        %v3412 = vunpack.c.l.b16 %v3311
        %v3413 = vunpack.c.l.b16 %v3312
        %v3414 = vunpack.c.l.b16 %v3313
        %v3415 = vpack.c.b16 %v3400, %v3399
        %v3416 = vpack.c.b16 %v3402, %v3401
        %v3417 = vpack.c.b16 %v3404, %v3403
        %v3418 = vpack.c.b16 %v3406, %v3405
        %v3419 = vpack.c.b16 %v3408, %v3407
        %v3420 = vpack.c.b16 %v3410, %v3409
        %v3421 = vpack.c.b16 %v3412, %v3411
        %v3422 = vpack.c.b16 %v3414, %v3413
        %v3455 = vunpack.c.l.b16 %v3314
        %v3456 = vunpack.c.l.b16 %v3315
        %v3457 = vunpack.c.l.b16 %v3316
        %v3458 = vunpack.c.l.b16 %v3317
        %v3459 = vunpack.c.l.b16 %v3318
        %v3460 = vunpack.c.l.b16 %v3319
        %v3461 = vunpack.c.l.b16 %v3320
        %v3462 = vunpack.c.l.b16 %v3321
        %v3463 = vunpack.c.l.b16 %v3322
        %v3464 = vunpack.c.l.b16 %v3323
        %v3465 = vunpack.c.l.b16 %v3324
        %v3466 = vunpack.c.l.b16 %v3325
        %v3467 = vunpack.c.l.b16 %v3326
        %v3468 = vunpack.c.l.b16 %v3327
        %v3469 = vunpack.c.l.b16 %v3328
        %v3470 = vunpack.c.l.b16 %v3329
        %v3471 = vunpack.c.l.b16 %v3330
        %v3472 = vunpack.c.l.b16 %v3331
        %v3473 = vunpack.c.l.b16 %v3332
        %v3474 = vunpack.c.l.b16 %v3333
        %v3475 = vunpack.c.l.b16 %v3334
        %v3476 = vunpack.c.l.b16 %v3335
        %v3477 = vunpack.c.l.b16 %v3336
        %v3478 = vunpack.c.l.b16 %v3337
        %v3479 = vunpack.c.l.b16 %v3338
        %v3480 = vunpack.c.l.b16 %v3339
        %v3481 = vunpack.c.l.b16 %v3340
        %v3482 = vunpack.c.l.b16 %v3341
        %v3483 = vunpack.c.l.b16 %v3342
        %v3484 = vunpack.c.l.b16 %v3343
        %v3485 = vunpack.c.l.b16 %v3344
        %v3486 = vunpack.c.l.b16 %v3345
        %v3487 = vpack.c.b16 %v3456, %v3455
        %v3488 = vpack.c.b16 %v3458, %v3457
        %v3489 = vpack.c.b16 %v3460, %v3459
        %v3490 = vpack.c.b16 %v3462, %v3461
        %v3491 = vpack.c.b16 %v3464, %v3463
        %v3492 = vpack.c.b16 %v3466, %v3465
        %v3493 = vpack.c.b16 %v3468, %v3467
        %v3494 = vpack.c.b16 %v3470, %v3469
        %v3495 = vpack.c.b16 %v3472, %v3471
        %v3496 = vpack.c.b16 %v3474, %v3473
        %v3497 = vpack.c.b16 %v3476, %v3475
        %v3498 = vpack.c.b16 %v3478, %v3477
        %v3499 = vpack.c.b16 %v3480, %v3479
        %v3500 = vpack.c.b16 %v3482, %v3481
        %v3501 = vpack.c.b16 %v3484, %v3483
        %v3502 = vpack.c.b16 %v3486, %v3485
        %vm3503 = vcmask 130048
        %v3505 = vsel %vm3503, %v3415, 0
        %v3508 = vsel %vm3503, %v3416, 0
        %v3511 = vsel %vm3503, %v3417, 0
        %v3514 = vsel %vm3503, %v3418, 0
        %v3517 = vsel %vm3503, %v3419, 0
        %v3520 = vsel %vm3503, %v3420, 0
        %v3523 = vsel %vm3503, %v3421, 0
        %v3526 = vsel %vm3503, %v3422, 0
        %v3529 = vsel %vm3503, %v3487, 0
        %v3532 = vsel %vm3503, %v3488, 0
        %v3535 = vsel %vm3503, %v3489, 0
        %v3538 = vsel %vm3503, %v3490, 0
        %v3541 = vsel %vm3503, %v3491, 0
        %v3544 = vsel %vm3503, %v3492, 0
        %v3547 = vsel %vm3503, %v3493, 0
        %v3550 = vsel %vm3503, %v3494, 0
        %v3553 = vsel %vm3503, %v3495, 0
        %v3556 = vsel %vm3503, %v3496, 0
        %v3559 = vsel %vm3503, %v3497, 0
        %v3562 = vsel %vm3503, %v3498, 0
        %v3565 = vsel %vm3503, %v3499, 0
        %v3568 = vsel %vm3503, %v3500, 0
        %v3571 = vsel %vm3503, %v3501, 0
        %v3574 = vsel %vm3503, %v3502, 0
        %3576 = vmatprep.subr.bf16.mxu0 0
        %3577 = vmatpush1.bf16.xpose.msra.mxu0 %v3550
        %3578 = vmatprep.subr.bf16.mxu0 0
        %3579 = vmatpush1.bf16.xpose.msra.mxu0 %v3547
        %3580 = vmatprep.subr.bf16.mxu0 0
        %3581 = vmatpush1.bf16.xpose.msra.mxu0 %v3544
        %3582 = vmatprep.subr.bf16.mxu0 0
        %3583 = vmatpush1.bf16.xpose.msra.mxu0 %v3541
        %3584 = vmatprep.subr.bf16.mxu0 0
        %3585 = vmatpush1.bf16.xpose.msra.mxu0 %v3538
        %3586 = vmatprep.subr.bf16.mxu0 0
        %3587 = vmatpush1.bf16.xpose.msra.mxu0 %v3535
        %3588 = vmatprep.subr.bf16.mxu0 0
        %3589 = vmatpush1.bf16.xpose.msra.mxu0 %v3532
        %3590 = vmatprep.subr.bf16.mxu0 0
        %3591 = vmatpush1.bf16.xpose.msra.mxu0 %v3529
        %3592 = vmatprep.subr.bf16.mxu0 0
        %3593 = vmatpush2.bf16.xpose.msra.mxu0 %v3574
        %3594 = vmatprep.subr.bf16.mxu0 0
        %3595 = vmatpush2.bf16.xpose.msra.mxu0 %v3571
        %3596 = vmatprep.subr.bf16.mxu0 0
        %3597 = vmatpush2.bf16.xpose.msra.mxu0 %v3568
        %3598 = vmatprep.subr.bf16.mxu0 0
        %3599 = vmatpush2.bf16.xpose.msra.mxu0 %v3565
        %3600 = vmatprep.subr.bf16.mxu0 0
        %3601 = vmatpush2.bf16.xpose.msra.mxu0 %v3562
        %3602 = vmatprep.subr.bf16.mxu0 0
        %3603 = vmatpush2.bf16.xpose.msra.mxu0 %v3559
        %3604 = vmatprep.subr.bf16.mxu0 0
        %3605 = vmatpush2.bf16.xpose.msra.mxu0 %v3556
        %3606 = vmatprep.subr.bf16.mxu0 0
        %3607 = vmatpush2.bf16.xpose.msra.mxu0 %v3553
        %3608 = vmatprep.mubr.bf16.mxu0 0
        %3609 = vmatmul.mubr.bf16.gmra.mxu0 %v3505
        %v3610 = vpop.f32.mrf.mxu0
        %v3611 = vadd.f32 0.0, %v3610
        %v3612 = vpop.f32.mrf.mxu0
        %v3613 = vadd.f32 0.0, %v3612
        %v3614 = vpop.f32.mrf.mxu0
        %v3615 = vadd.f32 0.0, %v3614
        %v3616 = vpop.f32.mrf.mxu0
        %v3617 = vadd.f32 0.0, %v3616
        %3618 = vmatprep.mubr.bf16.mxu0 0
        %3619 = vmatmul.mubr.bf16.gmra.mxu0 %v3508
        %v3620 = vpop.f32.mrf.mxu0
        %v3621 = vadd.f32 0.0, %v3620
        %v3622 = vpop.f32.mrf.mxu0
        %v3623 = vadd.f32 0.0, %v3622
        %v3624 = vpop.f32.mrf.mxu0
        %v3625 = vadd.f32 0.0, %v3624
        %v3626 = vpop.f32.mrf.mxu0
        %v3627 = vadd.f32 0.0, %v3626
        %3628 = vmatprep.mubr.bf16.mxu0 0
        %3629 = vmatmul.mubr.bf16.gmra.mxu0 %v3511
        %v3630 = vpop.f32.mrf.mxu0
        %v3631 = vadd.f32 0.0, %v3630
        %v3632 = vpop.f32.mrf.mxu0
        %v3633 = vadd.f32 0.0, %v3632
        %v3634 = vpop.f32.mrf.mxu0
        %v3635 = vadd.f32 0.0, %v3634
        %v3636 = vpop.f32.mrf.mxu0
        %v3637 = vadd.f32 0.0, %v3636
        %3638 = vmatprep.mubr.bf16.mxu0 0
        %3639 = vmatmul.mubr.bf16.gmra.mxu0 %v3514
        %v3640 = vpop.f32.mrf.mxu0
        %v3641 = vadd.f32 0.0, %v3640
        %v3642 = vpop.f32.mrf.mxu0
        %v3643 = vadd.f32 0.0, %v3642
        %v3644 = vpop.f32.mrf.mxu0
        %v3645 = vadd.f32 0.0, %v3644
        %v3646 = vpop.f32.mrf.mxu0
        %v3647 = vadd.f32 0.0, %v3646
        %3648 = vmatprep.mubr.bf16.mxu0 0
        %3649 = vmatmul.mubr.bf16.gmra.mxu0 %v3517
        %v3650 = vpop.f32.mrf.mxu0
        %v3651 = vadd.f32 0.0, %v3650
        %v3652 = vpop.f32.mrf.mxu0
        %v3653 = vadd.f32 0.0, %v3652
        %v3654 = vpop.f32.mrf.mxu0
        %v3655 = vadd.f32 0.0, %v3654
        %v3656 = vpop.f32.mrf.mxu0
        %v3657 = vadd.f32 0.0, %v3656
        %3658 = vmatprep.mubr.bf16.mxu0 0
        %3659 = vmatmul.mubr.bf16.gmra.mxu0 %v3520
        %v3660 = vpop.f32.mrf.mxu0
        %v3661 = vadd.f32 0.0, %v3660
        %v3662 = vpop.f32.mrf.mxu0
        %v3663 = vadd.f32 0.0, %v3662
        %v3664 = vpop.f32.mrf.mxu0
        %v3665 = vadd.f32 0.0, %v3664
        %v3666 = vpop.f32.mrf.mxu0
        %v3667 = vadd.f32 0.0, %v3666
        %3668 = vmatprep.mubr.bf16.mxu0 0
        %3669 = vmatmul.mubr.bf16.gmra.mxu0 %v3523
        %v3670 = vpop.f32.mrf.mxu0
        %v3671 = vadd.f32 0.0, %v3670
        %v3672 = vpop.f32.mrf.mxu0
        %v3673 = vadd.f32 0.0, %v3672
        %v3674 = vpop.f32.mrf.mxu0
        %v3675 = vadd.f32 0.0, %v3674
        %v3676 = vpop.f32.mrf.mxu0
        %v3677 = vadd.f32 0.0, %v3676
        %3678 = vmatprep.mubr.bf16.mxu0 0
        %3679 = vmatmul.mubr.bf16.gmra.mxu0 %v3526
        %v3680 = vpop.f32.mrf.mxu0
        %v3681 = vadd.f32 0.0, %v3680
        %v3682 = vpop.f32.mrf.mxu0
        %v3683 = vadd.f32 0.0, %v3682
        %v3684 = vpop.f32.mrf.mxu0
        %v3685 = vadd.f32 0.0, %v3684
        %v3686 = vpop.f32.mrf.mxu0
        %v3687 = vadd.f32 0.0, %v3686
        %3688 = vdwg.mxu0
        %v3689 = vmax.f32 %v3611, %v3613
        %3690 = vmax.xlane.f32.xlu0 %v3689
        %v3691 = vpop.xlane.xlu0 %3690
        %v3692 = vmax.f32 %v3615, %v3617
        %3693 = vmax.xlane.f32.xlu0 %v3692
        %v3694 = vpop.xlane.xlu0 %3693
        %v3695 = vmax.f32 %v3621, %v3623
        %3696 = vmax.xlane.f32.xlu0 %v3695
        %v3697 = vpop.xlane.xlu0 %3696
        %v3698 = vmax.f32 %v3625, %v3627
        %3699 = vmax.xlane.f32.xlu0 %v3698
        %v3700 = vpop.xlane.xlu0 %3699
        %v3701 = vmax.f32 %v3631, %v3633
        %3702 = vmax.xlane.f32.xlu0 %v3701
        %v3703 = vpop.xlane.xlu0 %3702
        %v3704 = vmax.f32 %v3635, %v3637
        %3705 = vmax.xlane.f32.xlu0 %v3704
        %v3706 = vpop.xlane.xlu0 %3705
        %v3707 = vmax.f32 %v3641, %v3643
        %3708 = vmax.xlane.f32.xlu0 %v3707
        %v3709 = vpop.xlane.xlu0 %3708
        %v3710 = vmax.f32 %v3645, %v3647
        %3711 = vmax.xlane.f32.xlu0 %v3710
        %v3712 = vpop.xlane.xlu0 %3711
        %v3713 = vmax.f32 %v3651, %v3653
        %3714 = vmax.xlane.f32.xlu0 %v3713
        %v3715 = vpop.xlane.xlu0 %3714
        %v3716 = vmax.f32 %v3655, %v3657
        %3717 = vmax.xlane.f32.xlu0 %v3716
        %v3718 = vpop.xlane.xlu0 %3717
        %v3719 = vmax.f32 %v3661, %v3663
        %3720 = vmax.xlane.f32.xlu0 %v3719
        %v3721 = vpop.xlane.xlu0 %3720
        %v3722 = vmax.f32 %v3665, %v3667
        %3723 = vmax.xlane.f32.xlu0 %v3722
        %v3724 = vpop.xlane.xlu0 %3723
        %v3725 = vmax.f32 %v3671, %v3673
        %3726 = vmax.xlane.f32.xlu0 %v3725
        %v3727 = vpop.xlane.xlu0 %3726
        %v3728 = vmax.f32 %v3675, %v3677
        %3729 = vmax.xlane.f32.xlu0 %v3728
        %v3730 = vpop.xlane.xlu0 %3729
        %v3731 = vmax.f32 %v3681, %v3683
        %3732 = vmax.xlane.f32.xlu0 %v3731
        %v3733 = vpop.xlane.xlu0 %3732
        %v3734 = vmax.f32 %v3685, %v3687
        %3735 = vmax.xlane.f32.xlu0 %v3734
        %v3736 = vpop.xlane.xlu0 %3735
        %v3737 = vsub.f32 %v3611, %v3691
        %v3738 = vsub.f32 %v3613, %v3691
        %v3739 = vsub.f32 %v3615, %v3694
        %v3740 = vsub.f32 %v3617, %v3694
        %v3741 = vsub.f32 %v3621, %v3697
        %v3742 = vsub.f32 %v3623, %v3697
        %v3743 = vsub.f32 %v3625, %v3700
        %v3744 = vsub.f32 %v3627, %v3700
        %v3745 = vsub.f32 %v3631, %v3703
        %v3746 = vsub.f32 %v3633, %v3703
        %v3747 = vsub.f32 %v3635, %v3706
        %v3748 = vsub.f32 %v3637, %v3706
        %v3749 = vsub.f32 %v3641, %v3709
        %v3750 = vsub.f32 %v3643, %v3709
        %v3751 = vsub.f32 %v3645, %v3712
        %v3752 = vsub.f32 %v3647, %v3712
        %v3753 = vsub.f32 %v3651, %v3715
        %v3754 = vsub.f32 %v3653, %v3715
        %v3755 = vsub.f32 %v3655, %v3718
        %v3756 = vsub.f32 %v3657, %v3718
        %v3757 = vsub.f32 %v3661, %v3721
        %v3758 = vsub.f32 %v3663, %v3721
        %v3759 = vsub.f32 %v3665, %v3724
        %v3760 = vsub.f32 %v3667, %v3724
        %v3761 = vsub.f32 %v3671, %v3727
        %v3762 = vsub.f32 %v3673, %v3727
        %v3763 = vsub.f32 %v3675, %v3730
        %v3764 = vsub.f32 %v3677, %v3730
        %v3765 = vsub.f32 %v3681, %v3733
        %v3766 = vsub.f32 %v3683, %v3733
        %v3767 = vsub.f32 %v3685, %v3736
        %v3768 = vsub.f32 %v3687, %v3736
        %v3769 = vmul.f32 %v3737, 1.442695
        %v3770 = vpow.pop %v3769
        %v3771 = vmul.f32 %v3738, 1.442695
        %v3772 = vpow.pop %v3771
        %v3773 = vmul.f32 %v3739, 1.442695
        %v3774 = vpow.pop %v3773
        %v3775 = vmul.f32 %v3740, 1.442695
        %v3776 = vpow.pop %v3775
        %v3777 = vmul.f32 %v3741, 1.442695
        %v3778 = vpow.pop %v3777
        %v3779 = vmul.f32 %v3742, 1.442695
        %v3780 = vpow.pop %v3779
        %v3781 = vmul.f32 %v3743, 1.442695
        %v3782 = vpow.pop %v3781
        %v3783 = vmul.f32 %v3744, 1.442695
        %v3784 = vpow.pop %v3783
        %v3785 = vmul.f32 %v3745, 1.442695
        %v3786 = vpow.pop %v3785
        %v3787 = vmul.f32 %v3746, 1.442695
        %v3788 = vpow.pop %v3787
        %v3789 = vmul.f32 %v3747, 1.442695
        %v3790 = vpow.pop %v3789
        %v3791 = vmul.f32 %v3748, 1.442695
        %v3792 = vpow.pop %v3791
        %v3793 = vmul.f32 %v3749, 1.442695
        %v3794 = vpow.pop %v3793
        %v3795 = vmul.f32 %v3750, 1.442695
        %v3796 = vpow.pop %v3795
        %v3797 = vmul.f32 %v3751, 1.442695
        %v3798 = vpow.pop %v3797
        %v3799 = vmul.f32 %v3752, 1.442695
        %v3800 = vpow.pop %v3799
        %v3801 = vmul.f32 %v3753, 1.442695
        %v3802 = vpow.pop %v3801
        %v3803 = vmul.f32 %v3754, 1.442695
        %v3804 = vpow.pop %v3803
        %v3805 = vmul.f32 %v3755, 1.442695
        %v3806 = vpow.pop %v3805
        %v3807 = vmul.f32 %v3756, 1.442695
        %v3808 = vpow.pop %v3807
        %v3809 = vmul.f32 %v3757, 1.442695
        %v3810 = vpow.pop %v3809
        %v3811 = vmul.f32 %v3758, 1.442695
        %v3812 = vpow.pop %v3811
        %v3813 = vmul.f32 %v3759, 1.442695
        %v3814 = vpow.pop %v3813
        %v3815 = vmul.f32 %v3760, 1.442695
        %v3816 = vpow.pop %v3815
        %v3817 = vmul.f32 %v3761, 1.442695
        %v3818 = vpow.pop %v3817
        %v3819 = vmul.f32 %v3762, 1.442695
        %v3820 = vpow.pop %v3819
        %v3821 = vmul.f32 %v3763, 1.442695
        %v3822 = vpow.pop %v3821
        %v3823 = vmul.f32 %v3764, 1.442695
        %v3824 = vpow.pop %v3823
        %v3825 = vmul.f32 %v3765, 1.442695
        %v3826 = vpow.pop %v3825
        %v3827 = vmul.f32 %v3766, 1.442695
        %v3828 = vpow.pop %v3827
        %v3829 = vmul.f32 %v3767, 1.442695
        %v3830 = vpow.pop %v3829
        %v3831 = vmul.f32 %v3768, 1.442695
        %v3832 = vpow.pop %v3831
        %v3833 = vadd.f32 %v3770, %v3772
        %3834 = vadd.xlane.f32.xlu0 %v3833
        %v3835 = vpop.xlane.xlu0 %3834
        %v3836 = vadd.f32 %v3774, %v3776
        %3837 = vadd.xlane.f32.xlu0 %v3836
        %v3838 = vpop.xlane.xlu0 %3837
        %v3839 = vadd.f32 %v3778, %v3780
        %3840 = vadd.xlane.f32.xlu0 %v3839
        %v3841 = vpop.xlane.xlu0 %3840
        %v3842 = vadd.f32 %v3782, %v3784
        %3843 = vadd.xlane.f32.xlu0 %v3842
        %v3844 = vpop.xlane.xlu0 %3843
        %v3845 = vadd.f32 %v3786, %v3788
        %3846 = vadd.xlane.f32.xlu0 %v3845
        %v3847 = vpop.xlane.xlu0 %3846
        %v3848 = vadd.f32 %v3790, %v3792
        %3849 = vadd.xlane.f32.xlu0 %v3848
        %v3850 = vpop.xlane.xlu0 %3849
        %v3851 = vadd.f32 %v3794, %v3796
        %3852 = vadd.xlane.f32.xlu0 %v3851
        %v3853 = vpop.xlane.xlu0 %3852
        %v3854 = vadd.f32 %v3798, %v3800
        %3855 = vadd.xlane.f32.xlu0 %v3854
        %v3856 = vpop.xlane.xlu0 %3855
        %v3857 = vadd.f32 %v3802, %v3804
        %3858 = vadd.xlane.f32.xlu0 %v3857
        %v3859 = vpop.xlane.xlu0 %3858
        %v3860 = vadd.f32 %v3806, %v3808
        %3861 = vadd.xlane.f32.xlu0 %v3860
        %v3862 = vpop.xlane.xlu0 %3861
        %v3863 = vadd.f32 %v3810, %v3812
        %3864 = vadd.xlane.f32.xlu0 %v3863
        %v3865 = vpop.xlane.xlu0 %3864
        %v3866 = vadd.f32 %v3814, %v3816
        %3867 = vadd.xlane.f32.xlu0 %v3866
        %v3868 = vpop.xlane.xlu0 %3867
        %v3869 = vadd.f32 %v3818, %v3820
        %3870 = vadd.xlane.f32.xlu0 %v3869
        %v3871 = vpop.xlane.xlu0 %3870
        %v3872 = vadd.f32 %v3822, %v3824
        %3873 = vadd.xlane.f32.xlu0 %v3872
        %v3874 = vpop.xlane.xlu0 %3873
        %v3875 = vadd.f32 %v3826, %v3828
        %3876 = vadd.xlane.f32.xlu0 %v3875
        %v3877 = vpop.xlane.xlu0 %3876
        %v3878 = vadd.f32 %v3830, %v3832
        %3879 = vadd.xlane.f32.xlu0 %v3878
        %v3880 = vpop.xlane.xlu0 %3879
        %v3881 = vrcp.pop %v3835
        %v3882 = vrcp.pop %v3838
        %v3883 = vrcp.pop %v3841
        %v3884 = vrcp.pop %v3844
        %v3885 = vrcp.pop %v3847
        %v3886 = vrcp.pop %v3850
        %v3887 = vrcp.pop %v3853
        %v3888 = vrcp.pop %v3856
        %v3889 = vrcp.pop %v3859
        %v3890 = vrcp.pop %v3862
        %v3891 = vrcp.pop %v3865
        %v3892 = vrcp.pop %v3868
        %v3893 = vrcp.pop %v3871
        %v3894 = vrcp.pop %v3874
        %v3895 = vrcp.pop %v3877
        %v3896 = vrcp.pop %v3880
        %v3897 = vmul.f32 %v3770, %v3881
        %v3898 = vmul.f32 %v3772, %v3881
        %v3899 = vmul.f32 %v3774, %v3882
        %v3900 = vmul.f32 %v3776, %v3882
        %v3901 = vmul.f32 %v3778, %v3883
        %v3902 = vmul.f32 %v3780, %v3883
        %v3903 = vmul.f32 %v3782, %v3884
        %v3904 = vmul.f32 %v3784, %v3884
        %v3905 = vmul.f32 %v3786, %v3885
        %v3906 = vmul.f32 %v3788, %v3885
        %v3907 = vmul.f32 %v3790, %v3886
        %v3908 = vmul.f32 %v3792, %v3886
        %v3909 = vmul.f32 %v3794, %v3887
        %v3910 = vmul.f32 %v3796, %v3887
        %v3911 = vmul.f32 %v3798, %v3888
        %v3912 = vmul.f32 %v3800, %v3888
        %v3913 = vmul.f32 %v3802, %v3889
        %v3914 = vmul.f32 %v3804, %v3889
        %v3915 = vmul.f32 %v3806, %v3890
        %v3916 = vmul.f32 %v3808, %v3890
        %v3917 = vmul.f32 %v3810, %v3891
        %v3918 = vmul.f32 %v3812, %v3891
        %v3919 = vmul.f32 %v3814, %v3892
        %v3920 = vmul.f32 %v3816, %v3892
        %v3921 = vmul.f32 %v3818, %v3893
        %v3922 = vmul.f32 %v3820, %v3893
        %v3923 = vmul.f32 %v3822, %v3894
        %v3924 = vmul.f32 %v3824, %v3894
        %v3925 = vmul.f32 %v3826, %v3895
        %v3926 = vmul.f32 %v3828, %v3895
        %v3927 = vmul.f32 %v3830, %v3896
        %v3928 = vmul.f32 %v3832, %v3896
        %v3929 = vpack.c.bf16 %v3899, %v3897
        %v3930 = vpack.c.bf16 %v3900, %v3898
        %v3931 = vpack.c.bf16 %v3903, %v3901
        %v3932 = vpack.c.bf16 %v3904, %v3902
        %v3933 = vpack.c.bf16 %v3907, %v3905
        %v3934 = vpack.c.bf16 %v3908, %v3906
        %v3935 = vpack.c.bf16 %v3911, %v3909
        %v3936 = vpack.c.bf16 %v3912, %v3910
        %v3937 = vpack.c.bf16 %v3915, %v3913
        %v3938 = vpack.c.bf16 %v3916, %v3914
        %v3939 = vpack.c.bf16 %v3919, %v3917
        %v3940 = vpack.c.bf16 %v3920, %v3918
        %v3941 = vpack.c.bf16 %v3923, %v3921
        %v3942 = vpack.c.bf16 %v3924, %v3922
        %v3943 = vpack.c.bf16 %v3927, %v3925
        %v3944 = vpack.c.bf16 %v3928, %v3926
        %v3977 = vunpack.c.l.b16 %v3346
        %v3978 = vunpack.c.l.b16 %v3347
        %v3979 = vunpack.c.l.b16 %v3348
        %v3980 = vunpack.c.l.b16 %v3349
        %v3981 = vunpack.c.l.b16 %v3350
        %v3982 = vunpack.c.l.b16 %v3351
        %v3983 = vunpack.c.l.b16 %v3352
        %v3984 = vunpack.c.l.b16 %v3353
        %v3985 = vunpack.c.l.b16 %v3354
        %v3986 = vunpack.c.l.b16 %v3355
        %v3987 = vunpack.c.l.b16 %v3356
        %v3988 = vunpack.c.l.b16 %v3357
        %v3989 = vunpack.c.l.b16 %v3358
        %v3990 = vunpack.c.l.b16 %v3359
        %v3991 = vunpack.c.l.b16 %v3360
        %v3992 = vunpack.c.l.b16 %v3361
        %v3993 = vunpack.c.l.b16 %v3362
        %v3994 = vunpack.c.l.b16 %v3363
        %v3995 = vunpack.c.l.b16 %v3364
        %v3996 = vunpack.c.l.b16 %v3365
        %v3997 = vunpack.c.l.b16 %v3366
        %v3998 = vunpack.c.l.b16 %v3367
        %v3999 = vunpack.c.l.b16 %v3368
        %v4000 = vunpack.c.l.b16 %v3369
        %v4001 = vunpack.c.l.b16 %v3370
        %v4002 = vunpack.c.l.b16 %v3371
        %v4003 = vunpack.c.l.b16 %v3372
        %v4004 = vunpack.c.l.b16 %v3373
        %v4005 = vunpack.c.l.b16 %v3374
        %v4006 = vunpack.c.l.b16 %v3375
        %v4007 = vunpack.c.l.b16 %v3376
        %v4008 = vunpack.c.l.b16 %v3377
        %v4009 = vpack.c.b16 %v3978, %v3977
        %v4010 = vpack.c.b16 %v3980, %v3979
        %v4011 = vpack.c.b16 %v3982, %v3981
        %v4012 = vpack.c.b16 %v3984, %v3983
        %v4013 = vpack.c.b16 %v3986, %v3985
        %v4014 = vpack.c.b16 %v3988, %v3987
        %v4015 = vpack.c.b16 %v3990, %v3989
        %v4016 = vpack.c.b16 %v3992, %v3991
        %v4017 = vpack.c.b16 %v3994, %v3993
        %v4018 = vpack.c.b16 %v3996, %v3995
        %v4019 = vpack.c.b16 %v3998, %v3997
        %v4020 = vpack.c.b16 %v4000, %v3999
        %v4021 = vpack.c.b16 %v4002, %v4001
        %v4022 = vpack.c.b16 %v4004, %v4003
        %v4023 = vpack.c.b16 %v4006, %v4005
        %v4024 = vpack.c.b16 %v4008, %v4007
        %4041 = vmatprep.subr.bf16.mxu0 0
        %4042 = vmatpush1.bf16.msra.mxu0 %v4016
        %4043 = vmatprep.subr.bf16.mxu0 0
        %4044 = vmatpush1.bf16.msra.mxu0 %v4015
        %4045 = vmatprep.subr.bf16.mxu0 0
        %4046 = vmatpush1.bf16.msra.mxu0 %v4014
        %4047 = vmatprep.subr.bf16.mxu0 0
        %4048 = vmatpush1.bf16.msra.mxu0 %v4013
        %4049 = vmatprep.subr.bf16.mxu0 0
        %4050 = vmatpush1.bf16.msra.mxu0 %v4012
        %4051 = vmatprep.subr.bf16.mxu0 0
        %4052 = vmatpush1.bf16.msra.mxu0 %v4011
        %4053 = vmatprep.subr.bf16.mxu0 0
        %4054 = vmatpush1.bf16.msra.mxu0 %v4010
        %4055 = vmatprep.subr.bf16.mxu0 0
        %4056 = vmatpush1.bf16.msra.mxu0 %v4009
        %4057 = vmatprep.subr.bf16.mxu0 0
        %4058 = vmatpush2.bf16.msra.mxu0 %v4024
        %4059 = vmatprep.subr.bf16.mxu0 0
        %4060 = vmatpush2.bf16.msra.mxu0 %v4023
        %4061 = vmatprep.subr.bf16.mxu0 0
        %4062 = vmatpush2.bf16.msra.mxu0 %v4022
        %4063 = vmatprep.subr.bf16.mxu0 0
        %4064 = vmatpush2.bf16.msra.mxu0 %v4021
        %4065 = vmatprep.subr.bf16.mxu0 0
        %4066 = vmatpush2.bf16.msra.mxu0 %v4020
        %4067 = vmatprep.subr.bf16.mxu0 0
        %4068 = vmatpush2.bf16.msra.mxu0 %v4019
        %4069 = vmatprep.subr.bf16.mxu0 0
        %4070 = vmatpush2.bf16.msra.mxu0 %v4018
        %4071 = vmatprep.subr.bf16.mxu0 0
        %4072 = vmatpush2.bf16.msra.mxu0 %v4017
        %4073 = vmatprep.mubr.bf16.mxu0 %v3930
        %4074 = vmatmul.mubr.bf16.gmra.mxu0 %v3929
        %v4075 = vpop.f32.mrf.mxu0
        %v4076 = vadd.f32 0.0, %v4075
        %v4077 = vpop.f32.mrf.mxu0
        %v4078 = vpop.f32.mrf.mxu0
        %v4079 = vadd.f32 0.0, %v4078
        %v4080 = vpop.f32.mrf.mxu0
        %4081 = vmatprep.mubr.bf16.mxu0 %v3932
        %4082 = vmatmul.mubr.bf16.gmra.mxu0 %v3931
        %v4083 = vpop.f32.mrf.mxu0
        %v4084 = vadd.f32 0.0, %v4083
        %v4085 = vpop.f32.mrf.mxu0
        %v4086 = vpop.f32.mrf.mxu0
        %v4087 = vadd.f32 0.0, %v4086
        %v4088 = vpop.f32.mrf.mxu0
        %4089 = vmatprep.mubr.bf16.mxu0 %v3934
        %4090 = vmatmul.mubr.bf16.gmra.mxu0 %v3933
        %v4091 = vpop.f32.mrf.mxu0
        %v4092 = vadd.f32 0.0, %v4091
        %v4093 = vpop.f32.mrf.mxu0
        %v4094 = vpop.f32.mrf.mxu0
        %v4095 = vadd.f32 0.0, %v4094
        %v4096 = vpop.f32.mrf.mxu0
        %4097 = vmatprep.mubr.bf16.mxu0 %v3936
        %4098 = vmatmul.mubr.bf16.gmra.mxu0 %v3935
        %v4099 = vpop.f32.mrf.mxu0
        %v4100 = vadd.f32 0.0, %v4099
        %v4101 = vpop.f32.mrf.mxu0
        %v4102 = vpop.f32.mrf.mxu0
        %v4103 = vadd.f32 0.0, %v4102
        %v4104 = vpop.f32.mrf.mxu0
        %4105 = vmatprep.mubr.bf16.mxu0 %v3938
        %4106 = vmatmul.mubr.bf16.gmra.mxu0 %v3937
        %v4107 = vpop.f32.mrf.mxu0
        %v4108 = vadd.f32 0.0, %v4107
        %v4109 = vpop.f32.mrf.mxu0
        %v4110 = vpop.f32.mrf.mxu0
        %v4111 = vadd.f32 0.0, %v4110
        %v4112 = vpop.f32.mrf.mxu0
        %4113 = vmatprep.mubr.bf16.mxu0 %v3940
        %4114 = vmatmul.mubr.bf16.gmra.mxu0 %v3939
        %v4115 = vpop.f32.mrf.mxu0
        %v4116 = vadd.f32 0.0, %v4115
        %v4117 = vpop.f32.mrf.mxu0
        %v4118 = vpop.f32.mrf.mxu0
        %v4119 = vadd.f32 0.0, %v4118
        %v4120 = vpop.f32.mrf.mxu0
        %4121 = vmatprep.mubr.bf16.mxu0 %v3942
        %4122 = vmatmul.mubr.bf16.gmra.mxu0 %v3941
        %v4123 = vpop.f32.mrf.mxu0
        %v4124 = vadd.f32 0.0, %v4123
        %v4125 = vpop.f32.mrf.mxu0
        %v4126 = vpop.f32.mrf.mxu0
        %v4127 = vadd.f32 0.0, %v4126
        %v4128 = vpop.f32.mrf.mxu0
        %4129 = vmatprep.mubr.bf16.mxu0 %v3944
        %4130 = vmatmul.mubr.bf16.gmra.mxu0 %v3943
        %v4131 = vpop.f32.mrf.mxu0
        %v4132 = vadd.f32 0.0, %v4131
        %v4133 = vpop.f32.mrf.mxu0
        %v4134 = vpop.f32.mrf.mxu0
        %v4135 = vadd.f32 0.0, %v4134
        %v4136 = vpop.f32.mrf.mxu0
        %4137 = vdwg.mxu0
        %v4138 = vpack.c.bf16 %v4079, %v4076
        %v4139 = vpack.c.bf16 %v4087, %v4084
        %v4140 = vpack.c.bf16 %v4095, %v4092
        %v4141 = vpack.c.bf16 %v4103, %v4100
        %v4142 = vpack.c.bf16 %v4111, %v4108
        %v4143 = vpack.c.bf16 %v4119, %v4116
        %v4144 = vpack.c.bf16 %v4127, %v4124
        %v4145 = vpack.c.bf16 %v4135, %v4132
        %v4146 = vld [vmem:[#allocation11] sm:$0xf]
        %v4147 = vld [vmem:[#allocation11 + $0x4] sm:$0xf]
        %v4150 = vunpack.c.l.b16 %v4146
        %v4151 = vunpack.c.l.b16 %v4147
        %v4152 = vpack.c.b16 %v4151, %v4150
        %v4155 = vsel %vm3503, %v4138, 0
        %v4158 = vsel %vm3503, %v4139, 0
        %v4161 = vsel %vm3503, %v4140, 0
        %v4164 = vsel %vm3503, %v4141, 0
        %v4167 = vsel %vm3503, %v4142, 0
        %v4170 = vsel %vm3503, %v4143, 0
        %v4173 = vsel %vm3503, %v4144, 0
        %v4176 = vsel %vm3503, %v4145, 0
        %4178 = vmatprep.subr.bf16.mxu0 0
        %4179 = vmatpush1.bf16.msra.mxu0 0
        %4180 = vmatprep.subr.bf16.mxu0 0
        %4181 = vmatpush1.bf16.msra.mxu0 0
        %4182 = vmatprep.subr.bf16.mxu0 0
        %4183 = vmatpush1.bf16.msra.mxu0 0
        %4184 = vmatprep.subr.bf16.mxu0 0
        %4185 = vmatpush1.bf16.msra.mxu0 0
        %4186 = vmatprep.subr.bf16.mxu0 0
        %4187 = vmatpush1.bf16.msra.mxu0 0
        %4188 = vmatprep.subr.bf16.mxu0 0
        %4189 = vmatpush1.bf16.msra.mxu0 0
        %4190 = vmatprep.subr.bf16.mxu0 0
        %4191 = vmatpush1.bf16.msra.mxu0 0
        %4192 = vmatprep.subr.bf16.mxu0 0
        %4193 = vmatpush1.bf16.msra.mxu0 %v4152
        %4194 = vmatprep.subr.bf16.mxu0 0
        %4195 = vmatpush2.bf16.msra.mxu0 0
        %4196 = vmatprep.subr.bf16.mxu0 0
        %4197 = vmatpush2.bf16.msra.mxu0 0
        %4198 = vmatprep.subr.bf16.mxu0 0
        %4199 = vmatpush2.bf16.msra.mxu0 0
        %4200 = vmatprep.subr.bf16.mxu0 0
        %4201 = vmatpush2.bf16.msra.mxu0 0
        %4202 = vmatprep.subr.bf16.mxu0 0
        %4203 = vmatpush2.bf16.msra.mxu0 0
        %4204 = vmatprep.subr.bf16.mxu0 0
        %4205 = vmatpush2.bf16.msra.mxu0 0
        %4206 = vmatprep.subr.bf16.mxu0 0
        %4207 = vmatpush2.bf16.msra.mxu0 0
        %4208 = vmatprep.subr.bf16.mxu0 0
        %4209 = vmatpush2.bf16.msra.mxu0 0
        %4210 = vmatprep.mubr.bf16.mxu0 0
        %4211 = vmatmul.mubr.bf16.gmra.mxu0 %v4155
        %v4212 = vpop.f32.mrf.mxu0
        %v4213 = vadd.f32 0.0, %v4212
        %v4214 = vpop.f32.mrf.mxu0
        %v4215 = vpop.f32.mrf.mxu0
        %v4216 = vadd.f32 0.0, %v4215
        %v4217 = vpop.f32.mrf.mxu0
        %4218 = vmatprep.mubr.bf16.mxu0 0
        %4219 = vmatmul.mubr.bf16.gmra.mxu0 %v4158
        %v4220 = vpop.f32.mrf.mxu0
        %v4221 = vadd.f32 0.0, %v4220
        %v4222 = vpop.f32.mrf.mxu0
        %v4223 = vpop.f32.mrf.mxu0
        %v4224 = vadd.f32 0.0, %v4223
        %v4225 = vpop.f32.mrf.mxu0
        %4226 = vmatprep.mubr.bf16.mxu0 0
        %4227 = vmatmul.mubr.bf16.gmra.mxu0 %v4161
        %v4228 = vpop.f32.mrf.mxu0
        %v4229 = vadd.f32 0.0, %v4228
        %v4230 = vpop.f32.mrf.mxu0
        %v4231 = vpop.f32.mrf.mxu0
        %v4232 = vadd.f32 0.0, %v4231
        %v4233 = vpop.f32.mrf.mxu0
        %4234 = vmatprep.mubr.bf16.mxu0 0
        %4235 = vmatmul.mubr.bf16.gmra.mxu0 %v4164
        %v4236 = vpop.f32.mrf.mxu0
        %v4237 = vadd.f32 0.0, %v4236
        %v4238 = vpop.f32.mrf.mxu0
        %v4239 = vpop.f32.mrf.mxu0
        %v4240 = vadd.f32 0.0, %v4239
        %v4241 = vpop.f32.mrf.mxu0
        %4242 = vmatprep.mubr.bf16.mxu0 0
        %4243 = vmatmul.mubr.bf16.gmra.mxu0 %v4167
        %v4244 = vpop.f32.mrf.mxu0
        %v4245 = vadd.f32 0.0, %v4244
        %v4246 = vpop.f32.mrf.mxu0
        %v4247 = vpop.f32.mrf.mxu0
        %v4248 = vadd.f32 0.0, %v4247
        %v4249 = vpop.f32.mrf.mxu0
        %4250 = vmatprep.mubr.bf16.mxu0 0
        %4251 = vmatmul.mubr.bf16.gmra.mxu0 %v4170
        %v4252 = vpop.f32.mrf.mxu0
        %v4253 = vadd.f32 0.0, %v4252
        %v4254 = vpop.f32.mrf.mxu0
        %v4255 = vpop.f32.mrf.mxu0
        %v4256 = vadd.f32 0.0, %v4255
        %v4257 = vpop.f32.mrf.mxu0
        %4258 = vmatprep.mubr.bf16.mxu0 0
        %4259 = vmatmul.mubr.bf16.gmra.mxu0 %v4173
        %v4260 = vpop.f32.mrf.mxu0
        %v4261 = vadd.f32 0.0, %v4260
        %v4262 = vpop.f32.mrf.mxu0
        %v4263 = vpop.f32.mrf.mxu0
        %v4264 = vadd.f32 0.0, %v4263
        %v4265 = vpop.f32.mrf.mxu0
        %4266 = vmatprep.mubr.bf16.mxu0 0
        %4267 = vmatmul.mubr.bf16.gmra.mxu0 %v4176
        %v4268 = vpop.f32.mrf.mxu0
        %v4269 = vadd.f32 0.0, %v4268
        %v4270 = vpop.f32.mrf.mxu0
        %v4271 = vpop.f32.mrf.mxu0
        %v4272 = vadd.f32 0.0, %v4271
        %v4273 = vpop.f32.mrf.mxu0
        %4274 = vdwg.mxu0
        %v4275 = vadd.f32 %v3382, %v4213
        %v4276 = vadd.f32 %v3382, %v4216
        %v4277 = vadd.f32 %v3382, %v4221
        %v4278 = vadd.f32 %v3382, %v4224
        %v4279 = vadd.f32 %v3382, %v4229
        %v4280 = vadd.f32 %v3382, %v4232
        %v4281 = vadd.f32 %v3382, %v4237
        %v4282 = vadd.f32 %v3382, %v4240
        %v4283 = vadd.f32 %v3382, %v4245
        %v4284 = vadd.f32 %v3382, %v4248
        %v4285 = vadd.f32 %v3382, %v4253
        %v4286 = vadd.f32 %v3382, %v4256
        %v4287 = vadd.f32 %v3382, %v4261
        %v4288 = vadd.f32 %v3382, %v4264
        %v4289 = vadd.f32 %v3382, %v4269
        %v4290 = vadd.f32 %v3382, %v4272
        %4291 = vrot.lane.b32.xlu0 %v3415, 112
        %v4292 = vpop.permute.xlu0 %4291
        %4293 = vrot.lane.b32.xlu0 %v3416, 112
        %v4294 = vpop.permute.xlu0 %4293
        %4295 = vrot.lane.b32.xlu0 %v3417, 112
        %v4296 = vpop.permute.xlu0 %4295
        %4297 = vrot.lane.b32.xlu0 %v3418, 112
        %v4298 = vpop.permute.xlu0 %4297
        %4299 = vrot.lane.b32.xlu0 %v3419, 112
        %v4300 = vpop.permute.xlu0 %4299
        %4301 = vrot.lane.b32.xlu0 %v3420, 112
        %v4302 = vpop.permute.xlu0 %4301
        %4303 = vrot.lane.b32.xlu0 %v3421, 112
        %v4304 = vpop.permute.xlu0 %4303
        %4305 = vrot.lane.b32.xlu0 %v3422, 112
        %v4306 = vpop.permute.xlu0 %4305
        %4307 = vrot.lane.b32.xlu0 %v3487, 112
        %v4308 = vpop.permute.xlu0 %4307
        %4309 = vrot.lane.b32.xlu0 %v3488, 112
        %v4310 = vpop.permute.xlu0 %4309
        %4311 = vrot.lane.b32.xlu0 %v3489, 112
        %v4312 = vpop.permute.xlu0 %4311
        %4313 = vrot.lane.b32.xlu0 %v3490, 112
        %v4314 = vpop.permute.xlu0 %4313
        %4315 = vrot.lane.b32.xlu0 %v3491, 112
        %v4316 = vpop.permute.xlu0 %4315
        %4317 = vrot.lane.b32.xlu0 %v3492, 112
        %v4318 = vpop.permute.xlu0 %4317
        %4319 = vrot.lane.b32.xlu0 %v3493, 112
        %v4320 = vpop.permute.xlu0 %4319
        %4321 = vrot.lane.b32.xlu0 %v3494, 112
        %v4322 = vpop.permute.xlu0 %4321
        %4323 = vrot.lane.b32.xlu0 %v3495, 112
        %v4324 = vpop.permute.xlu0 %4323
        %4325 = vrot.lane.b32.xlu0 %v3496, 112
        %v4326 = vpop.permute.xlu0 %4325
        %4327 = vrot.lane.b32.xlu0 %v3497, 112
        %v4328 = vpop.permute.xlu0 %4327
        %4329 = vrot.lane.b32.xlu0 %v3498, 112
        %v4330 = vpop.permute.xlu0 %4329
        %4331 = vrot.lane.b32.xlu0 %v3499, 112
        %v4332 = vpop.permute.xlu0 %4331
        %4333 = vrot.lane.b32.xlu0 %v3500, 112
        %v4334 = vpop.permute.xlu0 %4333
        %4335 = vrot.lane.b32.xlu0 %v3501, 112
        %v4336 = vpop.permute.xlu0 %4335
        %4337 = vrot.lane.b32.xlu0 %v3502, 112
        %v4338 = vpop.permute.xlu0 %4337
        %v4340 = vsel %vm3503, %v4292, 0
        %v4343 = vsel %vm3503, %v4294, 0
        %v4346 = vsel %vm3503, %v4296, 0
        %v4349 = vsel %vm3503, %v4298, 0
        %v4352 = vsel %vm3503, %v4300, 0
        %v4355 = vsel %vm3503, %v4302, 0
        %v4358 = vsel %vm3503, %v4304, 0
        %v4361 = vsel %vm3503, %v4306, 0
        %v4364 = vsel %vm3503, %v4308, 0
        %v4367 = vsel %vm3503, %v4310, 0
        %v4370 = vsel %vm3503, %v4312, 0
        %v4373 = vsel %vm3503, %v4314, 0
        %v4376 = vsel %vm3503, %v4316, 0
        %v4379 = vsel %vm3503, %v4318, 0
        %v4382 = vsel %vm3503, %v4320, 0
        %v4385 = vsel %vm3503, %v4322, 0
        %v4388 = vsel %vm3503, %v4324, 0
        %v4391 = vsel %vm3503, %v4326, 0
        %v4394 = vsel %vm3503, %v4328, 0
        %v4397 = vsel %vm3503, %v4330, 0
        %v4400 = vsel %vm3503, %v4332, 0
        %v4403 = vsel %vm3503, %v4334, 0
        %v4406 = vsel %vm3503, %v4336, 0
        %v4409 = vsel %vm3503, %v4338, 0
        %4411 = vmatprep.subr.bf16.mxu0 0
        %4412 = vmatpush1.bf16.xpose.msra.mxu0 %v4385
        %4413 = vmatprep.subr.bf16.mxu0 0
        %4414 = vmatpush1.bf16.xpose.msra.mxu0 %v4382
        %4415 = vmatprep.subr.bf16.mxu0 0
        %4416 = vmatpush1.bf16.xpose.msra.mxu0 %v4379
        %4417 = vmatprep.subr.bf16.mxu0 0
        %4418 = vmatpush1.bf16.xpose.msra.mxu0 %v4376
        %4419 = vmatprep.subr.bf16.mxu0 0
        %4420 = vmatpush1.bf16.xpose.msra.mxu0 %v4373
        %4421 = vmatprep.subr.bf16.mxu0 0
        %4422 = vmatpush1.bf16.xpose.msra.mxu0 %v4370
        %4423 = vmatprep.subr.bf16.mxu0 0
        %4424 = vmatpush1.bf16.xpose.msra.mxu0 %v4367
        %4425 = vmatprep.subr.bf16.mxu0 0
        %4426 = vmatpush1.bf16.xpose.msra.mxu0 %v4364
        %4427 = vmatprep.subr.bf16.mxu0 0
        %4428 = vmatpush2.bf16.xpose.msra.mxu0 %v4409
        %4429 = vmatprep.subr.bf16.mxu0 0
        %4430 = vmatpush2.bf16.xpose.msra.mxu0 %v4406
        %4431 = vmatprep.subr.bf16.mxu0 0
        %4432 = vmatpush2.bf16.xpose.msra.mxu0 %v4403
        %4433 = vmatprep.subr.bf16.mxu0 0
        %4434 = vmatpush2.bf16.xpose.msra.mxu0 %v4400
        %4435 = vmatprep.subr.bf16.mxu0 0
        %4436 = vmatpush2.bf16.xpose.msra.mxu0 %v4397
        %4437 = vmatprep.subr.bf16.mxu0 0
        %4438 = vmatpush2.bf16.xpose.msra.mxu0 %v4394
        %4439 = vmatprep.subr.bf16.mxu0 0
        %4440 = vmatpush2.bf16.xpose.msra.mxu0 %v4391
        %4441 = vmatprep.subr.bf16.mxu0 0
        %4442 = vmatpush2.bf16.xpose.msra.mxu0 %v4388
        %4443 = vmatprep.mubr.bf16.mxu0 0
        %4444 = vmatmul.mubr.bf16.gmra.mxu0 %v4340
        %v4445 = vpop.f32.mrf.mxu0
        %v4446 = vadd.f32 0.0, %v4445
        %v4447 = vpop.f32.mrf.mxu0
        %v4448 = vadd.f32 0.0, %v4447
        %v4449 = vpop.f32.mrf.mxu0
        %v4450 = vadd.f32 0.0, %v4449
        %v4451 = vpop.f32.mrf.mxu0
        %v4452 = vadd.f32 0.0, %v4451
        %4453 = vmatprep.mubr.bf16.mxu0 0
        %4454 = vmatmul.mubr.bf16.gmra.mxu0 %v4343
        %v4455 = vpop.f32.mrf.mxu0
        %v4456 = vadd.f32 0.0, %v4455
        %v4457 = vpop.f32.mrf.mxu0
        %v4458 = vadd.f32 0.0, %v4457
        %v4459 = vpop.f32.mrf.mxu0
        %v4460 = vadd.f32 0.0, %v4459
        %v4461 = vpop.f32.mrf.mxu0
        %v4462 = vadd.f32 0.0, %v4461
        %4463 = vmatprep.mubr.bf16.mxu0 0
        %4464 = vmatmul.mubr.bf16.gmra.mxu0 %v4346
        %v4465 = vpop.f32.mrf.mxu0
        %v4466 = vadd.f32 0.0, %v4465
        %v4467 = vpop.f32.mrf.mxu0
        %v4468 = vadd.f32 0.0, %v4467
        %v4469 = vpop.f32.mrf.mxu0
        %v4470 = vadd.f32 0.0, %v4469
        %v4471 = vpop.f32.mrf.mxu0
        %v4472 = vadd.f32 0.0, %v4471
        %4473 = vmatprep.mubr.bf16.mxu0 0
        %4474 = vmatmul.mubr.bf16.gmra.mxu0 %v4349
        %v4475 = vpop.f32.mrf.mxu0
        %v4476 = vadd.f32 0.0, %v4475
        %v4477 = vpop.f32.mrf.mxu0
        %v4478 = vadd.f32 0.0, %v4477
        %v4479 = vpop.f32.mrf.mxu0
        %v4480 = vadd.f32 0.0, %v4479
        %v4481 = vpop.f32.mrf.mxu0
        %v4482 = vadd.f32 0.0, %v4481
        %4483 = vmatprep.mubr.bf16.mxu0 0
        %4484 = vmatmul.mubr.bf16.gmra.mxu0 %v4352
        %v4485 = vpop.f32.mrf.mxu0
        %v4486 = vadd.f32 0.0, %v4485
        %v4487 = vpop.f32.mrf.mxu0
        %v4488 = vadd.f32 0.0, %v4487
        %v4489 = vpop.f32.mrf.mxu0
        %v4490 = vadd.f32 0.0, %v4489
        %v4491 = vpop.f32.mrf.mxu0
        %v4492 = vadd.f32 0.0, %v4491
        %4493 = vmatprep.mubr.bf16.mxu0 0
        %4494 = vmatmul.mubr.bf16.gmra.mxu0 %v4355
        %v4495 = vpop.f32.mrf.mxu0
        %v4496 = vadd.f32 0.0, %v4495
        %v4497 = vpop.f32.mrf.mxu0
        %v4498 = vadd.f32 0.0, %v4497
        %v4499 = vpop.f32.mrf.mxu0
        %v4500 = vadd.f32 0.0, %v4499
        %v4501 = vpop.f32.mrf.mxu0
        %v4502 = vadd.f32 0.0, %v4501
        %4503 = vmatprep.mubr.bf16.mxu0 0
        %4504 = vmatmul.mubr.bf16.gmra.mxu0 %v4358
        %v4505 = vpop.f32.mrf.mxu0
        %v4506 = vadd.f32 0.0, %v4505
        %v4507 = vpop.f32.mrf.mxu0
        %v4508 = vadd.f32 0.0, %v4507
        %v4509 = vpop.f32.mrf.mxu0
        %v4510 = vadd.f32 0.0, %v4509
        %v4511 = vpop.f32.mrf.mxu0
        %v4512 = vadd.f32 0.0, %v4511
        %4513 = vmatprep.mubr.bf16.mxu0 0
        %4514 = vmatmul.mubr.bf16.gmra.mxu0 %v4361
        %v4515 = vpop.f32.mrf.mxu0
        %v4516 = vadd.f32 0.0, %v4515
        %v4517 = vpop.f32.mrf.mxu0
        %v4518 = vadd.f32 0.0, %v4517
        %v4519 = vpop.f32.mrf.mxu0
        %v4520 = vadd.f32 0.0, %v4519
        %v4521 = vpop.f32.mrf.mxu0
        %v4522 = vadd.f32 0.0, %v4521
        %4523 = vdwg.mxu0
        %v4524 = vmax.f32 %v4446, %v4448
        %4525 = vmax.xlane.f32.xlu0 %v4524
        %v4526 = vpop.xlane.xlu0 %4525
        %v4527 = vmax.f32 %v4450, %v4452
        %4528 = vmax.xlane.f32.xlu0 %v4527
        %v4529 = vpop.xlane.xlu0 %4528
        %v4530 = vmax.f32 %v4456, %v4458
        %4531 = vmax.xlane.f32.xlu0 %v4530
        %v4532 = vpop.xlane.xlu0 %4531
        %v4533 = vmax.f32 %v4460, %v4462
        %4534 = vmax.xlane.f32.xlu0 %v4533
        %v4535 = vpop.xlane.xlu0 %4534
        %v4536 = vmax.f32 %v4466, %v4468
        %4537 = vmax.xlane.f32.xlu0 %v4536
        %v4538 = vpop.xlane.xlu0 %4537
        %v4539 = vmax.f32 %v4470, %v4472
        %4540 = vmax.xlane.f32.xlu0 %v4539
        %v4541 = vpop.xlane.xlu0 %4540
        %v4542 = vmax.f32 %v4476, %v4478
        %4543 = vmax.xlane.f32.xlu0 %v4542
        %v4544 = vpop.xlane.xlu0 %4543
        %v4545 = vmax.f32 %v4480, %v4482
        %4546 = vmax.xlane.f32.xlu0 %v4545
        %v4547 = vpop.xlane.xlu0 %4546
        %v4548 = vmax.f32 %v4486, %v4488
        %4549 = vmax.xlane.f32.xlu0 %v4548
        %v4550 = vpop.xlane.xlu0 %4549
        %v4551 = vmax.f32 %v4490, %v4492
        %4552 = vmax.xlane.f32.xlu0 %v4551
        %v4553 = vpop.xlane.xlu0 %4552
        %v4554 = vmax.f32 %v4496, %v4498
        %4555 = vmax.xlane.f32.xlu0 %v4554
        %v4556 = vpop.xlane.xlu0 %4555
        %v4557 = vmax.f32 %v4500, %v4502
        %4558 = vmax.xlane.f32.xlu0 %v4557
        %v4559 = vpop.xlane.xlu0 %4558
        %v4560 = vmax.f32 %v4506, %v4508
        %4561 = vmax.xlane.f32.xlu0 %v4560
        %v4562 = vpop.xlane.xlu0 %4561
        %v4563 = vmax.f32 %v4510, %v4512
        %4564 = vmax.xlane.f32.xlu0 %v4563
        %v4565 = vpop.xlane.xlu0 %4564
        %v4566 = vmax.f32 %v4516, %v4518
        %4567 = vmax.xlane.f32.xlu0 %v4566
        %v4568 = vpop.xlane.xlu0 %4567
        %v4569 = vmax.f32 %v4520, %v4522
        %4570 = vmax.xlane.f32.xlu0 %v4569
        %v4571 = vpop.xlane.xlu0 %4570
        %v4572 = vsub.f32 %v4446, %v4526
        %v4573 = vsub.f32 %v4448, %v4526
        %v4574 = vsub.f32 %v4450, %v4529
        %v4575 = vsub.f32 %v4452, %v4529
        %v4576 = vsub.f32 %v4456, %v4532
        %v4577 = vsub.f32 %v4458, %v4532
        %v4578 = vsub.f32 %v4460, %v4535
        %v4579 = vsub.f32 %v4462, %v4535
        %v4580 = vsub.f32 %v4466, %v4538
        %v4581 = vsub.f32 %v4468, %v4538
        %v4582 = vsub.f32 %v4470, %v4541
        %v4583 = vsub.f32 %v4472, %v4541
        %v4584 = vsub.f32 %v4476, %v4544
        %v4585 = vsub.f32 %v4478, %v4544
        %v4586 = vsub.f32 %v4480, %v4547
        %v4587 = vsub.f32 %v4482, %v4547
        %v4588 = vsub.f32 %v4486, %v4550
        %v4589 = vsub.f32 %v4488, %v4550
        %v4590 = vsub.f32 %v4490, %v4553
        %v4591 = vsub.f32 %v4492, %v4553
        %v4592 = vsub.f32 %v4496, %v4556
        %v4593 = vsub.f32 %v4498, %v4556
        %v4594 = vsub.f32 %v4500, %v4559
        %v4595 = vsub.f32 %v4502, %v4559
        %v4596 = vsub.f32 %v4506, %v4562
        %v4597 = vsub.f32 %v4508, %v4562
        %v4598 = vsub.f32 %v4510, %v4565
        %v4599 = vsub.f32 %v4512, %v4565
        %v4600 = vsub.f32 %v4516, %v4568
        %v4601 = vsub.f32 %v4518, %v4568
        %v4602 = vsub.f32 %v4520, %v4571
        %v4603 = vsub.f32 %v4522, %v4571
        %v4604 = vmul.f32 %v4572, 1.442695
        %v4605 = vpow.pop %v4604
        %v4606 = vmul.f32 %v4573, 1.442695
        %v4607 = vpow.pop %v4606
        %v4608 = vmul.f32 %v4574, 1.442695
        %v4609 = vpow.pop %v4608
        %v4610 = vmul.f32 %v4575, 1.442695
        %v4611 = vpow.pop %v4610
        %v4612 = vmul.f32 %v4576, 1.442695
        %v4613 = vpow.pop %v4612
        %v4614 = vmul.f32 %v4577, 1.442695
        %v4615 = vpow.pop %v4614
        %v4616 = vmul.f32 %v4578, 1.442695
        %v4617 = vpow.pop %v4616
        %v4618 = vmul.f32 %v4579, 1.442695
        %v4619 = vpow.pop %v4618
        %v4620 = vmul.f32 %v4580, 1.442695
        %v4621 = vpow.pop %v4620
        %v4622 = vmul.f32 %v4581, 1.442695
        %v4623 = vpow.pop %v4622
        %v4624 = vmul.f32 %v4582, 1.442695
        %v4625 = vpow.pop %v4624
        %v4626 = vmul.f32 %v4583, 1.442695
        %v4627 = vpow.pop %v4626
        %v4628 = vmul.f32 %v4584, 1.442695
        %v4629 = vpow.pop %v4628
        %v4630 = vmul.f32 %v4585, 1.442695
        %v4631 = vpow.pop %v4630
        %v4632 = vmul.f32 %v4586, 1.442695
        %v4633 = vpow.pop %v4632
        %v4634 = vmul.f32 %v4587, 1.442695
        %v4635 = vpow.pop %v4634
        %v4636 = vmul.f32 %v4588, 1.442695
        %v4637 = vpow.pop %v4636
        %v4638 = vmul.f32 %v4589, 1.442695
        %v4639 = vpow.pop %v4638
        %v4640 = vmul.f32 %v4590, 1.442695
        %v4641 = vpow.pop %v4640
        %v4642 = vmul.f32 %v4591, 1.442695
        %v4643 = vpow.pop %v4642
        %v4644 = vmul.f32 %v4592, 1.442695
        %v4645 = vpow.pop %v4644
        %v4646 = vmul.f32 %v4593, 1.442695
        %v4647 = vpow.pop %v4646
        %v4648 = vmul.f32 %v4594, 1.442695
        %v4649 = vpow.pop %v4648
        %v4650 = vmul.f32 %v4595, 1.442695
        %v4651 = vpow.pop %v4650
        %v4652 = vmul.f32 %v4596, 1.442695
        %v4653 = vpow.pop %v4652
        %v4654 = vmul.f32 %v4597, 1.442695
        %v4655 = vpow.pop %v4654
        %v4656 = vmul.f32 %v4598, 1.442695
        %v4657 = vpow.pop %v4656
        %v4658 = vmul.f32 %v4599, 1.442695
        %v4659 = vpow.pop %v4658
        %v4660 = vmul.f32 %v4600, 1.442695
        %v4661 = vpow.pop %v4660
        %v4662 = vmul.f32 %v4601, 1.442695
        %v4663 = vpow.pop %v4662
        %v4664 = vmul.f32 %v4602, 1.442695
        %v4665 = vpow.pop %v4664
        %v4666 = vmul.f32 %v4603, 1.442695
        %v4667 = vpow.pop %v4666
        %v4668 = vadd.f32 %v4605, %v4607
        %4669 = vadd.xlane.f32.xlu0 %v4668
        %v4670 = vpop.xlane.xlu0 %4669
        %v4671 = vadd.f32 %v4609, %v4611
        %4672 = vadd.xlane.f32.xlu0 %v4671
        %v4673 = vpop.xlane.xlu0 %4672
        %v4674 = vadd.f32 %v4613, %v4615
        %4675 = vadd.xlane.f32.xlu0 %v4674
        %v4676 = vpop.xlane.xlu0 %4675
        %v4677 = vadd.f32 %v4617, %v4619
        %4678 = vadd.xlane.f32.xlu0 %v4677
        %v4679 = vpop.xlane.xlu0 %4678
        %v4680 = vadd.f32 %v4621, %v4623
        %4681 = vadd.xlane.f32.xlu0 %v4680
        %v4682 = vpop.xlane.xlu0 %4681
        %v4683 = vadd.f32 %v4625, %v4627
        %4684 = vadd.xlane.f32.xlu0 %v4683
        %v4685 = vpop.xlane.xlu0 %4684
        %v4686 = vadd.f32 %v4629, %v4631
        %4687 = vadd.xlane.f32.xlu0 %v4686
        %v4688 = vpop.xlane.xlu0 %4687
        %v4689 = vadd.f32 %v4633, %v4635
        %4690 = vadd.xlane.f32.xlu0 %v4689
        %v4691 = vpop.xlane.xlu0 %4690
        %v4692 = vadd.f32 %v4637, %v4639
        %4693 = vadd.xlane.f32.xlu0 %v4692
        %v4694 = vpop.xlane.xlu0 %4693
        %v4695 = vadd.f32 %v4641, %v4643
        %4696 = vadd.xlane.f32.xlu0 %v4695
        %v4697 = vpop.xlane.xlu0 %4696
        %v4698 = vadd.f32 %v4645, %v4647
        %4699 = vadd.xlane.f32.xlu0 %v4698
        %v4700 = vpop.xlane.xlu0 %4699
        %v4701 = vadd.f32 %v4649, %v4651
        %4702 = vadd.xlane.f32.xlu0 %v4701
        %v4703 = vpop.xlane.xlu0 %4702
        %v4704 = vadd.f32 %v4653, %v4655
        %4705 = vadd.xlane.f32.xlu0 %v4704
        %v4706 = vpop.xlane.xlu0 %4705
        %v4707 = vadd.f32 %v4657, %v4659
        %4708 = vadd.xlane.f32.xlu0 %v4707
        %v4709 = vpop.xlane.xlu0 %4708
        %v4710 = vadd.f32 %v4661, %v4663
        %4711 = vadd.xlane.f32.xlu0 %v4710
        %v4712 = vpop.xlane.xlu0 %4711
        %v4713 = vadd.f32 %v4665, %v4667
        %4714 = vadd.xlane.f32.xlu0 %v4713
        %v4715 = vpop.xlane.xlu0 %4714
        %v4716 = vrcp.pop %v4670
        %v4717 = vrcp.pop %v4673
        %v4718 = vrcp.pop %v4676
        %v4719 = vrcp.pop %v4679
        %v4720 = vrcp.pop %v4682
        %v4721 = vrcp.pop %v4685
        %v4722 = vrcp.pop %v4688
        %v4723 = vrcp.pop %v4691
        %v4724 = vrcp.pop %v4694
        %v4725 = vrcp.pop %v4697
        %v4726 = vrcp.pop %v4700
        %v4727 = vrcp.pop %v4703
        %v4728 = vrcp.pop %v4706
        %v4729 = vrcp.pop %v4709
        %v4730 = vrcp.pop %v4712
        %v4731 = vrcp.pop %v4715
        %v4732 = vmul.f32 %v4605, %v4716
        %v4733 = vmul.f32 %v4607, %v4716
        %v4734 = vmul.f32 %v4609, %v4717
        %v4735 = vmul.f32 %v4611, %v4717
        %v4736 = vmul.f32 %v4613, %v4718
        %v4737 = vmul.f32 %v4615, %v4718
        %v4738 = vmul.f32 %v4617, %v4719
        %v4739 = vmul.f32 %v4619, %v4719
        %v4740 = vmul.f32 %v4621, %v4720
        %v4741 = vmul.f32 %v4623, %v4720
        %v4742 = vmul.f32 %v4625, %v4721
        %v4743 = vmul.f32 %v4627, %v4721
        %v4744 = vmul.f32 %v4629, %v4722
        %v4745 = vmul.f32 %v4631, %v4722
        %v4746 = vmul.f32 %v4633, %v4723
        %v4747 = vmul.f32 %v4635, %v4723
        %v4748 = vmul.f32 %v4637, %v4724
        %v4749 = vmul.f32 %v4639, %v4724
        %v4750 = vmul.f32 %v4641, %v4725
        %v4751 = vmul.f32 %v4643, %v4725
        %v4752 = vmul.f32 %v4645, %v4726
        %v4753 = vmul.f32 %v4647, %v4726
        %v4754 = vmul.f32 %v4649, %v4727
        %v4755 = vmul.f32 %v4651, %v4727
        %v4756 = vmul.f32 %v4653, %v4728
        %v4757 = vmul.f32 %v4655, %v4728
        %v4758 = vmul.f32 %v4657, %v4729
        %v4759 = vmul.f32 %v4659, %v4729
        %v4760 = vmul.f32 %v4661, %v4730
        %v4761 = vmul.f32 %v4663, %v4730
        %v4762 = vmul.f32 %v4665, %v4731
        %v4763 = vmul.f32 %v4667, %v4731
        %v4764 = vpack.c.bf16 %v4734, %v4732
        %v4765 = vpack.c.bf16 %v4735, %v4733
        %v4766 = vpack.c.bf16 %v4738, %v4736
        %v4767 = vpack.c.bf16 %v4739, %v4737
        %v4768 = vpack.c.bf16 %v4742, %v4740
        %v4769 = vpack.c.bf16 %v4743, %v4741
        %v4770 = vpack.c.bf16 %v4746, %v4744
        %v4771 = vpack.c.bf16 %v4747, %v4745
        %v4772 = vpack.c.bf16 %v4750, %v4748
        %v4773 = vpack.c.bf16 %v4751, %v4749
        %v4774 = vpack.c.bf16 %v4754, %v4752
        %v4775 = vpack.c.bf16 %v4755, %v4753
        %v4776 = vpack.c.bf16 %v4758, %v4756
        %v4777 = vpack.c.bf16 %v4759, %v4757
        %v4778 = vpack.c.bf16 %v4762, %v4760
        %v4779 = vpack.c.bf16 %v4763, %v4761
        %4780 = vrot.lane.b32.xlu0 %v4009, 112
        %v4781 = vpop.permute.xlu0 %4780
        %4782 = vrot.lane.b32.xlu0 %v4010, 112
        %v4783 = vpop.permute.xlu0 %4782
        %4784 = vrot.lane.b32.xlu0 %v4011, 112
        %v4785 = vpop.permute.xlu0 %4784
        %4786 = vrot.lane.b32.xlu0 %v4012, 112
        %v4787 = vpop.permute.xlu0 %4786
        %4788 = vrot.lane.b32.xlu0 %v4013, 112
        %v4789 = vpop.permute.xlu0 %4788
        %4790 = vrot.lane.b32.xlu0 %v4014, 112
        %v4791 = vpop.permute.xlu0 %4790
        %4792 = vrot.lane.b32.xlu0 %v4015, 112
        %v4793 = vpop.permute.xlu0 %4792
        %4794 = vrot.lane.b32.xlu0 %v4016, 112
        %v4795 = vpop.permute.xlu0 %4794
        %4796 = vrot.lane.b32.xlu0 %v4017, 112
        %v4797 = vpop.permute.xlu0 %4796
        %4798 = vrot.lane.b32.xlu0 %v4018, 112
        %v4799 = vpop.permute.xlu0 %4798
        %4800 = vrot.lane.b32.xlu0 %v4019, 112
        %v4801 = vpop.permute.xlu0 %4800
        %4802 = vrot.lane.b32.xlu0 %v4020, 112
        %v4803 = vpop.permute.xlu0 %4802
        %4804 = vrot.lane.b32.xlu0 %v4021, 112
        %v4805 = vpop.permute.xlu0 %4804
        %4806 = vrot.lane.b32.xlu0 %v4022, 112
        %v4807 = vpop.permute.xlu0 %4806
        %4808 = vrot.lane.b32.xlu0 %v4023, 112
        %v4809 = vpop.permute.xlu0 %4808
        %4810 = vrot.lane.b32.xlu0 %v4024, 112
        %v4811 = vpop.permute.xlu0 %4810
        %4828 = vmatprep.subr.bf16.mxu0 0
        %4829 = vmatpush1.bf16.msra.mxu0 %v4795
        %4830 = vmatprep.subr.bf16.mxu0 0
        %4831 = vmatpush1.bf16.msra.mxu0 %v4793
        %4832 = vmatprep.subr.bf16.mxu0 0
        %4833 = vmatpush1.bf16.msra.mxu0 %v4791
        %4834 = vmatprep.subr.bf16.mxu0 0
        %4835 = vmatpush1.bf16.msra.mxu0 %v4789
        %4836 = vmatprep.subr.bf16.mxu0 0
        %4837 = vmatpush1.bf16.msra.mxu0 %v4787
        %4838 = vmatprep.subr.bf16.mxu0 0
        %4839 = vmatpush1.bf16.msra.mxu0 %v4785
        %4840 = vmatprep.subr.bf16.mxu0 0
        %4841 = vmatpush1.bf16.msra.mxu0 %v4783
        %4842 = vmatprep.subr.bf16.mxu0 0
        %4843 = vmatpush1.bf16.msra.mxu0 %v4781
        %4844 = vmatprep.subr.bf16.mxu0 0
        %4845 = vmatpush2.bf16.msra.mxu0 %v4811
        %4846 = vmatprep.subr.bf16.mxu0 0
        %4847 = vmatpush2.bf16.msra.mxu0 %v4809
        %4848 = vmatprep.subr.bf16.mxu0 0
        %4849 = vmatpush2.bf16.msra.mxu0 %v4807
        %4850 = vmatprep.subr.bf16.mxu0 0
        %4851 = vmatpush2.bf16.msra.mxu0 %v4805
        %4852 = vmatprep.subr.bf16.mxu0 0
        %4853 = vmatpush2.bf16.msra.mxu0 %v4803
        %4854 = vmatprep.subr.bf16.mxu0 0
        %4855 = vmatpush2.bf16.msra.mxu0 %v4801
        %4856 = vmatprep.subr.bf16.mxu0 0
        %4857 = vmatpush2.bf16.msra.mxu0 %v4799
        %4858 = vmatprep.subr.bf16.mxu0 0
        %4859 = vmatpush2.bf16.msra.mxu0 %v4797
        %4860 = vmatprep.mubr.bf16.mxu0 %v4765
        %4861 = vmatmul.mubr.bf16.gmra.mxu0 %v4764
        %v4862 = vpop.f32.mrf.mxu0
        %v4863 = vadd.f32 0.0, %v4862
        %v4864 = vpop.f32.mrf.mxu0
        %v4865 = vpop.f32.mrf.mxu0
        %v4866 = vadd.f32 0.0, %v4865
        %v4867 = vpop.f32.mrf.mxu0
        %4868 = vmatprep.mubr.bf16.mxu0 %v4767
        %4869 = vmatmul.mubr.bf16.gmra.mxu0 %v4766
        %v4870 = vpop.f32.mrf.mxu0
        %v4871 = vadd.f32 0.0, %v4870
        %v4872 = vpop.f32.mrf.mxu0
        %v4873 = vpop.f32.mrf.mxu0
        %v4874 = vadd.f32 0.0, %v4873
        %v4875 = vpop.f32.mrf.mxu0
        %4876 = vmatprep.mubr.bf16.mxu0 %v4769
        %4877 = vmatmul.mubr.bf16.gmra.mxu0 %v4768
        %v4878 = vpop.f32.mrf.mxu0
        %v4879 = vadd.f32 0.0, %v4878
        %v4880 = vpop.f32.mrf.mxu0
        %v4881 = vpop.f32.mrf.mxu0
        %v4882 = vadd.f32 0.0, %v4881
        %v4883 = vpop.f32.mrf.mxu0
        %4884 = vmatprep.mubr.bf16.mxu0 %v4771
        %4885 = vmatmul.mubr.bf16.gmra.mxu0 %v4770
        %v4886 = vpop.f32.mrf.mxu0
        %v4887 = vadd.f32 0.0, %v4886
        %v4888 = vpop.f32.mrf.mxu0
        %v4889 = vpop.f32.mrf.mxu0
        %v4890 = vadd.f32 0.0, %v4889
        %v4891 = vpop.f32.mrf.mxu0
        %4892 = vmatprep.mubr.bf16.mxu0 %v4773
        %4893 = vmatmul.mubr.bf16.gmra.mxu0 %v4772
        %v4894 = vpop.f32.mrf.mxu0
        %v4895 = vadd.f32 0.0, %v4894
        %v4896 = vpop.f32.mrf.mxu0
        %v4897 = vpop.f32.mrf.mxu0
        %v4898 = vadd.f32 0.0, %v4897
        %v4899 = vpop.f32.mrf.mxu0
        %4900 = vmatprep.mubr.bf16.mxu0 %v4775
        %4901 = vmatmul.mubr.bf16.gmra.mxu0 %v4774
        %v4902 = vpop.f32.mrf.mxu0
        %v4903 = vadd.f32 0.0, %v4902
        %v4904 = vpop.f32.mrf.mxu0
        %v4905 = vpop.f32.mrf.mxu0
        %v4906 = vadd.f32 0.0, %v4905
        %v4907 = vpop.f32.mrf.mxu0
        %4908 = vmatprep.mubr.bf16.mxu0 %v4777
        %4909 = vmatmul.mubr.bf16.gmra.mxu0 %v4776
        %v4910 = vpop.f32.mrf.mxu0
        %v4911 = vadd.f32 0.0, %v4910
        %v4912 = vpop.f32.mrf.mxu0
        %v4913 = vpop.f32.mrf.mxu0
        %v4914 = vadd.f32 0.0, %v4913
        %v4915 = vpop.f32.mrf.mxu0
        %4916 = vmatprep.mubr.bf16.mxu0 %v4779
        %4917 = vmatmul.mubr.bf16.gmra.mxu0 %v4778
        %v4918 = vpop.f32.mrf.mxu0
        %v4919 = vadd.f32 0.0, %v4918
        %v4920 = vpop.f32.mrf.mxu0
        %v4921 = vpop.f32.mrf.mxu0
        %v4922 = vadd.f32 0.0, %v4921
        %v4923 = vpop.f32.mrf.mxu0
        %4924 = vdwg.mxu0
        %v4925 = vpack.c.bf16 %v4866, %v4863
        %v4926 = vpack.c.bf16 %v4874, %v4871
        %v4927 = vpack.c.bf16 %v4882, %v4879
        %v4928 = vpack.c.bf16 %v4890, %v4887
        %v4929 = vpack.c.bf16 %v4898, %v4895
        %v4930 = vpack.c.bf16 %v4906, %v4903
        %v4931 = vpack.c.bf16 %v4914, %v4911
        %v4932 = vpack.c.bf16 %v4922, %v4919
        %v4933 = vld [vmem:[#allocation11 + $0x8] sm:$0xf]
        %v4934 = vld [vmem:[#allocation11 + $0xc] sm:$0xf]
        %v4937 = vunpack.c.l.b16 %v4933
        %v4938 = vunpack.c.l.b16 %v4934
        %v4939 = vpack.c.b16 %v4938, %v4937
        %v4942 = vsel %vm3503, %v4925, 0
        %v4945 = vsel %vm3503, %v4926, 0
        %v4948 = vsel %vm3503, %v4927, 0
        %v4951 = vsel %vm3503, %v4928, 0
        %v4954 = vsel %vm3503, %v4929, 0
        %v4957 = vsel %vm3503, %v4930, 0
        %v4960 = vsel %vm3503, %v4931, 0
        %v4963 = vsel %vm3503, %v4932, 0
        %4965 = vmatprep.subr.bf16.mxu0 0
        %4966 = vmatpush1.bf16.msra.mxu0 0
        %4967 = vmatprep.subr.bf16.mxu0 0
        %4968 = vmatpush1.bf16.msra.mxu0 0
        %4969 = vmatprep.subr.bf16.mxu0 0
        %4970 = vmatpush1.bf16.msra.mxu0 0
        %4971 = vmatprep.subr.bf16.mxu0 0
        %4972 = vmatpush1.bf16.msra.mxu0 0
        %4973 = vmatprep.subr.bf16.mxu0 0
        %4974 = vmatpush1.bf16.msra.mxu0 0
        %4975 = vmatprep.subr.bf16.mxu0 0
        %4976 = vmatpush1.bf16.msra.mxu0 0
        %4977 = vmatprep.subr.bf16.mxu0 0
        %4978 = vmatpush1.bf16.msra.mxu0 0
        %4979 = vmatprep.subr.bf16.mxu0 0
        %4980 = vmatpush1.bf16.msra.mxu0 %v4939
        %4981 = vmatprep.subr.bf16.mxu0 0
        %4982 = vmatpush2.bf16.msra.mxu0 0
        %4983 = vmatprep.subr.bf16.mxu0 0
        %4984 = vmatpush2.bf16.msra.mxu0 0
        %4985 = vmatprep.subr.bf16.mxu0 0
        %4986 = vmatpush2.bf16.msra.mxu0 0
        %4987 = vmatprep.subr.bf16.mxu0 0
        %4988 = vmatpush2.bf16.msra.mxu0 0
        %4989 = vmatprep.subr.bf16.mxu0 0
        %4990 = vmatpush2.bf16.msra.mxu0 0
        %4991 = vmatprep.subr.bf16.mxu0 0
        %4992 = vmatpush2.bf16.msra.mxu0 0
        %4993 = vmatprep.subr.bf16.mxu0 0
        %4994 = vmatpush2.bf16.msra.mxu0 0
        %4995 = vmatprep.subr.bf16.mxu0 0
        %4996 = vmatpush2.bf16.msra.mxu0 0
        %4997 = vmatprep.mubr.bf16.mxu0 0
        %4998 = vmatmul.mubr.bf16.gmra.mxu0 %v4942
        %v4999 = vpop.f32.mrf.mxu0
        %v5000 = vadd.f32 0.0, %v4999
        %v5001 = vpop.f32.mrf.mxu0
        %v5002 = vpop.f32.mrf.mxu0
        %v5003 = vadd.f32 0.0, %v5002
        %v5004 = vpop.f32.mrf.mxu0
        %5005 = vmatprep.mubr.bf16.mxu0 0
        %5006 = vmatmul.mubr.bf16.gmra.mxu0 %v4945
        %v5007 = vpop.f32.mrf.mxu0
        %v5008 = vadd.f32 0.0, %v5007
        %v5009 = vpop.f32.mrf.mxu0
        %v5010 = vpop.f32.mrf.mxu0
        %v5011 = vadd.f32 0.0, %v5010
        %v5012 = vpop.f32.mrf.mxu0
        %5013 = vmatprep.mubr.bf16.mxu0 0
        %5014 = vmatmul.mubr.bf16.gmra.mxu0 %v4948
        %v5015 = vpop.f32.mrf.mxu0
        %v5016 = vadd.f32 0.0, %v5015
        %v5017 = vpop.f32.mrf.mxu0
        %v5018 = vpop.f32.mrf.mxu0
        %v5019 = vadd.f32 0.0, %v5018
        %v5020 = vpop.f32.mrf.mxu0
        %5021 = vmatprep.mubr.bf16.mxu0 0
        %5022 = vmatmul.mubr.bf16.gmra.mxu0 %v4951
        %v5023 = vpop.f32.mrf.mxu0
        %v5024 = vadd.f32 0.0, %v5023
        %v5025 = vpop.f32.mrf.mxu0
        %v5026 = vpop.f32.mrf.mxu0
        %v5027 = vadd.f32 0.0, %v5026
        %v5028 = vpop.f32.mrf.mxu0
        %5029 = vmatprep.mubr.bf16.mxu0 0
        %5030 = vmatmul.mubr.bf16.gmra.mxu0 %v4954
        %v5031 = vpop.f32.mrf.mxu0
        %v5032 = vadd.f32 0.0, %v5031
        %v5033 = vpop.f32.mrf.mxu0
        %v5034 = vpop.f32.mrf.mxu0
        %v5035 = vadd.f32 0.0, %v5034
        %v5036 = vpop.f32.mrf.mxu0
        %5037 = vmatprep.mubr.bf16.mxu0 0
        %5038 = vmatmul.mubr.bf16.gmra.mxu0 %v4957
        %v5039 = vpop.f32.mrf.mxu0
        %v5040 = vadd.f32 0.0, %v5039
        %v5041 = vpop.f32.mrf.mxu0
        %v5042 = vpop.f32.mrf.mxu0
        %v5043 = vadd.f32 0.0, %v5042
        %v5044 = vpop.f32.mrf.mxu0
        %5045 = vmatprep.mubr.bf16.mxu0 0
        %5046 = vmatmul.mubr.bf16.gmra.mxu0 %v4960
        %v5047 = vpop.f32.mrf.mxu0
        %v5048 = vadd.f32 0.0, %v5047
        %v5049 = vpop.f32.mrf.mxu0
        %v5050 = vpop.f32.mrf.mxu0
        %v5051 = vadd.f32 0.0, %v5050
        %v5052 = vpop.f32.mrf.mxu0
        %5053 = vmatprep.mubr.bf16.mxu0 0
        %5054 = vmatmul.mubr.bf16.gmra.mxu0 %v4963
        %v5055 = vpop.f32.mrf.mxu0
        %v5056 = vadd.f32 0.0, %v5055
        %v5057 = vpop.f32.mrf.mxu0
        %v5058 = vpop.f32.mrf.mxu0
        %v5059 = vadd.f32 0.0, %v5058
        %v5060 = vpop.f32.mrf.mxu0
        %5061 = vdwg.mxu0
        %v5062 = vadd.f32 %v4275, %v5000
        %v5063 = vadd.f32 %v4276, %v5003
        %v5064 = vadd.f32 %v4277, %v5008
        %v5065 = vadd.f32 %v4278, %v5011
        %v5066 = vadd.f32 %v4279, %v5016
        %v5067 = vadd.f32 %v4280, %v5019
        %v5068 = vadd.f32 %v4281, %v5024
        %v5069 = vadd.f32 %v4282, %v5027
        %v5070 = vadd.f32 %v4283, %v5032
        %v5071 = vadd.f32 %v4284, %v5035
        %v5072 = vadd.f32 %v4285, %v5040
        %v5073 = vadd.f32 %v4286, %v5043
        %v5074 = vadd.f32 %v4287, %v5048
        %v5075 = vadd.f32 %v4288, %v5051
        %v5076 = vadd.f32 %v4289, %v5056
        %v5077 = vadd.f32 %v4290, %v5059
        %5078 = vrot.lane.b32.xlu0 %v3415, 96
        %v5079 = vpop.permute.xlu0 %5078
        %5080 = vrot.lane.b32.xlu0 %v3416, 96
        %v5081 = vpop.permute.xlu0 %5080
        %5082 = vrot.lane.b32.xlu0 %v3417, 96
        %v5083 = vpop.permute.xlu0 %5082
        %5084 = vrot.lane.b32.xlu0 %v3418, 96
        %v5085 = vpop.permute.xlu0 %5084
        %5086 = vrot.lane.b32.xlu0 %v3419, 96
        %v5087 = vpop.permute.xlu0 %5086
        %5088 = vrot.lane.b32.xlu0 %v3420, 96
        %v5089 = vpop.permute.xlu0 %5088
        %5090 = vrot.lane.b32.xlu0 %v3421, 96
        %v5091 = vpop.permute.xlu0 %5090
        %5092 = vrot.lane.b32.xlu0 %v3422, 96
        %v5093 = vpop.permute.xlu0 %5092
        %5094 = vrot.lane.b32.xlu0 %v3487, 96
        %v5095 = vpop.permute.xlu0 %5094
        %5096 = vrot.lane.b32.xlu0 %v3488, 96
        %v5097 = vpop.permute.xlu0 %5096
        %5098 = vrot.lane.b32.xlu0 %v3489, 96
        %v5099 = vpop.permute.xlu0 %5098
        %5100 = vrot.lane.b32.xlu0 %v3490, 96
        %v5101 = vpop.permute.xlu0 %5100
        %5102 = vrot.lane.b32.xlu0 %v3491, 96
        %v5103 = vpop.permute.xlu0 %5102
        %5104 = vrot.lane.b32.xlu0 %v3492, 96
        %v5105 = vpop.permute.xlu0 %5104
        %5106 = vrot.lane.b32.xlu0 %v3493, 96
        %v5107 = vpop.permute.xlu0 %5106
        %5108 = vrot.lane.b32.xlu0 %v3494, 96
        %v5109 = vpop.permute.xlu0 %5108
        %5110 = vrot.lane.b32.xlu0 %v3495, 96
        %v5111 = vpop.permute.xlu0 %5110
        %5112 = vrot.lane.b32.xlu0 %v3496, 96
        %v5113 = vpop.permute.xlu0 %5112
        %5114 = vrot.lane.b32.xlu0 %v3497, 96
        %v5115 = vpop.permute.xlu0 %5114
        %5116 = vrot.lane.b32.xlu0 %v3498, 96
        %v5117 = vpop.permute.xlu0 %5116
        %5118 = vrot.lane.b32.xlu0 %v3499, 96
        %v5119 = vpop.permute.xlu0 %5118
        %5120 = vrot.lane.b32.xlu0 %v3500, 96
        %v5121 = vpop.permute.xlu0 %5120
        %5122 = vrot.lane.b32.xlu0 %v3501, 96
        %v5123 = vpop.permute.xlu0 %5122
        %5124 = vrot.lane.b32.xlu0 %v3502, 96
        %v5125 = vpop.permute.xlu0 %5124
        %v5127 = vsel %vm3503, %v5079, 0
        %v5130 = vsel %vm3503, %v5081, 0
        %v5133 = vsel %vm3503, %v5083, 0
        %v5136 = vsel %vm3503, %v5085, 0
        %v5139 = vsel %vm3503, %v5087, 0
        %v5142 = vsel %vm3503, %v5089, 0
        %v5145 = vsel %vm3503, %v5091, 0
        %v5148 = vsel %vm3503, %v5093, 0
        %v5151 = vsel %vm3503, %v5095, 0
        %v5154 = vsel %vm3503, %v5097, 0
        %v5157 = vsel %vm3503, %v5099, 0
        %v5160 = vsel %vm3503, %v5101, 0
        %v5163 = vsel %vm3503, %v5103, 0
        %v5166 = vsel %vm3503, %v5105, 0
        %v5169 = vsel %vm3503, %v5107, 0
        %v5172 = vsel %vm3503, %v5109, 0
        %v5175 = vsel %vm3503, %v5111, 0
        %v5178 = vsel %vm3503, %v5113, 0
        %v5181 = vsel %vm3503, %v5115, 0
        %v5184 = vsel %vm3503, %v5117, 0
        %v5187 = vsel %vm3503, %v5119, 0
        %v5190 = vsel %vm3503, %v5121, 0
        %v5193 = vsel %vm3503, %v5123, 0
        %v5196 = vsel %vm3503, %v5125, 0
        %5198 = vmatprep.subr.bf16.mxu0 0
        %5199 = vmatpush1.bf16.xpose.msra.mxu0 %v5172
        %5200 = vmatprep.subr.bf16.mxu0 0
        %5201 = vmatpush1.bf16.xpose.msra.mxu0 %v5169
        %5202 = vmatprep.subr.bf16.mxu0 0
        %5203 = vmatpush1.bf16.xpose.msra.mxu0 %v5166
        %5204 = vmatprep.subr.bf16.mxu0 0
        %5205 = vmatpush1.bf16.xpose.msra.mxu0 %v5163
        %5206 = vmatprep.subr.bf16.mxu0 0
        %5207 = vmatpush1.bf16.xpose.msra.mxu0 %v5160
        %5208 = vmatprep.subr.bf16.mxu0 0
        %5209 = vmatpush1.bf16.xpose.msra.mxu0 %v5157
        %5210 = vmatprep.subr.bf16.mxu0 0
        %5211 = vmatpush1.bf16.xpose.msra.mxu0 %v5154
        %5212 = vmatprep.subr.bf16.mxu0 0
        %5213 = vmatpush1.bf16.xpose.msra.mxu0 %v5151
        %5214 = vmatprep.subr.bf16.mxu0 0
        %5215 = vmatpush2.bf16.xpose.msra.mxu0 %v5196
        %5216 = vmatprep.subr.bf16.mxu0 0
        %5217 = vmatpush2.bf16.xpose.msra.mxu0 %v5193
        %5218 = vmatprep.subr.bf16.mxu0 0
        %5219 = vmatpush2.bf16.xpose.msra.mxu0 %v5190
        %5220 = vmatprep.subr.bf16.mxu0 0
        %5221 = vmatpush2.bf16.xpose.msra.mxu0 %v5187
        %5222 = vmatprep.subr.bf16.mxu0 0
        %5223 = vmatpush2.bf16.xpose.msra.mxu0 %v5184
        %5224 = vmatprep.subr.bf16.mxu0 0
        %5225 = vmatpush2.bf16.xpose.msra.mxu0 %v5181
        %5226 = vmatprep.subr.bf16.mxu0 0
        %5227 = vmatpush2.bf16.xpose.msra.mxu0 %v5178
        %5228 = vmatprep.subr.bf16.mxu0 0
        %5229 = vmatpush2.bf16.xpose.msra.mxu0 %v5175
        %5230 = vmatprep.mubr.bf16.mxu0 0
        %5231 = vmatmul.mubr.bf16.gmra.mxu0 %v5127
        %v5232 = vpop.f32.mrf.mxu0
        %v5233 = vadd.f32 0.0, %v5232
        %v5234 = vpop.f32.mrf.mxu0
        %v5235 = vadd.f32 0.0, %v5234
        %v5236 = vpop.f32.mrf.mxu0
        %v5237 = vadd.f32 0.0, %v5236
        %v5238 = vpop.f32.mrf.mxu0
        %v5239 = vadd.f32 0.0, %v5238
        %5240 = vmatprep.mubr.bf16.mxu0 0
        %5241 = vmatmul.mubr.bf16.gmra.mxu0 %v5130
        %v5242 = vpop.f32.mrf.mxu0
        %v5243 = vadd.f32 0.0, %v5242
        %v5244 = vpop.f32.mrf.mxu0
        %v5245 = vadd.f32 0.0, %v5244
        %v5246 = vpop.f32.mrf.mxu0
        %v5247 = vadd.f32 0.0, %v5246
        %v5248 = vpop.f32.mrf.mxu0
        %v5249 = vadd.f32 0.0, %v5248
        %5250 = vmatprep.mubr.bf16.mxu0 0
        %5251 = vmatmul.mubr.bf16.gmra.mxu0 %v5133
        %v5252 = vpop.f32.mrf.mxu0
        %v5253 = vadd.f32 0.0, %v5252
        %v5254 = vpop.f32.mrf.mxu0
        %v5255 = vadd.f32 0.0, %v5254
        %v5256 = vpop.f32.mrf.mxu0
        %v5257 = vadd.f32 0.0, %v5256
        %v5258 = vpop.f32.mrf.mxu0
        %v5259 = vadd.f32 0.0, %v5258
        %5260 = vmatprep.mubr.bf16.mxu0 0
        %5261 = vmatmul.mubr.bf16.gmra.mxu0 %v5136
        %v5262 = vpop.f32.mrf.mxu0
        %v5263 = vadd.f32 0.0, %v5262
        %v5264 = vpop.f32.mrf.mxu0
        %v5265 = vadd.f32 0.0, %v5264
        %v5266 = vpop.f32.mrf.mxu0
        %v5267 = vadd.f32 0.0, %v5266
        %v5268 = vpop.f32.mrf.mxu0
        %v5269 = vadd.f32 0.0, %v5268
        %5270 = vmatprep.mubr.bf16.mxu0 0
        %5271 = vmatmul.mubr.bf16.gmra.mxu0 %v5139
        %v5272 = vpop.f32.mrf.mxu0
        %v5273 = vadd.f32 0.0, %v5272
        %v5274 = vpop.f32.mrf.mxu0
        %v5275 = vadd.f32 0.0, %v5274
        %v5276 = vpop.f32.mrf.mxu0
        %v5277 = vadd.f32 0.0, %v5276
        %v5278 = vpop.f32.mrf.mxu0
        %v5279 = vadd.f32 0.0, %v5278
        %5280 = vmatprep.mubr.bf16.mxu0 0
        %5281 = vmatmul.mubr.bf16.gmra.mxu0 %v5142
        %v5282 = vpop.f32.mrf.mxu0
        %v5283 = vadd.f32 0.0, %v5282
        %v5284 = vpop.f32.mrf.mxu0
        %v5285 = vadd.f32 0.0, %v5284
        %v5286 = vpop.f32.mrf.mxu0
        %v5287 = vadd.f32 0.0, %v5286
        %v5288 = vpop.f32.mrf.mxu0
        %v5289 = vadd.f32 0.0, %v5288
        %5290 = vmatprep.mubr.bf16.mxu0 0
        %5291 = vmatmul.mubr.bf16.gmra.mxu0 %v5145
        %v5292 = vpop.f32.mrf.mxu0
        %v5293 = vadd.f32 0.0, %v5292
        %v5294 = vpop.f32.mrf.mxu0
        %v5295 = vadd.f32 0.0, %v5294
        %v5296 = vpop.f32.mrf.mxu0
        %v5297 = vadd.f32 0.0, %v5296
        %v5298 = vpop.f32.mrf.mxu0
        %v5299 = vadd.f32 0.0, %v5298
        %5300 = vmatprep.mubr.bf16.mxu0 0
        %5301 = vmatmul.mubr.bf16.gmra.mxu0 %v5148
        %v5302 = vpop.f32.mrf.mxu0
        %v5303 = vadd.f32 0.0, %v5302
        %v5304 = vpop.f32.mrf.mxu0
        %v5305 = vadd.f32 0.0, %v5304
        %v5306 = vpop.f32.mrf.mxu0
        %v5307 = vadd.f32 0.0, %v5306
        %v5308 = vpop.f32.mrf.mxu0
        %v5309 = vadd.f32 0.0, %v5308
        %5310 = vdwg.mxu0
        %v5311 = vmax.f32 %v5233, %v5235
        %5312 = vmax.xlane.f32.xlu0 %v5311
        %v5313 = vpop.xlane.xlu0 %5312
        %v5314 = vmax.f32 %v5237, %v5239
        %5315 = vmax.xlane.f32.xlu0 %v5314
        %v5316 = vpop.xlane.xlu0 %5315
        %v5317 = vmax.f32 %v5243, %v5245
        %5318 = vmax.xlane.f32.xlu0 %v5317
        %v5319 = vpop.xlane.xlu0 %5318
        %v5320 = vmax.f32 %v5247, %v5249
        %5321 = vmax.xlane.f32.xlu0 %v5320
        %v5322 = vpop.xlane.xlu0 %5321
        %v5323 = vmax.f32 %v5253, %v5255
        %5324 = vmax.xlane.f32.xlu0 %v5323
        %v5325 = vpop.xlane.xlu0 %5324
        %v5326 = vmax.f32 %v5257, %v5259
        %5327 = vmax.xlane.f32.xlu0 %v5326
        %v5328 = vpop.xlane.xlu0 %5327
        %v5329 = vmax.f32 %v5263, %v5265
        %5330 = vmax.xlane.f32.xlu0 %v5329
        %v5331 = vpop.xlane.xlu0 %5330
        %v5332 = vmax.f32 %v5267, %v5269
        %5333 = vmax.xlane.f32.xlu0 %v5332
        %v5334 = vpop.xlane.xlu0 %5333
        %v5335 = vmax.f32 %v5273, %v5275
        %5336 = vmax.xlane.f32.xlu0 %v5335
        %v5337 = vpop.xlane.xlu0 %5336
        %v5338 = vmax.f32 %v5277, %v5279
        %5339 = vmax.xlane.f32.xlu0 %v5338
        %v5340 = vpop.xlane.xlu0 %5339
        %v5341 = vmax.f32 %v5283, %v5285
        %5342 = vmax.xlane.f32.xlu0 %v5341
        %v5343 = vpop.xlane.xlu0 %5342
        %v5344 = vmax.f32 %v5287, %v5289
        %5345 = vmax.xlane.f32.xlu0 %v5344
        %v5346 = vpop.xlane.xlu0 %5345
        %v5347 = vmax.f32 %v5293, %v5295
        %5348 = vmax.xlane.f32.xlu0 %v5347
        %v5349 = vpop.xlane.xlu0 %5348
        %v5350 = vmax.f32 %v5297, %v5299
        %5351 = vmax.xlane.f32.xlu0 %v5350
        %v5352 = vpop.xlane.xlu0 %5351
        %v5353 = vmax.f32 %v5303, %v5305
        %5354 = vmax.xlane.f32.xlu0 %v5353
        %v5355 = vpop.xlane.xlu0 %5354
        %v5356 = vmax.f32 %v5307, %v5309
        %5357 = vmax.xlane.f32.xlu0 %v5356
        %v5358 = vpop.xlane.xlu0 %5357
        %v5359 = vsub.f32 %v5233, %v5313
        %v5360 = vsub.f32 %v5235, %v5313
        %v5361 = vsub.f32 %v5237, %v5316
        %v5362 = vsub.f32 %v5239, %v5316
        %v5363 = vsub.f32 %v5243, %v5319
        %v5364 = vsub.f32 %v5245, %v5319
        %v5365 = vsub.f32 %v5247, %v5322
        %v5366 = vsub.f32 %v5249, %v5322
        %v5367 = vsub.f32 %v5253, %v5325
        %v5368 = vsub.f32 %v5255, %v5325
        %v5369 = vsub.f32 %v5257, %v5328
        %v5370 = vsub.f32 %v5259, %v5328
        %v5371 = vsub.f32 %v5263, %v5331
        %v5372 = vsub.f32 %v5265, %v5331
        %v5373 = vsub.f32 %v5267, %v5334
        %v5374 = vsub.f32 %v5269, %v5334
        %v5375 = vsub.f32 %v5273, %v5337
        %v5376 = vsub.f32 %v5275, %v5337
        %v5377 = vsub.f32 %v5277, %v5340
        %v5378 = vsub.f32 %v5279, %v5340
        %v5379 = vsub.f32 %v5283, %v5343
        %v5380 = vsub.f32 %v5285, %v5343
        %v5381 = vsub.f32 %v5287, %v5346
        %v5382 = vsub.f32 %v5289, %v5346
        %v5383 = vsub.f32 %v5293, %v5349
        %v5384 = vsub.f32 %v5295, %v5349
        %v5385 = vsub.f32 %v5297, %v5352
        %v5386 = vsub.f32 %v5299, %v5352
        %v5387 = vsub.f32 %v5303, %v5355
        %v5388 = vsub.f32 %v5305, %v5355
        %v5389 = vsub.f32 %v5307, %v5358
        %v5390 = vsub.f32 %v5309, %v5358
        %v5391 = vmul.f32 %v5359, 1.442695
        %v5392 = vpow.pop %v5391
        %v5393 = vmul.f32 %v5360, 1.442695
        %v5394 = vpow.pop %v5393
        %v5395 = vmul.f32 %v5361, 1.442695
        %v5396 = vpow.pop %v5395
        %v5397 = vmul.f32 %v5362, 1.442695
        %v5398 = vpow.pop %v5397
        %v5399 = vmul.f32 %v5363, 1.442695
        %v5400 = vpow.pop %v5399
        %v5401 = vmul.f32 %v5364, 1.442695
        %v5402 = vpow.pop %v5401
        %v5403 = vmul.f32 %v5365, 1.442695
        %v5404 = vpow.pop %v5403
        %v5405 = vmul.f32 %v5366, 1.442695
        %v5406 = vpow.pop %v5405
        %v5407 = vmul.f32 %v5367, 1.442695
        %v5408 = vpow.pop %v5407
        %v5409 = vmul.f32 %v5368, 1.442695
        %v5410 = vpow.pop %v5409
        %v5411 = vmul.f32 %v5369, 1.442695
        %v5412 = vpow.pop %v5411
        %v5413 = vmul.f32 %v5370, 1.442695
        %v5414 = vpow.pop %v5413
        %v5415 = vmul.f32 %v5371, 1.442695
        %v5416 = vpow.pop %v5415
        %v5417 = vmul.f32 %v5372, 1.442695
        %v5418 = vpow.pop %v5417
        %v5419 = vmul.f32 %v5373, 1.442695
        %v5420 = vpow.pop %v5419
        %v5421 = vmul.f32 %v5374, 1.442695
        %v5422 = vpow.pop %v5421
        %v5423 = vmul.f32 %v5375, 1.442695
        %v5424 = vpow.pop %v5423
        %v5425 = vmul.f32 %v5376, 1.442695
        %v5426 = vpow.pop %v5425
        %v5427 = vmul.f32 %v5377, 1.442695
        %v5428 = vpow.pop %v5427
        %v5429 = vmul.f32 %v5378, 1.442695
        %v5430 = vpow.pop %v5429
        %v5431 = vmul.f32 %v5379, 1.442695
        %v5432 = vpow.pop %v5431
        %v5433 = vmul.f32 %v5380, 1.442695
        %v5434 = vpow.pop %v5433
        %v5435 = vmul.f32 %v5381, 1.442695
        %v5436 = vpow.pop %v5435
        %v5437 = vmul.f32 %v5382, 1.442695
        %v5438 = vpow.pop %v5437
        %v5439 = vmul.f32 %v5383, 1.442695
        %v5440 = vpow.pop %v5439
        %v5441 = vmul.f32 %v5384, 1.442695
        %v5442 = vpow.pop %v5441
        %v5443 = vmul.f32 %v5385, 1.442695
        %v5444 = vpow.pop %v5443
        %v5445 = vmul.f32 %v5386, 1.442695
        %v5446 = vpow.pop %v5445
        %v5447 = vmul.f32 %v5387, 1.442695
        %v5448 = vpow.pop %v5447
        %v5449 = vmul.f32 %v5388, 1.442695
        %v5450 = vpow.pop %v5449
        %v5451 = vmul.f32 %v5389, 1.442695
        %v5452 = vpow.pop %v5451
        %v5453 = vmul.f32 %v5390, 1.442695
        %v5454 = vpow.pop %v5453
        %v5455 = vadd.f32 %v5392, %v5394
        %5456 = vadd.xlane.f32.xlu0 %v5455
        %v5457 = vpop.xlane.xlu0 %5456
        %v5458 = vadd.f32 %v5396, %v5398
        %5459 = vadd.xlane.f32.xlu0 %v5458
        %v5460 = vpop.xlane.xlu0 %5459
        %v5461 = vadd.f32 %v5400, %v5402
        %5462 = vadd.xlane.f32.xlu0 %v5461
        %v5463 = vpop.xlane.xlu0 %5462
        %v5464 = vadd.f32 %v5404, %v5406
        %5465 = vadd.xlane.f32.xlu0 %v5464
        %v5466 = vpop.xlane.xlu0 %5465
        %v5467 = vadd.f32 %v5408, %v5410
        %5468 = vadd.xlane.f32.xlu0 %v5467
        %v5469 = vpop.xlane.xlu0 %5468
        %v5470 = vadd.f32 %v5412, %v5414
        %5471 = vadd.xlane.f32.xlu0 %v5470
        %v5472 = vpop.xlane.xlu0 %5471
        %v5473 = vadd.f32 %v5416, %v5418
        %5474 = vadd.xlane.f32.xlu0 %v5473
        %v5475 = vpop.xlane.xlu0 %5474
        %v5476 = vadd.f32 %v5420, %v5422
        %5477 = vadd.xlane.f32.xlu0 %v5476
        %v5478 = vpop.xlane.xlu0 %5477
        %v5479 = vadd.f32 %v5424, %v5426
        %5480 = vadd.xlane.f32.xlu0 %v5479
        %v5481 = vpop.xlane.xlu0 %5480
        %v5482 = vadd.f32 %v5428, %v5430
        %5483 = vadd.xlane.f32.xlu0 %v5482
        %v5484 = vpop.xlane.xlu0 %5483
        %v5485 = vadd.f32 %v5432, %v5434
        %5486 = vadd.xlane.f32.xlu0 %v5485
        %v5487 = vpop.xlane.xlu0 %5486
        %v5488 = vadd.f32 %v5436, %v5438
        %5489 = vadd.xlane.f32.xlu0 %v5488
        %v5490 = vpop.xlane.xlu0 %5489
        %v5491 = vadd.f32 %v5440, %v5442
        %5492 = vadd.xlane.f32.xlu0 %v5491
        %v5493 = vpop.xlane.xlu0 %5492
        %v5494 = vadd.f32 %v5444, %v5446
        %5495 = vadd.xlane.f32.xlu0 %v5494
        %v5496 = vpop.xlane.xlu0 %5495
        %v5497 = vadd.f32 %v5448, %v5450
        %5498 = vadd.xlane.f32.xlu0 %v5497
        %v5499 = vpop.xlane.xlu0 %5498
        %v5500 = vadd.f32 %v5452, %v5454
        %5501 = vadd.xlane.f32.xlu0 %v5500
        %v5502 = vpop.xlane.xlu0 %5501
        %v5503 = vrcp.pop %v5457
        %v5504 = vrcp.pop %v5460
        %v5505 = vrcp.pop %v5463
        %v5506 = vrcp.pop %v5466
        %v5507 = vrcp.pop %v5469
        %v5508 = vrcp.pop %v5472
        %v5509 = vrcp.pop %v5475
        %v5510 = vrcp.pop %v5478
        %v5511 = vrcp.pop %v5481
        %v5512 = vrcp.pop %v5484
        %v5513 = vrcp.pop %v5487
        %v5514 = vrcp.pop %v5490
        %v5515 = vrcp.pop %v5493
        %v5516 = vrcp.pop %v5496
        %v5517 = vrcp.pop %v5499
        %v5518 = vrcp.pop %v5502
        %v5519 = vmul.f32 %v5392, %v5503
        %v5520 = vmul.f32 %v5394, %v5503
        %v5521 = vmul.f32 %v5396, %v5504
        %v5522 = vmul.f32 %v5398, %v5504
        %v5523 = vmul.f32 %v5400, %v5505
        %v5524 = vmul.f32 %v5402, %v5505
        %v5525 = vmul.f32 %v5404, %v5506
        %v5526 = vmul.f32 %v5406, %v5506
        %v5527 = vmul.f32 %v5408, %v5507
        %v5528 = vmul.f32 %v5410, %v5507
        %v5529 = vmul.f32 %v5412, %v5508
        %v5530 = vmul.f32 %v5414, %v5508
        %v5531 = vmul.f32 %v5416, %v5509
        %v5532 = vmul.f32 %v5418, %v5509
        %v5533 = vmul.f32 %v5420, %v5510
        %v5534 = vmul.f32 %v5422, %v5510
        %v5535 = vmul.f32 %v5424, %v5511
        %v5536 = vmul.f32 %v5426, %v5511
        %v5537 = vmul.f32 %v5428, %v5512
        %v5538 = vmul.f32 %v5430, %v5512
        %v5539 = vmul.f32 %v5432, %v5513
        %v5540 = vmul.f32 %v5434, %v5513
        %v5541 = vmul.f32 %v5436, %v5514
        %v5542 = vmul.f32 %v5438, %v5514
        %v5543 = vmul.f32 %v5440, %v5515
        %v5544 = vmul.f32 %v5442, %v5515
        %v5545 = vmul.f32 %v5444, %v5516
        %v5546 = vmul.f32 %v5446, %v5516
        %v5547 = vmul.f32 %v5448, %v5517
        %v5548 = vmul.f32 %v5450, %v5517
        %v5549 = vmul.f32 %v5452, %v5518
        %v5550 = vmul.f32 %v5454, %v5518
        %v5551 = vpack.c.bf16 %v5521, %v5519
        %v5552 = vpack.c.bf16 %v5522, %v5520
        %v5553 = vpack.c.bf16 %v5525, %v5523
        %v5554 = vpack.c.bf16 %v5526, %v5524
        %v5555 = vpack.c.bf16 %v5529, %v5527
        %v5556 = vpack.c.bf16 %v5530, %v5528
        %v5557 = vpack.c.bf16 %v5533, %v5531
        %v5558 = vpack.c.bf16 %v5534, %v5532
        %v5559 = vpack.c.bf16 %v5537, %v5535
        %v5560 = vpack.c.bf16 %v5538, %v5536
        %v5561 = vpack.c.bf16 %v5541, %v5539
        %v5562 = vpack.c.bf16 %v5542, %v5540
        %v5563 = vpack.c.bf16 %v5545, %v5543
        %v5564 = vpack.c.bf16 %v5546, %v5544
        %v5565 = vpack.c.bf16 %v5549, %v5547
        %v5566 = vpack.c.bf16 %v5550, %v5548
        %5567 = vrot.lane.b32.xlu0 %v4009, 96
        %v5568 = vpop.permute.xlu0 %5567
        %5569 = vrot.lane.b32.xlu0 %v4010, 96
        %v5570 = vpop.permute.xlu0 %5569
        %5571 = vrot.lane.b32.xlu0 %v4011, 96
        %v5572 = vpop.permute.xlu0 %5571
        %5573 = vrot.lane.b32.xlu0 %v4012, 96
        %v5574 = vpop.permute.xlu0 %5573
        %5575 = vrot.lane.b32.xlu0 %v4013, 96
        %v5576 = vpop.permute.xlu0 %5575
        %5577 = vrot.lane.b32.xlu0 %v4014, 96
        %v5578 = vpop.permute.xlu0 %5577
        %5579 = vrot.lane.b32.xlu0 %v4015, 96
        %v5580 = vpop.permute.xlu0 %5579
        %5581 = vrot.lane.b32.xlu0 %v4016, 96
        %v5582 = vpop.permute.xlu0 %5581
        %5583 = vrot.lane.b32.xlu0 %v4017, 96
        %v5584 = vpop.permute.xlu0 %5583
        %5585 = vrot.lane.b32.xlu0 %v4018, 96
        %v5586 = vpop.permute.xlu0 %5585
        %5587 = vrot.lane.b32.xlu0 %v4019, 96
        %v5588 = vpop.permute.xlu0 %5587
        %5589 = vrot.lane.b32.xlu0 %v4020, 96
        %v5590 = vpop.permute.xlu0 %5589
        %5591 = vrot.lane.b32.xlu0 %v4021, 96
        %v5592 = vpop.permute.xlu0 %5591
        %5593 = vrot.lane.b32.xlu0 %v4022, 96
        %v5594 = vpop.permute.xlu0 %5593
        %5595 = vrot.lane.b32.xlu0 %v4023, 96
        %v5596 = vpop.permute.xlu0 %5595
        %5597 = vrot.lane.b32.xlu0 %v4024, 96
        %v5598 = vpop.permute.xlu0 %5597
        %5615 = vmatprep.subr.bf16.mxu0 0
        %5616 = vmatpush1.bf16.msra.mxu0 %v5582
        %5617 = vmatprep.subr.bf16.mxu0 0
        %5618 = vmatpush1.bf16.msra.mxu0 %v5580
        %5619 = vmatprep.subr.bf16.mxu0 0
        %5620 = vmatpush1.bf16.msra.mxu0 %v5578
        %5621 = vmatprep.subr.bf16.mxu0 0
        %5622 = vmatpush1.bf16.msra.mxu0 %v5576
        %5623 = vmatprep.subr.bf16.mxu0 0
        %5624 = vmatpush1.bf16.msra.mxu0 %v5574
        %5625 = vmatprep.subr.bf16.mxu0 0
        %5626 = vmatpush1.bf16.msra.mxu0 %v5572
        %5627 = vmatprep.subr.bf16.mxu0 0
        %5628 = vmatpush1.bf16.msra.mxu0 %v5570
        %5629 = vmatprep.subr.bf16.mxu0 0
        %5630 = vmatpush1.bf16.msra.mxu0 %v5568
        %5631 = vmatprep.subr.bf16.mxu0 0
        %5632 = vmatpush2.bf16.msra.mxu0 %v5598
        %5633 = vmatprep.subr.bf16.mxu0 0
        %5634 = vmatpush2.bf16.msra.mxu0 %v5596
        %5635 = vmatprep.subr.bf16.mxu0 0
        %5636 = vmatpush2.bf16.msra.mxu0 %v5594
        %5637 = vmatprep.subr.bf16.mxu0 0
        %5638 = vmatpush2.bf16.msra.mxu0 %v5592
        %5639 = vmatprep.subr.bf16.mxu0 0
        %5640 = vmatpush2.bf16.msra.mxu0 %v5590
        %5641 = vmatprep.subr.bf16.mxu0 0
        %5642 = vmatpush2.bf16.msra.mxu0 %v5588
        %5643 = vmatprep.subr.bf16.mxu0 0
        %5644 = vmatpush2.bf16.msra.mxu0 %v5586
        %5645 = vmatprep.subr.bf16.mxu0 0
        %5646 = vmatpush2.bf16.msra.mxu0 %v5584
        %5647 = vmatprep.mubr.bf16.mxu0 %v5552
        %5648 = vmatmul.mubr.bf16.gmra.mxu0 %v5551
        %v5649 = vpop.f32.mrf.mxu0
        %v5650 = vadd.f32 0.0, %v5649
        %v5651 = vpop.f32.mrf.mxu0
        %v5652 = vpop.f32.mrf.mxu0
        %v5653 = vadd.f32 0.0, %v5652
        %v5654 = vpop.f32.mrf.mxu0
        %5655 = vmatprep.mubr.bf16.mxu0 %v5554
        %5656 = vmatmul.mubr.bf16.gmra.mxu0 %v5553
        %v5657 = vpop.f32.mrf.mxu0
        %v5658 = vadd.f32 0.0, %v5657
        %v5659 = vpop.f32.mrf.mxu0
        %v5660 = vpop.f32.mrf.mxu0
        %v5661 = vadd.f32 0.0, %v5660
        %v5662 = vpop.f32.mrf.mxu0
        %5663 = vmatprep.mubr.bf16.mxu0 %v5556
        %5664 = vmatmul.mubr.bf16.gmra.mxu0 %v5555
        %v5665 = vpop.f32.mrf.mxu0
        %v5666 = vadd.f32 0.0, %v5665
        %v5667 = vpop.f32.mrf.mxu0
        %v5668 = vpop.f32.mrf.mxu0
        %v5669 = vadd.f32 0.0, %v5668
        %v5670 = vpop.f32.mrf.mxu0
        %5671 = vmatprep.mubr.bf16.mxu0 %v5558
        %5672 = vmatmul.mubr.bf16.gmra.mxu0 %v5557
        %v5673 = vpop.f32.mrf.mxu0
        %v5674 = vadd.f32 0.0, %v5673
        %v5675 = vpop.f32.mrf.mxu0
        %v5676 = vpop.f32.mrf.mxu0
        %v5677 = vadd.f32 0.0, %v5676
        %v5678 = vpop.f32.mrf.mxu0
        %5679 = vmatprep.mubr.bf16.mxu0 %v5560
        %5680 = vmatmul.mubr.bf16.gmra.mxu0 %v5559
        %v5681 = vpop.f32.mrf.mxu0
        %v5682 = vadd.f32 0.0, %v5681
        %v5683 = vpop.f32.mrf.mxu0
        %v5684 = vpop.f32.mrf.mxu0
        %v5685 = vadd.f32 0.0, %v5684
        %v5686 = vpop.f32.mrf.mxu0
        %5687 = vmatprep.mubr.bf16.mxu0 %v5562
        %5688 = vmatmul.mubr.bf16.gmra.mxu0 %v5561
        %v5689 = vpop.f32.mrf.mxu0
        %v5690 = vadd.f32 0.0, %v5689
        %v5691 = vpop.f32.mrf.mxu0
        %v5692 = vpop.f32.mrf.mxu0
        %v5693 = vadd.f32 0.0, %v5692
        %v5694 = vpop.f32.mrf.mxu0
        %5695 = vmatprep.mubr.bf16.mxu0 %v5564
        %5696 = vmatmul.mubr.bf16.gmra.mxu0 %v5563
        %v5697 = vpop.f32.mrf.mxu0
        %v5698 = vadd.f32 0.0, %v5697
        %v5699 = vpop.f32.mrf.mxu0
        %v5700 = vpop.f32.mrf.mxu0
        %v5701 = vadd.f32 0.0, %v5700
        %v5702 = vpop.f32.mrf.mxu0
        %5703 = vmatprep.mubr.bf16.mxu0 %v5566
        %5704 = vmatmul.mubr.bf16.gmra.mxu0 %v5565
        %v5705 = vpop.f32.mrf.mxu0
        %v5706 = vadd.f32 0.0, %v5705
        %v5707 = vpop.f32.mrf.mxu0
        %v5708 = vpop.f32.mrf.mxu0
        %v5709 = vadd.f32 0.0, %v5708
        %v5710 = vpop.f32.mrf.mxu0
        %5711 = vdwg.mxu0
        %v5712 = vpack.c.bf16 %v5653, %v5650
        %v5713 = vpack.c.bf16 %v5661, %v5658
        %v5714 = vpack.c.bf16 %v5669, %v5666
        %v5715 = vpack.c.bf16 %v5677, %v5674
        %v5716 = vpack.c.bf16 %v5685, %v5682
        %v5717 = vpack.c.bf16 %v5693, %v5690
        %v5718 = vpack.c.bf16 %v5701, %v5698
        %v5719 = vpack.c.bf16 %v5709, %v5706
        %v5720 = vld [vmem:[#allocation11 + $0x10] sm:$0xf]
        %v5721 = vld [vmem:[#allocation11 + $0x14] sm:$0xf]
        %v5724 = vunpack.c.l.b16 %v5720
        %v5725 = vunpack.c.l.b16 %v5721
        %v5726 = vpack.c.b16 %v5725, %v5724
        %v5729 = vsel %vm3503, %v5712, 0
        %v5732 = vsel %vm3503, %v5713, 0
        %v5735 = vsel %vm3503, %v5714, 0
        %v5738 = vsel %vm3503, %v5715, 0
        %v5741 = vsel %vm3503, %v5716, 0
        %v5744 = vsel %vm3503, %v5717, 0
        %v5747 = vsel %vm3503, %v5718, 0
        %v5750 = vsel %vm3503, %v5719, 0
        %5752 = vmatprep.subr.bf16.mxu0 0
        %5753 = vmatpush1.bf16.msra.mxu0 0
        %5754 = vmatprep.subr.bf16.mxu0 0
        %5755 = vmatpush1.bf16.msra.mxu0 0
        %5756 = vmatprep.subr.bf16.mxu0 0
        %5757 = vmatpush1.bf16.msra.mxu0 0
        %5758 = vmatprep.subr.bf16.mxu0 0
        %5759 = vmatpush1.bf16.msra.mxu0 0
        %5760 = vmatprep.subr.bf16.mxu0 0
        %5761 = vmatpush1.bf16.msra.mxu0 0
        %5762 = vmatprep.subr.bf16.mxu0 0
        %5763 = vmatpush1.bf16.msra.mxu0 0
        %5764 = vmatprep.subr.bf16.mxu0 0
        %5765 = vmatpush1.bf16.msra.mxu0 0
        %5766 = vmatprep.subr.bf16.mxu0 0
        %5767 = vmatpush1.bf16.msra.mxu0 %v5726
        %5768 = vmatprep.subr.bf16.mxu0 0
        %5769 = vmatpush2.bf16.msra.mxu0 0
        %5770 = vmatprep.subr.bf16.mxu0 0
        %5771 = vmatpush2.bf16.msra.mxu0 0
        %5772 = vmatprep.subr.bf16.mxu0 0
        %5773 = vmatpush2.bf16.msra.mxu0 0
        %5774 = vmatprep.subr.bf16.mxu0 0
        %5775 = vmatpush2.bf16.msra.mxu0 0
        %5776 = vmatprep.subr.bf16.mxu0 0
        %5777 = vmatpush2.bf16.msra.mxu0 0
        %5778 = vmatprep.subr.bf16.mxu0 0
        %5779 = vmatpush2.bf16.msra.mxu0 0
        %5780 = vmatprep.subr.bf16.mxu0 0
        %5781 = vmatpush2.bf16.msra.mxu0 0
        %5782 = vmatprep.subr.bf16.mxu0 0
        %5783 = vmatpush2.bf16.msra.mxu0 0
        %5784 = vmatprep.mubr.bf16.mxu0 0
        %5785 = vmatmul.mubr.bf16.gmra.mxu0 %v5729
        %v5786 = vpop.f32.mrf.mxu0
        %v5787 = vadd.f32 0.0, %v5786
        %v5788 = vpop.f32.mrf.mxu0
        %v5789 = vpop.f32.mrf.mxu0
        %v5790 = vadd.f32 0.0, %v5789
        %v5791 = vpop.f32.mrf.mxu0
        %5792 = vmatprep.mubr.bf16.mxu0 0
        %5793 = vmatmul.mubr.bf16.gmra.mxu0 %v5732
        %v5794 = vpop.f32.mrf.mxu0
        %v5795 = vadd.f32 0.0, %v5794
        %v5796 = vpop.f32.mrf.mxu0
        %v5797 = vpop.f32.mrf.mxu0
        %v5798 = vadd.f32 0.0, %v5797
        %v5799 = vpop.f32.mrf.mxu0
        %5800 = vmatprep.mubr.bf16.mxu0 0
        %5801 = vmatmul.mubr.bf16.gmra.mxu0 %v5735
        %v5802 = vpop.f32.mrf.mxu0
        %v5803 = vadd.f32 0.0, %v5802
        %v5804 = vpop.f32.mrf.mxu0
        %v5805 = vpop.f32.mrf.mxu0
        %v5806 = vadd.f32 0.0, %v5805
        %v5807 = vpop.f32.mrf.mxu0
        %5808 = vmatprep.mubr.bf16.mxu0 0
        %5809 = vmatmul.mubr.bf16.gmra.mxu0 %v5738
        %v5810 = vpop.f32.mrf.mxu0
        %v5811 = vadd.f32 0.0, %v5810
        %v5812 = vpop.f32.mrf.mxu0
        %v5813 = vpop.f32.mrf.mxu0
        %v5814 = vadd.f32 0.0, %v5813
        %v5815 = vpop.f32.mrf.mxu0
        %5816 = vmatprep.mubr.bf16.mxu0 0
        %5817 = vmatmul.mubr.bf16.gmra.mxu0 %v5741
        %v5818 = vpop.f32.mrf.mxu0
        %v5819 = vadd.f32 0.0, %v5818
        %v5820 = vpop.f32.mrf.mxu0
        %v5821 = vpop.f32.mrf.mxu0
        %v5822 = vadd.f32 0.0, %v5821
        %v5823 = vpop.f32.mrf.mxu0
        %5824 = vmatprep.mubr.bf16.mxu0 0
        %5825 = vmatmul.mubr.bf16.gmra.mxu0 %v5744
        %v5826 = vpop.f32.mrf.mxu0
        %v5827 = vadd.f32 0.0, %v5826
        %v5828 = vpop.f32.mrf.mxu0
        %v5829 = vpop.f32.mrf.mxu0
        %v5830 = vadd.f32 0.0, %v5829
        %v5831 = vpop.f32.mrf.mxu0
        %5832 = vmatprep.mubr.bf16.mxu0 0
        %5833 = vmatmul.mubr.bf16.gmra.mxu0 %v5747
        %v5834 = vpop.f32.mrf.mxu0
        %v5835 = vadd.f32 0.0, %v5834
        %v5836 = vpop.f32.mrf.mxu0
        %v5837 = vpop.f32.mrf.mxu0
        %v5838 = vadd.f32 0.0, %v5837
        %v5839 = vpop.f32.mrf.mxu0
        %5840 = vmatprep.mubr.bf16.mxu0 0
        %5841 = vmatmul.mubr.bf16.gmra.mxu0 %v5750
        %v5842 = vpop.f32.mrf.mxu0
        %v5843 = vadd.f32 0.0, %v5842
        %v5844 = vpop.f32.mrf.mxu0
        %v5845 = vpop.f32.mrf.mxu0
        %v5846 = vadd.f32 0.0, %v5845
        %v5847 = vpop.f32.mrf.mxu0
        %5848 = vdwg.mxu0
        %v5849 = vadd.f32 %v5062, %v5787
        %v5850 = vadd.f32 %v5063, %v5790
        %v5851 = vadd.f32 %v5064, %v5795
        %v5852 = vadd.f32 %v5065, %v5798
        %v5853 = vadd.f32 %v5066, %v5803
        %v5854 = vadd.f32 %v5067, %v5806
        %v5855 = vadd.f32 %v5068, %v5811
        %v5856 = vadd.f32 %v5069, %v5814
        %v5857 = vadd.f32 %v5070, %v5819
        %v5858 = vadd.f32 %v5071, %v5822
        %v5859 = vadd.f32 %v5072, %v5827
        %v5860 = vadd.f32 %v5073, %v5830
        %v5861 = vadd.f32 %v5074, %v5835
        %v5862 = vadd.f32 %v5075, %v5838
        %v5863 = vadd.f32 %v5076, %v5843
        %v5864 = vadd.f32 %v5077, %v5846
        %5865 = vrot.lane.b32.xlu0 %v3415, 80
        %v5866 = vpop.permute.xlu0 %5865
        %5867 = vrot.lane.b32.xlu0 %v3416, 80
        %v5868 = vpop.permute.xlu0 %5867
        %5869 = vrot.lane.b32.xlu0 %v3417, 80
        %v5870 = vpop.permute.xlu0 %5869
        %5871 = vrot.lane.b32.xlu0 %v3418, 80
        %v5872 = vpop.permute.xlu0 %5871
        %5873 = vrot.lane.b32.xlu0 %v3419, 80
        %v5874 = vpop.permute.xlu0 %5873
        %5875 = vrot.lane.b32.xlu0 %v3420, 80
        %v5876 = vpop.permute.xlu0 %5875
        %5877 = vrot.lane.b32.xlu0 %v3421, 80
        %v5878 = vpop.permute.xlu0 %5877
        %5879 = vrot.lane.b32.xlu0 %v3422, 80
        %v5880 = vpop.permute.xlu0 %5879
        %5881 = vrot.lane.b32.xlu0 %v3487, 80
        %v5882 = vpop.permute.xlu0 %5881
        %5883 = vrot.lane.b32.xlu0 %v3488, 80
        %v5884 = vpop.permute.xlu0 %5883
        %5885 = vrot.lane.b32.xlu0 %v3489, 80
        %v5886 = vpop.permute.xlu0 %5885
        %5887 = vrot.lane.b32.xlu0 %v3490, 80
        %v5888 = vpop.permute.xlu0 %5887
        %5889 = vrot.lane.b32.xlu0 %v3491, 80
        %v5890 = vpop.permute.xlu0 %5889
        %5891 = vrot.lane.b32.xlu0 %v3492, 80
        %v5892 = vpop.permute.xlu0 %5891
        %5893 = vrot.lane.b32.xlu0 %v3493, 80
        %v5894 = vpop.permute.xlu0 %5893
        %5895 = vrot.lane.b32.xlu0 %v3494, 80
        %v5896 = vpop.permute.xlu0 %5895
        %5897 = vrot.lane.b32.xlu0 %v3495, 80
        %v5898 = vpop.permute.xlu0 %5897
        %5899 = vrot.lane.b32.xlu0 %v3496, 80
        %v5900 = vpop.permute.xlu0 %5899
        %5901 = vrot.lane.b32.xlu0 %v3497, 80
        %v5902 = vpop.permute.xlu0 %5901
        %5903 = vrot.lane.b32.xlu0 %v3498, 80
        %v5904 = vpop.permute.xlu0 %5903
        %5905 = vrot.lane.b32.xlu0 %v3499, 80
        %v5906 = vpop.permute.xlu0 %5905
        %5907 = vrot.lane.b32.xlu0 %v3500, 80
        %v5908 = vpop.permute.xlu0 %5907
        %5909 = vrot.lane.b32.xlu0 %v3501, 80
        %v5910 = vpop.permute.xlu0 %5909
        %5911 = vrot.lane.b32.xlu0 %v3502, 80
        %v5912 = vpop.permute.xlu0 %5911
        %v5914 = vsel %vm3503, %v5866, 0
        %v5917 = vsel %vm3503, %v5868, 0
        %v5920 = vsel %vm3503, %v5870, 0
        %v5923 = vsel %vm3503, %v5872, 0
        %v5926 = vsel %vm3503, %v5874, 0
        %v5929 = vsel %vm3503, %v5876, 0
        %v5932 = vsel %vm3503, %v5878, 0
        %v5935 = vsel %vm3503, %v5880, 0
        %v5938 = vsel %vm3503, %v5882, 0
        %v5941 = vsel %vm3503, %v5884, 0
        %v5944 = vsel %vm3503, %v5886, 0
        %v5947 = vsel %vm3503, %v5888, 0
        %v5950 = vsel %vm3503, %v5890, 0
        %v5953 = vsel %vm3503, %v5892, 0
        %v5956 = vsel %vm3503, %v5894, 0
        %v5959 = vsel %vm3503, %v5896, 0
        %v5962 = vsel %vm3503, %v5898, 0
        %v5965 = vsel %vm3503, %v5900, 0
        %v5968 = vsel %vm3503, %v5902, 0
        %v5971 = vsel %vm3503, %v5904, 0
        %v5974 = vsel %vm3503, %v5906, 0
        %v5977 = vsel %vm3503, %v5908, 0
        %v5980 = vsel %vm3503, %v5910, 0
        %v5983 = vsel %vm3503, %v5912, 0
        %5985 = vmatprep.subr.bf16.mxu0 0
        %5986 = vmatpush1.bf16.xpose.msra.mxu0 %v5959
        %5987 = vmatprep.subr.bf16.mxu0 0
        %5988 = vmatpush1.bf16.xpose.msra.mxu0 %v5956
        %5989 = vmatprep.subr.bf16.mxu0 0
        %5990 = vmatpush1.bf16.xpose.msra.mxu0 %v5953
        %5991 = vmatprep.subr.bf16.mxu0 0
        %5992 = vmatpush1.bf16.xpose.msra.mxu0 %v5950
        %5993 = vmatprep.subr.bf16.mxu0 0
        %5994 = vmatpush1.bf16.xpose.msra.mxu0 %v5947
        %5995 = vmatprep.subr.bf16.mxu0 0
        %5996 = vmatpush1.bf16.xpose.msra.mxu0 %v5944
        %5997 = vmatprep.subr.bf16.mxu0 0
        %5998 = vmatpush1.bf16.xpose.msra.mxu0 %v5941
        %5999 = vmatprep.subr.bf16.mxu0 0
        %6000 = vmatpush1.bf16.xpose.msra.mxu0 %v5938
        %6001 = vmatprep.subr.bf16.mxu0 0
        %6002 = vmatpush2.bf16.xpose.msra.mxu0 %v5983
        %6003 = vmatprep.subr.bf16.mxu0 0
        %6004 = vmatpush2.bf16.xpose.msra.mxu0 %v5980
        %6005 = vmatprep.subr.bf16.mxu0 0
        %6006 = vmatpush2.bf16.xpose.msra.mxu0 %v5977
        %6007 = vmatprep.subr.bf16.mxu0 0
        %6008 = vmatpush2.bf16.xpose.msra.mxu0 %v5974
        %6009 = vmatprep.subr.bf16.mxu0 0
        %6010 = vmatpush2.bf16.xpose.msra.mxu0 %v5971
        %6011 = vmatprep.subr.bf16.mxu0 0
        %6012 = vmatpush2.bf16.xpose.msra.mxu0 %v5968
        %6013 = vmatprep.subr.bf16.mxu0 0
        %6014 = vmatpush2.bf16.xpose.msra.mxu0 %v5965
        %6015 = vmatprep.subr.bf16.mxu0 0
        %6016 = vmatpush2.bf16.xpose.msra.mxu0 %v5962
        %6017 = vmatprep.mubr.bf16.mxu0 0
        %6018 = vmatmul.mubr.bf16.gmra.mxu0 %v5914
        %v6019 = vpop.f32.mrf.mxu0
        %v6020 = vadd.f32 0.0, %v6019
        %v6021 = vpop.f32.mrf.mxu0
        %v6022 = vadd.f32 0.0, %v6021
        %v6023 = vpop.f32.mrf.mxu0
        %v6024 = vadd.f32 0.0, %v6023
        %v6025 = vpop.f32.mrf.mxu0
        %v6026 = vadd.f32 0.0, %v6025
        %6027 = vmatprep.mubr.bf16.mxu0 0
        %6028 = vmatmul.mubr.bf16.gmra.mxu0 %v5917
        %v6029 = vpop.f32.mrf.mxu0
        %v6030 = vadd.f32 0.0, %v6029
        %v6031 = vpop.f32.mrf.mxu0
        %v6032 = vadd.f32 0.0, %v6031
        %v6033 = vpop.f32.mrf.mxu0
        %v6034 = vadd.f32 0.0, %v6033
        %v6035 = vpop.f32.mrf.mxu0
        %v6036 = vadd.f32 0.0, %v6035
        %6037 = vmatprep.mubr.bf16.mxu0 0
        %6038 = vmatmul.mubr.bf16.gmra.mxu0 %v5920
        %v6039 = vpop.f32.mrf.mxu0
        %v6040 = vadd.f32 0.0, %v6039
        %v6041 = vpop.f32.mrf.mxu0
        %v6042 = vadd.f32 0.0, %v6041
        %v6043 = vpop.f32.mrf.mxu0
        %v6044 = vadd.f32 0.0, %v6043
        %v6045 = vpop.f32.mrf.mxu0
        %v6046 = vadd.f32 0.0, %v6045
        %6047 = vmatprep.mubr.bf16.mxu0 0
        %6048 = vmatmul.mubr.bf16.gmra.mxu0 %v5923
        %v6049 = vpop.f32.mrf.mxu0
        %v6050 = vadd.f32 0.0, %v6049
        %v6051 = vpop.f32.mrf.mxu0
        %v6052 = vadd.f32 0.0, %v6051
        %v6053 = vpop.f32.mrf.mxu0
        %v6054 = vadd.f32 0.0, %v6053
        %v6055 = vpop.f32.mrf.mxu0
        %v6056 = vadd.f32 0.0, %v6055
        %6057 = vmatprep.mubr.bf16.mxu0 0
        %6058 = vmatmul.mubr.bf16.gmra.mxu0 %v5926
        %v6059 = vpop.f32.mrf.mxu0
        %v6060 = vadd.f32 0.0, %v6059
        %v6061 = vpop.f32.mrf.mxu0
        %v6062 = vadd.f32 0.0, %v6061
        %v6063 = vpop.f32.mrf.mxu0
        %v6064 = vadd.f32 0.0, %v6063
        %v6065 = vpop.f32.mrf.mxu0
        %v6066 = vadd.f32 0.0, %v6065
        %6067 = vmatprep.mubr.bf16.mxu0 0
        %6068 = vmatmul.mubr.bf16.gmra.mxu0 %v5929
        %v6069 = vpop.f32.mrf.mxu0
        %v6070 = vadd.f32 0.0, %v6069
        %v6071 = vpop.f32.mrf.mxu0
        %v6072 = vadd.f32 0.0, %v6071
        %v6073 = vpop.f32.mrf.mxu0
        %v6074 = vadd.f32 0.0, %v6073
        %v6075 = vpop.f32.mrf.mxu0
        %v6076 = vadd.f32 0.0, %v6075
        %6077 = vmatprep.mubr.bf16.mxu0 0
        %6078 = vmatmul.mubr.bf16.gmra.mxu0 %v5932
        %v6079 = vpop.f32.mrf.mxu0
        %v6080 = vadd.f32 0.0, %v6079
        %v6081 = vpop.f32.mrf.mxu0
        %v6082 = vadd.f32 0.0, %v6081
        %v6083 = vpop.f32.mrf.mxu0
        %v6084 = vadd.f32 0.0, %v6083
        %v6085 = vpop.f32.mrf.mxu0
        %v6086 = vadd.f32 0.0, %v6085
        %6087 = vmatprep.mubr.bf16.mxu0 0
        %6088 = vmatmul.mubr.bf16.gmra.mxu0 %v5935
        %v6089 = vpop.f32.mrf.mxu0
        %v6090 = vadd.f32 0.0, %v6089
        %v6091 = vpop.f32.mrf.mxu0
        %v6092 = vadd.f32 0.0, %v6091
        %v6093 = vpop.f32.mrf.mxu0
        %v6094 = vadd.f32 0.0, %v6093
        %v6095 = vpop.f32.mrf.mxu0
        %v6096 = vadd.f32 0.0, %v6095
        %6097 = vdwg.mxu0
        %v6098 = vmax.f32 %v6020, %v6022
        %6099 = vmax.xlane.f32.xlu0 %v6098
        %v6100 = vpop.xlane.xlu0 %6099
        %v6101 = vmax.f32 %v6024, %v6026
        %6102 = vmax.xlane.f32.xlu0 %v6101
        %v6103 = vpop.xlane.xlu0 %6102
        %v6104 = vmax.f32 %v6030, %v6032
        %6105 = vmax.xlane.f32.xlu0 %v6104
        %v6106 = vpop.xlane.xlu0 %6105
        %v6107 = vmax.f32 %v6034, %v6036
        %6108 = vmax.xlane.f32.xlu0 %v6107
        %v6109 = vpop.xlane.xlu0 %6108
        %v6110 = vmax.f32 %v6040, %v6042
        %6111 = vmax.xlane.f32.xlu0 %v6110
        %v6112 = vpop.xlane.xlu0 %6111
        %v6113 = vmax.f32 %v6044, %v6046
        %6114 = vmax.xlane.f32.xlu0 %v6113
        %v6115 = vpop.xlane.xlu0 %6114
        %v6116 = vmax.f32 %v6050, %v6052
        %6117 = vmax.xlane.f32.xlu0 %v6116
        %v6118 = vpop.xlane.xlu0 %6117
        %v6119 = vmax.f32 %v6054, %v6056
        %6120 = vmax.xlane.f32.xlu0 %v6119
        %v6121 = vpop.xlane.xlu0 %6120
        %v6122 = vmax.f32 %v6060, %v6062
        %6123 = vmax.xlane.f32.xlu0 %v6122
        %v6124 = vpop.xlane.xlu0 %6123
        %v6125 = vmax.f32 %v6064, %v6066
        %6126 = vmax.xlane.f32.xlu0 %v6125
        %v6127 = vpop.xlane.xlu0 %6126
        %v6128 = vmax.f32 %v6070, %v6072
        %6129 = vmax.xlane.f32.xlu0 %v6128
        %v6130 = vpop.xlane.xlu0 %6129
        %v6131 = vmax.f32 %v6074, %v6076
        %6132 = vmax.xlane.f32.xlu0 %v6131
        %v6133 = vpop.xlane.xlu0 %6132
        %v6134 = vmax.f32 %v6080, %v6082
        %6135 = vmax.xlane.f32.xlu0 %v6134
        %v6136 = vpop.xlane.xlu0 %6135
        %v6137 = vmax.f32 %v6084, %v6086
        %6138 = vmax.xlane.f32.xlu0 %v6137
        %v6139 = vpop.xlane.xlu0 %6138
        %v6140 = vmax.f32 %v6090, %v6092
        %6141 = vmax.xlane.f32.xlu0 %v6140
        %v6142 = vpop.xlane.xlu0 %6141
        %v6143 = vmax.f32 %v6094, %v6096
        %6144 = vmax.xlane.f32.xlu0 %v6143
        %v6145 = vpop.xlane.xlu0 %6144
        %v6146 = vsub.f32 %v6020, %v6100
        %v6147 = vsub.f32 %v6022, %v6100
        %v6148 = vsub.f32 %v6024, %v6103
        %v6149 = vsub.f32 %v6026, %v6103
        %v6150 = vsub.f32 %v6030, %v6106
        %v6151 = vsub.f32 %v6032, %v6106
        %v6152 = vsub.f32 %v6034, %v6109
        %v6153 = vsub.f32 %v6036, %v6109
        %v6154 = vsub.f32 %v6040, %v6112
        %v6155 = vsub.f32 %v6042, %v6112
        %v6156 = vsub.f32 %v6044, %v6115
        %v6157 = vsub.f32 %v6046, %v6115
        %v6158 = vsub.f32 %v6050, %v6118
        %v6159 = vsub.f32 %v6052, %v6118
        %v6160 = vsub.f32 %v6054, %v6121
        %v6161 = vsub.f32 %v6056, %v6121
        %v6162 = vsub.f32 %v6060, %v6124
        %v6163 = vsub.f32 %v6062, %v6124
        %v6164 = vsub.f32 %v6064, %v6127
        %v6165 = vsub.f32 %v6066, %v6127
        %v6166 = vsub.f32 %v6070, %v6130
        %v6167 = vsub.f32 %v6072, %v6130
        %v6168 = vsub.f32 %v6074, %v6133
        %v6169 = vsub.f32 %v6076, %v6133
        %v6170 = vsub.f32 %v6080, %v6136
        %v6171 = vsub.f32 %v6082, %v6136
        %v6172 = vsub.f32 %v6084, %v6139
        %v6173 = vsub.f32 %v6086, %v6139
        %v6174 = vsub.f32 %v6090, %v6142
        %v6175 = vsub.f32 %v6092, %v6142
        %v6176 = vsub.f32 %v6094, %v6145
        %v6177 = vsub.f32 %v6096, %v6145
        %v6178 = vmul.f32 %v6146, 1.442695
        %v6179 = vpow.pop %v6178
        %v6180 = vmul.f32 %v6147, 1.442695
        %v6181 = vpow.pop %v6180
        %v6182 = vmul.f32 %v6148, 1.442695
        %v6183 = vpow.pop %v6182
        %v6184 = vmul.f32 %v6149, 1.442695
        %v6185 = vpow.pop %v6184
        %v6186 = vmul.f32 %v6150, 1.442695
        %v6187 = vpow.pop %v6186
        %v6188 = vmul.f32 %v6151, 1.442695
        %v6189 = vpow.pop %v6188
        %v6190 = vmul.f32 %v6152, 1.442695
        %v6191 = vpow.pop %v6190
        %v6192 = vmul.f32 %v6153, 1.442695
        %v6193 = vpow.pop %v6192
        %v6194 = vmul.f32 %v6154, 1.442695
        %v6195 = vpow.pop %v6194
        %v6196 = vmul.f32 %v6155, 1.442695
        %v6197 = vpow.pop %v6196
        %v6198 = vmul.f32 %v6156, 1.442695
        %v6199 = vpow.pop %v6198
        %v6200 = vmul.f32 %v6157, 1.442695
        %v6201 = vpow.pop %v6200
        %v6202 = vmul.f32 %v6158, 1.442695
        %v6203 = vpow.pop %v6202
        %v6204 = vmul.f32 %v6159, 1.442695
        %v6205 = vpow.pop %v6204
        %v6206 = vmul.f32 %v6160, 1.442695
        %v6207 = vpow.pop %v6206
        %v6208 = vmul.f32 %v6161, 1.442695
        %v6209 = vpow.pop %v6208
        %v6210 = vmul.f32 %v6162, 1.442695
        %v6211 = vpow.pop %v6210
        %v6212 = vmul.f32 %v6163, 1.442695
        %v6213 = vpow.pop %v6212
        %v6214 = vmul.f32 %v6164, 1.442695
        %v6215 = vpow.pop %v6214
        %v6216 = vmul.f32 %v6165, 1.442695
        %v6217 = vpow.pop %v6216
        %v6218 = vmul.f32 %v6166, 1.442695
        %v6219 = vpow.pop %v6218
        %v6220 = vmul.f32 %v6167, 1.442695
        %v6221 = vpow.pop %v6220
        %v6222 = vmul.f32 %v6168, 1.442695
        %v6223 = vpow.pop %v6222
        %v6224 = vmul.f32 %v6169, 1.442695
        %v6225 = vpow.pop %v6224
        %v6226 = vmul.f32 %v6170, 1.442695
        %v6227 = vpow.pop %v6226
        %v6228 = vmul.f32 %v6171, 1.442695
        %v6229 = vpow.pop %v6228
        %v6230 = vmul.f32 %v6172, 1.442695
        %v6231 = vpow.pop %v6230
        %v6232 = vmul.f32 %v6173, 1.442695
        %v6233 = vpow.pop %v6232
        %v6234 = vmul.f32 %v6174, 1.442695
        %v6235 = vpow.pop %v6234
        %v6236 = vmul.f32 %v6175, 1.442695
        %v6237 = vpow.pop %v6236
        %v6238 = vmul.f32 %v6176, 1.442695
        %v6239 = vpow.pop %v6238
        %v6240 = vmul.f32 %v6177, 1.442695
        %v6241 = vpow.pop %v6240
        %v6242 = vadd.f32 %v6179, %v6181
        %6243 = vadd.xlane.f32.xlu0 %v6242
        %v6244 = vpop.xlane.xlu0 %6243
        %v6245 = vadd.f32 %v6183, %v6185
        %6246 = vadd.xlane.f32.xlu0 %v6245
        %v6247 = vpop.xlane.xlu0 %6246
        %v6248 = vadd.f32 %v6187, %v6189
        %6249 = vadd.xlane.f32.xlu0 %v6248
        %v6250 = vpop.xlane.xlu0 %6249
        %v6251 = vadd.f32 %v6191, %v6193
        %6252 = vadd.xlane.f32.xlu0 %v6251
        %v6253 = vpop.xlane.xlu0 %6252
        %v6254 = vadd.f32 %v6195, %v6197
        %6255 = vadd.xlane.f32.xlu0 %v6254
        %v6256 = vpop.xlane.xlu0 %6255
        %v6257 = vadd.f32 %v6199, %v6201
        %6258 = vadd.xlane.f32.xlu0 %v6257
        %v6259 = vpop.xlane.xlu0 %6258
        %v6260 = vadd.f32 %v6203, %v6205
        %6261 = vadd.xlane.f32.xlu0 %v6260
        %v6262 = vpop.xlane.xlu0 %6261
        %v6263 = vadd.f32 %v6207, %v6209
        %6264 = vadd.xlane.f32.xlu0 %v6263
        %v6265 = vpop.xlane.xlu0 %6264
        %v6266 = vadd.f32 %v6211, %v6213
        %6267 = vadd.xlane.f32.xlu0 %v6266
        %v6268 = vpop.xlane.xlu0 %6267
        %v6269 = vadd.f32 %v6215, %v6217
        %6270 = vadd.xlane.f32.xlu0 %v6269
        %v6271 = vpop.xlane.xlu0 %6270
        %v6272 = vadd.f32 %v6219, %v6221
        %6273 = vadd.xlane.f32.xlu0 %v6272
        %v6274 = vpop.xlane.xlu0 %6273
        %v6275 = vadd.f32 %v6223, %v6225
        %6276 = vadd.xlane.f32.xlu0 %v6275
        %v6277 = vpop.xlane.xlu0 %6276
        %v6278 = vadd.f32 %v6227, %v6229
        %6279 = vadd.xlane.f32.xlu0 %v6278
        %v6280 = vpop.xlane.xlu0 %6279
        %v6281 = vadd.f32 %v6231, %v6233
        %6282 = vadd.xlane.f32.xlu0 %v6281
        %v6283 = vpop.xlane.xlu0 %6282
        %v6284 = vadd.f32 %v6235, %v6237
        %6285 = vadd.xlane.f32.xlu0 %v6284
        %v6286 = vpop.xlane.xlu0 %6285
        %v6287 = vadd.f32 %v6239, %v6241
        %6288 = vadd.xlane.f32.xlu0 %v6287
        %v6289 = vpop.xlane.xlu0 %6288
        %v6290 = vrcp.pop %v6244
        %v6291 = vrcp.pop %v6247
        %v6292 = vrcp.pop %v6250
        %v6293 = vrcp.pop %v6253
        %v6294 = vrcp.pop %v6256
        %v6295 = vrcp.pop %v6259
        %v6296 = vrcp.pop %v6262
        %v6297 = vrcp.pop %v6265
        %v6298 = vrcp.pop %v6268
        %v6299 = vrcp.pop %v6271
        %v6300 = vrcp.pop %v6274
        %v6301 = vrcp.pop %v6277
        %v6302 = vrcp.pop %v6280
        %v6303 = vrcp.pop %v6283
        %v6304 = vrcp.pop %v6286
        %v6305 = vrcp.pop %v6289
        %v6306 = vmul.f32 %v6179, %v6290
        %v6307 = vmul.f32 %v6181, %v6290
        %v6308 = vmul.f32 %v6183, %v6291
        %v6309 = vmul.f32 %v6185, %v6291
        %v6310 = vmul.f32 %v6187, %v6292
        %v6311 = vmul.f32 %v6189, %v6292
        %v6312 = vmul.f32 %v6191, %v6293
        %v6313 = vmul.f32 %v6193, %v6293
        %v6314 = vmul.f32 %v6195, %v6294
        %v6315 = vmul.f32 %v6197, %v6294
        %v6316 = vmul.f32 %v6199, %v6295
        %v6317 = vmul.f32 %v6201, %v6295
        %v6318 = vmul.f32 %v6203, %v6296
        %v6319 = vmul.f32 %v6205, %v6296
        %v6320 = vmul.f32 %v6207, %v6297
        %v6321 = vmul.f32 %v6209, %v6297
        %v6322 = vmul.f32 %v6211, %v6298
        %v6323 = vmul.f32 %v6213, %v6298
        %v6324 = vmul.f32 %v6215, %v6299
        %v6325 = vmul.f32 %v6217, %v6299
        %v6326 = vmul.f32 %v6219, %v6300
        %v6327 = vmul.f32 %v6221, %v6300
        %v6328 = vmul.f32 %v6223, %v6301
        %v6329 = vmul.f32 %v6225, %v6301
        %v6330 = vmul.f32 %v6227, %v6302
        %v6331 = vmul.f32 %v6229, %v6302
        %v6332 = vmul.f32 %v6231, %v6303
        %v6333 = vmul.f32 %v6233, %v6303
        %v6334 = vmul.f32 %v6235, %v6304
        %v6335 = vmul.f32 %v6237, %v6304
        %v6336 = vmul.f32 %v6239, %v6305
        %v6337 = vmul.f32 %v6241, %v6305
        %v6338 = vpack.c.bf16 %v6308, %v6306
        %v6339 = vpack.c.bf16 %v6309, %v6307
        %v6340 = vpack.c.bf16 %v6312, %v6310
        %v6341 = vpack.c.bf16 %v6313, %v6311
        %v6342 = vpack.c.bf16 %v6316, %v6314
        %v6343 = vpack.c.bf16 %v6317, %v6315
        %v6344 = vpack.c.bf16 %v6320, %v6318
        %v6345 = vpack.c.bf16 %v6321, %v6319
        %v6346 = vpack.c.bf16 %v6324, %v6322
        %v6347 = vpack.c.bf16 %v6325, %v6323
        %v6348 = vpack.c.bf16 %v6328, %v6326
        %v6349 = vpack.c.bf16 %v6329, %v6327
        %v6350 = vpack.c.bf16 %v6332, %v6330
        %v6351 = vpack.c.bf16 %v6333, %v6331
        %v6352 = vpack.c.bf16 %v6336, %v6334
        %v6353 = vpack.c.bf16 %v6337, %v6335
        %6354 = vrot.lane.b32.xlu0 %v4009, 80
        %v6355 = vpop.permute.xlu0 %6354
        %6356 = vrot.lane.b32.xlu0 %v4010, 80
        %v6357 = vpop.permute.xlu0 %6356
        %6358 = vrot.lane.b32.xlu0 %v4011, 80
        %v6359 = vpop.permute.xlu0 %6358
        %6360 = vrot.lane.b32.xlu0 %v4012, 80
        %v6361 = vpop.permute.xlu0 %6360
        %6362 = vrot.lane.b32.xlu0 %v4013, 80
        %v6363 = vpop.permute.xlu0 %6362
        %6364 = vrot.lane.b32.xlu0 %v4014, 80
        %v6365 = vpop.permute.xlu0 %6364
        %6366 = vrot.lane.b32.xlu0 %v4015, 80
        %v6367 = vpop.permute.xlu0 %6366
        %6368 = vrot.lane.b32.xlu0 %v4016, 80
        %v6369 = vpop.permute.xlu0 %6368
        %6370 = vrot.lane.b32.xlu0 %v4017, 80
        %v6371 = vpop.permute.xlu0 %6370
        %6372 = vrot.lane.b32.xlu0 %v4018, 80
        %v6373 = vpop.permute.xlu0 %6372
        %6374 = vrot.lane.b32.xlu0 %v4019, 80
        %v6375 = vpop.permute.xlu0 %6374
        %6376 = vrot.lane.b32.xlu0 %v4020, 80
        %v6377 = vpop.permute.xlu0 %6376
        %6378 = vrot.lane.b32.xlu0 %v4021, 80
        %v6379 = vpop.permute.xlu0 %6378
        %6380 = vrot.lane.b32.xlu0 %v4022, 80
        %v6381 = vpop.permute.xlu0 %6380
        %6382 = vrot.lane.b32.xlu0 %v4023, 80
        %v6383 = vpop.permute.xlu0 %6382
        %6384 = vrot.lane.b32.xlu0 %v4024, 80
        %v6385 = vpop.permute.xlu0 %6384
        %6402 = vmatprep.subr.bf16.mxu0 0
        %6403 = vmatpush1.bf16.msra.mxu0 %v6369
        %6404 = vmatprep.subr.bf16.mxu0 0
        %6405 = vmatpush1.bf16.msra.mxu0 %v6367
        %6406 = vmatprep.subr.bf16.mxu0 0
        %6407 = vmatpush1.bf16.msra.mxu0 %v6365
        %6408 = vmatprep.subr.bf16.mxu0 0
        %6409 = vmatpush1.bf16.msra.mxu0 %v6363
        %6410 = vmatprep.subr.bf16.mxu0 0
        %6411 = vmatpush1.bf16.msra.mxu0 %v6361
        %6412 = vmatprep.subr.bf16.mxu0 0
        %6413 = vmatpush1.bf16.msra.mxu0 %v6359
        %6414 = vmatprep.subr.bf16.mxu0 0
        %6415 = vmatpush1.bf16.msra.mxu0 %v6357
        %6416 = vmatprep.subr.bf16.mxu0 0
        %6417 = vmatpush1.bf16.msra.mxu0 %v6355
        %6418 = vmatprep.subr.bf16.mxu0 0
        %6419 = vmatpush2.bf16.msra.mxu0 %v6385
        %6420 = vmatprep.subr.bf16.mxu0 0
        %6421 = vmatpush2.bf16.msra.mxu0 %v6383
        %6422 = vmatprep.subr.bf16.mxu0 0
        %6423 = vmatpush2.bf16.msra.mxu0 %v6381
        %6424 = vmatprep.subr.bf16.mxu0 0
        %6425 = vmatpush2.bf16.msra.mxu0 %v6379
        %6426 = vmatprep.subr.bf16.mxu0 0
        %6427 = vmatpush2.bf16.msra.mxu0 %v6377
        %6428 = vmatprep.subr.bf16.mxu0 0
        %6429 = vmatpush2.bf16.msra.mxu0 %v6375
        %6430 = vmatprep.subr.bf16.mxu0 0
        %6431 = vmatpush2.bf16.msra.mxu0 %v6373
        %6432 = vmatprep.subr.bf16.mxu0 0
        %6433 = vmatpush2.bf16.msra.mxu0 %v6371
        %6434 = vmatprep.mubr.bf16.mxu0 %v6339
        %6435 = vmatmul.mubr.bf16.gmra.mxu0 %v6338
        %v6436 = vpop.f32.mrf.mxu0
        %v6437 = vadd.f32 0.0, %v6436
        %v6438 = vpop.f32.mrf.mxu0
        %v6439 = vpop.f32.mrf.mxu0
        %v6440 = vadd.f32 0.0, %v6439
        %v6441 = vpop.f32.mrf.mxu0
        %6442 = vmatprep.mubr.bf16.mxu0 %v6341
        %6443 = vmatmul.mubr.bf16.gmra.mxu0 %v6340
        %v6444 = vpop.f32.mrf.mxu0
        %v6445 = vadd.f32 0.0, %v6444
        %v6446 = vpop.f32.mrf.mxu0
        %v6447 = vpop.f32.mrf.mxu0
        %v6448 = vadd.f32 0.0, %v6447
        %v6449 = vpop.f32.mrf.mxu0
        %6450 = vmatprep.mubr.bf16.mxu0 %v6343
        %6451 = vmatmul.mubr.bf16.gmra.mxu0 %v6342
        %v6452 = vpop.f32.mrf.mxu0
        %v6453 = vadd.f32 0.0, %v6452
        %v6454 = vpop.f32.mrf.mxu0
        %v6455 = vpop.f32.mrf.mxu0
        %v6456 = vadd.f32 0.0, %v6455
        %v6457 = vpop.f32.mrf.mxu0
        %6458 = vmatprep.mubr.bf16.mxu0 %v6345
        %6459 = vmatmul.mubr.bf16.gmra.mxu0 %v6344
        %v6460 = vpop.f32.mrf.mxu0
        %v6461 = vadd.f32 0.0, %v6460
        %v6462 = vpop.f32.mrf.mxu0
        %v6463 = vpop.f32.mrf.mxu0
        %v6464 = vadd.f32 0.0, %v6463
        %v6465 = vpop.f32.mrf.mxu0
        %6466 = vmatprep.mubr.bf16.mxu0 %v6347
        %6467 = vmatmul.mubr.bf16.gmra.mxu0 %v6346
        %v6468 = vpop.f32.mrf.mxu0
        %v6469 = vadd.f32 0.0, %v6468
        %v6470 = vpop.f32.mrf.mxu0
        %v6471 = vpop.f32.mrf.mxu0
        %v6472 = vadd.f32 0.0, %v6471
        %v6473 = vpop.f32.mrf.mxu0
        %6474 = vmatprep.mubr.bf16.mxu0 %v6349
        %6475 = vmatmul.mubr.bf16.gmra.mxu0 %v6348
        %v6476 = vpop.f32.mrf.mxu0
        %v6477 = vadd.f32 0.0, %v6476
        %v6478 = vpop.f32.mrf.mxu0
        %v6479 = vpop.f32.mrf.mxu0
        %v6480 = vadd.f32 0.0, %v6479
        %v6481 = vpop.f32.mrf.mxu0
        %6482 = vmatprep.mubr.bf16.mxu0 %v6351
        %6483 = vmatmul.mubr.bf16.gmra.mxu0 %v6350
        %v6484 = vpop.f32.mrf.mxu0
        %v6485 = vadd.f32 0.0, %v6484
        %v6486 = vpop.f32.mrf.mxu0
        %v6487 = vpop.f32.mrf.mxu0
        %v6488 = vadd.f32 0.0, %v6487
        %v6489 = vpop.f32.mrf.mxu0
        %6490 = vmatprep.mubr.bf16.mxu0 %v6353
        %6491 = vmatmul.mubr.bf16.gmra.mxu0 %v6352
        %v6492 = vpop.f32.mrf.mxu0
        %v6493 = vadd.f32 0.0, %v6492
        %v6494 = vpop.f32.mrf.mxu0
        %v6495 = vpop.f32.mrf.mxu0
        %v6496 = vadd.f32 0.0, %v6495
        %v6497 = vpop.f32.mrf.mxu0
        %6498 = vdwg.mxu0
        %v6499 = vpack.c.bf16 %v6440, %v6437
        %v6500 = vpack.c.bf16 %v6448, %v6445
        %v6501 = vpack.c.bf16 %v6456, %v6453
        %v6502 = vpack.c.bf16 %v6464, %v6461
        %v6503 = vpack.c.bf16 %v6472, %v6469
        %v6504 = vpack.c.bf16 %v6480, %v6477
        %v6505 = vpack.c.bf16 %v6488, %v6485
        %v6506 = vpack.c.bf16 %v6496, %v6493
        %v6507 = vld [vmem:[#allocation11 + $0x18] sm:$0xf]
        %v6508 = vld [vmem:[#allocation11 + $0x1c] sm:$0xf]
        %v6511 = vunpack.c.l.b16 %v6507
        %v6512 = vunpack.c.l.b16 %v6508
        %v6513 = vpack.c.b16 %v6512, %v6511
        %v6516 = vsel %vm3503, %v6499, 0
        %v6519 = vsel %vm3503, %v6500, 0
        %v6522 = vsel %vm3503, %v6501, 0
        %v6525 = vsel %vm3503, %v6502, 0
        %v6528 = vsel %vm3503, %v6503, 0
        %v6531 = vsel %vm3503, %v6504, 0
        %v6534 = vsel %vm3503, %v6505, 0
        %v6537 = vsel %vm3503, %v6506, 0
        %6539 = vmatprep.subr.bf16.mxu0 0
        %6540 = vmatpush1.bf16.msra.mxu0 0
        %6541 = vmatprep.subr.bf16.mxu0 0
        %6542 = vmatpush1.bf16.msra.mxu0 0
        %6543 = vmatprep.subr.bf16.mxu0 0
        %6544 = vmatpush1.bf16.msra.mxu0 0
        %6545 = vmatprep.subr.bf16.mxu0 0
        %6546 = vmatpush1.bf16.msra.mxu0 0
        %6547 = vmatprep.subr.bf16.mxu0 0
        %6548 = vmatpush1.bf16.msra.mxu0 0
        %6549 = vmatprep.subr.bf16.mxu0 0
        %6550 = vmatpush1.bf16.msra.mxu0 0
        %6551 = vmatprep.subr.bf16.mxu0 0
        %6552 = vmatpush1.bf16.msra.mxu0 0
        %6553 = vmatprep.subr.bf16.mxu0 0
        %6554 = vmatpush1.bf16.msra.mxu0 %v6513
        %6555 = vmatprep.subr.bf16.mxu0 0
        %6556 = vmatpush2.bf16.msra.mxu0 0
        %6557 = vmatprep.subr.bf16.mxu0 0
        %6558 = vmatpush2.bf16.msra.mxu0 0
        %6559 = vmatprep.subr.bf16.mxu0 0
        %6560 = vmatpush2.bf16.msra.mxu0 0
        %6561 = vmatprep.subr.bf16.mxu0 0
        %6562 = vmatpush2.bf16.msra.mxu0 0
        %6563 = vmatprep.subr.bf16.mxu0 0
        %6564 = vmatpush2.bf16.msra.mxu0 0
        %6565 = vmatprep.subr.bf16.mxu0 0
        %6566 = vmatpush2.bf16.msra.mxu0 0
        %6567 = vmatprep.subr.bf16.mxu0 0
        %6568 = vmatpush2.bf16.msra.mxu0 0
        %6569 = vmatprep.subr.bf16.mxu0 0
        %6570 = vmatpush2.bf16.msra.mxu0 0
        %6571 = vmatprep.mubr.bf16.mxu0 0
        %6572 = vmatmul.mubr.bf16.gmra.mxu0 %v6516
        %v6573 = vpop.f32.mrf.mxu0
        %v6574 = vadd.f32 0.0, %v6573
        %v6575 = vpop.f32.mrf.mxu0
        %v6576 = vpop.f32.mrf.mxu0
        %v6577 = vadd.f32 0.0, %v6576
        %v6578 = vpop.f32.mrf.mxu0
        %6579 = vmatprep.mubr.bf16.mxu0 0
        %6580 = vmatmul.mubr.bf16.gmra.mxu0 %v6519
        %v6581 = vpop.f32.mrf.mxu0
        %v6582 = vadd.f32 0.0, %v6581
        %v6583 = vpop.f32.mrf.mxu0
        %v6584 = vpop.f32.mrf.mxu0
        %v6585 = vadd.f32 0.0, %v6584
        %v6586 = vpop.f32.mrf.mxu0
        %6587 = vmatprep.mubr.bf16.mxu0 0
        %6588 = vmatmul.mubr.bf16.gmra.mxu0 %v6522
        %v6589 = vpop.f32.mrf.mxu0
        %v6590 = vadd.f32 0.0, %v6589
        %v6591 = vpop.f32.mrf.mxu0
        %v6592 = vpop.f32.mrf.mxu0
        %v6593 = vadd.f32 0.0, %v6592
        %v6594 = vpop.f32.mrf.mxu0
        %6595 = vmatprep.mubr.bf16.mxu0 0
        %6596 = vmatmul.mubr.bf16.gmra.mxu0 %v6525
        %v6597 = vpop.f32.mrf.mxu0
        %v6598 = vadd.f32 0.0, %v6597
        %v6599 = vpop.f32.mrf.mxu0
        %v6600 = vpop.f32.mrf.mxu0
        %v6601 = vadd.f32 0.0, %v6600
        %v6602 = vpop.f32.mrf.mxu0
        %6603 = vmatprep.mubr.bf16.mxu0 0
        %6604 = vmatmul.mubr.bf16.gmra.mxu0 %v6528
        %v6605 = vpop.f32.mrf.mxu0
        %v6606 = vadd.f32 0.0, %v6605
        %v6607 = vpop.f32.mrf.mxu0
        %v6608 = vpop.f32.mrf.mxu0
        %v6609 = vadd.f32 0.0, %v6608
        %v6610 = vpop.f32.mrf.mxu0
        %6611 = vmatprep.mubr.bf16.mxu0 0
        %6612 = vmatmul.mubr.bf16.gmra.mxu0 %v6531
        %v6613 = vpop.f32.mrf.mxu0
        %v6614 = vadd.f32 0.0, %v6613
        %v6615 = vpop.f32.mrf.mxu0
        %v6616 = vpop.f32.mrf.mxu0
        %v6617 = vadd.f32 0.0, %v6616
        %v6618 = vpop.f32.mrf.mxu0
        %6619 = vmatprep.mubr.bf16.mxu0 0
        %6620 = vmatmul.mubr.bf16.gmra.mxu0 %v6534
        %v6621 = vpop.f32.mrf.mxu0
        %v6622 = vadd.f32 0.0, %v6621
        %v6623 = vpop.f32.mrf.mxu0
        %v6624 = vpop.f32.mrf.mxu0
        %v6625 = vadd.f32 0.0, %v6624
        %v6626 = vpop.f32.mrf.mxu0
        %6627 = vmatprep.mubr.bf16.mxu0 0
        %6628 = vmatmul.mubr.bf16.gmra.mxu0 %v6537
        %v6629 = vpop.f32.mrf.mxu0
        %v6630 = vadd.f32 0.0, %v6629
        %v6631 = vpop.f32.mrf.mxu0
        %v6632 = vpop.f32.mrf.mxu0
        %v6633 = vadd.f32 0.0, %v6632
        %v6634 = vpop.f32.mrf.mxu0
        %6635 = vdwg.mxu0
        %v6636 = vadd.f32 %v5849, %v6574
        %v6637 = vadd.f32 %v5850, %v6577
        %v6638 = vadd.f32 %v5851, %v6582
        %v6639 = vadd.f32 %v5852, %v6585
        %v6640 = vadd.f32 %v5853, %v6590
        %v6641 = vadd.f32 %v5854, %v6593
        %v6642 = vadd.f32 %v5855, %v6598
        %v6643 = vadd.f32 %v5856, %v6601
        %v6644 = vadd.f32 %v5857, %v6606
        %v6645 = vadd.f32 %v5858, %v6609
        %v6646 = vadd.f32 %v5859, %v6614
        %v6647 = vadd.f32 %v5860, %v6617
        %v6648 = vadd.f32 %v5861, %v6622
        %v6649 = vadd.f32 %v5862, %v6625
        %v6650 = vadd.f32 %v5863, %v6630
        %v6651 = vadd.f32 %v5864, %v6633
        %6652 = vrot.lane.b32.xlu0 %v3415, 64
        %v6653 = vpop.permute.xlu0 %6652
        %6654 = vrot.lane.b32.xlu0 %v3416, 64
        %v6655 = vpop.permute.xlu0 %6654
        %6656 = vrot.lane.b32.xlu0 %v3417, 64
        %v6657 = vpop.permute.xlu0 %6656
        %6658 = vrot.lane.b32.xlu0 %v3418, 64
        %v6659 = vpop.permute.xlu0 %6658
        %6660 = vrot.lane.b32.xlu0 %v3419, 64
        %v6661 = vpop.permute.xlu0 %6660
        %6662 = vrot.lane.b32.xlu0 %v3420, 64
        %v6663 = vpop.permute.xlu0 %6662
        %6664 = vrot.lane.b32.xlu0 %v3421, 64
        %v6665 = vpop.permute.xlu0 %6664
        %6666 = vrot.lane.b32.xlu0 %v3422, 64
        %v6667 = vpop.permute.xlu0 %6666
        %6668 = vrot.lane.b32.xlu0 %v3487, 64
        %v6669 = vpop.permute.xlu0 %6668
        %6670 = vrot.lane.b32.xlu0 %v3488, 64
        %v6671 = vpop.permute.xlu0 %6670
        %6672 = vrot.lane.b32.xlu0 %v3489, 64
        %v6673 = vpop.permute.xlu0 %6672
        %6674 = vrot.lane.b32.xlu0 %v3490, 64
        %v6675 = vpop.permute.xlu0 %6674
        %6676 = vrot.lane.b32.xlu0 %v3491, 64
        %v6677 = vpop.permute.xlu0 %6676
        %6678 = vrot.lane.b32.xlu0 %v3492, 64
        %v6679 = vpop.permute.xlu0 %6678
        %6680 = vrot.lane.b32.xlu0 %v3493, 64
        %v6681 = vpop.permute.xlu0 %6680
        %6682 = vrot.lane.b32.xlu0 %v3494, 64
        %v6683 = vpop.permute.xlu0 %6682
        %6684 = vrot.lane.b32.xlu0 %v3495, 64
        %v6685 = vpop.permute.xlu0 %6684
        %6686 = vrot.lane.b32.xlu0 %v3496, 64
        %v6687 = vpop.permute.xlu0 %6686
        %6688 = vrot.lane.b32.xlu0 %v3497, 64
        %v6689 = vpop.permute.xlu0 %6688
        %6690 = vrot.lane.b32.xlu0 %v3498, 64
        %v6691 = vpop.permute.xlu0 %6690
        %6692 = vrot.lane.b32.xlu0 %v3499, 64
        %v6693 = vpop.permute.xlu0 %6692
        %6694 = vrot.lane.b32.xlu0 %v3500, 64
        %v6695 = vpop.permute.xlu0 %6694
        %6696 = vrot.lane.b32.xlu0 %v3501, 64
        %v6697 = vpop.permute.xlu0 %6696
        %6698 = vrot.lane.b32.xlu0 %v3502, 64
        %v6699 = vpop.permute.xlu0 %6698
        %v6701 = vsel %vm3503, %v6653, 0
        %v6704 = vsel %vm3503, %v6655, 0
        %v6707 = vsel %vm3503, %v6657, 0
        %v6710 = vsel %vm3503, %v6659, 0
        %v6713 = vsel %vm3503, %v6661, 0
        %v6716 = vsel %vm3503, %v6663, 0
        %v6719 = vsel %vm3503, %v6665, 0
        %v6722 = vsel %vm3503, %v6667, 0
        %v6725 = vsel %vm3503, %v6669, 0
        %v6728 = vsel %vm3503, %v6671, 0
        %v6731 = vsel %vm3503, %v6673, 0
        %v6734 = vsel %vm3503, %v6675, 0
        %v6737 = vsel %vm3503, %v6677, 0
        %v6740 = vsel %vm3503, %v6679, 0
        %v6743 = vsel %vm3503, %v6681, 0
        %v6746 = vsel %vm3503, %v6683, 0
        %v6749 = vsel %vm3503, %v6685, 0
        %v6752 = vsel %vm3503, %v6687, 0
        %v6755 = vsel %vm3503, %v6689, 0
        %v6758 = vsel %vm3503, %v6691, 0
        %v6761 = vsel %vm3503, %v6693, 0
        %v6764 = vsel %vm3503, %v6695, 0
        %v6767 = vsel %vm3503, %v6697, 0
        %v6770 = vsel %vm3503, %v6699, 0
        %6772 = vmatprep.subr.bf16.mxu0 0
        %6773 = vmatpush1.bf16.xpose.msra.mxu0 %v6746
        %6774 = vmatprep.subr.bf16.mxu0 0
        %6775 = vmatpush1.bf16.xpose.msra.mxu0 %v6743
        %6776 = vmatprep.subr.bf16.mxu0 0
        %6777 = vmatpush1.bf16.xpose.msra.mxu0 %v6740
        %6778 = vmatprep.subr.bf16.mxu0 0
        %6779 = vmatpush1.bf16.xpose.msra.mxu0 %v6737
        %6780 = vmatprep.subr.bf16.mxu0 0
        %6781 = vmatpush1.bf16.xpose.msra.mxu0 %v6734
        %6782 = vmatprep.subr.bf16.mxu0 0
        %6783 = vmatpush1.bf16.xpose.msra.mxu0 %v6731
        %6784 = vmatprep.subr.bf16.mxu0 0
        %6785 = vmatpush1.bf16.xpose.msra.mxu0 %v6728
        %6786 = vmatprep.subr.bf16.mxu0 0
        %6787 = vmatpush1.bf16.xpose.msra.mxu0 %v6725
        %6788 = vmatprep.subr.bf16.mxu0 0
        %6789 = vmatpush2.bf16.xpose.msra.mxu0 %v6770
        %6790 = vmatprep.subr.bf16.mxu0 0
        %6791 = vmatpush2.bf16.xpose.msra.mxu0 %v6767
        %6792 = vmatprep.subr.bf16.mxu0 0
        %6793 = vmatpush2.bf16.xpose.msra.mxu0 %v6764
        %6794 = vmatprep.subr.bf16.mxu0 0
        %6795 = vmatpush2.bf16.xpose.msra.mxu0 %v6761
        %6796 = vmatprep.subr.bf16.mxu0 0
        %6797 = vmatpush2.bf16.xpose.msra.mxu0 %v6758
        %6798 = vmatprep.subr.bf16.mxu0 0
        %6799 = vmatpush2.bf16.xpose.msra.mxu0 %v6755
        %6800 = vmatprep.subr.bf16.mxu0 0
        %6801 = vmatpush2.bf16.xpose.msra.mxu0 %v6752
        %6802 = vmatprep.subr.bf16.mxu0 0
        %6803 = vmatpush2.bf16.xpose.msra.mxu0 %v6749
        %6804 = vmatprep.mubr.bf16.mxu0 0
        %6805 = vmatmul.mubr.bf16.gmra.mxu0 %v6701
        %v6806 = vpop.f32.mrf.mxu0
        %v6807 = vadd.f32 0.0, %v6806
        %v6808 = vpop.f32.mrf.mxu0
        %v6809 = vadd.f32 0.0, %v6808
        %v6810 = vpop.f32.mrf.mxu0
        %v6811 = vadd.f32 0.0, %v6810
        %v6812 = vpop.f32.mrf.mxu0
        %v6813 = vadd.f32 0.0, %v6812
        %6814 = vmatprep.mubr.bf16.mxu0 0
        %6815 = vmatmul.mubr.bf16.gmra.mxu0 %v6704
        %v6816 = vpop.f32.mrf.mxu0
        %v6817 = vadd.f32 0.0, %v6816
        %v6818 = vpop.f32.mrf.mxu0
        %v6819 = vadd.f32 0.0, %v6818
        %v6820 = vpop.f32.mrf.mxu0
        %v6821 = vadd.f32 0.0, %v6820
        %v6822 = vpop.f32.mrf.mxu0
        %v6823 = vadd.f32 0.0, %v6822
        %6824 = vmatprep.mubr.bf16.mxu0 0
        %6825 = vmatmul.mubr.bf16.gmra.mxu0 %v6707
        %v6826 = vpop.f32.mrf.mxu0
        %v6827 = vadd.f32 0.0, %v6826
        %v6828 = vpop.f32.mrf.mxu0
        %v6829 = vadd.f32 0.0, %v6828
        %v6830 = vpop.f32.mrf.mxu0
        %v6831 = vadd.f32 0.0, %v6830
        %v6832 = vpop.f32.mrf.mxu0
        %v6833 = vadd.f32 0.0, %v6832
        %6834 = vmatprep.mubr.bf16.mxu0 0
        %6835 = vmatmul.mubr.bf16.gmra.mxu0 %v6710
        %v6836 = vpop.f32.mrf.mxu0
        %v6837 = vadd.f32 0.0, %v6836
        %v6838 = vpop.f32.mrf.mxu0
        %v6839 = vadd.f32 0.0, %v6838
        %v6840 = vpop.f32.mrf.mxu0
        %v6841 = vadd.f32 0.0, %v6840
        %v6842 = vpop.f32.mrf.mxu0
        %v6843 = vadd.f32 0.0, %v6842
        %6844 = vmatprep.mubr.bf16.mxu0 0
        %6845 = vmatmul.mubr.bf16.gmra.mxu0 %v6713
        %v6846 = vpop.f32.mrf.mxu0
        %v6847 = vadd.f32 0.0, %v6846
        %v6848 = vpop.f32.mrf.mxu0
        %v6849 = vadd.f32 0.0, %v6848
        %v6850 = vpop.f32.mrf.mxu0
        %v6851 = vadd.f32 0.0, %v6850
        %v6852 = vpop.f32.mrf.mxu0
        %v6853 = vadd.f32 0.0, %v6852
        %6854 = vmatprep.mubr.bf16.mxu0 0
        %6855 = vmatmul.mubr.bf16.gmra.mxu0 %v6716
        %v6856 = vpop.f32.mrf.mxu0
        %v6857 = vadd.f32 0.0, %v6856
        %v6858 = vpop.f32.mrf.mxu0
        %v6859 = vadd.f32 0.0, %v6858
        %v6860 = vpop.f32.mrf.mxu0
        %v6861 = vadd.f32 0.0, %v6860
        %v6862 = vpop.f32.mrf.mxu0
        %v6863 = vadd.f32 0.0, %v6862
        %6864 = vmatprep.mubr.bf16.mxu0 0
        %6865 = vmatmul.mubr.bf16.gmra.mxu0 %v6719
        %v6866 = vpop.f32.mrf.mxu0
        %v6867 = vadd.f32 0.0, %v6866
        %v6868 = vpop.f32.mrf.mxu0
        %v6869 = vadd.f32 0.0, %v6868
        %v6870 = vpop.f32.mrf.mxu0
        %v6871 = vadd.f32 0.0, %v6870
        %v6872 = vpop.f32.mrf.mxu0
        %v6873 = vadd.f32 0.0, %v6872
        %6874 = vmatprep.mubr.bf16.mxu0 0
        %6875 = vmatmul.mubr.bf16.gmra.mxu0 %v6722
        %v6876 = vpop.f32.mrf.mxu0
        %v6877 = vadd.f32 0.0, %v6876
        %v6878 = vpop.f32.mrf.mxu0
        %v6879 = vadd.f32 0.0, %v6878
        %v6880 = vpop.f32.mrf.mxu0
        %v6881 = vadd.f32 0.0, %v6880
        %v6882 = vpop.f32.mrf.mxu0
        %v6883 = vadd.f32 0.0, %v6882
        %6884 = vdwg.mxu0
        %v6885 = vmax.f32 %v6807, %v6809
        %6886 = vmax.xlane.f32.xlu0 %v6885
        %v6887 = vpop.xlane.xlu0 %6886
        %v6888 = vmax.f32 %v6811, %v6813
        %6889 = vmax.xlane.f32.xlu0 %v6888
        %v6890 = vpop.xlane.xlu0 %6889
        %v6891 = vmax.f32 %v6817, %v6819
        %6892 = vmax.xlane.f32.xlu0 %v6891
        %v6893 = vpop.xlane.xlu0 %6892
        %v6894 = vmax.f32 %v6821, %v6823
        %6895 = vmax.xlane.f32.xlu0 %v6894
        %v6896 = vpop.xlane.xlu0 %6895
        %v6897 = vmax.f32 %v6827, %v6829
        %6898 = vmax.xlane.f32.xlu0 %v6897
        %v6899 = vpop.xlane.xlu0 %6898
        %v6900 = vmax.f32 %v6831, %v6833
        %6901 = vmax.xlane.f32.xlu0 %v6900
        %v6902 = vpop.xlane.xlu0 %6901
        %v6903 = vmax.f32 %v6837, %v6839
        %6904 = vmax.xlane.f32.xlu0 %v6903
        %v6905 = vpop.xlane.xlu0 %6904
        %v6906 = vmax.f32 %v6841, %v6843
        %6907 = vmax.xlane.f32.xlu0 %v6906
        %v6908 = vpop.xlane.xlu0 %6907
        %v6909 = vmax.f32 %v6847, %v6849
        %6910 = vmax.xlane.f32.xlu0 %v6909
        %v6911 = vpop.xlane.xlu0 %6910
        %v6912 = vmax.f32 %v6851, %v6853
        %6913 = vmax.xlane.f32.xlu0 %v6912
        %v6914 = vpop.xlane.xlu0 %6913
        %v6915 = vmax.f32 %v6857, %v6859
        %6916 = vmax.xlane.f32.xlu0 %v6915
        %v6917 = vpop.xlane.xlu0 %6916
        %v6918 = vmax.f32 %v6861, %v6863
        %6919 = vmax.xlane.f32.xlu0 %v6918
        %v6920 = vpop.xlane.xlu0 %6919
        %v6921 = vmax.f32 %v6867, %v6869
        %6922 = vmax.xlane.f32.xlu0 %v6921
        %v6923 = vpop.xlane.xlu0 %6922
        %v6924 = vmax.f32 %v6871, %v6873
        %6925 = vmax.xlane.f32.xlu0 %v6924
        %v6926 = vpop.xlane.xlu0 %6925
        %v6927 = vmax.f32 %v6877, %v6879
        %6928 = vmax.xlane.f32.xlu0 %v6927
        %v6929 = vpop.xlane.xlu0 %6928
        %v6930 = vmax.f32 %v6881, %v6883
        %6931 = vmax.xlane.f32.xlu0 %v6930
        %v6932 = vpop.xlane.xlu0 %6931
        %v6933 = vsub.f32 %v6807, %v6887
        %v6934 = vsub.f32 %v6809, %v6887
        %v6935 = vsub.f32 %v6811, %v6890
        %v6936 = vsub.f32 %v6813, %v6890
        %v6937 = vsub.f32 %v6817, %v6893
        %v6938 = vsub.f32 %v6819, %v6893
        %v6939 = vsub.f32 %v6821, %v6896
        %v6940 = vsub.f32 %v6823, %v6896
        %v6941 = vsub.f32 %v6827, %v6899
        %v6942 = vsub.f32 %v6829, %v6899
        %v6943 = vsub.f32 %v6831, %v6902
        %v6944 = vsub.f32 %v6833, %v6902
        %v6945 = vsub.f32 %v6837, %v6905
        %v6946 = vsub.f32 %v6839, %v6905
        %v6947 = vsub.f32 %v6841, %v6908
        %v6948 = vsub.f32 %v6843, %v6908
        %v6949 = vsub.f32 %v6847, %v6911
        %v6950 = vsub.f32 %v6849, %v6911
        %v6951 = vsub.f32 %v6851, %v6914
        %v6952 = vsub.f32 %v6853, %v6914
        %v6953 = vsub.f32 %v6857, %v6917
        %v6954 = vsub.f32 %v6859, %v6917
        %v6955 = vsub.f32 %v6861, %v6920
        %v6956 = vsub.f32 %v6863, %v6920
        %v6957 = vsub.f32 %v6867, %v6923
        %v6958 = vsub.f32 %v6869, %v6923
        %v6959 = vsub.f32 %v6871, %v6926
        %v6960 = vsub.f32 %v6873, %v6926
        %v6961 = vsub.f32 %v6877, %v6929
        %v6962 = vsub.f32 %v6879, %v6929
        %v6963 = vsub.f32 %v6881, %v6932
        %v6964 = vsub.f32 %v6883, %v6932
        %v6965 = vmul.f32 %v6933, 1.442695
        %v6966 = vpow.pop %v6965
        %v6967 = vmul.f32 %v6934, 1.442695
        %v6968 = vpow.pop %v6967
        %v6969 = vmul.f32 %v6935, 1.442695
        %v6970 = vpow.pop %v6969
        %v6971 = vmul.f32 %v6936, 1.442695
        %v6972 = vpow.pop %v6971
        %v6973 = vmul.f32 %v6937, 1.442695
        %v6974 = vpow.pop %v6973
        %v6975 = vmul.f32 %v6938, 1.442695
        %v6976 = vpow.pop %v6975
        %v6977 = vmul.f32 %v6939, 1.442695
        %v6978 = vpow.pop %v6977
        %v6979 = vmul.f32 %v6940, 1.442695
        %v6980 = vpow.pop %v6979
        %v6981 = vmul.f32 %v6941, 1.442695
        %v6982 = vpow.pop %v6981
        %v6983 = vmul.f32 %v6942, 1.442695
        %v6984 = vpow.pop %v6983
        %v6985 = vmul.f32 %v6943, 1.442695
        %v6986 = vpow.pop %v6985
        %v6987 = vmul.f32 %v6944, 1.442695
        %v6988 = vpow.pop %v6987
        %v6989 = vmul.f32 %v6945, 1.442695
        %v6990 = vpow.pop %v6989
        %v6991 = vmul.f32 %v6946, 1.442695
        %v6992 = vpow.pop %v6991
        %v6993 = vmul.f32 %v6947, 1.442695
        %v6994 = vpow.pop %v6993
        %v6995 = vmul.f32 %v6948, 1.442695
        %v6996 = vpow.pop %v6995
        %v6997 = vmul.f32 %v6949, 1.442695
        %v6998 = vpow.pop %v6997
        %v6999 = vmul.f32 %v6950, 1.442695
        %v7000 = vpow.pop %v6999
        %v7001 = vmul.f32 %v6951, 1.442695
        %v7002 = vpow.pop %v7001
        %v7003 = vmul.f32 %v6952, 1.442695
        %v7004 = vpow.pop %v7003
        %v7005 = vmul.f32 %v6953, 1.442695
        %v7006 = vpow.pop %v7005
        %v7007 = vmul.f32 %v6954, 1.442695
        %v7008 = vpow.pop %v7007
        %v7009 = vmul.f32 %v6955, 1.442695
        %v7010 = vpow.pop %v7009
        %v7011 = vmul.f32 %v6956, 1.442695
        %v7012 = vpow.pop %v7011
        %v7013 = vmul.f32 %v6957, 1.442695
        %v7014 = vpow.pop %v7013
        %v7015 = vmul.f32 %v6958, 1.442695
        %v7016 = vpow.pop %v7015
        %v7017 = vmul.f32 %v6959, 1.442695
        %v7018 = vpow.pop %v7017
        %v7019 = vmul.f32 %v6960, 1.442695
        %v7020 = vpow.pop %v7019
        %v7021 = vmul.f32 %v6961, 1.442695
        %v7022 = vpow.pop %v7021
        %v7023 = vmul.f32 %v6962, 1.442695
        %v7024 = vpow.pop %v7023
        %v7025 = vmul.f32 %v6963, 1.442695
        %v7026 = vpow.pop %v7025
        %v7027 = vmul.f32 %v6964, 1.442695
        %v7028 = vpow.pop %v7027
        %v7029 = vadd.f32 %v6966, %v6968
        %7030 = vadd.xlane.f32.xlu0 %v7029
        %v7031 = vpop.xlane.xlu0 %7030
        %v7032 = vadd.f32 %v6970, %v6972
        %7033 = vadd.xlane.f32.xlu0 %v7032
        %v7034 = vpop.xlane.xlu0 %7033
        %v7035 = vadd.f32 %v6974, %v6976
        %7036 = vadd.xlane.f32.xlu0 %v7035
        %v7037 = vpop.xlane.xlu0 %7036
        %v7038 = vadd.f32 %v6978, %v6980
        %7039 = vadd.xlane.f32.xlu0 %v7038
        %v7040 = vpop.xlane.xlu0 %7039
        %v7041 = vadd.f32 %v6982, %v6984
        %7042 = vadd.xlane.f32.xlu0 %v7041
        %v7043 = vpop.xlane.xlu0 %7042
        %v7044 = vadd.f32 %v6986, %v6988
        %7045 = vadd.xlane.f32.xlu0 %v7044
        %v7046 = vpop.xlane.xlu0 %7045
        %v7047 = vadd.f32 %v6990, %v6992
        %7048 = vadd.xlane.f32.xlu0 %v7047
        %v7049 = vpop.xlane.xlu0 %7048
        %v7050 = vadd.f32 %v6994, %v6996
        %7051 = vadd.xlane.f32.xlu0 %v7050
        %v7052 = vpop.xlane.xlu0 %7051
        %v7053 = vadd.f32 %v6998, %v7000
        %7054 = vadd.xlane.f32.xlu0 %v7053
        %v7055 = vpop.xlane.xlu0 %7054
        %v7056 = vadd.f32 %v7002, %v7004
        %7057 = vadd.xlane.f32.xlu0 %v7056
        %v7058 = vpop.xlane.xlu0 %7057
        %v7059 = vadd.f32 %v7006, %v7008
        %7060 = vadd.xlane.f32.xlu0 %v7059
        %v7061 = vpop.xlane.xlu0 %7060
        %v7062 = vadd.f32 %v7010, %v7012
        %7063 = vadd.xlane.f32.xlu0 %v7062
        %v7064 = vpop.xlane.xlu0 %7063
        %v7065 = vadd.f32 %v7014, %v7016
        %7066 = vadd.xlane.f32.xlu0 %v7065
        %v7067 = vpop.xlane.xlu0 %7066
        %v7068 = vadd.f32 %v7018, %v7020
        %7069 = vadd.xlane.f32.xlu0 %v7068
        %v7070 = vpop.xlane.xlu0 %7069
        %v7071 = vadd.f32 %v7022, %v7024
        %7072 = vadd.xlane.f32.xlu0 %v7071
        %v7073 = vpop.xlane.xlu0 %7072
        %v7074 = vadd.f32 %v7026, %v7028
        %7075 = vadd.xlane.f32.xlu0 %v7074
        %v7076 = vpop.xlane.xlu0 %7075
        %v7077 = vrcp.pop %v7031
        %v7078 = vrcp.pop %v7034
        %v7079 = vrcp.pop %v7037
        %v7080 = vrcp.pop %v7040
        %v7081 = vrcp.pop %v7043
        %v7082 = vrcp.pop %v7046
        %v7083 = vrcp.pop %v7049
        %v7084 = vrcp.pop %v7052
        %v7085 = vrcp.pop %v7055
        %v7086 = vrcp.pop %v7058
        %v7087 = vrcp.pop %v7061
        %v7088 = vrcp.pop %v7064
        %v7089 = vrcp.pop %v7067
        %v7090 = vrcp.pop %v7070
        %v7091 = vrcp.pop %v7073
        %v7092 = vrcp.pop %v7076
        %v7093 = vmul.f32 %v6966, %v7077
        %v7094 = vmul.f32 %v6968, %v7077
        %v7095 = vmul.f32 %v6970, %v7078
        %v7096 = vmul.f32 %v6972, %v7078
        %v7097 = vmul.f32 %v6974, %v7079
        %v7098 = vmul.f32 %v6976, %v7079
        %v7099 = vmul.f32 %v6978, %v7080
        %v7100 = vmul.f32 %v6980, %v7080
        %v7101 = vmul.f32 %v6982, %v7081
        %v7102 = vmul.f32 %v6984, %v7081
        %v7103 = vmul.f32 %v6986, %v7082
        %v7104 = vmul.f32 %v6988, %v7082
        %v7105 = vmul.f32 %v6990, %v7083
        %v7106 = vmul.f32 %v6992, %v7083
        %v7107 = vmul.f32 %v6994, %v7084
        %v7108 = vmul.f32 %v6996, %v7084
        %v7109 = vmul.f32 %v6998, %v7085
        %v7110 = vmul.f32 %v7000, %v7085
        %v7111 = vmul.f32 %v7002, %v7086
        %v7112 = vmul.f32 %v7004, %v7086
        %v7113 = vmul.f32 %v7006, %v7087
        %v7114 = vmul.f32 %v7008, %v7087
        %v7115 = vmul.f32 %v7010, %v7088
        %v7116 = vmul.f32 %v7012, %v7088
        %v7117 = vmul.f32 %v7014, %v7089
        %v7118 = vmul.f32 %v7016, %v7089
        %v7119 = vmul.f32 %v7018, %v7090
        %v7120 = vmul.f32 %v7020, %v7090
        %v7121 = vmul.f32 %v7022, %v7091
        %v7122 = vmul.f32 %v7024, %v7091
        %v7123 = vmul.f32 %v7026, %v7092
        %v7124 = vmul.f32 %v7028, %v7092
        %v7125 = vpack.c.bf16 %v7095, %v7093
        %v7126 = vpack.c.bf16 %v7096, %v7094
        %v7127 = vpack.c.bf16 %v7099, %v7097
        %v7128 = vpack.c.bf16 %v7100, %v7098
        %v7129 = vpack.c.bf16 %v7103, %v7101
        %v7130 = vpack.c.bf16 %v7104, %v7102
        %v7131 = vpack.c.bf16 %v7107, %v7105
        %v7132 = vpack.c.bf16 %v7108, %v7106
        %v7133 = vpack.c.bf16 %v7111, %v7109
        %v7134 = vpack.c.bf16 %v7112, %v7110
        %v7135 = vpack.c.bf16 %v7115, %v7113
        %v7136 = vpack.c.bf16 %v7116, %v7114
        %v7137 = vpack.c.bf16 %v7119, %v7117
        %v7138 = vpack.c.bf16 %v7120, %v7118
        %v7139 = vpack.c.bf16 %v7123, %v7121
        %v7140 = vpack.c.bf16 %v7124, %v7122
        %7141 = vrot.lane.b32.xlu0 %v4009, 64
        %v7142 = vpop.permute.xlu0 %7141
        %7143 = vrot.lane.b32.xlu0 %v4010, 64
        %v7144 = vpop.permute.xlu0 %7143
        %7145 = vrot.lane.b32.xlu0 %v4011, 64
        %v7146 = vpop.permute.xlu0 %7145
        %7147 = vrot.lane.b32.xlu0 %v4012, 64
        %v7148 = vpop.permute.xlu0 %7147
        %7149 = vrot.lane.b32.xlu0 %v4013, 64
        %v7150 = vpop.permute.xlu0 %7149
        %7151 = vrot.lane.b32.xlu0 %v4014, 64
        %v7152 = vpop.permute.xlu0 %7151
        %7153 = vrot.lane.b32.xlu0 %v4015, 64
        %v7154 = vpop.permute.xlu0 %7153
        %7155 = vrot.lane.b32.xlu0 %v4016, 64
        %v7156 = vpop.permute.xlu0 %7155
        %7157 = vrot.lane.b32.xlu0 %v4017, 64
        %v7158 = vpop.permute.xlu0 %7157
        %7159 = vrot.lane.b32.xlu0 %v4018, 64
        %v7160 = vpop.permute.xlu0 %7159
        %7161 = vrot.lane.b32.xlu0 %v4019, 64
        %v7162 = vpop.permute.xlu0 %7161
        %7163 = vrot.lane.b32.xlu0 %v4020, 64
        %v7164 = vpop.permute.xlu0 %7163
        %7165 = vrot.lane.b32.xlu0 %v4021, 64
        %v7166 = vpop.permute.xlu0 %7165
        %7167 = vrot.lane.b32.xlu0 %v4022, 64
        %v7168 = vpop.permute.xlu0 %7167
        %7169 = vrot.lane.b32.xlu0 %v4023, 64
        %v7170 = vpop.permute.xlu0 %7169
        %7171 = vrot.lane.b32.xlu0 %v4024, 64
        %v7172 = vpop.permute.xlu0 %7171
        %7189 = vmatprep.subr.bf16.mxu0 0
        %7190 = vmatpush1.bf16.msra.mxu0 %v7156
        %7191 = vmatprep.subr.bf16.mxu0 0
        %7192 = vmatpush1.bf16.msra.mxu0 %v7154
        %7193 = vmatprep.subr.bf16.mxu0 0
        %7194 = vmatpush1.bf16.msra.mxu0 %v7152
        %7195 = vmatprep.subr.bf16.mxu0 0
        %7196 = vmatpush1.bf16.msra.mxu0 %v7150
        %7197 = vmatprep.subr.bf16.mxu0 0
        %7198 = vmatpush1.bf16.msra.mxu0 %v7148
        %7199 = vmatprep.subr.bf16.mxu0 0
        %7200 = vmatpush1.bf16.msra.mxu0 %v7146
        %7201 = vmatprep.subr.bf16.mxu0 0
        %7202 = vmatpush1.bf16.msra.mxu0 %v7144
        %7203 = vmatprep.subr.bf16.mxu0 0
        %7204 = vmatpush1.bf16.msra.mxu0 %v7142
        %7205 = vmatprep.subr.bf16.mxu0 0
        %7206 = vmatpush2.bf16.msra.mxu0 %v7172
        %7207 = vmatprep.subr.bf16.mxu0 0
        %7208 = vmatpush2.bf16.msra.mxu0 %v7170
        %7209 = vmatprep.subr.bf16.mxu0 0
        %7210 = vmatpush2.bf16.msra.mxu0 %v7168
        %7211 = vmatprep.subr.bf16.mxu0 0
        %7212 = vmatpush2.bf16.msra.mxu0 %v7166
        %7213 = vmatprep.subr.bf16.mxu0 0
        %7214 = vmatpush2.bf16.msra.mxu0 %v7164
        %7215 = vmatprep.subr.bf16.mxu0 0
        %7216 = vmatpush2.bf16.msra.mxu0 %v7162
        %7217 = vmatprep.subr.bf16.mxu0 0
        %7218 = vmatpush2.bf16.msra.mxu0 %v7160
        %7219 = vmatprep.subr.bf16.mxu0 0
        %7220 = vmatpush2.bf16.msra.mxu0 %v7158
        %7221 = vmatprep.mubr.bf16.mxu0 %v7126
        %7222 = vmatmul.mubr.bf16.gmra.mxu0 %v7125
        %v7223 = vpop.f32.mrf.mxu0
        %v7224 = vadd.f32 0.0, %v7223
        %v7225 = vpop.f32.mrf.mxu0
        %v7226 = vpop.f32.mrf.mxu0
        %v7227 = vadd.f32 0.0, %v7226
        %v7228 = vpop.f32.mrf.mxu0
        %7229 = vmatprep.mubr.bf16.mxu0 %v7128
        %7230 = vmatmul.mubr.bf16.gmra.mxu0 %v7127
        %v7231 = vpop.f32.mrf.mxu0
        %v7232 = vadd.f32 0.0, %v7231
        %v7233 = vpop.f32.mrf.mxu0
        %v7234 = vpop.f32.mrf.mxu0
        %v7235 = vadd.f32 0.0, %v7234
        %v7236 = vpop.f32.mrf.mxu0
        %7237 = vmatprep.mubr.bf16.mxu0 %v7130
        %7238 = vmatmul.mubr.bf16.gmra.mxu0 %v7129
        %v7239 = vpop.f32.mrf.mxu0
        %v7240 = vadd.f32 0.0, %v7239
        %v7241 = vpop.f32.mrf.mxu0
        %v7242 = vpop.f32.mrf.mxu0
        %v7243 = vadd.f32 0.0, %v7242
        %v7244 = vpop.f32.mrf.mxu0
        %7245 = vmatprep.mubr.bf16.mxu0 %v7132
        %7246 = vmatmul.mubr.bf16.gmra.mxu0 %v7131
        %v7247 = vpop.f32.mrf.mxu0
        %v7248 = vadd.f32 0.0, %v7247
        %v7249 = vpop.f32.mrf.mxu0
        %v7250 = vpop.f32.mrf.mxu0
        %v7251 = vadd.f32 0.0, %v7250
        %v7252 = vpop.f32.mrf.mxu0
        %7253 = vmatprep.mubr.bf16.mxu0 %v7134
        %7254 = vmatmul.mubr.bf16.gmra.mxu0 %v7133
        %v7255 = vpop.f32.mrf.mxu0
        %v7256 = vadd.f32 0.0, %v7255
        %v7257 = vpop.f32.mrf.mxu0
        %v7258 = vpop.f32.mrf.mxu0
        %v7259 = vadd.f32 0.0, %v7258
        %v7260 = vpop.f32.mrf.mxu0
        %7261 = vmatprep.mubr.bf16.mxu0 %v7136
        %7262 = vmatmul.mubr.bf16.gmra.mxu0 %v7135
        %v7263 = vpop.f32.mrf.mxu0
        %v7264 = vadd.f32 0.0, %v7263
        %v7265 = vpop.f32.mrf.mxu0
        %v7266 = vpop.f32.mrf.mxu0
        %v7267 = vadd.f32 0.0, %v7266
        %v7268 = vpop.f32.mrf.mxu0
        %7269 = vmatprep.mubr.bf16.mxu0 %v7138
        %7270 = vmatmul.mubr.bf16.gmra.mxu0 %v7137
        %v7271 = vpop.f32.mrf.mxu0
        %v7272 = vadd.f32 0.0, %v7271
        %v7273 = vpop.f32.mrf.mxu0
        %v7274 = vpop.f32.mrf.mxu0
        %v7275 = vadd.f32 0.0, %v7274
        %v7276 = vpop.f32.mrf.mxu0
        %7277 = vmatprep.mubr.bf16.mxu0 %v7140
        %7278 = vmatmul.mubr.bf16.gmra.mxu0 %v7139
        %v7279 = vpop.f32.mrf.mxu0
        %v7280 = vadd.f32 0.0, %v7279
        %v7281 = vpop.f32.mrf.mxu0
        %v7282 = vpop.f32.mrf.mxu0
        %v7283 = vadd.f32 0.0, %v7282
        %v7284 = vpop.f32.mrf.mxu0
        %7285 = vdwg.mxu0
        %v7286 = vpack.c.bf16 %v7227, %v7224
        %v7287 = vpack.c.bf16 %v7235, %v7232
        %v7288 = vpack.c.bf16 %v7243, %v7240
        %v7289 = vpack.c.bf16 %v7251, %v7248
        %v7290 = vpack.c.bf16 %v7259, %v7256
        %v7291 = vpack.c.bf16 %v7267, %v7264
        %v7292 = vpack.c.bf16 %v7275, %v7272
        %v7293 = vpack.c.bf16 %v7283, %v7280
        %v7294 = vld [vmem:[#allocation11 + $0x20] sm:$0xf]
        %v7295 = vld [vmem:[#allocation11 + $0x24] sm:$0xf]
        %v7298 = vunpack.c.l.b16 %v7294
        %v7299 = vunpack.c.l.b16 %v7295
        %v7300 = vpack.c.b16 %v7299, %v7298
        %v7303 = vsel %vm3503, %v7286, 0
        %v7306 = vsel %vm3503, %v7287, 0
        %v7309 = vsel %vm3503, %v7288, 0
        %v7312 = vsel %vm3503, %v7289, 0
        %v7315 = vsel %vm3503, %v7290, 0
        %v7318 = vsel %vm3503, %v7291, 0
        %v7321 = vsel %vm3503, %v7292, 0
        %v7324 = vsel %vm3503, %v7293, 0
        %7326 = vmatprep.subr.bf16.mxu0 0
        %7327 = vmatpush1.bf16.msra.mxu0 0
        %7328 = vmatprep.subr.bf16.mxu0 0
        %7329 = vmatpush1.bf16.msra.mxu0 0
        %7330 = vmatprep.subr.bf16.mxu0 0
        %7331 = vmatpush1.bf16.msra.mxu0 0
        %7332 = vmatprep.subr.bf16.mxu0 0
        %7333 = vmatpush1.bf16.msra.mxu0 0
        %7334 = vmatprep.subr.bf16.mxu0 0
        %7335 = vmatpush1.bf16.msra.mxu0 0
        %7336 = vmatprep.subr.bf16.mxu0 0
        %7337 = vmatpush1.bf16.msra.mxu0 0
        %7338 = vmatprep.subr.bf16.mxu0 0
        %7339 = vmatpush1.bf16.msra.mxu0 0
        %7340 = vmatprep.subr.bf16.mxu0 0
        %7341 = vmatpush1.bf16.msra.mxu0 %v7300
        %7342 = vmatprep.subr.bf16.mxu0 0
        %7343 = vmatpush2.bf16.msra.mxu0 0
        %7344 = vmatprep.subr.bf16.mxu0 0
        %7345 = vmatpush2.bf16.msra.mxu0 0
        %7346 = vmatprep.subr.bf16.mxu0 0
        %7347 = vmatpush2.bf16.msra.mxu0 0
        %7348 = vmatprep.subr.bf16.mxu0 0
        %7349 = vmatpush2.bf16.msra.mxu0 0
        %7350 = vmatprep.subr.bf16.mxu0 0
        %7351 = vmatpush2.bf16.msra.mxu0 0
        %7352 = vmatprep.subr.bf16.mxu0 0
        %7353 = vmatpush2.bf16.msra.mxu0 0
        %7354 = vmatprep.subr.bf16.mxu0 0
        %7355 = vmatpush2.bf16.msra.mxu0 0
        %7356 = vmatprep.subr.bf16.mxu0 0
        %7357 = vmatpush2.bf16.msra.mxu0 0
        %7358 = vmatprep.mubr.bf16.mxu0 0
        %7359 = vmatmul.mubr.bf16.gmra.mxu0 %v7303
        %v7360 = vpop.f32.mrf.mxu0
        %v7361 = vadd.f32 0.0, %v7360
        %v7362 = vpop.f32.mrf.mxu0
        %v7363 = vpop.f32.mrf.mxu0
        %v7364 = vadd.f32 0.0, %v7363
        %v7365 = vpop.f32.mrf.mxu0
        %7366 = vmatprep.mubr.bf16.mxu0 0
        %7367 = vmatmul.mubr.bf16.gmra.mxu0 %v7306
        %v7368 = vpop.f32.mrf.mxu0
        %v7369 = vadd.f32 0.0, %v7368
        %v7370 = vpop.f32.mrf.mxu0
        %v7371 = vpop.f32.mrf.mxu0
        %v7372 = vadd.f32 0.0, %v7371
        %v7373 = vpop.f32.mrf.mxu0
        %7374 = vmatprep.mubr.bf16.mxu0 0
        %7375 = vmatmul.mubr.bf16.gmra.mxu0 %v7309
        %v7376 = vpop.f32.mrf.mxu0
        %v7377 = vadd.f32 0.0, %v7376
        %v7378 = vpop.f32.mrf.mxu0
        %v7379 = vpop.f32.mrf.mxu0
        %v7380 = vadd.f32 0.0, %v7379
        %v7381 = vpop.f32.mrf.mxu0
        %7382 = vmatprep.mubr.bf16.mxu0 0
        %7383 = vmatmul.mubr.bf16.gmra.mxu0 %v7312
        %v7384 = vpop.f32.mrf.mxu0
        %v7385 = vadd.f32 0.0, %v7384
        %v7386 = vpop.f32.mrf.mxu0
        %v7387 = vpop.f32.mrf.mxu0
        %v7388 = vadd.f32 0.0, %v7387
        %v7389 = vpop.f32.mrf.mxu0
        %7390 = vmatprep.mubr.bf16.mxu0 0
        %7391 = vmatmul.mubr.bf16.gmra.mxu0 %v7315
        %v7392 = vpop.f32.mrf.mxu0
        %v7393 = vadd.f32 0.0, %v7392
        %v7394 = vpop.f32.mrf.mxu0
        %v7395 = vpop.f32.mrf.mxu0
        %v7396 = vadd.f32 0.0, %v7395
        %v7397 = vpop.f32.mrf.mxu0
        %7398 = vmatprep.mubr.bf16.mxu0 0
        %7399 = vmatmul.mubr.bf16.gmra.mxu0 %v7318
        %v7400 = vpop.f32.mrf.mxu0
        %v7401 = vadd.f32 0.0, %v7400
        %v7402 = vpop.f32.mrf.mxu0
        %v7403 = vpop.f32.mrf.mxu0
        %v7404 = vadd.f32 0.0, %v7403
        %v7405 = vpop.f32.mrf.mxu0
        %7406 = vmatprep.mubr.bf16.mxu0 0
        %7407 = vmatmul.mubr.bf16.gmra.mxu0 %v7321
        %v7408 = vpop.f32.mrf.mxu0
        %v7409 = vadd.f32 0.0, %v7408
        %v7410 = vpop.f32.mrf.mxu0
        %v7411 = vpop.f32.mrf.mxu0
        %v7412 = vadd.f32 0.0, %v7411
        %v7413 = vpop.f32.mrf.mxu0
        %7414 = vmatprep.mubr.bf16.mxu0 0
        %7415 = vmatmul.mubr.bf16.gmra.mxu0 %v7324
        %v7416 = vpop.f32.mrf.mxu0
        %v7417 = vadd.f32 0.0, %v7416
        %v7418 = vpop.f32.mrf.mxu0
        %v7419 = vpop.f32.mrf.mxu0
        %v7420 = vadd.f32 0.0, %v7419
        %v7421 = vpop.f32.mrf.mxu0
        %7422 = vdwg.mxu0
        %v7423 = vadd.f32 %v6636, %v7361
        %v7424 = vadd.f32 %v6637, %v7364
        %v7425 = vadd.f32 %v6638, %v7369
        %v7426 = vadd.f32 %v6639, %v7372
        %v7427 = vadd.f32 %v6640, %v7377
        %v7428 = vadd.f32 %v6641, %v7380
        %v7429 = vadd.f32 %v6642, %v7385
        %v7430 = vadd.f32 %v6643, %v7388
        %v7431 = vadd.f32 %v6644, %v7393
        %v7432 = vadd.f32 %v6645, %v7396
        %v7433 = vadd.f32 %v6646, %v7401
        %v7434 = vadd.f32 %v6647, %v7404
        %v7435 = vadd.f32 %v6648, %v7409
        %v7436 = vadd.f32 %v6649, %v7412
        %v7437 = vadd.f32 %v6650, %v7417
        %v7438 = vadd.f32 %v6651, %v7420
        %7439 = vrot.lane.b32.xlu0 %v3415, 48
        %v7440 = vpop.permute.xlu0 %7439
        %7441 = vrot.lane.b32.xlu0 %v3416, 48
        %v7442 = vpop.permute.xlu0 %7441
        %7443 = vrot.lane.b32.xlu0 %v3417, 48
        %v7444 = vpop.permute.xlu0 %7443
        %7445 = vrot.lane.b32.xlu0 %v3418, 48
        %v7446 = vpop.permute.xlu0 %7445
        %7447 = vrot.lane.b32.xlu0 %v3419, 48
        %v7448 = vpop.permute.xlu0 %7447
        %7449 = vrot.lane.b32.xlu0 %v3420, 48
        %v7450 = vpop.permute.xlu0 %7449
        %7451 = vrot.lane.b32.xlu0 %v3421, 48
        %v7452 = vpop.permute.xlu0 %7451
        %7453 = vrot.lane.b32.xlu0 %v3422, 48
        %v7454 = vpop.permute.xlu0 %7453
        %7455 = vrot.lane.b32.xlu0 %v3487, 48
        %v7456 = vpop.permute.xlu0 %7455
        %7457 = vrot.lane.b32.xlu0 %v3488, 48
        %v7458 = vpop.permute.xlu0 %7457
        %7459 = vrot.lane.b32.xlu0 %v3489, 48
        %v7460 = vpop.permute.xlu0 %7459
        %7461 = vrot.lane.b32.xlu0 %v3490, 48
        %v7462 = vpop.permute.xlu0 %7461
        %7463 = vrot.lane.b32.xlu0 %v3491, 48
        %v7464 = vpop.permute.xlu0 %7463
        %7465 = vrot.lane.b32.xlu0 %v3492, 48
        %v7466 = vpop.permute.xlu0 %7465
        %7467 = vrot.lane.b32.xlu0 %v3493, 48
        %v7468 = vpop.permute.xlu0 %7467
        %7469 = vrot.lane.b32.xlu0 %v3494, 48
        %v7470 = vpop.permute.xlu0 %7469
        %7471 = vrot.lane.b32.xlu0 %v3495, 48
        %v7472 = vpop.permute.xlu0 %7471
        %7473 = vrot.lane.b32.xlu0 %v3496, 48
        %v7474 = vpop.permute.xlu0 %7473
        %7475 = vrot.lane.b32.xlu0 %v3497, 48
        %v7476 = vpop.permute.xlu0 %7475
        %7477 = vrot.lane.b32.xlu0 %v3498, 48
        %v7478 = vpop.permute.xlu0 %7477
        %7479 = vrot.lane.b32.xlu0 %v3499, 48
        %v7480 = vpop.permute.xlu0 %7479
        %7481 = vrot.lane.b32.xlu0 %v3500, 48
        %v7482 = vpop.permute.xlu0 %7481
        %7483 = vrot.lane.b32.xlu0 %v3501, 48
        %v7484 = vpop.permute.xlu0 %7483
        %7485 = vrot.lane.b32.xlu0 %v3502, 48
        %v7486 = vpop.permute.xlu0 %7485
        %v7488 = vsel %vm3503, %v7440, 0
        %v7491 = vsel %vm3503, %v7442, 0
        %v7494 = vsel %vm3503, %v7444, 0
        %v7497 = vsel %vm3503, %v7446, 0
        %v7500 = vsel %vm3503, %v7448, 0
        %v7503 = vsel %vm3503, %v7450, 0
        %v7506 = vsel %vm3503, %v7452, 0
        %v7509 = vsel %vm3503, %v7454, 0
        %v7512 = vsel %vm3503, %v7456, 0
        %v7515 = vsel %vm3503, %v7458, 0
        %v7518 = vsel %vm3503, %v7460, 0
        %v7521 = vsel %vm3503, %v7462, 0
        %v7524 = vsel %vm3503, %v7464, 0
        %v7527 = vsel %vm3503, %v7466, 0
        %v7530 = vsel %vm3503, %v7468, 0
        %v7533 = vsel %vm3503, %v7470, 0
        %v7536 = vsel %vm3503, %v7472, 0
        %v7539 = vsel %vm3503, %v7474, 0
        %v7542 = vsel %vm3503, %v7476, 0
        %v7545 = vsel %vm3503, %v7478, 0
        %v7548 = vsel %vm3503, %v7480, 0
        %v7551 = vsel %vm3503, %v7482, 0
        %v7554 = vsel %vm3503, %v7484, 0
        %v7557 = vsel %vm3503, %v7486, 0
        %7559 = vmatprep.subr.bf16.mxu0 0
        %7560 = vmatpush1.bf16.xpose.msra.mxu0 %v7533
        %7561 = vmatprep.subr.bf16.mxu0 0
        %7562 = vmatpush1.bf16.xpose.msra.mxu0 %v7530
        %7563 = vmatprep.subr.bf16.mxu0 0
        %7564 = vmatpush1.bf16.xpose.msra.mxu0 %v7527
        %7565 = vmatprep.subr.bf16.mxu0 0
        %7566 = vmatpush1.bf16.xpose.msra.mxu0 %v7524
        %7567 = vmatprep.subr.bf16.mxu0 0
        %7568 = vmatpush1.bf16.xpose.msra.mxu0 %v7521
        %7569 = vmatprep.subr.bf16.mxu0 0
        %7570 = vmatpush1.bf16.xpose.msra.mxu0 %v7518
        %7571 = vmatprep.subr.bf16.mxu0 0
        %7572 = vmatpush1.bf16.xpose.msra.mxu0 %v7515
        %7573 = vmatprep.subr.bf16.mxu0 0
        %7574 = vmatpush1.bf16.xpose.msra.mxu0 %v7512
        %7575 = vmatprep.subr.bf16.mxu0 0
        %7576 = vmatpush2.bf16.xpose.msra.mxu0 %v7557
        %7577 = vmatprep.subr.bf16.mxu0 0
        %7578 = vmatpush2.bf16.xpose.msra.mxu0 %v7554
        %7579 = vmatprep.subr.bf16.mxu0 0
        %7580 = vmatpush2.bf16.xpose.msra.mxu0 %v7551
        %7581 = vmatprep.subr.bf16.mxu0 0
        %7582 = vmatpush2.bf16.xpose.msra.mxu0 %v7548
        %7583 = vmatprep.subr.bf16.mxu0 0
        %7584 = vmatpush2.bf16.xpose.msra.mxu0 %v7545
        %7585 = vmatprep.subr.bf16.mxu0 0
        %7586 = vmatpush2.bf16.xpose.msra.mxu0 %v7542
        %7587 = vmatprep.subr.bf16.mxu0 0
        %7588 = vmatpush2.bf16.xpose.msra.mxu0 %v7539
        %7589 = vmatprep.subr.bf16.mxu0 0
        %7590 = vmatpush2.bf16.xpose.msra.mxu0 %v7536
        %7591 = vmatprep.mubr.bf16.mxu0 0
        %7592 = vmatmul.mubr.bf16.gmra.mxu0 %v7488
        %v7593 = vpop.f32.mrf.mxu0
        %v7594 = vadd.f32 0.0, %v7593
        %v7595 = vpop.f32.mrf.mxu0
        %v7596 = vadd.f32 0.0, %v7595
        %v7597 = vpop.f32.mrf.mxu0
        %v7598 = vadd.f32 0.0, %v7597
        %v7599 = vpop.f32.mrf.mxu0
        %v7600 = vadd.f32 0.0, %v7599
        %7601 = vmatprep.mubr.bf16.mxu0 0
        %7602 = vmatmul.mubr.bf16.gmra.mxu0 %v7491
        %v7603 = vpop.f32.mrf.mxu0
        %v7604 = vadd.f32 0.0, %v7603
        %v7605 = vpop.f32.mrf.mxu0
        %v7606 = vadd.f32 0.0, %v7605
        %v7607 = vpop.f32.mrf.mxu0
        %v7608 = vadd.f32 0.0, %v7607
        %v7609 = vpop.f32.mrf.mxu0
        %v7610 = vadd.f32 0.0, %v7609
        %7611 = vmatprep.mubr.bf16.mxu0 0
        %7612 = vmatmul.mubr.bf16.gmra.mxu0 %v7494
        %v7613 = vpop.f32.mrf.mxu0
        %v7614 = vadd.f32 0.0, %v7613
        %v7615 = vpop.f32.mrf.mxu0
        %v7616 = vadd.f32 0.0, %v7615
        %v7617 = vpop.f32.mrf.mxu0
        %v7618 = vadd.f32 0.0, %v7617
        %v7619 = vpop.f32.mrf.mxu0
        %v7620 = vadd.f32 0.0, %v7619
        %7621 = vmatprep.mubr.bf16.mxu0 0
        %7622 = vmatmul.mubr.bf16.gmra.mxu0 %v7497
        %v7623 = vpop.f32.mrf.mxu0
        %v7624 = vadd.f32 0.0, %v7623
        %v7625 = vpop.f32.mrf.mxu0
        %v7626 = vadd.f32 0.0, %v7625
        %v7627 = vpop.f32.mrf.mxu0
        %v7628 = vadd.f32 0.0, %v7627
        %v7629 = vpop.f32.mrf.mxu0
        %v7630 = vadd.f32 0.0, %v7629
        %7631 = vmatprep.mubr.bf16.mxu0 0
        %7632 = vmatmul.mubr.bf16.gmra.mxu0 %v7500
        %v7633 = vpop.f32.mrf.mxu0
        %v7634 = vadd.f32 0.0, %v7633
        %v7635 = vpop.f32.mrf.mxu0
        %v7636 = vadd.f32 0.0, %v7635
        %v7637 = vpop.f32.mrf.mxu0
        %v7638 = vadd.f32 0.0, %v7637
        %v7639 = vpop.f32.mrf.mxu0
        %v7640 = vadd.f32 0.0, %v7639
        %7641 = vmatprep.mubr.bf16.mxu0 0
        %7642 = vmatmul.mubr.bf16.gmra.mxu0 %v7503
        %v7643 = vpop.f32.mrf.mxu0
        %v7644 = vadd.f32 0.0, %v7643
        %v7645 = vpop.f32.mrf.mxu0
        %v7646 = vadd.f32 0.0, %v7645
        %v7647 = vpop.f32.mrf.mxu0
        %v7648 = vadd.f32 0.0, %v7647
        %v7649 = vpop.f32.mrf.mxu0
        %v7650 = vadd.f32 0.0, %v7649
        %7651 = vmatprep.mubr.bf16.mxu0 0
        %7652 = vmatmul.mubr.bf16.gmra.mxu0 %v7506
        %v7653 = vpop.f32.mrf.mxu0
        %v7654 = vadd.f32 0.0, %v7653
        %v7655 = vpop.f32.mrf.mxu0
        %v7656 = vadd.f32 0.0, %v7655
        %v7657 = vpop.f32.mrf.mxu0
        %v7658 = vadd.f32 0.0, %v7657
        %v7659 = vpop.f32.mrf.mxu0
        %v7660 = vadd.f32 0.0, %v7659
        %7661 = vmatprep.mubr.bf16.mxu0 0
        %7662 = vmatmul.mubr.bf16.gmra.mxu0 %v7509
        %v7663 = vpop.f32.mrf.mxu0
        %v7664 = vadd.f32 0.0, %v7663
        %v7665 = vpop.f32.mrf.mxu0
        %v7666 = vadd.f32 0.0, %v7665
        %v7667 = vpop.f32.mrf.mxu0
        %v7668 = vadd.f32 0.0, %v7667
        %v7669 = vpop.f32.mrf.mxu0
        %v7670 = vadd.f32 0.0, %v7669
        %7671 = vdwg.mxu0
        %v7672 = vmax.f32 %v7594, %v7596
        %7673 = vmax.xlane.f32.xlu0 %v7672
        %v7674 = vpop.xlane.xlu0 %7673
        %v7675 = vmax.f32 %v7598, %v7600
        %7676 = vmax.xlane.f32.xlu0 %v7675
        %v7677 = vpop.xlane.xlu0 %7676
        %v7678 = vmax.f32 %v7604, %v7606
        %7679 = vmax.xlane.f32.xlu0 %v7678
        %v7680 = vpop.xlane.xlu0 %7679
        %v7681 = vmax.f32 %v7608, %v7610
        %7682 = vmax.xlane.f32.xlu0 %v7681
        %v7683 = vpop.xlane.xlu0 %7682
        %v7684 = vmax.f32 %v7614, %v7616
        %7685 = vmax.xlane.f32.xlu0 %v7684
        %v7686 = vpop.xlane.xlu0 %7685
        %v7687 = vmax.f32 %v7618, %v7620
        %7688 = vmax.xlane.f32.xlu0 %v7687
        %v7689 = vpop.xlane.xlu0 %7688
        %v7690 = vmax.f32 %v7624, %v7626
        %7691 = vmax.xlane.f32.xlu0 %v7690
        %v7692 = vpop.xlane.xlu0 %7691
        %v7693 = vmax.f32 %v7628, %v7630
        %7694 = vmax.xlane.f32.xlu0 %v7693
        %v7695 = vpop.xlane.xlu0 %7694
        %v7696 = vmax.f32 %v7634, %v7636
        %7697 = vmax.xlane.f32.xlu0 %v7696
        %v7698 = vpop.xlane.xlu0 %7697
        %v7699 = vmax.f32 %v7638, %v7640
        %7700 = vmax.xlane.f32.xlu0 %v7699
        %v7701 = vpop.xlane.xlu0 %7700
        %v7702 = vmax.f32 %v7644, %v7646
        %7703 = vmax.xlane.f32.xlu0 %v7702
        %v7704 = vpop.xlane.xlu0 %7703
        %v7705 = vmax.f32 %v7648, %v7650
        %7706 = vmax.xlane.f32.xlu0 %v7705
        %v7707 = vpop.xlane.xlu0 %7706
        %v7708 = vmax.f32 %v7654, %v7656
        %7709 = vmax.xlane.f32.xlu0 %v7708
        %v7710 = vpop.xlane.xlu0 %7709
        %v7711 = vmax.f32 %v7658, %v7660
        %7712 = vmax.xlane.f32.xlu0 %v7711
        %v7713 = vpop.xlane.xlu0 %7712
        %v7714 = vmax.f32 %v7664, %v7666
        %7715 = vmax.xlane.f32.xlu0 %v7714
        %v7716 = vpop.xlane.xlu0 %7715
        %v7717 = vmax.f32 %v7668, %v7670
        %7718 = vmax.xlane.f32.xlu0 %v7717
        %v7719 = vpop.xlane.xlu0 %7718
        %v7720 = vsub.f32 %v7594, %v7674
        %v7721 = vsub.f32 %v7596, %v7674
        %v7722 = vsub.f32 %v7598, %v7677
        %v7723 = vsub.f32 %v7600, %v7677
        %v7724 = vsub.f32 %v7604, %v7680
        %v7725 = vsub.f32 %v7606, %v7680
        %v7726 = vsub.f32 %v7608, %v7683
        %v7727 = vsub.f32 %v7610, %v7683
        %v7728 = vsub.f32 %v7614, %v7686
        %v7729 = vsub.f32 %v7616, %v7686
        %v7730 = vsub.f32 %v7618, %v7689
        %v7731 = vsub.f32 %v7620, %v7689
        %v7732 = vsub.f32 %v7624, %v7692
        %v7733 = vsub.f32 %v7626, %v7692
        %v7734 = vsub.f32 %v7628, %v7695
        %v7735 = vsub.f32 %v7630, %v7695
        %v7736 = vsub.f32 %v7634, %v7698
        %v7737 = vsub.f32 %v7636, %v7698
        %v7738 = vsub.f32 %v7638, %v7701
        %v7739 = vsub.f32 %v7640, %v7701
        %v7740 = vsub.f32 %v7644, %v7704
        %v7741 = vsub.f32 %v7646, %v7704
        %v7742 = vsub.f32 %v7648, %v7707
        %v7743 = vsub.f32 %v7650, %v7707
        %v7744 = vsub.f32 %v7654, %v7710
        %v7745 = vsub.f32 %v7656, %v7710
        %v7746 = vsub.f32 %v7658, %v7713
        %v7747 = vsub.f32 %v7660, %v7713
        %v7748 = vsub.f32 %v7664, %v7716
        %v7749 = vsub.f32 %v7666, %v7716
        %v7750 = vsub.f32 %v7668, %v7719
        %v7751 = vsub.f32 %v7670, %v7719
        %v7752 = vmul.f32 %v7720, 1.442695
        %v7753 = vpow.pop %v7752
        %v7754 = vmul.f32 %v7721, 1.442695
        %v7755 = vpow.pop %v7754
        %v7756 = vmul.f32 %v7722, 1.442695
        %v7757 = vpow.pop %v7756
        %v7758 = vmul.f32 %v7723, 1.442695
        %v7759 = vpow.pop %v7758
        %v7760 = vmul.f32 %v7724, 1.442695
        %v7761 = vpow.pop %v7760
        %v7762 = vmul.f32 %v7725, 1.442695
        %v7763 = vpow.pop %v7762
        %v7764 = vmul.f32 %v7726, 1.442695
        %v7765 = vpow.pop %v7764
        %v7766 = vmul.f32 %v7727, 1.442695
        %v7767 = vpow.pop %v7766
        %v7768 = vmul.f32 %v7728, 1.442695
        %v7769 = vpow.pop %v7768
        %v7770 = vmul.f32 %v7729, 1.442695
        %v7771 = vpow.pop %v7770
        %v7772 = vmul.f32 %v7730, 1.442695
        %v7773 = vpow.pop %v7772
        %v7774 = vmul.f32 %v7731, 1.442695
        %v7775 = vpow.pop %v7774
        %v7776 = vmul.f32 %v7732, 1.442695
        %v7777 = vpow.pop %v7776
        %v7778 = vmul.f32 %v7733, 1.442695
        %v7779 = vpow.pop %v7778
        %v7780 = vmul.f32 %v7734, 1.442695
        %v7781 = vpow.pop %v7780
        %v7782 = vmul.f32 %v7735, 1.442695
        %v7783 = vpow.pop %v7782
        %v7784 = vmul.f32 %v7736, 1.442695
        %v7785 = vpow.pop %v7784
        %v7786 = vmul.f32 %v7737, 1.442695
        %v7787 = vpow.pop %v7786
        %v7788 = vmul.f32 %v7738, 1.442695
        %v7789 = vpow.pop %v7788
        %v7790 = vmul.f32 %v7739, 1.442695
        %v7791 = vpow.pop %v7790
        %v7792 = vmul.f32 %v7740, 1.442695
        %v7793 = vpow.pop %v7792
        %v7794 = vmul.f32 %v7741, 1.442695
        %v7795 = vpow.pop %v7794
        %v7796 = vmul.f32 %v7742, 1.442695
        %v7797 = vpow.pop %v7796
        %v7798 = vmul.f32 %v7743, 1.442695
        %v7799 = vpow.pop %v7798
        %v7800 = vmul.f32 %v7744, 1.442695
        %v7801 = vpow.pop %v7800
        %v7802 = vmul.f32 %v7745, 1.442695
        %v7803 = vpow.pop %v7802
        %v7804 = vmul.f32 %v7746, 1.442695
        %v7805 = vpow.pop %v7804
        %v7806 = vmul.f32 %v7747, 1.442695
        %v7807 = vpow.pop %v7806
        %v7808 = vmul.f32 %v7748, 1.442695
        %v7809 = vpow.pop %v7808
        %v7810 = vmul.f32 %v7749, 1.442695
        %v7811 = vpow.pop %v7810
        %v7812 = vmul.f32 %v7750, 1.442695
        %v7813 = vpow.pop %v7812
        %v7814 = vmul.f32 %v7751, 1.442695
        %v7815 = vpow.pop %v7814
        %v7816 = vadd.f32 %v7753, %v7755
        %7817 = vadd.xlane.f32.xlu0 %v7816
        %v7818 = vpop.xlane.xlu0 %7817
        %v7819 = vadd.f32 %v7757, %v7759
        %7820 = vadd.xlane.f32.xlu0 %v7819
        %v7821 = vpop.xlane.xlu0 %7820
        %v7822 = vadd.f32 %v7761, %v7763
        %7823 = vadd.xlane.f32.xlu0 %v7822
        %v7824 = vpop.xlane.xlu0 %7823
        %v7825 = vadd.f32 %v7765, %v7767
        %7826 = vadd.xlane.f32.xlu0 %v7825
        %v7827 = vpop.xlane.xlu0 %7826
        %v7828 = vadd.f32 %v7769, %v7771
        %7829 = vadd.xlane.f32.xlu0 %v7828
        %v7830 = vpop.xlane.xlu0 %7829
        %v7831 = vadd.f32 %v7773, %v7775
        %7832 = vadd.xlane.f32.xlu0 %v7831
        %v7833 = vpop.xlane.xlu0 %7832
        %v7834 = vadd.f32 %v7777, %v7779
        %7835 = vadd.xlane.f32.xlu0 %v7834
        %v7836 = vpop.xlane.xlu0 %7835
        %v7837 = vadd.f32 %v7781, %v7783
        %7838 = vadd.xlane.f32.xlu0 %v7837
        %v7839 = vpop.xlane.xlu0 %7838
        %v7840 = vadd.f32 %v7785, %v7787
        %7841 = vadd.xlane.f32.xlu0 %v7840
        %v7842 = vpop.xlane.xlu0 %7841
        %v7843 = vadd.f32 %v7789, %v7791
        %7844 = vadd.xlane.f32.xlu0 %v7843
        %v7845 = vpop.xlane.xlu0 %7844
        %v7846 = vadd.f32 %v7793, %v7795
        %7847 = vadd.xlane.f32.xlu0 %v7846
        %v7848 = vpop.xlane.xlu0 %7847
        %v7849 = vadd.f32 %v7797, %v7799
        %7850 = vadd.xlane.f32.xlu0 %v7849
        %v7851 = vpop.xlane.xlu0 %7850
        %v7852 = vadd.f32 %v7801, %v7803
        %7853 = vadd.xlane.f32.xlu0 %v7852
        %v7854 = vpop.xlane.xlu0 %7853
        %v7855 = vadd.f32 %v7805, %v7807
        %7856 = vadd.xlane.f32.xlu0 %v7855
        %v7857 = vpop.xlane.xlu0 %7856
        %v7858 = vadd.f32 %v7809, %v7811
        %7859 = vadd.xlane.f32.xlu0 %v7858
        %v7860 = vpop.xlane.xlu0 %7859
        %v7861 = vadd.f32 %v7813, %v7815
        %7862 = vadd.xlane.f32.xlu0 %v7861
        %v7863 = vpop.xlane.xlu0 %7862
        %v7864 = vrcp.pop %v7818
        %v7865 = vrcp.pop %v7821
        %v7866 = vrcp.pop %v7824
        %v7867 = vrcp.pop %v7827
        %v7868 = vrcp.pop %v7830
        %v7869 = vrcp.pop %v7833
        %v7870 = vrcp.pop %v7836
        %v7871 = vrcp.pop %v7839
        %v7872 = vrcp.pop %v7842
        %v7873 = vrcp.pop %v7845
        %v7874 = vrcp.pop %v7848
        %v7875 = vrcp.pop %v7851
        %v7876 = vrcp.pop %v7854
        %v7877 = vrcp.pop %v7857
        %v7878 = vrcp.pop %v7860
        %v7879 = vrcp.pop %v7863
        %v7880 = vmul.f32 %v7753, %v7864
        %v7881 = vmul.f32 %v7755, %v7864
        %v7882 = vmul.f32 %v7757, %v7865
        %v7883 = vmul.f32 %v7759, %v7865
        %v7884 = vmul.f32 %v7761, %v7866
        %v7885 = vmul.f32 %v7763, %v7866
        %v7886 = vmul.f32 %v7765, %v7867
        %v7887 = vmul.f32 %v7767, %v7867
        %v7888 = vmul.f32 %v7769, %v7868
        %v7889 = vmul.f32 %v7771, %v7868
        %v7890 = vmul.f32 %v7773, %v7869
        %v7891 = vmul.f32 %v7775, %v7869
        %v7892 = vmul.f32 %v7777, %v7870
        %v7893 = vmul.f32 %v7779, %v7870
        %v7894 = vmul.f32 %v7781, %v7871
        %v7895 = vmul.f32 %v7783, %v7871
        %v7896 = vmul.f32 %v7785, %v7872
        %v7897 = vmul.f32 %v7787, %v7872
        %v7898 = vmul.f32 %v7789, %v7873
        %v7899 = vmul.f32 %v7791, %v7873
        %v7900 = vmul.f32 %v7793, %v7874
        %v7901 = vmul.f32 %v7795, %v7874
        %v7902 = vmul.f32 %v7797, %v7875
        %v7903 = vmul.f32 %v7799, %v7875
        %v7904 = vmul.f32 %v7801, %v7876
        %v7905 = vmul.f32 %v7803, %v7876
        %v7906 = vmul.f32 %v7805, %v7877
        %v7907 = vmul.f32 %v7807, %v7877
        %v7908 = vmul.f32 %v7809, %v7878
        %v7909 = vmul.f32 %v7811, %v7878
        %v7910 = vmul.f32 %v7813, %v7879
        %v7911 = vmul.f32 %v7815, %v7879
        %v7912 = vpack.c.bf16 %v7882, %v7880
        %v7913 = vpack.c.bf16 %v7883, %v7881
        %v7914 = vpack.c.bf16 %v7886, %v7884
        %v7915 = vpack.c.bf16 %v7887, %v7885
        %v7916 = vpack.c.bf16 %v7890, %v7888
        %v7917 = vpack.c.bf16 %v7891, %v7889
        %v7918 = vpack.c.bf16 %v7894, %v7892
        %v7919 = vpack.c.bf16 %v7895, %v7893
        %v7920 = vpack.c.bf16 %v7898, %v7896
        %v7921 = vpack.c.bf16 %v7899, %v7897
        %v7922 = vpack.c.bf16 %v7902, %v7900
        %v7923 = vpack.c.bf16 %v7903, %v7901
        %v7924 = vpack.c.bf16 %v7906, %v7904
        %v7925 = vpack.c.bf16 %v7907, %v7905
        %v7926 = vpack.c.bf16 %v7910, %v7908
        %v7927 = vpack.c.bf16 %v7911, %v7909
        %7928 = vrot.lane.b32.xlu0 %v4009, 48
        %v7929 = vpop.permute.xlu0 %7928
        %7930 = vrot.lane.b32.xlu0 %v4010, 48
        %v7931 = vpop.permute.xlu0 %7930
        %7932 = vrot.lane.b32.xlu0 %v4011, 48
        %v7933 = vpop.permute.xlu0 %7932
        %7934 = vrot.lane.b32.xlu0 %v4012, 48
        %v7935 = vpop.permute.xlu0 %7934
        %7936 = vrot.lane.b32.xlu0 %v4013, 48
        %v7937 = vpop.permute.xlu0 %7936
        %7938 = vrot.lane.b32.xlu0 %v4014, 48
        %v7939 = vpop.permute.xlu0 %7938
        %7940 = vrot.lane.b32.xlu0 %v4015, 48
        %v7941 = vpop.permute.xlu0 %7940
        %7942 = vrot.lane.b32.xlu0 %v4016, 48
        %v7943 = vpop.permute.xlu0 %7942
        %7944 = vrot.lane.b32.xlu0 %v4017, 48
        %v7945 = vpop.permute.xlu0 %7944
        %7946 = vrot.lane.b32.xlu0 %v4018, 48
        %v7947 = vpop.permute.xlu0 %7946
        %7948 = vrot.lane.b32.xlu0 %v4019, 48
        %v7949 = vpop.permute.xlu0 %7948
        %7950 = vrot.lane.b32.xlu0 %v4020, 48
        %v7951 = vpop.permute.xlu0 %7950
        %7952 = vrot.lane.b32.xlu0 %v4021, 48
        %v7953 = vpop.permute.xlu0 %7952
        %7954 = vrot.lane.b32.xlu0 %v4022, 48
        %v7955 = vpop.permute.xlu0 %7954
        %7956 = vrot.lane.b32.xlu0 %v4023, 48
        %v7957 = vpop.permute.xlu0 %7956
        %7958 = vrot.lane.b32.xlu0 %v4024, 48
        %v7959 = vpop.permute.xlu0 %7958
        %7976 = vmatprep.subr.bf16.mxu0 0
        %7977 = vmatpush1.bf16.msra.mxu0 %v7943
        %7978 = vmatprep.subr.bf16.mxu0 0
        %7979 = vmatpush1.bf16.msra.mxu0 %v7941
        %7980 = vmatprep.subr.bf16.mxu0 0
        %7981 = vmatpush1.bf16.msra.mxu0 %v7939
        %7982 = vmatprep.subr.bf16.mxu0 0
        %7983 = vmatpush1.bf16.msra.mxu0 %v7937
        %7984 = vmatprep.subr.bf16.mxu0 0
        %7985 = vmatpush1.bf16.msra.mxu0 %v7935
        %7986 = vmatprep.subr.bf16.mxu0 0
        %7987 = vmatpush1.bf16.msra.mxu0 %v7933
        %7988 = vmatprep.subr.bf16.mxu0 0
        %7989 = vmatpush1.bf16.msra.mxu0 %v7931
        %7990 = vmatprep.subr.bf16.mxu0 0
        %7991 = vmatpush1.bf16.msra.mxu0 %v7929
        %7992 = vmatprep.subr.bf16.mxu0 0
        %7993 = vmatpush2.bf16.msra.mxu0 %v7959
        %7994 = vmatprep.subr.bf16.mxu0 0
        %7995 = vmatpush2.bf16.msra.mxu0 %v7957
        %7996 = vmatprep.subr.bf16.mxu0 0
        %7997 = vmatpush2.bf16.msra.mxu0 %v7955
        %7998 = vmatprep.subr.bf16.mxu0 0
        %7999 = vmatpush2.bf16.msra.mxu0 %v7953
        %8000 = vmatprep.subr.bf16.mxu0 0
        %8001 = vmatpush2.bf16.msra.mxu0 %v7951
        %8002 = vmatprep.subr.bf16.mxu0 0
        %8003 = vmatpush2.bf16.msra.mxu0 %v7949
        %8004 = vmatprep.subr.bf16.mxu0 0
        %8005 = vmatpush2.bf16.msra.mxu0 %v7947
        %8006 = vmatprep.subr.bf16.mxu0 0
        %8007 = vmatpush2.bf16.msra.mxu0 %v7945
        %8008 = vmatprep.mubr.bf16.mxu0 %v7913
        %8009 = vmatmul.mubr.bf16.gmra.mxu0 %v7912
        %v8010 = vpop.f32.mrf.mxu0
        %v8011 = vadd.f32 0.0, %v8010
        %v8012 = vpop.f32.mrf.mxu0
        %v8013 = vpop.f32.mrf.mxu0
        %v8014 = vadd.f32 0.0, %v8013
        %v8015 = vpop.f32.mrf.mxu0
        %8016 = vmatprep.mubr.bf16.mxu0 %v7915
        %8017 = vmatmul.mubr.bf16.gmra.mxu0 %v7914
        %v8018 = vpop.f32.mrf.mxu0
        %v8019 = vadd.f32 0.0, %v8018
        %v8020 = vpop.f32.mrf.mxu0
        %v8021 = vpop.f32.mrf.mxu0
        %v8022 = vadd.f32 0.0, %v8021
        %v8023 = vpop.f32.mrf.mxu0
        %8024 = vmatprep.mubr.bf16.mxu0 %v7917
        %8025 = vmatmul.mubr.bf16.gmra.mxu0 %v7916
        %v8026 = vpop.f32.mrf.mxu0
        %v8027 = vadd.f32 0.0, %v8026
        %v8028 = vpop.f32.mrf.mxu0
        %v8029 = vpop.f32.mrf.mxu0
        %v8030 = vadd.f32 0.0, %v8029
        %v8031 = vpop.f32.mrf.mxu0
        %8032 = vmatprep.mubr.bf16.mxu0 %v7919
        %8033 = vmatmul.mubr.bf16.gmra.mxu0 %v7918
        %v8034 = vpop.f32.mrf.mxu0
        %v8035 = vadd.f32 0.0, %v8034
        %v8036 = vpop.f32.mrf.mxu0
        %v8037 = vpop.f32.mrf.mxu0
        %v8038 = vadd.f32 0.0, %v8037
        %v8039 = vpop.f32.mrf.mxu0
        %8040 = vmatprep.mubr.bf16.mxu0 %v7921
        %8041 = vmatmul.mubr.bf16.gmra.mxu0 %v7920
        %v8042 = vpop.f32.mrf.mxu0
        %v8043 = vadd.f32 0.0, %v8042
        %v8044 = vpop.f32.mrf.mxu0
        %v8045 = vpop.f32.mrf.mxu0
        %v8046 = vadd.f32 0.0, %v8045
        %v8047 = vpop.f32.mrf.mxu0
        %8048 = vmatprep.mubr.bf16.mxu0 %v7923
        %8049 = vmatmul.mubr.bf16.gmra.mxu0 %v7922
        %v8050 = vpop.f32.mrf.mxu0
        %v8051 = vadd.f32 0.0, %v8050
        %v8052 = vpop.f32.mrf.mxu0
        %v8053 = vpop.f32.mrf.mxu0
        %v8054 = vadd.f32 0.0, %v8053
        %v8055 = vpop.f32.mrf.mxu0
        %8056 = vmatprep.mubr.bf16.mxu0 %v7925
        %8057 = vmatmul.mubr.bf16.gmra.mxu0 %v7924
        %v8058 = vpop.f32.mrf.mxu0
        %v8059 = vadd.f32 0.0, %v8058
        %v8060 = vpop.f32.mrf.mxu0
        %v8061 = vpop.f32.mrf.mxu0
        %v8062 = vadd.f32 0.0, %v8061
        %v8063 = vpop.f32.mrf.mxu0
        %8064 = vmatprep.mubr.bf16.mxu0 %v7927
        %8065 = vmatmul.mubr.bf16.gmra.mxu0 %v7926
        %v8066 = vpop.f32.mrf.mxu0
        %v8067 = vadd.f32 0.0, %v8066
        %v8068 = vpop.f32.mrf.mxu0
        %v8069 = vpop.f32.mrf.mxu0
        %v8070 = vadd.f32 0.0, %v8069
        %v8071 = vpop.f32.mrf.mxu0
        %8072 = vdwg.mxu0
        %v8073 = vpack.c.bf16 %v8014, %v8011
        %v8074 = vpack.c.bf16 %v8022, %v8019
        %v8075 = vpack.c.bf16 %v8030, %v8027
        %v8076 = vpack.c.bf16 %v8038, %v8035
        %v8077 = vpack.c.bf16 %v8046, %v8043
        %v8078 = vpack.c.bf16 %v8054, %v8051
        %v8079 = vpack.c.bf16 %v8062, %v8059
        %v8080 = vpack.c.bf16 %v8070, %v8067
        %v8081 = vld [vmem:[#allocation11 + $0x28] sm:$0xf]
        %v8082 = vld [vmem:[#allocation11 + $0x2c] sm:$0xf]
        %v8085 = vunpack.c.l.b16 %v8081
        %v8086 = vunpack.c.l.b16 %v8082
        %v8087 = vpack.c.b16 %v8086, %v8085
        %v8090 = vsel %vm3503, %v8073, 0
        %v8093 = vsel %vm3503, %v8074, 0
        %v8096 = vsel %vm3503, %v8075, 0
        %v8099 = vsel %vm3503, %v8076, 0
        %v8102 = vsel %vm3503, %v8077, 0
        %v8105 = vsel %vm3503, %v8078, 0
        %v8108 = vsel %vm3503, %v8079, 0
        %v8111 = vsel %vm3503, %v8080, 0
        %8113 = vmatprep.subr.bf16.mxu0 0
        %8114 = vmatpush1.bf16.msra.mxu0 0
        %8115 = vmatprep.subr.bf16.mxu0 0
        %8116 = vmatpush1.bf16.msra.mxu0 0
        %8117 = vmatprep.subr.bf16.mxu0 0
        %8118 = vmatpush1.bf16.msra.mxu0 0
        %8119 = vmatprep.subr.bf16.mxu0 0
        %8120 = vmatpush1.bf16.msra.mxu0 0
        %8121 = vmatprep.subr.bf16.mxu0 0
        %8122 = vmatpush1.bf16.msra.mxu0 0
        %8123 = vmatprep.subr.bf16.mxu0 0
        %8124 = vmatpush1.bf16.msra.mxu0 0
        %8125 = vmatprep.subr.bf16.mxu0 0
        %8126 = vmatpush1.bf16.msra.mxu0 0
        %8127 = vmatprep.subr.bf16.mxu0 0
        %8128 = vmatpush1.bf16.msra.mxu0 %v8087
        %8129 = vmatprep.subr.bf16.mxu0 0
        %8130 = vmatpush2.bf16.msra.mxu0 0
        %8131 = vmatprep.subr.bf16.mxu0 0
        %8132 = vmatpush2.bf16.msra.mxu0 0
        %8133 = vmatprep.subr.bf16.mxu0 0
        %8134 = vmatpush2.bf16.msra.mxu0 0
        %8135 = vmatprep.subr.bf16.mxu0 0
        %8136 = vmatpush2.bf16.msra.mxu0 0
        %8137 = vmatprep.subr.bf16.mxu0 0
        %8138 = vmatpush2.bf16.msra.mxu0 0
        %8139 = vmatprep.subr.bf16.mxu0 0
        %8140 = vmatpush2.bf16.msra.mxu0 0
        %8141 = vmatprep.subr.bf16.mxu0 0
        %8142 = vmatpush2.bf16.msra.mxu0 0
        %8143 = vmatprep.subr.bf16.mxu0 0
        %8144 = vmatpush2.bf16.msra.mxu0 0
        %8145 = vmatprep.mubr.bf16.mxu0 0
        %8146 = vmatmul.mubr.bf16.gmra.mxu0 %v8090
        %v8147 = vpop.f32.mrf.mxu0
        %v8148 = vadd.f32 0.0, %v8147
        %v8149 = vpop.f32.mrf.mxu0
        %v8150 = vpop.f32.mrf.mxu0
        %v8151 = vadd.f32 0.0, %v8150
        %v8152 = vpop.f32.mrf.mxu0
        %8153 = vmatprep.mubr.bf16.mxu0 0
        %8154 = vmatmul.mubr.bf16.gmra.mxu0 %v8093
        %v8155 = vpop.f32.mrf.mxu0
        %v8156 = vadd.f32 0.0, %v8155
        %v8157 = vpop.f32.mrf.mxu0
        %v8158 = vpop.f32.mrf.mxu0
        %v8159 = vadd.f32 0.0, %v8158
        %v8160 = vpop.f32.mrf.mxu0
        %8161 = vmatprep.mubr.bf16.mxu0 0
        %8162 = vmatmul.mubr.bf16.gmra.mxu0 %v8096
        %v8163 = vpop.f32.mrf.mxu0
        %v8164 = vadd.f32 0.0, %v8163
        %v8165 = vpop.f32.mrf.mxu0
        %v8166 = vpop.f32.mrf.mxu0
        %v8167 = vadd.f32 0.0, %v8166
        %v8168 = vpop.f32.mrf.mxu0
        %8169 = vmatprep.mubr.bf16.mxu0 0
        %8170 = vmatmul.mubr.bf16.gmra.mxu0 %v8099
        %v8171 = vpop.f32.mrf.mxu0
        %v8172 = vadd.f32 0.0, %v8171
        %v8173 = vpop.f32.mrf.mxu0
        %v8174 = vpop.f32.mrf.mxu0
        %v8175 = vadd.f32 0.0, %v8174
        %v8176 = vpop.f32.mrf.mxu0
        %8177 = vmatprep.mubr.bf16.mxu0 0
        %8178 = vmatmul.mubr.bf16.gmra.mxu0 %v8102
        %v8179 = vpop.f32.mrf.mxu0
        %v8180 = vadd.f32 0.0, %v8179
        %v8181 = vpop.f32.mrf.mxu0
        %v8182 = vpop.f32.mrf.mxu0
        %v8183 = vadd.f32 0.0, %v8182
        %v8184 = vpop.f32.mrf.mxu0
        %8185 = vmatprep.mubr.bf16.mxu0 0
        %8186 = vmatmul.mubr.bf16.gmra.mxu0 %v8105
        %v8187 = vpop.f32.mrf.mxu0
        %v8188 = vadd.f32 0.0, %v8187
        %v8189 = vpop.f32.mrf.mxu0
        %v8190 = vpop.f32.mrf.mxu0
        %v8191 = vadd.f32 0.0, %v8190
        %v8192 = vpop.f32.mrf.mxu0
        %8193 = vmatprep.mubr.bf16.mxu0 0
        %8194 = vmatmul.mubr.bf16.gmra.mxu0 %v8108
        %v8195 = vpop.f32.mrf.mxu0
        %v8196 = vadd.f32 0.0, %v8195
        %v8197 = vpop.f32.mrf.mxu0
        %v8198 = vpop.f32.mrf.mxu0
        %v8199 = vadd.f32 0.0, %v8198
        %v8200 = vpop.f32.mrf.mxu0
        %8201 = vmatprep.mubr.bf16.mxu0 0
        %8202 = vmatmul.mubr.bf16.gmra.mxu0 %v8111
        %v8203 = vpop.f32.mrf.mxu0
        %v8204 = vadd.f32 0.0, %v8203
        %v8205 = vpop.f32.mrf.mxu0
        %v8206 = vpop.f32.mrf.mxu0
        %v8207 = vadd.f32 0.0, %v8206
        %v8208 = vpop.f32.mrf.mxu0
        %8209 = vdwg.mxu0
        %v8210 = vadd.f32 %v7423, %v8148
        %v8211 = vadd.f32 %v7424, %v8151
        %v8212 = vadd.f32 %v7425, %v8156
        %v8213 = vadd.f32 %v7426, %v8159
        %v8214 = vadd.f32 %v7427, %v8164
        %v8215 = vadd.f32 %v7428, %v8167
        %v8216 = vadd.f32 %v7429, %v8172
        %v8217 = vadd.f32 %v7430, %v8175
        %v8218 = vadd.f32 %v7431, %v8180
        %v8219 = vadd.f32 %v7432, %v8183
        %v8220 = vadd.f32 %v7433, %v8188
        %v8221 = vadd.f32 %v7434, %v8191
        %v8222 = vadd.f32 %v7435, %v8196
        %v8223 = vadd.f32 %v7436, %v8199
        %v8224 = vadd.f32 %v7437, %v8204
        %v8225 = vadd.f32 %v7438, %v8207
        %8226 = vrot.lane.b32.xlu0 %v3415, 32
        %v8227 = vpop.permute.xlu0 %8226
        %8228 = vrot.lane.b32.xlu0 %v3416, 32
        %v8229 = vpop.permute.xlu0 %8228
        %8230 = vrot.lane.b32.xlu0 %v3417, 32
        %v8231 = vpop.permute.xlu0 %8230
        %8232 = vrot.lane.b32.xlu0 %v3418, 32
        %v8233 = vpop.permute.xlu0 %8232
        %8234 = vrot.lane.b32.xlu0 %v3419, 32
        %v8235 = vpop.permute.xlu0 %8234
        %8236 = vrot.lane.b32.xlu0 %v3420, 32
        %v8237 = vpop.permute.xlu0 %8236
        %8238 = vrot.lane.b32.xlu0 %v3421, 32
        %v8239 = vpop.permute.xlu0 %8238
        %8240 = vrot.lane.b32.xlu0 %v3422, 32
        %v8241 = vpop.permute.xlu0 %8240
        %8242 = vrot.lane.b32.xlu0 %v3487, 32
        %v8243 = vpop.permute.xlu0 %8242
        %8244 = vrot.lane.b32.xlu0 %v3488, 32
        %v8245 = vpop.permute.xlu0 %8244
        %8246 = vrot.lane.b32.xlu0 %v3489, 32
        %v8247 = vpop.permute.xlu0 %8246
        %8248 = vrot.lane.b32.xlu0 %v3490, 32
        %v8249 = vpop.permute.xlu0 %8248
        %8250 = vrot.lane.b32.xlu0 %v3491, 32
        %v8251 = vpop.permute.xlu0 %8250
        %8252 = vrot.lane.b32.xlu0 %v3492, 32
        %v8253 = vpop.permute.xlu0 %8252
        %8254 = vrot.lane.b32.xlu0 %v3493, 32
        %v8255 = vpop.permute.xlu0 %8254
        %8256 = vrot.lane.b32.xlu0 %v3494, 32
        %v8257 = vpop.permute.xlu0 %8256
        %8258 = vrot.lane.b32.xlu0 %v3495, 32
        %v8259 = vpop.permute.xlu0 %8258
        %8260 = vrot.lane.b32.xlu0 %v3496, 32
        %v8261 = vpop.permute.xlu0 %8260
        %8262 = vrot.lane.b32.xlu0 %v3497, 32
        %v8263 = vpop.permute.xlu0 %8262
        %8264 = vrot.lane.b32.xlu0 %v3498, 32
        %v8265 = vpop.permute.xlu0 %8264
        %8266 = vrot.lane.b32.xlu0 %v3499, 32
        %v8267 = vpop.permute.xlu0 %8266
        %8268 = vrot.lane.b32.xlu0 %v3500, 32
        %v8269 = vpop.permute.xlu0 %8268
        %8270 = vrot.lane.b32.xlu0 %v3501, 32
        %v8271 = vpop.permute.xlu0 %8270
        %8272 = vrot.lane.b32.xlu0 %v3502, 32
        %v8273 = vpop.permute.xlu0 %8272
        %v8275 = vsel %vm3503, %v8227, 0
        %v8278 = vsel %vm3503, %v8229, 0
        %v8281 = vsel %vm3503, %v8231, 0
        %v8284 = vsel %vm3503, %v8233, 0
        %v8287 = vsel %vm3503, %v8235, 0
        %v8290 = vsel %vm3503, %v8237, 0
        %v8293 = vsel %vm3503, %v8239, 0
        %v8296 = vsel %vm3503, %v8241, 0
        %v8299 = vsel %vm3503, %v8243, 0
        %v8302 = vsel %vm3503, %v8245, 0
        %v8305 = vsel %vm3503, %v8247, 0
        %v8308 = vsel %vm3503, %v8249, 0
        %v8311 = vsel %vm3503, %v8251, 0
        %v8314 = vsel %vm3503, %v8253, 0
        %v8317 = vsel %vm3503, %v8255, 0
        %v8320 = vsel %vm3503, %v8257, 0
        %v8323 = vsel %vm3503, %v8259, 0
        %v8326 = vsel %vm3503, %v8261, 0
        %v8329 = vsel %vm3503, %v8263, 0
        %v8332 = vsel %vm3503, %v8265, 0
        %v8335 = vsel %vm3503, %v8267, 0
        %v8338 = vsel %vm3503, %v8269, 0
        %v8341 = vsel %vm3503, %v8271, 0
        %v8344 = vsel %vm3503, %v8273, 0
        %8346 = vmatprep.subr.bf16.mxu0 0
        %8347 = vmatpush1.bf16.xpose.msra.mxu0 %v8320
        %8348 = vmatprep.subr.bf16.mxu0 0
        %8349 = vmatpush1.bf16.xpose.msra.mxu0 %v8317
        %8350 = vmatprep.subr.bf16.mxu0 0
        %8351 = vmatpush1.bf16.xpose.msra.mxu0 %v8314
        %8352 = vmatprep.subr.bf16.mxu0 0
        %8353 = vmatpush1.bf16.xpose.msra.mxu0 %v8311
        %8354 = vmatprep.subr.bf16.mxu0 0
        %8355 = vmatpush1.bf16.xpose.msra.mxu0 %v8308
        %8356 = vmatprep.subr.bf16.mxu0 0
        %8357 = vmatpush1.bf16.xpose.msra.mxu0 %v8305
        %8358 = vmatprep.subr.bf16.mxu0 0
        %8359 = vmatpush1.bf16.xpose.msra.mxu0 %v8302
        %8360 = vmatprep.subr.bf16.mxu0 0
        %8361 = vmatpush1.bf16.xpose.msra.mxu0 %v8299
        %8362 = vmatprep.subr.bf16.mxu0 0
        %8363 = vmatpush2.bf16.xpose.msra.mxu0 %v8344
        %8364 = vmatprep.subr.bf16.mxu0 0
        %8365 = vmatpush2.bf16.xpose.msra.mxu0 %v8341
        %8366 = vmatprep.subr.bf16.mxu0 0
        %8367 = vmatpush2.bf16.xpose.msra.mxu0 %v8338
        %8368 = vmatprep.subr.bf16.mxu0 0
        %8369 = vmatpush2.bf16.xpose.msra.mxu0 %v8335
        %8370 = vmatprep.subr.bf16.mxu0 0
        %8371 = vmatpush2.bf16.xpose.msra.mxu0 %v8332
        %8372 = vmatprep.subr.bf16.mxu0 0
        %8373 = vmatpush2.bf16.xpose.msra.mxu0 %v8329
        %8374 = vmatprep.subr.bf16.mxu0 0
        %8375 = vmatpush2.bf16.xpose.msra.mxu0 %v8326
        %8376 = vmatprep.subr.bf16.mxu0 0
        %8377 = vmatpush2.bf16.xpose.msra.mxu0 %v8323
        %8378 = vmatprep.mubr.bf16.mxu0 0
        %8379 = vmatmul.mubr.bf16.gmra.mxu0 %v8275
        %v8380 = vpop.f32.mrf.mxu0
        %v8381 = vadd.f32 0.0, %v8380
        %v8382 = vpop.f32.mrf.mxu0
        %v8383 = vadd.f32 0.0, %v8382
        %v8384 = vpop.f32.mrf.mxu0
        %v8385 = vadd.f32 0.0, %v8384
        %v8386 = vpop.f32.mrf.mxu0
        %v8387 = vadd.f32 0.0, %v8386
        %8388 = vmatprep.mubr.bf16.mxu0 0
        %8389 = vmatmul.mubr.bf16.gmra.mxu0 %v8278
        %v8390 = vpop.f32.mrf.mxu0
        %v8391 = vadd.f32 0.0, %v8390
        %v8392 = vpop.f32.mrf.mxu0
        %v8393 = vadd.f32 0.0, %v8392
        %v8394 = vpop.f32.mrf.mxu0
        %v8395 = vadd.f32 0.0, %v8394
        %v8396 = vpop.f32.mrf.mxu0
        %v8397 = vadd.f32 0.0, %v8396
        %8398 = vmatprep.mubr.bf16.mxu0 0
        %8399 = vmatmul.mubr.bf16.gmra.mxu0 %v8281
        %v8400 = vpop.f32.mrf.mxu0
        %v8401 = vadd.f32 0.0, %v8400
        %v8402 = vpop.f32.mrf.mxu0
        %v8403 = vadd.f32 0.0, %v8402
        %v8404 = vpop.f32.mrf.mxu0
        %v8405 = vadd.f32 0.0, %v8404
        %v8406 = vpop.f32.mrf.mxu0
        %v8407 = vadd.f32 0.0, %v8406
        %8408 = vmatprep.mubr.bf16.mxu0 0
        %8409 = vmatmul.mubr.bf16.gmra.mxu0 %v8284
        %v8410 = vpop.f32.mrf.mxu0
        %v8411 = vadd.f32 0.0, %v8410
        %v8412 = vpop.f32.mrf.mxu0
        %v8413 = vadd.f32 0.0, %v8412
        %v8414 = vpop.f32.mrf.mxu0
        %v8415 = vadd.f32 0.0, %v8414
        %v8416 = vpop.f32.mrf.mxu0
        %v8417 = vadd.f32 0.0, %v8416
        %8418 = vmatprep.mubr.bf16.mxu0 0
        %8419 = vmatmul.mubr.bf16.gmra.mxu0 %v8287
        %v8420 = vpop.f32.mrf.mxu0
        %v8421 = vadd.f32 0.0, %v8420
        %v8422 = vpop.f32.mrf.mxu0
        %v8423 = vadd.f32 0.0, %v8422
        %v8424 = vpop.f32.mrf.mxu0
        %v8425 = vadd.f32 0.0, %v8424
        %v8426 = vpop.f32.mrf.mxu0
        %v8427 = vadd.f32 0.0, %v8426
        %8428 = vmatprep.mubr.bf16.mxu0 0
        %8429 = vmatmul.mubr.bf16.gmra.mxu0 %v8290
        %v8430 = vpop.f32.mrf.mxu0
        %v8431 = vadd.f32 0.0, %v8430
        %v8432 = vpop.f32.mrf.mxu0
        %v8433 = vadd.f32 0.0, %v8432
        %v8434 = vpop.f32.mrf.mxu0
        %v8435 = vadd.f32 0.0, %v8434
        %v8436 = vpop.f32.mrf.mxu0
        %v8437 = vadd.f32 0.0, %v8436
        %8438 = vmatprep.mubr.bf16.mxu0 0
        %8439 = vmatmul.mubr.bf16.gmra.mxu0 %v8293
        %v8440 = vpop.f32.mrf.mxu0
        %v8441 = vadd.f32 0.0, %v8440
        %v8442 = vpop.f32.mrf.mxu0
        %v8443 = vadd.f32 0.0, %v8442
        %v8444 = vpop.f32.mrf.mxu0
        %v8445 = vadd.f32 0.0, %v8444
        %v8446 = vpop.f32.mrf.mxu0
        %v8447 = vadd.f32 0.0, %v8446
        %8448 = vmatprep.mubr.bf16.mxu0 0
        %8449 = vmatmul.mubr.bf16.gmra.mxu0 %v8296
        %v8450 = vpop.f32.mrf.mxu0
        %v8451 = vadd.f32 0.0, %v8450
        %v8452 = vpop.f32.mrf.mxu0
        %v8453 = vadd.f32 0.0, %v8452
        %v8454 = vpop.f32.mrf.mxu0
        %v8455 = vadd.f32 0.0, %v8454
        %v8456 = vpop.f32.mrf.mxu0
        %v8457 = vadd.f32 0.0, %v8456
        %8458 = vdwg.mxu0
        %v8459 = vmax.f32 %v8381, %v8383
        %8460 = vmax.xlane.f32.xlu0 %v8459
        %v8461 = vpop.xlane.xlu0 %8460
        %v8462 = vmax.f32 %v8385, %v8387
        %8463 = vmax.xlane.f32.xlu0 %v8462
        %v8464 = vpop.xlane.xlu0 %8463
        %v8465 = vmax.f32 %v8391, %v8393
        %8466 = vmax.xlane.f32.xlu0 %v8465
        %v8467 = vpop.xlane.xlu0 %8466
        %v8468 = vmax.f32 %v8395, %v8397
        %8469 = vmax.xlane.f32.xlu0 %v8468
        %v8470 = vpop.xlane.xlu0 %8469
        %v8471 = vmax.f32 %v8401, %v8403
        %8472 = vmax.xlane.f32.xlu0 %v8471
        %v8473 = vpop.xlane.xlu0 %8472
        %v8474 = vmax.f32 %v8405, %v8407
        %8475 = vmax.xlane.f32.xlu0 %v8474
        %v8476 = vpop.xlane.xlu0 %8475
        %v8477 = vmax.f32 %v8411, %v8413
        %8478 = vmax.xlane.f32.xlu0 %v8477
        %v8479 = vpop.xlane.xlu0 %8478
        %v8480 = vmax.f32 %v8415, %v8417
        %8481 = vmax.xlane.f32.xlu0 %v8480
        %v8482 = vpop.xlane.xlu0 %8481
        %v8483 = vmax.f32 %v8421, %v8423
        %8484 = vmax.xlane.f32.xlu0 %v8483
        %v8485 = vpop.xlane.xlu0 %8484
        %v8486 = vmax.f32 %v8425, %v8427
        %8487 = vmax.xlane.f32.xlu0 %v8486
        %v8488 = vpop.xlane.xlu0 %8487
        %v8489 = vmax.f32 %v8431, %v8433
        %8490 = vmax.xlane.f32.xlu0 %v8489
        %v8491 = vpop.xlane.xlu0 %8490
        %v8492 = vmax.f32 %v8435, %v8437
        %8493 = vmax.xlane.f32.xlu0 %v8492
        %v8494 = vpop.xlane.xlu0 %8493
        %v8495 = vmax.f32 %v8441, %v8443
        %8496 = vmax.xlane.f32.xlu0 %v8495
        %v8497 = vpop.xlane.xlu0 %8496
        %v8498 = vmax.f32 %v8445, %v8447
        %8499 = vmax.xlane.f32.xlu0 %v8498
        %v8500 = vpop.xlane.xlu0 %8499
        %v8501 = vmax.f32 %v8451, %v8453
        %8502 = vmax.xlane.f32.xlu0 %v8501
        %v8503 = vpop.xlane.xlu0 %8502
        %v8504 = vmax.f32 %v8455, %v8457
        %8505 = vmax.xlane.f32.xlu0 %v8504
        %v8506 = vpop.xlane.xlu0 %8505
        %v8507 = vsub.f32 %v8381, %v8461
        %v8508 = vsub.f32 %v8383, %v8461
        %v8509 = vsub.f32 %v8385, %v8464
        %v8510 = vsub.f32 %v8387, %v8464
        %v8511 = vsub.f32 %v8391, %v8467
        %v8512 = vsub.f32 %v8393, %v8467
        %v8513 = vsub.f32 %v8395, %v8470
        %v8514 = vsub.f32 %v8397, %v8470
        %v8515 = vsub.f32 %v8401, %v8473
        %v8516 = vsub.f32 %v8403, %v8473
        %v8517 = vsub.f32 %v8405, %v8476
        %v8518 = vsub.f32 %v8407, %v8476
        %v8519 = vsub.f32 %v8411, %v8479
        %v8520 = vsub.f32 %v8413, %v8479
        %v8521 = vsub.f32 %v8415, %v8482
        %v8522 = vsub.f32 %v8417, %v8482
        %v8523 = vsub.f32 %v8421, %v8485
        %v8524 = vsub.f32 %v8423, %v8485
        %v8525 = vsub.f32 %v8425, %v8488
        %v8526 = vsub.f32 %v8427, %v8488
        %v8527 = vsub.f32 %v8431, %v8491
        %v8528 = vsub.f32 %v8433, %v8491
        %v8529 = vsub.f32 %v8435, %v8494
        %v8530 = vsub.f32 %v8437, %v8494
        %v8531 = vsub.f32 %v8441, %v8497
        %v8532 = vsub.f32 %v8443, %v8497
        %v8533 = vsub.f32 %v8445, %v8500
        %v8534 = vsub.f32 %v8447, %v8500
        %v8535 = vsub.f32 %v8451, %v8503
        %v8536 = vsub.f32 %v8453, %v8503
        %v8537 = vsub.f32 %v8455, %v8506
        %v8538 = vsub.f32 %v8457, %v8506
        %v8539 = vmul.f32 %v8507, 1.442695
        %v8540 = vpow.pop %v8539
        %v8541 = vmul.f32 %v8508, 1.442695
        %v8542 = vpow.pop %v8541
        %v8543 = vmul.f32 %v8509, 1.442695
        %v8544 = vpow.pop %v8543
        %v8545 = vmul.f32 %v8510, 1.442695
        %v8546 = vpow.pop %v8545
        %v8547 = vmul.f32 %v8511, 1.442695
        %v8548 = vpow.pop %v8547
        %v8549 = vmul.f32 %v8512, 1.442695
        %v8550 = vpow.pop %v8549
        %v8551 = vmul.f32 %v8513, 1.442695
        %v8552 = vpow.pop %v8551
        %v8553 = vmul.f32 %v8514, 1.442695
        %v8554 = vpow.pop %v8553
        %v8555 = vmul.f32 %v8515, 1.442695
        %v8556 = vpow.pop %v8555
        %v8557 = vmul.f32 %v8516, 1.442695
        %v8558 = vpow.pop %v8557
        %v8559 = vmul.f32 %v8517, 1.442695
        %v8560 = vpow.pop %v8559
        %v8561 = vmul.f32 %v8518, 1.442695
        %v8562 = vpow.pop %v8561
        %v8563 = vmul.f32 %v8519, 1.442695
        %v8564 = vpow.pop %v8563
        %v8565 = vmul.f32 %v8520, 1.442695
        %v8566 = vpow.pop %v8565
        %v8567 = vmul.f32 %v8521, 1.442695
        %v8568 = vpow.pop %v8567
        %v8569 = vmul.f32 %v8522, 1.442695
        %v8570 = vpow.pop %v8569
        %v8571 = vmul.f32 %v8523, 1.442695
        %v8572 = vpow.pop %v8571
        %v8573 = vmul.f32 %v8524, 1.442695
        %v8574 = vpow.pop %v8573
        %v8575 = vmul.f32 %v8525, 1.442695
        %v8576 = vpow.pop %v8575
        %v8577 = vmul.f32 %v8526, 1.442695
        %v8578 = vpow.pop %v8577
        %v8579 = vmul.f32 %v8527, 1.442695
        %v8580 = vpow.pop %v8579
        %v8581 = vmul.f32 %v8528, 1.442695
        %v8582 = vpow.pop %v8581
        %v8583 = vmul.f32 %v8529, 1.442695
        %v8584 = vpow.pop %v8583
        %v8585 = vmul.f32 %v8530, 1.442695
        %v8586 = vpow.pop %v8585
        %v8587 = vmul.f32 %v8531, 1.442695
        %v8588 = vpow.pop %v8587
        %v8589 = vmul.f32 %v8532, 1.442695
        %v8590 = vpow.pop %v8589
        %v8591 = vmul.f32 %v8533, 1.442695
        %v8592 = vpow.pop %v8591
        %v8593 = vmul.f32 %v8534, 1.442695
        %v8594 = vpow.pop %v8593
        %v8595 = vmul.f32 %v8535, 1.442695
        %v8596 = vpow.pop %v8595
        %v8597 = vmul.f32 %v8536, 1.442695
        %v8598 = vpow.pop %v8597
        %v8599 = vmul.f32 %v8537, 1.442695
        %v8600 = vpow.pop %v8599
        %v8601 = vmul.f32 %v8538, 1.442695
        %v8602 = vpow.pop %v8601
        %v8603 = vadd.f32 %v8540, %v8542
        %8604 = vadd.xlane.f32.xlu0 %v8603
        %v8605 = vpop.xlane.xlu0 %8604
        %v8606 = vadd.f32 %v8544, %v8546
        %8607 = vadd.xlane.f32.xlu0 %v8606
        %v8608 = vpop.xlane.xlu0 %8607
        %v8609 = vadd.f32 %v8548, %v8550
        %8610 = vadd.xlane.f32.xlu0 %v8609
        %v8611 = vpop.xlane.xlu0 %8610
        %v8612 = vadd.f32 %v8552, %v8554
        %8613 = vadd.xlane.f32.xlu0 %v8612
        %v8614 = vpop.xlane.xlu0 %8613
        %v8615 = vadd.f32 %v8556, %v8558
        %8616 = vadd.xlane.f32.xlu0 %v8615
        %v8617 = vpop.xlane.xlu0 %8616
        %v8618 = vadd.f32 %v8560, %v8562
        %8619 = vadd.xlane.f32.xlu0 %v8618
        %v8620 = vpop.xlane.xlu0 %8619
        %v8621 = vadd.f32 %v8564, %v8566
        %8622 = vadd.xlane.f32.xlu0 %v8621
        %v8623 = vpop.xlane.xlu0 %8622
        %v8624 = vadd.f32 %v8568, %v8570
        %8625 = vadd.xlane.f32.xlu0 %v8624
        %v8626 = vpop.xlane.xlu0 %8625
        %v8627 = vadd.f32 %v8572, %v8574
        %8628 = vadd.xlane.f32.xlu0 %v8627
        %v8629 = vpop.xlane.xlu0 %8628
        %v8630 = vadd.f32 %v8576, %v8578
        %8631 = vadd.xlane.f32.xlu0 %v8630
        %v8632 = vpop.xlane.xlu0 %8631
        %v8633 = vadd.f32 %v8580, %v8582
        %8634 = vadd.xlane.f32.xlu0 %v8633
        %v8635 = vpop.xlane.xlu0 %8634
        %v8636 = vadd.f32 %v8584, %v8586
        %8637 = vadd.xlane.f32.xlu0 %v8636
        %v8638 = vpop.xlane.xlu0 %8637
        %v8639 = vadd.f32 %v8588, %v8590
        %8640 = vadd.xlane.f32.xlu0 %v8639
        %v8641 = vpop.xlane.xlu0 %8640
        %v8642 = vadd.f32 %v8592, %v8594
        %8643 = vadd.xlane.f32.xlu0 %v8642
        %v8644 = vpop.xlane.xlu0 %8643
        %v8645 = vadd.f32 %v8596, %v8598
        %8646 = vadd.xlane.f32.xlu0 %v8645
        %v8647 = vpop.xlane.xlu0 %8646
        %v8648 = vadd.f32 %v8600, %v8602
        %8649 = vadd.xlane.f32.xlu0 %v8648
        %v8650 = vpop.xlane.xlu0 %8649
        %v8651 = vrcp.pop %v8605
        %v8652 = vrcp.pop %v8608
        %v8653 = vrcp.pop %v8611
        %v8654 = vrcp.pop %v8614
        %v8655 = vrcp.pop %v8617
        %v8656 = vrcp.pop %v8620
        %v8657 = vrcp.pop %v8623
        %v8658 = vrcp.pop %v8626
        %v8659 = vrcp.pop %v8629
        %v8660 = vrcp.pop %v8632
        %v8661 = vrcp.pop %v8635
        %v8662 = vrcp.pop %v8638
        %v8663 = vrcp.pop %v8641
        %v8664 = vrcp.pop %v8644
        %v8665 = vrcp.pop %v8647
        %v8666 = vrcp.pop %v8650
        %v8667 = vmul.f32 %v8540, %v8651
        %v8668 = vmul.f32 %v8542, %v8651
        %v8669 = vmul.f32 %v8544, %v8652
        %v8670 = vmul.f32 %v8546, %v8652
        %v8671 = vmul.f32 %v8548, %v8653
        %v8672 = vmul.f32 %v8550, %v8653
        %v8673 = vmul.f32 %v8552, %v8654
        %v8674 = vmul.f32 %v8554, %v8654
        %v8675 = vmul.f32 %v8556, %v8655
        %v8676 = vmul.f32 %v8558, %v8655
        %v8677 = vmul.f32 %v8560, %v8656
        %v8678 = vmul.f32 %v8562, %v8656
        %v8679 = vmul.f32 %v8564, %v8657
        %v8680 = vmul.f32 %v8566, %v8657
        %v8681 = vmul.f32 %v8568, %v8658
        %v8682 = vmul.f32 %v8570, %v8658
        %v8683 = vmul.f32 %v8572, %v8659
        %v8684 = vmul.f32 %v8574, %v8659
        %v8685 = vmul.f32 %v8576, %v8660
        %v8686 = vmul.f32 %v8578, %v8660
        %v8687 = vmul.f32 %v8580, %v8661
        %v8688 = vmul.f32 %v8582, %v8661
        %v8689 = vmul.f32 %v8584, %v8662
        %v8690 = vmul.f32 %v8586, %v8662
        %v8691 = vmul.f32 %v8588, %v8663
        %v8692 = vmul.f32 %v8590, %v8663
        %v8693 = vmul.f32 %v8592, %v8664
        %v8694 = vmul.f32 %v8594, %v8664
        %v8695 = vmul.f32 %v8596, %v8665
        %v8696 = vmul.f32 %v8598, %v8665
        %v8697 = vmul.f32 %v8600, %v8666
        %v8698 = vmul.f32 %v8602, %v8666
        %v8699 = vpack.c.bf16 %v8669, %v8667
        %v8700 = vpack.c.bf16 %v8670, %v8668
        %v8701 = vpack.c.bf16 %v8673, %v8671
        %v8702 = vpack.c.bf16 %v8674, %v8672
        %v8703 = vpack.c.bf16 %v8677, %v8675
        %v8704 = vpack.c.bf16 %v8678, %v8676
        %v8705 = vpack.c.bf16 %v8681, %v8679
        %v8706 = vpack.c.bf16 %v8682, %v8680
        %v8707 = vpack.c.bf16 %v8685, %v8683
        %v8708 = vpack.c.bf16 %v8686, %v8684
        %v8709 = vpack.c.bf16 %v8689, %v8687
        %v8710 = vpack.c.bf16 %v8690, %v8688
        %v8711 = vpack.c.bf16 %v8693, %v8691
        %v8712 = vpack.c.bf16 %v8694, %v8692
        %v8713 = vpack.c.bf16 %v8697, %v8695
        %v8714 = vpack.c.bf16 %v8698, %v8696
        %8715 = vrot.lane.b32.xlu0 %v4009, 32
        %v8716 = vpop.permute.xlu0 %8715
        %8717 = vrot.lane.b32.xlu0 %v4010, 32
        %v8718 = vpop.permute.xlu0 %8717
        %8719 = vrot.lane.b32.xlu0 %v4011, 32
        %v8720 = vpop.permute.xlu0 %8719
        %8721 = vrot.lane.b32.xlu0 %v4012, 32
        %v8722 = vpop.permute.xlu0 %8721
        %8723 = vrot.lane.b32.xlu0 %v4013, 32
        %v8724 = vpop.permute.xlu0 %8723
        %8725 = vrot.lane.b32.xlu0 %v4014, 32
        %v8726 = vpop.permute.xlu0 %8725
        %8727 = vrot.lane.b32.xlu0 %v4015, 32
        %v8728 = vpop.permute.xlu0 %8727
        %8729 = vrot.lane.b32.xlu0 %v4016, 32
        %v8730 = vpop.permute.xlu0 %8729
        %8731 = vrot.lane.b32.xlu0 %v4017, 32
        %v8732 = vpop.permute.xlu0 %8731
        %8733 = vrot.lane.b32.xlu0 %v4018, 32
        %v8734 = vpop.permute.xlu0 %8733
        %8735 = vrot.lane.b32.xlu0 %v4019, 32
        %v8736 = vpop.permute.xlu0 %8735
        %8737 = vrot.lane.b32.xlu0 %v4020, 32
        %v8738 = vpop.permute.xlu0 %8737
        %8739 = vrot.lane.b32.xlu0 %v4021, 32
        %v8740 = vpop.permute.xlu0 %8739
        %8741 = vrot.lane.b32.xlu0 %v4022, 32
        %v8742 = vpop.permute.xlu0 %8741
        %8743 = vrot.lane.b32.xlu0 %v4023, 32
        %v8744 = vpop.permute.xlu0 %8743
        %8745 = vrot.lane.b32.xlu0 %v4024, 32
        %v8746 = vpop.permute.xlu0 %8745
        %8763 = vmatprep.subr.bf16.mxu0 0
        %8764 = vmatpush1.bf16.msra.mxu0 %v8730
        %8765 = vmatprep.subr.bf16.mxu0 0
        %8766 = vmatpush1.bf16.msra.mxu0 %v8728
        %8767 = vmatprep.subr.bf16.mxu0 0
        %8768 = vmatpush1.bf16.msra.mxu0 %v8726
        %8769 = vmatprep.subr.bf16.mxu0 0
        %8770 = vmatpush1.bf16.msra.mxu0 %v8724
        %8771 = vmatprep.subr.bf16.mxu0 0
        %8772 = vmatpush1.bf16.msra.mxu0 %v8722
        %8773 = vmatprep.subr.bf16.mxu0 0
        %8774 = vmatpush1.bf16.msra.mxu0 %v8720
        %8775 = vmatprep.subr.bf16.mxu0 0
        %8776 = vmatpush1.bf16.msra.mxu0 %v8718
        %8777 = vmatprep.subr.bf16.mxu0 0
        %8778 = vmatpush1.bf16.msra.mxu0 %v8716
        %8779 = vmatprep.subr.bf16.mxu0 0
        %8780 = vmatpush2.bf16.msra.mxu0 %v8746
        %8781 = vmatprep.subr.bf16.mxu0 0
        %8782 = vmatpush2.bf16.msra.mxu0 %v8744
        %8783 = vmatprep.subr.bf16.mxu0 0
        %8784 = vmatpush2.bf16.msra.mxu0 %v8742
        %8785 = vmatprep.subr.bf16.mxu0 0
        %8786 = vmatpush2.bf16.msra.mxu0 %v8740
        %8787 = vmatprep.subr.bf16.mxu0 0
        %8788 = vmatpush2.bf16.msra.mxu0 %v8738
        %8789 = vmatprep.subr.bf16.mxu0 0
        %8790 = vmatpush2.bf16.msra.mxu0 %v8736
        %8791 = vmatprep.subr.bf16.mxu0 0
        %8792 = vmatpush2.bf16.msra.mxu0 %v8734
        %8793 = vmatprep.subr.bf16.mxu0 0
        %8794 = vmatpush2.bf16.msra.mxu0 %v8732
        %8795 = vmatprep.mubr.bf16.mxu0 %v8700
        %8796 = vmatmul.mubr.bf16.gmra.mxu0 %v8699
        %v8797 = vpop.f32.mrf.mxu0
        %v8798 = vadd.f32 0.0, %v8797
        %v8799 = vpop.f32.mrf.mxu0
        %v8800 = vpop.f32.mrf.mxu0
        %v8801 = vadd.f32 0.0, %v8800
        %v8802 = vpop.f32.mrf.mxu0
        %8803 = vmatprep.mubr.bf16.mxu0 %v8702
        %8804 = vmatmul.mubr.bf16.gmra.mxu0 %v8701
        %v8805 = vpop.f32.mrf.mxu0
        %v8806 = vadd.f32 0.0, %v8805
        %v8807 = vpop.f32.mrf.mxu0
        %v8808 = vpop.f32.mrf.mxu0
        %v8809 = vadd.f32 0.0, %v8808
        %v8810 = vpop.f32.mrf.mxu0
        %8811 = vmatprep.mubr.bf16.mxu0 %v8704
        %8812 = vmatmul.mubr.bf16.gmra.mxu0 %v8703
        %v8813 = vpop.f32.mrf.mxu0
        %v8814 = vadd.f32 0.0, %v8813
        %v8815 = vpop.f32.mrf.mxu0
        %v8816 = vpop.f32.mrf.mxu0
        %v8817 = vadd.f32 0.0, %v8816
        %v8818 = vpop.f32.mrf.mxu0
        %8819 = vmatprep.mubr.bf16.mxu0 %v8706
        %8820 = vmatmul.mubr.bf16.gmra.mxu0 %v8705
        %v8821 = vpop.f32.mrf.mxu0
        %v8822 = vadd.f32 0.0, %v8821
        %v8823 = vpop.f32.mrf.mxu0
        %v8824 = vpop.f32.mrf.mxu0
        %v8825 = vadd.f32 0.0, %v8824
        %v8826 = vpop.f32.mrf.mxu0
        %8827 = vmatprep.mubr.bf16.mxu0 %v8708
        %8828 = vmatmul.mubr.bf16.gmra.mxu0 %v8707
        %v8829 = vpop.f32.mrf.mxu0
        %v8830 = vadd.f32 0.0, %v8829
        %v8831 = vpop.f32.mrf.mxu0
        %v8832 = vpop.f32.mrf.mxu0
        %v8833 = vadd.f32 0.0, %v8832
        %v8834 = vpop.f32.mrf.mxu0
        %8835 = vmatprep.mubr.bf16.mxu0 %v8710
        %8836 = vmatmul.mubr.bf16.gmra.mxu0 %v8709
        %v8837 = vpop.f32.mrf.mxu0
        %v8838 = vadd.f32 0.0, %v8837
        %v8839 = vpop.f32.mrf.mxu0
        %v8840 = vpop.f32.mrf.mxu0
        %v8841 = vadd.f32 0.0, %v8840
        %v8842 = vpop.f32.mrf.mxu0
        %8843 = vmatprep.mubr.bf16.mxu0 %v8712
        %8844 = vmatmul.mubr.bf16.gmra.mxu0 %v8711
        %v8845 = vpop.f32.mrf.mxu0
        %v8846 = vadd.f32 0.0, %v8845
        %v8847 = vpop.f32.mrf.mxu0
        %v8848 = vpop.f32.mrf.mxu0
        %v8849 = vadd.f32 0.0, %v8848
        %v8850 = vpop.f32.mrf.mxu0
        %8851 = vmatprep.mubr.bf16.mxu0 %v8714
        %8852 = vmatmul.mubr.bf16.gmra.mxu0 %v8713
        %v8853 = vpop.f32.mrf.mxu0
        %v8854 = vadd.f32 0.0, %v8853
        %v8855 = vpop.f32.mrf.mxu0
        %v8856 = vpop.f32.mrf.mxu0
        %v8857 = vadd.f32 0.0, %v8856
        %v8858 = vpop.f32.mrf.mxu0
        %8859 = vdwg.mxu0
        %v8860 = vpack.c.bf16 %v8801, %v8798
        %v8861 = vpack.c.bf16 %v8809, %v8806
        %v8862 = vpack.c.bf16 %v8817, %v8814
        %v8863 = vpack.c.bf16 %v8825, %v8822
        %v8864 = vpack.c.bf16 %v8833, %v8830
        %v8865 = vpack.c.bf16 %v8841, %v8838
        %v8866 = vpack.c.bf16 %v8849, %v8846
        %v8867 = vpack.c.bf16 %v8857, %v8854
        %v8868 = vld [vmem:[#allocation11 + $0x30] sm:$0xf]
        %v8869 = vld [vmem:[#allocation11 + $0x34] sm:$0xf]
        %v8872 = vunpack.c.l.b16 %v8868
        %v8873 = vunpack.c.l.b16 %v8869
        %v8874 = vpack.c.b16 %v8873, %v8872
        %v8877 = vsel %vm3503, %v8860, 0
        %v8880 = vsel %vm3503, %v8861, 0
        %v8883 = vsel %vm3503, %v8862, 0
        %v8886 = vsel %vm3503, %v8863, 0
        %v8889 = vsel %vm3503, %v8864, 0
        %v8892 = vsel %vm3503, %v8865, 0
        %v8895 = vsel %vm3503, %v8866, 0
        %v8898 = vsel %vm3503, %v8867, 0
        %8900 = vmatprep.subr.bf16.mxu0 0
        %8901 = vmatpush1.bf16.msra.mxu0 0
        %8902 = vmatprep.subr.bf16.mxu0 0
        %8903 = vmatpush1.bf16.msra.mxu0 0
        %8904 = vmatprep.subr.bf16.mxu0 0
        %8905 = vmatpush1.bf16.msra.mxu0 0
        %8906 = vmatprep.subr.bf16.mxu0 0
        %8907 = vmatpush1.bf16.msra.mxu0 0
        %8908 = vmatprep.subr.bf16.mxu0 0
        %8909 = vmatpush1.bf16.msra.mxu0 0
        %8910 = vmatprep.subr.bf16.mxu0 0
        %8911 = vmatpush1.bf16.msra.mxu0 0
        %8912 = vmatprep.subr.bf16.mxu0 0
        %8913 = vmatpush1.bf16.msra.mxu0 0
        %8914 = vmatprep.subr.bf16.mxu0 0
        %8915 = vmatpush1.bf16.msra.mxu0 %v8874
        %8916 = vmatprep.subr.bf16.mxu0 0
        %8917 = vmatpush2.bf16.msra.mxu0 0
        %8918 = vmatprep.subr.bf16.mxu0 0
        %8919 = vmatpush2.bf16.msra.mxu0 0
        %8920 = vmatprep.subr.bf16.mxu0 0
        %8921 = vmatpush2.bf16.msra.mxu0 0
        %8922 = vmatprep.subr.bf16.mxu0 0
        %8923 = vmatpush2.bf16.msra.mxu0 0
        %8924 = vmatprep.subr.bf16.mxu0 0
        %8925 = vmatpush2.bf16.msra.mxu0 0
        %8926 = vmatprep.subr.bf16.mxu0 0
        %8927 = vmatpush2.bf16.msra.mxu0 0
        %8928 = vmatprep.subr.bf16.mxu0 0
        %8929 = vmatpush2.bf16.msra.mxu0 0
        %8930 = vmatprep.subr.bf16.mxu0 0
        %8931 = vmatpush2.bf16.msra.mxu0 0
        %8932 = vmatprep.mubr.bf16.mxu0 0
        %8933 = vmatmul.mubr.bf16.gmra.mxu0 %v8877
        %v8934 = vpop.f32.mrf.mxu0
        %v8935 = vadd.f32 0.0, %v8934
        %v8936 = vpop.f32.mrf.mxu0
        %v8937 = vpop.f32.mrf.mxu0
        %v8938 = vadd.f32 0.0, %v8937
        %v8939 = vpop.f32.mrf.mxu0
        %8940 = vmatprep.mubr.bf16.mxu0 0
        %8941 = vmatmul.mubr.bf16.gmra.mxu0 %v8880
        %v8942 = vpop.f32.mrf.mxu0
        %v8943 = vadd.f32 0.0, %v8942
        %v8944 = vpop.f32.mrf.mxu0
        %v8945 = vpop.f32.mrf.mxu0
        %v8946 = vadd.f32 0.0, %v8945
        %v8947 = vpop.f32.mrf.mxu0
        %8948 = vmatprep.mubr.bf16.mxu0 0
        %8949 = vmatmul.mubr.bf16.gmra.mxu0 %v8883
        %v8950 = vpop.f32.mrf.mxu0
        %v8951 = vadd.f32 0.0, %v8950
        %v8952 = vpop.f32.mrf.mxu0
        %v8953 = vpop.f32.mrf.mxu0
        %v8954 = vadd.f32 0.0, %v8953
        %v8955 = vpop.f32.mrf.mxu0
        %8956 = vmatprep.mubr.bf16.mxu0 0
        %8957 = vmatmul.mubr.bf16.gmra.mxu0 %v8886
        %v8958 = vpop.f32.mrf.mxu0
        %v8959 = vadd.f32 0.0, %v8958
        %v8960 = vpop.f32.mrf.mxu0
        %v8961 = vpop.f32.mrf.mxu0
        %v8962 = vadd.f32 0.0, %v8961
        %v8963 = vpop.f32.mrf.mxu0
        %8964 = vmatprep.mubr.bf16.mxu0 0
        %8965 = vmatmul.mubr.bf16.gmra.mxu0 %v8889
        %v8966 = vpop.f32.mrf.mxu0
        %v8967 = vadd.f32 0.0, %v8966
        %v8968 = vpop.f32.mrf.mxu0
        %v8969 = vpop.f32.mrf.mxu0
        %v8970 = vadd.f32 0.0, %v8969
        %v8971 = vpop.f32.mrf.mxu0
        %8972 = vmatprep.mubr.bf16.mxu0 0
        %8973 = vmatmul.mubr.bf16.gmra.mxu0 %v8892
        %v8974 = vpop.f32.mrf.mxu0
        %v8975 = vadd.f32 0.0, %v8974
        %v8976 = vpop.f32.mrf.mxu0
        %v8977 = vpop.f32.mrf.mxu0
        %v8978 = vadd.f32 0.0, %v8977
        %v8979 = vpop.f32.mrf.mxu0
        %8980 = vmatprep.mubr.bf16.mxu0 0
        %8981 = vmatmul.mubr.bf16.gmra.mxu0 %v8895
        %v8982 = vpop.f32.mrf.mxu0
        %v8983 = vadd.f32 0.0, %v8982
        %v8984 = vpop.f32.mrf.mxu0
        %v8985 = vpop.f32.mrf.mxu0
        %v8986 = vadd.f32 0.0, %v8985
        %v8987 = vpop.f32.mrf.mxu0
        %8988 = vmatprep.mubr.bf16.mxu0 0
        %8989 = vmatmul.mubr.bf16.gmra.mxu0 %v8898
        %v8990 = vpop.f32.mrf.mxu0
        %v8991 = vadd.f32 0.0, %v8990
        %v8992 = vpop.f32.mrf.mxu0
        %v8993 = vpop.f32.mrf.mxu0
        %v8994 = vadd.f32 0.0, %v8993
        %v8995 = vpop.f32.mrf.mxu0
        %8996 = vdwg.mxu0
        %v8997 = vadd.f32 %v8210, %v8935
        %v8998 = vadd.f32 %v8211, %v8938
        %v8999 = vadd.f32 %v8212, %v8943
        %v9000 = vadd.f32 %v8213, %v8946
        %v9001 = vadd.f32 %v8214, %v8951
        %v9002 = vadd.f32 %v8215, %v8954
        %v9003 = vadd.f32 %v8216, %v8959
        %v9004 = vadd.f32 %v8217, %v8962
        %v9005 = vadd.f32 %v8218, %v8967
        %v9006 = vadd.f32 %v8219, %v8970
        %v9007 = vadd.f32 %v8220, %v8975
        %v9008 = vadd.f32 %v8221, %v8978
        %v9009 = vadd.f32 %v8222, %v8983
        %v9010 = vadd.f32 %v8223, %v8986
        %v9011 = vadd.f32 %v8224, %v8991
        %v9012 = vadd.f32 %v8225, %v8994
        %9013 = vrot.lane.b32.xlu0 %v3415, 16
        %v9014 = vpop.permute.xlu0 %9013
        %9015 = vrot.lane.b32.xlu0 %v3416, 16
        %v9016 = vpop.permute.xlu0 %9015
        %9017 = vrot.lane.b32.xlu0 %v3417, 16
        %v9018 = vpop.permute.xlu0 %9017
        %9019 = vrot.lane.b32.xlu0 %v3418, 16
        %v9020 = vpop.permute.xlu0 %9019
        %9021 = vrot.lane.b32.xlu0 %v3419, 16
        %v9022 = vpop.permute.xlu0 %9021
        %9023 = vrot.lane.b32.xlu0 %v3420, 16
        %v9024 = vpop.permute.xlu0 %9023
        %9025 = vrot.lane.b32.xlu0 %v3421, 16
        %v9026 = vpop.permute.xlu0 %9025
        %9027 = vrot.lane.b32.xlu0 %v3422, 16
        %v9028 = vpop.permute.xlu0 %9027
        %9029 = vrot.lane.b32.xlu0 %v3487, 16
        %v9030 = vpop.permute.xlu0 %9029
        %9031 = vrot.lane.b32.xlu0 %v3488, 16
        %v9032 = vpop.permute.xlu0 %9031
        %9033 = vrot.lane.b32.xlu0 %v3489, 16
        %v9034 = vpop.permute.xlu0 %9033
        %9035 = vrot.lane.b32.xlu0 %v3490, 16
        %v9036 = vpop.permute.xlu0 %9035
        %9037 = vrot.lane.b32.xlu0 %v3491, 16
        %v9038 = vpop.permute.xlu0 %9037
        %9039 = vrot.lane.b32.xlu0 %v3492, 16
        %v9040 = vpop.permute.xlu0 %9039
        %9041 = vrot.lane.b32.xlu0 %v3493, 16
        %v9042 = vpop.permute.xlu0 %9041
        %9043 = vrot.lane.b32.xlu0 %v3494, 16
        %v9044 = vpop.permute.xlu0 %9043
        %9045 = vrot.lane.b32.xlu0 %v3495, 16
        %v9046 = vpop.permute.xlu0 %9045
        %9047 = vrot.lane.b32.xlu0 %v3496, 16
        %v9048 = vpop.permute.xlu0 %9047
        %9049 = vrot.lane.b32.xlu0 %v3497, 16
        %v9050 = vpop.permute.xlu0 %9049
        %9051 = vrot.lane.b32.xlu0 %v3498, 16
        %v9052 = vpop.permute.xlu0 %9051
        %9053 = vrot.lane.b32.xlu0 %v3499, 16
        %v9054 = vpop.permute.xlu0 %9053
        %9055 = vrot.lane.b32.xlu0 %v3500, 16
        %v9056 = vpop.permute.xlu0 %9055
        %9057 = vrot.lane.b32.xlu0 %v3501, 16
        %v9058 = vpop.permute.xlu0 %9057
        %9059 = vrot.lane.b32.xlu0 %v3502, 16
        %v9060 = vpop.permute.xlu0 %9059
        %v9062 = vsel %vm3503, %v9014, 0
        %v9065 = vsel %vm3503, %v9016, 0
        %v9068 = vsel %vm3503, %v9018, 0
        %v9071 = vsel %vm3503, %v9020, 0
        %v9074 = vsel %vm3503, %v9022, 0
        %v9077 = vsel %vm3503, %v9024, 0
        %v9080 = vsel %vm3503, %v9026, 0
        %v9083 = vsel %vm3503, %v9028, 0
        %v9086 = vsel %vm3503, %v9030, 0
        %v9089 = vsel %vm3503, %v9032, 0
        %v9092 = vsel %vm3503, %v9034, 0
        %v9095 = vsel %vm3503, %v9036, 0
        %v9098 = vsel %vm3503, %v9038, 0
        %v9101 = vsel %vm3503, %v9040, 0
        %v9104 = vsel %vm3503, %v9042, 0
        %v9107 = vsel %vm3503, %v9044, 0
        %v9110 = vsel %vm3503, %v9046, 0
        %v9113 = vsel %vm3503, %v9048, 0
        %v9116 = vsel %vm3503, %v9050, 0
        %v9119 = vsel %vm3503, %v9052, 0
        %v9122 = vsel %vm3503, %v9054, 0
        %v9125 = vsel %vm3503, %v9056, 0
        %v9128 = vsel %vm3503, %v9058, 0
        %v9131 = vsel %vm3503, %v9060, 0
        %9133 = vmatprep.subr.bf16.mxu0 0
        %9134 = vmatpush1.bf16.xpose.msra.mxu0 %v9107
        %9135 = vmatprep.subr.bf16.mxu0 0
        %9136 = vmatpush1.bf16.xpose.msra.mxu0 %v9104
        %9137 = vmatprep.subr.bf16.mxu0 0
        %9138 = vmatpush1.bf16.xpose.msra.mxu0 %v9101
        %9139 = vmatprep.subr.bf16.mxu0 0
        %9140 = vmatpush1.bf16.xpose.msra.mxu0 %v9098
        %9141 = vmatprep.subr.bf16.mxu0 0
        %9142 = vmatpush1.bf16.xpose.msra.mxu0 %v9095
        %9143 = vmatprep.subr.bf16.mxu0 0
        %9144 = vmatpush1.bf16.xpose.msra.mxu0 %v9092
        %9145 = vmatprep.subr.bf16.mxu0 0
        %9146 = vmatpush1.bf16.xpose.msra.mxu0 %v9089
        %9147 = vmatprep.subr.bf16.mxu0 0
        %9148 = vmatpush1.bf16.xpose.msra.mxu0 %v9086
        %9149 = vmatprep.subr.bf16.mxu0 0
        %9150 = vmatpush2.bf16.xpose.msra.mxu0 %v9131
        %9151 = vmatprep.subr.bf16.mxu0 0
        %9152 = vmatpush2.bf16.xpose.msra.mxu0 %v9128
        %9153 = vmatprep.subr.bf16.mxu0 0
        %9154 = vmatpush2.bf16.xpose.msra.mxu0 %v9125
        %9155 = vmatprep.subr.bf16.mxu0 0
        %9156 = vmatpush2.bf16.xpose.msra.mxu0 %v9122
        %9157 = vmatprep.subr.bf16.mxu0 0
        %9158 = vmatpush2.bf16.xpose.msra.mxu0 %v9119
        %9159 = vmatprep.subr.bf16.mxu0 0
        %9160 = vmatpush2.bf16.xpose.msra.mxu0 %v9116
        %9161 = vmatprep.subr.bf16.mxu0 0
        %9162 = vmatpush2.bf16.xpose.msra.mxu0 %v9113
        %9163 = vmatprep.subr.bf16.mxu0 0
        %9164 = vmatpush2.bf16.xpose.msra.mxu0 %v9110
        %9165 = vmatprep.mubr.bf16.mxu0 0
        %9166 = vmatmul.mubr.bf16.gmra.mxu0 %v9062
        %v9167 = vpop.f32.mrf.mxu0
        %v9168 = vadd.f32 0.0, %v9167
        %v9169 = vpop.f32.mrf.mxu0
        %v9170 = vadd.f32 0.0, %v9169
        %v9171 = vpop.f32.mrf.mxu0
        %v9172 = vadd.f32 0.0, %v9171
        %v9173 = vpop.f32.mrf.mxu0
        %v9174 = vadd.f32 0.0, %v9173
        %9175 = vmatprep.mubr.bf16.mxu0 0
        %9176 = vmatmul.mubr.bf16.gmra.mxu0 %v9065
        %v9177 = vpop.f32.mrf.mxu0
        %v9178 = vadd.f32 0.0, %v9177
        %v9179 = vpop.f32.mrf.mxu0
        %v9180 = vadd.f32 0.0, %v9179
        %v9181 = vpop.f32.mrf.mxu0
        %v9182 = vadd.f32 0.0, %v9181
        %v9183 = vpop.f32.mrf.mxu0
        %v9184 = vadd.f32 0.0, %v9183
        %9185 = vmatprep.mubr.bf16.mxu0 0
        %9186 = vmatmul.mubr.bf16.gmra.mxu0 %v9068
        %v9187 = vpop.f32.mrf.mxu0
        %v9188 = vadd.f32 0.0, %v9187
        %v9189 = vpop.f32.mrf.mxu0
        %v9190 = vadd.f32 0.0, %v9189
        %v9191 = vpop.f32.mrf.mxu0
        %v9192 = vadd.f32 0.0, %v9191
        %v9193 = vpop.f32.mrf.mxu0
        %v9194 = vadd.f32 0.0, %v9193
        %9195 = vmatprep.mubr.bf16.mxu0 0
        %9196 = vmatmul.mubr.bf16.gmra.mxu0 %v9071
        %v9197 = vpop.f32.mrf.mxu0
        %v9198 = vadd.f32 0.0, %v9197
        %v9199 = vpop.f32.mrf.mxu0
        %v9200 = vadd.f32 0.0, %v9199
        %v9201 = vpop.f32.mrf.mxu0
        %v9202 = vadd.f32 0.0, %v9201
        %v9203 = vpop.f32.mrf.mxu0
        %v9204 = vadd.f32 0.0, %v9203
        %9205 = vmatprep.mubr.bf16.mxu0 0
        %9206 = vmatmul.mubr.bf16.gmra.mxu0 %v9074
        %v9207 = vpop.f32.mrf.mxu0
        %v9208 = vadd.f32 0.0, %v9207
        %v9209 = vpop.f32.mrf.mxu0
        %v9210 = vadd.f32 0.0, %v9209
        %v9211 = vpop.f32.mrf.mxu0
        %v9212 = vadd.f32 0.0, %v9211
        %v9213 = vpop.f32.mrf.mxu0
        %v9214 = vadd.f32 0.0, %v9213
        %9215 = vmatprep.mubr.bf16.mxu0 0
        %9216 = vmatmul.mubr.bf16.gmra.mxu0 %v9077
        %v9217 = vpop.f32.mrf.mxu0
        %v9218 = vadd.f32 0.0, %v9217
        %v9219 = vpop.f32.mrf.mxu0
        %v9220 = vadd.f32 0.0, %v9219
        %v9221 = vpop.f32.mrf.mxu0
        %v9222 = vadd.f32 0.0, %v9221
        %v9223 = vpop.f32.mrf.mxu0
        %v9224 = vadd.f32 0.0, %v9223
        %9225 = vmatprep.mubr.bf16.mxu0 0
        %9226 = vmatmul.mubr.bf16.gmra.mxu0 %v9080
        %v9227 = vpop.f32.mrf.mxu0
        %v9228 = vadd.f32 0.0, %v9227
        %v9229 = vpop.f32.mrf.mxu0
        %v9230 = vadd.f32 0.0, %v9229
        %v9231 = vpop.f32.mrf.mxu0
        %v9232 = vadd.f32 0.0, %v9231
        %v9233 = vpop.f32.mrf.mxu0
        %v9234 = vadd.f32 0.0, %v9233
        %9235 = vmatprep.mubr.bf16.mxu0 0
        %9236 = vmatmul.mubr.bf16.gmra.mxu0 %v9083
        %v9237 = vpop.f32.mrf.mxu0
        %v9238 = vadd.f32 0.0, %v9237
        %v9239 = vpop.f32.mrf.mxu0
        %v9240 = vadd.f32 0.0, %v9239
        %v9241 = vpop.f32.mrf.mxu0
        %v9242 = vadd.f32 0.0, %v9241
        %v9243 = vpop.f32.mrf.mxu0
        %v9244 = vadd.f32 0.0, %v9243
        %9245 = vdwg.mxu0
        %v9246 = vmax.f32 %v9168, %v9170
        %9247 = vmax.xlane.f32.xlu0 %v9246
        %v9248 = vpop.xlane.xlu0 %9247
        %v9249 = vmax.f32 %v9172, %v9174
        %9250 = vmax.xlane.f32.xlu0 %v9249
        %v9251 = vpop.xlane.xlu0 %9250
        %v9252 = vmax.f32 %v9178, %v9180
        %9253 = vmax.xlane.f32.xlu0 %v9252
        %v9254 = vpop.xlane.xlu0 %9253
        %v9255 = vmax.f32 %v9182, %v9184
        %9256 = vmax.xlane.f32.xlu0 %v9255
        %v9257 = vpop.xlane.xlu0 %9256
        %v9258 = vmax.f32 %v9188, %v9190
        %9259 = vmax.xlane.f32.xlu0 %v9258
        %v9260 = vpop.xlane.xlu0 %9259
        %v9261 = vmax.f32 %v9192, %v9194
        %9262 = vmax.xlane.f32.xlu0 %v9261
        %v9263 = vpop.xlane.xlu0 %9262
        %v9264 = vmax.f32 %v9198, %v9200
        %9265 = vmax.xlane.f32.xlu0 %v9264
        %v9266 = vpop.xlane.xlu0 %9265
        %v9267 = vmax.f32 %v9202, %v9204
        %9268 = vmax.xlane.f32.xlu0 %v9267
        %v9269 = vpop.xlane.xlu0 %9268
        %v9270 = vmax.f32 %v9208, %v9210
        %9271 = vmax.xlane.f32.xlu0 %v9270
        %v9272 = vpop.xlane.xlu0 %9271
        %v9273 = vmax.f32 %v9212, %v9214
        %9274 = vmax.xlane.f32.xlu0 %v9273
        %v9275 = vpop.xlane.xlu0 %9274
        %v9276 = vmax.f32 %v9218, %v9220
        %9277 = vmax.xlane.f32.xlu0 %v9276
        %v9278 = vpop.xlane.xlu0 %9277
        %v9279 = vmax.f32 %v9222, %v9224
        %9280 = vmax.xlane.f32.xlu0 %v9279
        %v9281 = vpop.xlane.xlu0 %9280
        %v9282 = vmax.f32 %v9228, %v9230
        %9283 = vmax.xlane.f32.xlu0 %v9282
        %v9284 = vpop.xlane.xlu0 %9283
        %v9285 = vmax.f32 %v9232, %v9234
        %9286 = vmax.xlane.f32.xlu0 %v9285
        %v9287 = vpop.xlane.xlu0 %9286
        %v9288 = vmax.f32 %v9238, %v9240
        %9289 = vmax.xlane.f32.xlu0 %v9288
        %v9290 = vpop.xlane.xlu0 %9289
        %v9291 = vmax.f32 %v9242, %v9244
        %9292 = vmax.xlane.f32.xlu0 %v9291
        %v9293 = vpop.xlane.xlu0 %9292
        %v9294 = vsub.f32 %v9168, %v9248
        %v9295 = vsub.f32 %v9170, %v9248
        %v9296 = vsub.f32 %v9172, %v9251
        %v9297 = vsub.f32 %v9174, %v9251
        %v9298 = vsub.f32 %v9178, %v9254
        %v9299 = vsub.f32 %v9180, %v9254
        %v9300 = vsub.f32 %v9182, %v9257
        %v9301 = vsub.f32 %v9184, %v9257
        %v9302 = vsub.f32 %v9188, %v9260
        %v9303 = vsub.f32 %v9190, %v9260
        %v9304 = vsub.f32 %v9192, %v9263
        %v9305 = vsub.f32 %v9194, %v9263
        %v9306 = vsub.f32 %v9198, %v9266
        %v9307 = vsub.f32 %v9200, %v9266
        %v9308 = vsub.f32 %v9202, %v9269
        %v9309 = vsub.f32 %v9204, %v9269
        %v9310 = vsub.f32 %v9208, %v9272
        %v9311 = vsub.f32 %v9210, %v9272
        %v9312 = vsub.f32 %v9212, %v9275
        %v9313 = vsub.f32 %v9214, %v9275
        %v9314 = vsub.f32 %v9218, %v9278
        %v9315 = vsub.f32 %v9220, %v9278
        %v9316 = vsub.f32 %v9222, %v9281
        %v9317 = vsub.f32 %v9224, %v9281
        %v9318 = vsub.f32 %v9228, %v9284
        %v9319 = vsub.f32 %v9230, %v9284
        %v9320 = vsub.f32 %v9232, %v9287
        %v9321 = vsub.f32 %v9234, %v9287
        %v9322 = vsub.f32 %v9238, %v9290
        %v9323 = vsub.f32 %v9240, %v9290
        %v9324 = vsub.f32 %v9242, %v9293
        %v9325 = vsub.f32 %v9244, %v9293
        %v9326 = vmul.f32 %v9294, 1.442695
        %v9327 = vpow.pop %v9326
        %v9328 = vmul.f32 %v9295, 1.442695
        %v9329 = vpow.pop %v9328
        %v9330 = vmul.f32 %v9296, 1.442695
        %v9331 = vpow.pop %v9330
        %v9332 = vmul.f32 %v9297, 1.442695
        %v9333 = vpow.pop %v9332
        %v9334 = vmul.f32 %v9298, 1.442695
        %v9335 = vpow.pop %v9334
        %v9336 = vmul.f32 %v9299, 1.442695
        %v9337 = vpow.pop %v9336
        %v9338 = vmul.f32 %v9300, 1.442695
        %v9339 = vpow.pop %v9338
        %v9340 = vmul.f32 %v9301, 1.442695
        %v9341 = vpow.pop %v9340
        %v9342 = vmul.f32 %v9302, 1.442695
        %v9343 = vpow.pop %v9342
        %v9344 = vmul.f32 %v9303, 1.442695
        %v9345 = vpow.pop %v9344
        %v9346 = vmul.f32 %v9304, 1.442695
        %v9347 = vpow.pop %v9346
        %v9348 = vmul.f32 %v9305, 1.442695
        %v9349 = vpow.pop %v9348
        %v9350 = vmul.f32 %v9306, 1.442695
        %v9351 = vpow.pop %v9350
        %v9352 = vmul.f32 %v9307, 1.442695
        %v9353 = vpow.pop %v9352
        %v9354 = vmul.f32 %v9308, 1.442695
        %v9355 = vpow.pop %v9354
        %v9356 = vmul.f32 %v9309, 1.442695
        %v9357 = vpow.pop %v9356
        %v9358 = vmul.f32 %v9310, 1.442695
        %v9359 = vpow.pop %v9358
        %v9360 = vmul.f32 %v9311, 1.442695
        %v9361 = vpow.pop %v9360
        %v9362 = vmul.f32 %v9312, 1.442695
        %v9363 = vpow.pop %v9362
        %v9364 = vmul.f32 %v9313, 1.442695
        %v9365 = vpow.pop %v9364
        %v9366 = vmul.f32 %v9314, 1.442695
        %v9367 = vpow.pop %v9366
        %v9368 = vmul.f32 %v9315, 1.442695
        %v9369 = vpow.pop %v9368
        %v9370 = vmul.f32 %v9316, 1.442695
        %v9371 = vpow.pop %v9370
        %v9372 = vmul.f32 %v9317, 1.442695
        %v9373 = vpow.pop %v9372
        %v9374 = vmul.f32 %v9318, 1.442695
        %v9375 = vpow.pop %v9374
        %v9376 = vmul.f32 %v9319, 1.442695
        %v9377 = vpow.pop %v9376
        %v9378 = vmul.f32 %v9320, 1.442695
        %v9379 = vpow.pop %v9378
        %v9380 = vmul.f32 %v9321, 1.442695
        %v9381 = vpow.pop %v9380
        %v9382 = vmul.f32 %v9322, 1.442695
        %v9383 = vpow.pop %v9382
        %v9384 = vmul.f32 %v9323, 1.442695
        %v9385 = vpow.pop %v9384
        %v9386 = vmul.f32 %v9324, 1.442695
        %v9387 = vpow.pop %v9386
        %v9388 = vmul.f32 %v9325, 1.442695
        %v9389 = vpow.pop %v9388
        %v9390 = vadd.f32 %v9327, %v9329
        %9391 = vadd.xlane.f32.xlu0 %v9390
        %v9392 = vpop.xlane.xlu0 %9391
        %v9393 = vadd.f32 %v9331, %v9333
        %9394 = vadd.xlane.f32.xlu0 %v9393
        %v9395 = vpop.xlane.xlu0 %9394
        %v9396 = vadd.f32 %v9335, %v9337
        %9397 = vadd.xlane.f32.xlu0 %v9396
        %v9398 = vpop.xlane.xlu0 %9397
        %v9399 = vadd.f32 %v9339, %v9341
        %9400 = vadd.xlane.f32.xlu0 %v9399
        %v9401 = vpop.xlane.xlu0 %9400
        %v9402 = vadd.f32 %v9343, %v9345
        %9403 = vadd.xlane.f32.xlu0 %v9402
        %v9404 = vpop.xlane.xlu0 %9403
        %v9405 = vadd.f32 %v9347, %v9349
        %9406 = vadd.xlane.f32.xlu0 %v9405
        %v9407 = vpop.xlane.xlu0 %9406
        %v9408 = vadd.f32 %v9351, %v9353
        %9409 = vadd.xlane.f32.xlu0 %v9408
        %v9410 = vpop.xlane.xlu0 %9409
        %v9411 = vadd.f32 %v9355, %v9357
        %9412 = vadd.xlane.f32.xlu0 %v9411
        %v9413 = vpop.xlane.xlu0 %9412
        %v9414 = vadd.f32 %v9359, %v9361
        %9415 = vadd.xlane.f32.xlu0 %v9414
        %v9416 = vpop.xlane.xlu0 %9415
        %v9417 = vadd.f32 %v9363, %v9365
        %9418 = vadd.xlane.f32.xlu0 %v9417
        %v9419 = vpop.xlane.xlu0 %9418
        %v9420 = vadd.f32 %v9367, %v9369
        %9421 = vadd.xlane.f32.xlu0 %v9420
        %v9422 = vpop.xlane.xlu0 %9421
        %v9423 = vadd.f32 %v9371, %v9373
        %9424 = vadd.xlane.f32.xlu0 %v9423
        %v9425 = vpop.xlane.xlu0 %9424
        %v9426 = vadd.f32 %v9375, %v9377
        %9427 = vadd.xlane.f32.xlu0 %v9426
        %v9428 = vpop.xlane.xlu0 %9427
        %v9429 = vadd.f32 %v9379, %v9381
        %9430 = vadd.xlane.f32.xlu0 %v9429
        %v9431 = vpop.xlane.xlu0 %9430
        %v9432 = vadd.f32 %v9383, %v9385
        %9433 = vadd.xlane.f32.xlu0 %v9432
        %v9434 = vpop.xlane.xlu0 %9433
        %v9435 = vadd.f32 %v9387, %v9389
        %9436 = vadd.xlane.f32.xlu0 %v9435
        %v9437 = vpop.xlane.xlu0 %9436
        %v9438 = vrcp.pop %v9392
        %v9439 = vrcp.pop %v9395
        %v9440 = vrcp.pop %v9398
        %v9441 = vrcp.pop %v9401
        %v9442 = vrcp.pop %v9404
        %v9443 = vrcp.pop %v9407
        %v9444 = vrcp.pop %v9410
        %v9445 = vrcp.pop %v9413
        %v9446 = vrcp.pop %v9416
        %v9447 = vrcp.pop %v9419
        %v9448 = vrcp.pop %v9422
        %v9449 = vrcp.pop %v9425
        %v9450 = vrcp.pop %v9428
        %v9451 = vrcp.pop %v9431
        %v9452 = vrcp.pop %v9434
        %v9453 = vrcp.pop %v9437
        %v9454 = vmul.f32 %v9327, %v9438
        %v9455 = vmul.f32 %v9329, %v9438
        %v9456 = vmul.f32 %v9331, %v9439
        %v9457 = vmul.f32 %v9333, %v9439
        %v9458 = vmul.f32 %v9335, %v9440
        %v9459 = vmul.f32 %v9337, %v9440
        %v9460 = vmul.f32 %v9339, %v9441
        %v9461 = vmul.f32 %v9341, %v9441
        %v9462 = vmul.f32 %v9343, %v9442
        %v9463 = vmul.f32 %v9345, %v9442
        %v9464 = vmul.f32 %v9347, %v9443
        %v9465 = vmul.f32 %v9349, %v9443
        %v9466 = vmul.f32 %v9351, %v9444
        %v9467 = vmul.f32 %v9353, %v9444
        %v9468 = vmul.f32 %v9355, %v9445
        %v9469 = vmul.f32 %v9357, %v9445
        %v9470 = vmul.f32 %v9359, %v9446
        %v9471 = vmul.f32 %v9361, %v9446
        %v9472 = vmul.f32 %v9363, %v9447
        %v9473 = vmul.f32 %v9365, %v9447
        %v9474 = vmul.f32 %v9367, %v9448
        %v9475 = vmul.f32 %v9369, %v9448
        %v9476 = vmul.f32 %v9371, %v9449
        %v9477 = vmul.f32 %v9373, %v9449
        %v9478 = vmul.f32 %v9375, %v9450
        %v9479 = vmul.f32 %v9377, %v9450
        %v9480 = vmul.f32 %v9379, %v9451
        %v9481 = vmul.f32 %v9381, %v9451
        %v9482 = vmul.f32 %v9383, %v9452
        %v9483 = vmul.f32 %v9385, %v9452
        %v9484 = vmul.f32 %v9387, %v9453
        %v9485 = vmul.f32 %v9389, %v9453
        %v9486 = vpack.c.bf16 %v9456, %v9454
        %v9487 = vpack.c.bf16 %v9457, %v9455
        %v9488 = vpack.c.bf16 %v9460, %v9458
        %v9489 = vpack.c.bf16 %v9461, %v9459
        %v9490 = vpack.c.bf16 %v9464, %v9462
        %v9491 = vpack.c.bf16 %v9465, %v9463
        %v9492 = vpack.c.bf16 %v9468, %v9466
        %v9493 = vpack.c.bf16 %v9469, %v9467
        %v9494 = vpack.c.bf16 %v9472, %v9470
        %v9495 = vpack.c.bf16 %v9473, %v9471
        %v9496 = vpack.c.bf16 %v9476, %v9474
        %v9497 = vpack.c.bf16 %v9477, %v9475
        %v9498 = vpack.c.bf16 %v9480, %v9478
        %v9499 = vpack.c.bf16 %v9481, %v9479
        %v9500 = vpack.c.bf16 %v9484, %v9482
        %v9501 = vpack.c.bf16 %v9485, %v9483
        %9502 = vrot.lane.b32.xlu0 %v4009, 16
        %v9503 = vpop.permute.xlu0 %9502
        %9504 = vrot.lane.b32.xlu0 %v4010, 16
        %v9505 = vpop.permute.xlu0 %9504
        %9506 = vrot.lane.b32.xlu0 %v4011, 16
        %v9507 = vpop.permute.xlu0 %9506
        %9508 = vrot.lane.b32.xlu0 %v4012, 16
        %v9509 = vpop.permute.xlu0 %9508
        %9510 = vrot.lane.b32.xlu0 %v4013, 16
        %v9511 = vpop.permute.xlu0 %9510
        %9512 = vrot.lane.b32.xlu0 %v4014, 16
        %v9513 = vpop.permute.xlu0 %9512
        %9514 = vrot.lane.b32.xlu0 %v4015, 16
        %v9515 = vpop.permute.xlu0 %9514
        %9516 = vrot.lane.b32.xlu0 %v4016, 16
        %v9517 = vpop.permute.xlu0 %9516
        %9518 = vrot.lane.b32.xlu0 %v4017, 16
        %v9519 = vpop.permute.xlu0 %9518
        %9520 = vrot.lane.b32.xlu0 %v4018, 16
        %v9521 = vpop.permute.xlu0 %9520
        %9522 = vrot.lane.b32.xlu0 %v4019, 16
        %v9523 = vpop.permute.xlu0 %9522
        %9524 = vrot.lane.b32.xlu0 %v4020, 16
        %v9525 = vpop.permute.xlu0 %9524
        %9526 = vrot.lane.b32.xlu0 %v4021, 16
        %v9527 = vpop.permute.xlu0 %9526
        %9528 = vrot.lane.b32.xlu0 %v4022, 16
        %v9529 = vpop.permute.xlu0 %9528
        %9530 = vrot.lane.b32.xlu0 %v4023, 16
        %v9531 = vpop.permute.xlu0 %9530
        %9532 = vrot.lane.b32.xlu0 %v4024, 16
        %v9533 = vpop.permute.xlu0 %9532
        %9550 = vmatprep.subr.bf16.mxu0 0
        %9551 = vmatpush1.bf16.msra.mxu0 %v9517
        %9552 = vmatprep.subr.bf16.mxu0 0
        %9553 = vmatpush1.bf16.msra.mxu0 %v9515
        %9554 = vmatprep.subr.bf16.mxu0 0
        %9555 = vmatpush1.bf16.msra.mxu0 %v9513
        %9556 = vmatprep.subr.bf16.mxu0 0
        %9557 = vmatpush1.bf16.msra.mxu0 %v9511
        %9558 = vmatprep.subr.bf16.mxu0 0
        %9559 = vmatpush1.bf16.msra.mxu0 %v9509
        %9560 = vmatprep.subr.bf16.mxu0 0
        %9561 = vmatpush1.bf16.msra.mxu0 %v9507
        %9562 = vmatprep.subr.bf16.mxu0 0
        %9563 = vmatpush1.bf16.msra.mxu0 %v9505
        %9564 = vmatprep.subr.bf16.mxu0 0
        %9565 = vmatpush1.bf16.msra.mxu0 %v9503
        %9566 = vmatprep.subr.bf16.mxu0 0
        %9567 = vmatpush2.bf16.msra.mxu0 %v9533
        %9568 = vmatprep.subr.bf16.mxu0 0
        %9569 = vmatpush2.bf16.msra.mxu0 %v9531
        %9570 = vmatprep.subr.bf16.mxu0 0
        %9571 = vmatpush2.bf16.msra.mxu0 %v9529
        %9572 = vmatprep.subr.bf16.mxu0 0
        %9573 = vmatpush2.bf16.msra.mxu0 %v9527
        %9574 = vmatprep.subr.bf16.mxu0 0
        %9575 = vmatpush2.bf16.msra.mxu0 %v9525
        %9576 = vmatprep.subr.bf16.mxu0 0
        %9577 = vmatpush2.bf16.msra.mxu0 %v9523
        %9578 = vmatprep.subr.bf16.mxu0 0
        %9579 = vmatpush2.bf16.msra.mxu0 %v9521
        %9580 = vmatprep.subr.bf16.mxu0 0
        %9581 = vmatpush2.bf16.msra.mxu0 %v9519
        %9582 = vmatprep.mubr.bf16.mxu0 %v9487
        %9583 = vmatmul.mubr.bf16.gmra.mxu0 %v9486
        %v9584 = vpop.f32.mrf.mxu0
        %v9585 = vadd.f32 0.0, %v9584
        %v9586 = vpop.f32.mrf.mxu0
        %v9587 = vpop.f32.mrf.mxu0
        %v9588 = vadd.f32 0.0, %v9587
        %v9589 = vpop.f32.mrf.mxu0
        %9590 = vmatprep.mubr.bf16.mxu0 %v9489
        %9591 = vmatmul.mubr.bf16.gmra.mxu0 %v9488
        %v9592 = vpop.f32.mrf.mxu0
        %v9593 = vadd.f32 0.0, %v9592
        %v9594 = vpop.f32.mrf.mxu0
        %v9595 = vpop.f32.mrf.mxu0
        %v9596 = vadd.f32 0.0, %v9595
        %v9597 = vpop.f32.mrf.mxu0
        %9598 = vmatprep.mubr.bf16.mxu0 %v9491
        %9599 = vmatmul.mubr.bf16.gmra.mxu0 %v9490
        %v9600 = vpop.f32.mrf.mxu0
        %v9601 = vadd.f32 0.0, %v9600
        %v9602 = vpop.f32.mrf.mxu0
        %v9603 = vpop.f32.mrf.mxu0
        %v9604 = vadd.f32 0.0, %v9603
        %v9605 = vpop.f32.mrf.mxu0
        %9606 = vmatprep.mubr.bf16.mxu0 %v9493
        %9607 = vmatmul.mubr.bf16.gmra.mxu0 %v9492
        %v9608 = vpop.f32.mrf.mxu0
        %v9609 = vadd.f32 0.0, %v9608
        %v9610 = vpop.f32.mrf.mxu0
        %v9611 = vpop.f32.mrf.mxu0
        %v9612 = vadd.f32 0.0, %v9611
        %v9613 = vpop.f32.mrf.mxu0
        %9614 = vmatprep.mubr.bf16.mxu0 %v9495
        %9615 = vmatmul.mubr.bf16.gmra.mxu0 %v9494
        %v9616 = vpop.f32.mrf.mxu0
        %v9617 = vadd.f32 0.0, %v9616
        %v9618 = vpop.f32.mrf.mxu0
        %v9619 = vpop.f32.mrf.mxu0
        %v9620 = vadd.f32 0.0, %v9619
        %v9621 = vpop.f32.mrf.mxu0
        %9622 = vmatprep.mubr.bf16.mxu0 %v9497
        %9623 = vmatmul.mubr.bf16.gmra.mxu0 %v9496
        %v9624 = vpop.f32.mrf.mxu0
        %v9625 = vadd.f32 0.0, %v9624
        %v9626 = vpop.f32.mrf.mxu0
        %v9627 = vpop.f32.mrf.mxu0
        %v9628 = vadd.f32 0.0, %v9627
        %v9629 = vpop.f32.mrf.mxu0
        %9630 = vmatprep.mubr.bf16.mxu0 %v9499
        %9631 = vmatmul.mubr.bf16.gmra.mxu0 %v9498
        %v9632 = vpop.f32.mrf.mxu0
        %v9633 = vadd.f32 0.0, %v9632
        %v9634 = vpop.f32.mrf.mxu0
        %v9635 = vpop.f32.mrf.mxu0
        %v9636 = vadd.f32 0.0, %v9635
        %v9637 = vpop.f32.mrf.mxu0
        %9638 = vmatprep.mubr.bf16.mxu0 %v9501
        %9639 = vmatmul.mubr.bf16.gmra.mxu0 %v9500
        %v9640 = vpop.f32.mrf.mxu0
        %v9641 = vadd.f32 0.0, %v9640
        %v9642 = vpop.f32.mrf.mxu0
        %v9643 = vpop.f32.mrf.mxu0
        %v9644 = vadd.f32 0.0, %v9643
        %v9645 = vpop.f32.mrf.mxu0
        %9646 = vdwg.mxu0
        %v9647 = vpack.c.bf16 %v9588, %v9585
        %v9648 = vpack.c.bf16 %v9596, %v9593
        %v9649 = vpack.c.bf16 %v9604, %v9601
        %v9650 = vpack.c.bf16 %v9612, %v9609
        %v9651 = vpack.c.bf16 %v9620, %v9617
        %v9652 = vpack.c.bf16 %v9628, %v9625
        %v9653 = vpack.c.bf16 %v9636, %v9633
        %v9654 = vpack.c.bf16 %v9644, %v9641
        %v9655 = vld [vmem:[#allocation11 + $0x38] sm:$0xf]
        %v9656 = vld [vmem:[#allocation11 + $0x3c] sm:$0xf]
        %v9659 = vunpack.c.l.b16 %v9655
        %v9660 = vunpack.c.l.b16 %v9656
        %v9661 = vpack.c.b16 %v9660, %v9659
        %v9664 = vsel %vm3503, %v9647, 0
        %v9667 = vsel %vm3503, %v9648, 0
        %v9670 = vsel %vm3503, %v9649, 0
        %v9673 = vsel %vm3503, %v9650, 0
        %v9676 = vsel %vm3503, %v9651, 0
        %v9679 = vsel %vm3503, %v9652, 0
        %v9682 = vsel %vm3503, %v9653, 0
        %v9685 = vsel %vm3503, %v9654, 0
        %9687 = vmatprep.subr.bf16.mxu0 0
        %9688 = vmatpush1.bf16.msra.mxu0 0
        %9689 = vmatprep.subr.bf16.mxu0 0
        %9690 = vmatpush1.bf16.msra.mxu0 0
        %9691 = vmatprep.subr.bf16.mxu0 0
        %9692 = vmatpush1.bf16.msra.mxu0 0
        %9693 = vmatprep.subr.bf16.mxu0 0
        %9694 = vmatpush1.bf16.msra.mxu0 0
        %9695 = vmatprep.subr.bf16.mxu0 0
        %9696 = vmatpush1.bf16.msra.mxu0 0
        %9697 = vmatprep.subr.bf16.mxu0 0
        %9698 = vmatpush1.bf16.msra.mxu0 0
        %9699 = vmatprep.subr.bf16.mxu0 0
        %9700 = vmatpush1.bf16.msra.mxu0 0
        %9701 = vmatprep.subr.bf16.mxu0 0
        %9702 = vmatpush1.bf16.msra.mxu0 %v9661
        %9703 = vmatprep.subr.bf16.mxu0 0
        %9704 = vmatpush2.bf16.msra.mxu0 0
        %9705 = vmatprep.subr.bf16.mxu0 0
        %9706 = vmatpush2.bf16.msra.mxu0 0
        %9707 = vmatprep.subr.bf16.mxu0 0
        %9708 = vmatpush2.bf16.msra.mxu0 0
        %9709 = vmatprep.subr.bf16.mxu0 0
        %9710 = vmatpush2.bf16.msra.mxu0 0
        %9711 = vmatprep.subr.bf16.mxu0 0
        %9712 = vmatpush2.bf16.msra.mxu0 0
        %9713 = vmatprep.subr.bf16.mxu0 0
        %9714 = vmatpush2.bf16.msra.mxu0 0
        %9715 = vmatprep.subr.bf16.mxu0 0
        %9716 = vmatpush2.bf16.msra.mxu0 0
        %9717 = vmatprep.subr.bf16.mxu0 0
        %9718 = vmatpush2.bf16.msra.mxu0 0
        %9719 = vmatprep.mubr.bf16.mxu0 0
        %9720 = vmatmul.mubr.bf16.gmra.mxu0 %v9664
        %v9721 = vpop.f32.mrf.mxu0
        %v9722 = vadd.f32 0.0, %v9721
        %v9723 = vpop.f32.mrf.mxu0
        %v9724 = vpop.f32.mrf.mxu0
        %v9725 = vadd.f32 0.0, %v9724
        %v9726 = vpop.f32.mrf.mxu0
        %9727 = vmatprep.mubr.bf16.mxu0 0
        %9728 = vmatmul.mubr.bf16.gmra.mxu0 %v9667
        %v9729 = vpop.f32.mrf.mxu0
        %v9730 = vadd.f32 0.0, %v9729
        %v9731 = vpop.f32.mrf.mxu0
        %v9732 = vpop.f32.mrf.mxu0
        %v9733 = vadd.f32 0.0, %v9732
        %v9734 = vpop.f32.mrf.mxu0
        %9735 = vmatprep.mubr.bf16.mxu0 0
        %9736 = vmatmul.mubr.bf16.gmra.mxu0 %v9670
        %v9737 = vpop.f32.mrf.mxu0
        %v9738 = vadd.f32 0.0, %v9737
        %v9739 = vpop.f32.mrf.mxu0
        %v9740 = vpop.f32.mrf.mxu0
        %v9741 = vadd.f32 0.0, %v9740
        %v9742 = vpop.f32.mrf.mxu0
        %9743 = vmatprep.mubr.bf16.mxu0 0
        %9744 = vmatmul.mubr.bf16.gmra.mxu0 %v9673
        %v9745 = vpop.f32.mrf.mxu0
        %v9746 = vadd.f32 0.0, %v9745
        %v9747 = vpop.f32.mrf.mxu0
        %v9748 = vpop.f32.mrf.mxu0
        %v9749 = vadd.f32 0.0, %v9748
        %v9750 = vpop.f32.mrf.mxu0
        %9751 = vmatprep.mubr.bf16.mxu0 0
        %9752 = vmatmul.mubr.bf16.gmra.mxu0 %v9676
        %v9753 = vpop.f32.mrf.mxu0
        %v9754 = vadd.f32 0.0, %v9753
        %v9755 = vpop.f32.mrf.mxu0
        %v9756 = vpop.f32.mrf.mxu0
        %v9757 = vadd.f32 0.0, %v9756
        %v9758 = vpop.f32.mrf.mxu0
        %9759 = vmatprep.mubr.bf16.mxu0 0
        %9760 = vmatmul.mubr.bf16.gmra.mxu0 %v9679
        %v9761 = vpop.f32.mrf.mxu0
        %v9762 = vadd.f32 0.0, %v9761
        %v9763 = vpop.f32.mrf.mxu0
        %v9764 = vpop.f32.mrf.mxu0
        %v9765 = vadd.f32 0.0, %v9764
        %v9766 = vpop.f32.mrf.mxu0
        %9767 = vmatprep.mubr.bf16.mxu0 0
        %9768 = vmatmul.mubr.bf16.gmra.mxu0 %v9682
        %v9769 = vpop.f32.mrf.mxu0
        %v9770 = vadd.f32 0.0, %v9769
        %v9771 = vpop.f32.mrf.mxu0
        %v9772 = vpop.f32.mrf.mxu0
        %v9773 = vadd.f32 0.0, %v9772
        %v9774 = vpop.f32.mrf.mxu0
        %9775 = vmatprep.mubr.bf16.mxu0 0
        %9776 = vmatmul.mubr.bf16.gmra.mxu0 %v9685
        %v9777 = vpop.f32.mrf.mxu0
        %v9778 = vadd.f32 0.0, %v9777
        %v9779 = vpop.f32.mrf.mxu0
        %v9780 = vpop.f32.mrf.mxu0
        %v9781 = vadd.f32 0.0, %v9780
        %v9782 = vpop.f32.mrf.mxu0
        %9783 = vdwg.mxu0
        %v9784 = vadd.f32 %v8997, %v9722
        %v9785 = vadd.f32 %v8998, %v9725
        %v9786 = vadd.f32 %v8999, %v9730
        %v9787 = vadd.f32 %v9000, %v9733
        %v9788 = vadd.f32 %v9001, %v9738
        %v9789 = vadd.f32 %v9002, %v9741
        %v9790 = vadd.f32 %v9003, %v9746
        %v9791 = vadd.f32 %v9004, %v9749
        %v9792 = vadd.f32 %v9005, %v9754
        %v9793 = vadd.f32 %v9006, %v9757
        %v9794 = vadd.f32 %v9007, %v9762
        %v9795 = vadd.f32 %v9008, %v9765
        %v9796 = vadd.f32 %v9009, %v9770
        %v9797 = vadd.f32 %v9010, %v9773
        %v9798 = vadd.f32 %v9011, %v9778
        %v9799 = vadd.f32 %v9012, %v9781
        %9800 = vst [vmem:[%s231] sm:$0xff] %v9784
        %9801 = vst [vmem:[%s231 + $0x8] sm:$0xff] %v9785
        %9802 = vst [vmem:[%s231 + $0x10] sm:$0xff] %v9786
        %9803 = vst [vmem:[%s231 + $0x18] sm:$0xff] %v9787
        %9804 = vst [vmem:[%s231 + $0x20] sm:$0xff] %v9788
        %9805 = vst [vmem:[%s231 + $0x28] sm:$0xff] %v9789
        %9806 = vst [vmem:[%s231 + $0x30] sm:$0xff] %v9790
        %9807 = vst [vmem:[%s231 + $0x38] sm:$0xff] %v9791
        %9808 = vst [vmem:[%s231 + $0x40] sm:$0xff] %v9792
        %9809 = vst [vmem:[%s231 + $0x48] sm:$0xff] %v9793
        %9810 = vst [vmem:[%s231 + $0x50] sm:$0xff] %v9794
        %9811 = vst [vmem:[%s231 + $0x58] sm:$0xff] %v9795
        %9812 = vst [vmem:[%s231 + $0x60] sm:$0xff] %v9796
        %9813 = vst [vmem:[%s231 + $0x68] sm:$0xff] %v9797
        %9814 = vst [vmem:[%s231 + $0x70] sm:$0xff] %v9798
        %9815 = vst [vmem:[%s231 + $0x78] sm:$0xff] %v9799
        %s9816 = sand.u32 %s111, 1
        %s9817 = scalar_lea.sflag [#allocation8], %s9816
        %s9818 = sand.u32 %s111, 1
        %s9819 = smul.addr %s9818, 128
        %s9820 = scalar_lea.vmem [#allocation12], %s9819
        // Predicated region
        $region49: #{tpu_custom_call.1} parent=31 // pred_check
          %p9821 = pneg %p121
        $region50: #{tpu_custom_call.1} parent=31 // pred_check_branch
          %9823 = sbr.rel (%p9821) target = $region52
        $region51: #{tpu_custom_call.1} parent=31 // pred_region
          %s9824 = smul.u32 16, %s26
          %s9826 = ssub.s32 2048, 2048
          %9827 = vsyncadd %s9817, %s9826
          %s9828 = smul.addr %s25, 32
          %s9829 = sadd.s32 %s9824, %s9828
          %s9830 = smul.addr %s9829, 128
          %s9831 = scalar_lea.hbm %s3, %s9830
          %s9832 = sshll.u32 %s9820, 4
          %s9833 = int_to_ptr.vmem [resolvable:$true] %s9832
          %9838 = dma.vmem_to_hbm [thread:$0]  %s9833, 2048, %s9831, %s9817, 128, 128, 8
        $region52: #{tpu_custom_call.1} parent=31 // pred_fallthru
          _
      $region32: #{tpu_custom_call.1} parent=5 // pred_fallthru
        _
      %p9839 = scmp.le.s32.totalorder 2, %s16
      // Predicated region
      $region53: #{tpu_custom_call.1} parent=5 // pred_check
        %p9840 = pneg %p9839
      $region54: #{tpu_custom_call.1} parent=5 // pred_check_branch
        %9842 = sbr.rel (%p9840) target = $region56
      $region55: #{tpu_custom_call.1} parent=5 // pred_region
        %s9843 = ssub.s32 %s16, 2
        // Predicated region
        $region57: #{tpu_custom_call.1} parent=55 // pred_check
          %p9844 = pneg %p127
        $region58: #{tpu_custom_call.1} parent=55 // pred_check_branch
          %9846 = sbr.rel (%p9844) target = $region60
        $region59: #{tpu_custom_call.1} parent=55 // pred_region
          %s9847 = sand.u32 %s112, 1
          %s9848 = scalar_lea.sflag [#allocation8], %s9847
          %s9849 = sand.u32 %s112, 1
          %s9850 = smul.addr %s9849, 128
          %s9851 = scalar_lea.vmem [#allocation12], %s9850
          %9852 = dma.done %s9848, 2048
        $region60: #{tpu_custom_call.1} parent=55 // pred_fallthru
          _
      $region56: #{tpu_custom_call.1} parent=5 // pred_fallthru
        _
    $region6: #{tpu_custom_call.1} parent=1 // loop_footer
      %s20 = sadd.s32 1, %s16
    $region7: #{tpu_custom_call.1} parent=1 // loop_footer_branch
      %15 = sbr.rel target = $region3
    $region8: #{tpu_custom_call.1} parent=1 // loop_exit
      _
    %9853 = vsyncpa [#allocation7], 1
    %s9854 = scalar_lea.sflag [#allocation7], 1
    %9855 = vsyncpa %s9854, 1
    %9856 = vsyncpa [#allocation10], 1
    %9857 = vsyncpa [#allocation8], 1
    %s9858 = scalar_lea.sflag [#allocation8], 1
    %9859 = vsyncpa %s9858, 1

</llo_original>
